<compile_context>
chip_gen: v7x
topology: tpu7x:2x2x1
jax: 0.10.0
libtpu: 0.0.40
codegen_flags: <defaults>
</compile_context>

<pallas_src>
import math
from functools import partial

import jax
import jax.numpy as jnp
import numpy as np
from jax import lax
from jax.experimental import pallas as pl
from jax.experimental.pallas import tpu as pltpu


def _rotate_half(t, hd):
    """[a | b] -> [b | a] along the last axis (2-D value). With sinf = [-sin | sin]
    this implements the interleaved complex rotation in de-interleaved layout."""
    if hd % 128 == 0:
        # Native XLU lane rotation (free slot relative to MXU/VPU).
        return pltpu.roll(t, shift=hd // 2, axis=1)
    half = hd // 2
    return jnp.concatenate([t[:, half:], t[:, :half]], axis=-1)


# --------------------------------------------------------------------------- #
# Pass 1: fused QKV projection + RoPE.
# One (block_l, D) x (D, (n_heads + 2*n_kv)*hd) MXU matmul per grid step; the
# weight slab has a constant index_map so it is fetched once and stays resident.
# --------------------------------------------------------------------------- #
def qkv_rope_kernel(x_ref, wqkv_ref, cos_ref, sin_ref,
                    q_ref, k_ref, v_ref, *, head_dim, n_heads, n_kv_heads):
    hd = head_dim
    x = x_ref[0]                                          # (TL, D) bf16
    qkv = jnp.dot(x, wqkv_ref[...],
                  preferred_element_type=jnp.float32)     # (TL, (nh+2*nkv)*hd) f32
    cos = cos_ref[...]                                    # (TL, hd) f32
    sin = sin_ref[...]                                    # (TL, hd) f32, signed [-sin|sin]

    k_off = n_heads * hd
    v_off = k_off + n_kv_heads * hd

    # Q heads: RoPE per 128-lane head slice, stored directly into the output
    # lane slice (no concatenate / relayout). Softmax scale is already in W_q.
    for h in range(n_heads):
        qh = qkv[:, h * hd:(h + 1) * hd]
        qh = qh * cos + _rotate_half(qh, hd) * sin
        q_ref[0, :, h * hd:(h + 1) * hd] = qh.astype(q_ref.dtype)

    # K heads: RoPE once per KV head.
    for h in range(n_kv_heads):
        kh = qkv[:, k_off + h * hd:k_off + (h + 1) * hd]
        kh = kh * cos + _rotate_half(kh, hd) * sin
        k_ref[0, :, h * hd:(h + 1) * hd] = kh.astype(k_ref.dtype)

    # V heads: no rotation, single wide store.
    v_ref[0] = qkv[:, v_off:].astype(v_ref.dtype)


# --------------------------------------------------------------------------- #
# Pass 2: GQA attention + output projection.
# grid = (B, L/block_q, n_kv); the KV-head axis is the reduction axis for the
# wo accumulation (f32 VMEM scratch) and MUST stay "arbitrary" (innermost).
# --------------------------------------------------------------------------- #
def attention_kernel(q_ref, k_ref, v_ref, wo_ref, o_ref,
                     out_sc, acc_ref, *, head_dim, n_rep, block_q, mask_value):
    qi = pl.program_id(1)
    kv = pl.program_id(2)
    n_kv = pl.num_programs(2)
    hd = head_dim

    @pl.when(kv == 0)
    def _init():
        acc_ref[...] = jnp.zeros_like(acc_ref)

    q = q_ref[0]                       # (TQ, n_rep*hd) bf16, rotated & pre-scaled
    k = k_ref[0]                       # (L,  hd) bf16, rotated
    v = v_ref[0]                       # (L,  hd) bf16
    L = k.shape[0]

    # Causal mask generated in-kernel (no (L, L) HBM read / VMEM-resident mask).
    row = lax.broadcasted_iota(jnp.int32, (block_q, L), 0) + qi * block_q
    col = lax.broadcasted_iota(jnp.int32, (block_q, L), 1)
    causal = col <= row

    for r in range(n_rep):             # static unroll over Q heads sharing this KV head
        q_r = q[:, r * hd:(r + 1) * hd]
        s = lax.dot_general(q_r, k, (((1,), (1,)), ((), ())),
                            preferred_element_type=jnp.float32)      # (TQ, L) f32
        s = jnp.where(causal, s, mask_value)
        m = jnp.max(s, axis=-1, keepdims=True)
        p = jnp.exp(s - m)                                           # f32 softmax math
        l = jnp.sum(p, axis=-1, keepdims=True)
        o_r = jnp.dot(p.astype(v.dtype), v,
                      preferred_element_type=jnp.float32)            # (TQ, hd) f32
        # Normalize the (TQ, hd) output instead of the (TQ, L) probabilities;
        # approx reciprocal goes to the EUP slot. Write into a lane slice of the
        # bf16 scratch (no concatenate).
        out_sc[:, r * hd:(r + 1) * hd] = (
            o_r * pl.reciprocal(l, approx=True)).astype(out_sc.dtype)

    # Output projection for this head group; f32 accumulation across KV heads.
    acc_ref[...] += jnp.dot(out_sc[...], wo_ref[kv],
                            preferred_element_type=jnp.float32)

    @pl.when(kv == n_kv - 1)
    def _finalize():
        o_ref[0] = acc_ref[...].astype(o_ref.dtype)


# --------------------------------------------------------------------------- #
# One-time parameter / table preparation (hoisted out of the per-call path).
# --------------------------------------------------------------------------- #
def prepare_attention_params(wq_w, wk_w, wv_w, wo_w, n_heads, n_kv_heads):
    """Repack PyTorch-style (out, in) weights:
      * single fused bf16 QKV slab (D, (n_heads + 2*n_kv)*hd), Q/K columns
        de-interleaved per head (even indices then odd) so RoPE is a rotate-half,
        softmax scale 1/sqrt(hd) folded into the Q columns,
      * per-KV-head bf16 W_o slabs (n_kv, n_rep*hd, D)."""
    D = wq_w.shape[1]
    hd = D // n_heads
    n_rep = n_heads // n_kv_heads
    perm = jnp.concatenate([jnp.arange(0, hd, 2), jnp.arange(1, hd, 2)])
    scale = 1.0 / math.sqrt(hd)

    wq_t = (wq_w.T.reshape(D, n_heads, hd)[:, :, perm] * scale).reshape(D, n_heads * hd)
    wk_t = wk_w.T.reshape(D, n_kv_heads, hd)[:, :, perm].reshape(D, n_kv_heads * hd)
    wv_t = wv_w.T                                                    # (D, n_kv*hd)
    wqkv = jnp.concatenate([wq_t, wk_t, wv_t], axis=1).astype(jnp.bfloat16)

    wo_s = wo_w.T.reshape(n_kv_heads, n_rep * hd, D).astype(jnp.bfloat16)
    return wqkv, wo_s


def prepare_rope_tables(freqs_cos, freqs_sin):
    """cos/sin tables in de-interleaved layout; sign of sin baked in. Kept f32."""
    cosf = jnp.concatenate([freqs_cos, freqs_cos], axis=-1).astype(jnp.float32)
    sinf = jnp.concatenate([-freqs_sin, freqs_sin], axis=-1).astype(jnp.float32)
    return cosf, sinf


def _default_vmem_limit():
    """Raise the scoped-VMEM cap, clamped well below physical capacity."""
    try:
        cap = pltpu.get_tpu_info().vmem_capacity_bytes
        return int(min(cap * 3 // 4, 96 * 1024 * 1024))
    except Exception:
        return None


def self_attention_forward(x, wqkv, wo_s, cosf, sinf,
                           *, block_q=None, block_l=None, vmem_limit_bytes=None):
    """x: (B, L, D); wqkv/wo_s from prepare_attention_params, cosf/sinf from
    prepare_rope_tables."""
    B, L, D = x.shape
    Lc, hd = cosf.shape
    assert Lc == L
    n_kv = wo_s.shape[0]
    n_rep = wo_s.shape[1] // hd
    n_heads = n_kv * n_rep
    assert wqkv.shape == (D, (n_heads + 2 * n_kv) * hd)

    if block_q is None:
        block_q = min(L, 256)
    if block_l is None:
        block_l = min(L, 256)
    assert L % block_q == 0 and L % block_l == 0
    n_qt = L // block_q
    n_lt = L // block_l

    cdt = jnp.bfloat16
    # bf16 MXU operands (halves HBM/VMEM traffic); accumulation stays f32.
    x_c = x.astype(cdt)

    # ---- Pass 1: fused QKV projection + RoPE --------------------------------
    q_rot, k_rot, v_p = pl.pallas_call(
        partial(qkv_rope_kernel, head_dim=hd, n_heads=n_heads, n_kv_heads=n_kv),
        out_shape=(
            jax.ShapeDtypeStruct((B, L, n_heads * hd), cdt),   # Q (rotated, pre-scaled)
            jax.ShapeDtypeStruct((B, L, n_kv * hd), cdt),      # K (rotated)
            jax.ShapeDtypeStruct((B, L, n_kv * hd), cdt),      # V
        ),
        grid_spec=pltpu.PrefetchScalarGridSpec(
            num_scalar_prefetch=0,
            grid=(B, n_lt),
            in_specs=[
                pl.BlockSpec((1, block_l, D), lambda b, lt: (b, lt, 0)),           # x tile
                pl.BlockSpec((D, (n_heads + 2 * n_kv) * hd), lambda b, lt: (0, 0)),  # W_qkv (resident)
                pl.BlockSpec((block_l, hd), lambda b, lt: (lt, 0)),                # cos tile
                pl.BlockSpec((block_l, hd), lambda b, lt: (lt, 0)),                # sin tile (signed)
            ],
            out_specs=[
                pl.BlockSpec((1, block_l, n_heads * hd), lambda b, lt: (b, lt, 0)),
                pl.BlockSpec((1, block_l, n_kv * hd), lambda b, lt: (b, lt, 0)),
                pl.BlockSpec((1, block_l, n_kv * hd), lambda b, lt: (b, lt, 0)),
            ],
        ),
        compiler_params=pltpu.CompilerParams(
            dimension_semantics=("parallel", "parallel"),
            vmem_limit_bytes=vmem_limit_bytes),
    )(x_c, wqkv, cosf, sinf)

    # ---- Pass 2: attention + output projection ------------------------------
    return pl.pallas_call(
        partial(attention_kernel, head_dim=hd, n_rep=n_rep,
                block_q=block_q, mask_value=-1e30),
        out_shape=jax.ShapeDtypeStruct((B, L, D), x.dtype),
        grid_spec=pltpu.PrefetchScalarGridSpec(
            num_scalar_prefetch=0,
            grid=(B, n_qt, n_kv),
            in_specs=[
                pl.BlockSpec((1, block_q, n_rep * hd), lambda b, qi, kv: (b, qi, kv)),  # Q head group
                pl.BlockSpec((1, L, hd), lambda b, qi, kv: (b, 0, kv)),                 # K (this KV head)
                pl.BlockSpec((1, L, hd), lambda b, qi, kv: (b, 0, kv)),                 # V (this KV head)
                pl.BlockSpec((n_kv, n_rep * hd, D), lambda b, qi, kv: (0, 0, 0)),       # W_o (resident)
            ],
            out_specs=pl.BlockSpec((1, block_q, D), lambda b, qi, kv: (b, qi, 0)),
            scratch_shapes=[
                pltpu.VMEM((block_q, n_rep * hd), cdt),       # per-group attention output (bf16)
                pltpu.VMEM((block_q, D), jnp.float32),        # f32 wo accumulator
            ],
        ),
        compiler_params=pltpu.CompilerParams(
            # KV-head axis accumulates into the output block -> MUST stay "arbitrary".
            dimension_semantics=("parallel", "parallel", "arbitrary"),
            vmem_limit_bytes=vmem_limit_bytes),
    )(q_rot, k_rot, v_p, wo_s)


# --------------------------------------------------------------------------- #
# Pure-JAX mirror of the PyTorch forward (dropout=0, cache write omitted).
# --------------------------------------------------------------------------- #
def reference_forward(x, wq_w, wk_w, wv_w, wo_w, freqs_cos, freqs_sin,
                      n_heads, n_kv_heads, n_rep):
    B, L, D = x.shape
    hd = D // n_heads
    xq = (x @ wq_w.T).reshape(B, L, n_heads, hd)
    xk = (x @ wk_w.T).reshape(B, L, n_kv_heads, hd)
    xv = (x @ wv_w.T).reshape(B, L, n_kv_heads, hd)

    def rope(t):
        tr = t.reshape(*t.shape[:-1], hd // 2, 2)
        a, b = tr[..., 0], tr[..., 1]
        c = freqs_cos[None, :, None, :]
        s = freqs_sin[None, :, None, :]
        return jnp.stack([a * c - b * s, a * s + b * c], axis=-1).reshape(t.shape)

    xq = rope(xq)
    xk = rope(xk)
    xk = jnp.repeat(xk, n_rep, axis=2)    # == torch.repeat_interleave(dim=2)
    xv = jnp.repeat(xv, n_rep, axis=2)
    q = xq.transpose(0, 2, 1, 3)
    k = xk.transpose(0, 2, 1, 3)
    v = xv.transpose(0, 2, 1, 3)
    row = jnp.arange(L)[:, None]
    col = jnp.arange(L)[None, :]
    mask = jnp.where(col <= row, 0.0, -1e30).astype(jnp.float32)
    s = jnp.einsum('bhqd,bhkd->bhqk', q, k) / math.sqrt(hd) + mask[None, None]
    p = jax.nn.softmax(s, axis=-1)
    o = jnp.einsum('bhqk,bhkd->bhqd', p, v)
    o = o.transpose(0, 2, 1, 3).reshape(B, L, -1)
    return o @ wo_w.T


if __name__ == "__main__":
    # Production-like small shapes: hd = 128 (lane-aligned), n_rep*hd = 256 (full
    # MXU width on v6e/v7x), two query tiles to exercise the tiled path.
    B, L, D = 2, 256, 512
    n_heads, n_kv_heads = 4, 2
    n_rep = n_heads // n_kv_heads
    hd = D // n_heads            # 128
    start_pos = 0
    theta = 10000.0

    key = jax.random.PRNGKey(0)
    kx, kq, kk, kv, ko = jax.random.split(key, 5)
    x = jax.random.normal(kx, (B, L, D), dtype=jnp.float32)
    # PyTorch-style (out_features, in_features), bias=False
    wq_w = jax.random.normal(kq, (n_heads * hd, D), dtype=jnp.float32) * 0.02
    wk_w = jax.random.normal(kk, (n_kv_heads * hd, D), dtype=jnp.float32) * 0.02
    wv_w = jax.random.normal(kv, (n_kv_heads * hd, D), dtype=jnp.float32) * 0.02
    wo_w = jax.random.normal(ko, (D, n_heads * hd), dtype=jnp.float32) * 0.02

    # freqs_cis (complex (L, hd//2)) represented as cos/sin tables.
    inv_freq = 1.0 / (theta ** (jnp.arange(0, hd, 2, dtype=jnp.float32) / hd))
    t = jnp.arange(start_pos, start_pos + L, dtype=jnp.float32)
    angles = jnp.outer(t, inv_freq)          # (L, hd//2)
    freqs_cos = jnp.cos(angles)
    freqs_sin = jnp.sin(angles)

    # One-time parameter/table prep (hoisted out of the per-call path).
    wqkv, wo_s = prepare_attention_params(wq_w, wk_w, wv_w, wo_w, n_heads, n_kv_heads)
    cosf, sinf = prepare_rope_tables(freqs_cos, freqs_sin)

    fwd = jax.jit(partial(self_attention_forward, block_q=128, block_l=128,
                          vmem_limit_bytes=_default_vmem_limit()))
    out = jax.block_until_ready(fwd(x, wqkv, wo_s, cosf, sinf))

    ref = jax.block_until_ready(
        reference_forward(x, wq_w, wk_w, wv_w, wo_w, freqs_cos, freqs_sin,
                          n_heads, n_kv_heads, n_rep))

    # Tolerance accounts for bf16 MXU operands + approx-reciprocal normalization.
    np.testing.assert_allclose(np.asarray(out), np.asarray(ref), atol=2e-2, rtol=2e-2)
    print("KERNEL_OK")
</pallas_src>

<mosaic_0001>
module attributes {stable_mosaic.version = 11 : i64} {
  func.func @attention_kernel(%arg0: i32, %arg1: i32, %arg2: i32, %arg3: memref<1x128x256xbf16, #tpu.memory_space<vmem>>, %arg4: memref<1x256x128xbf16, #tpu.memory_space<vmem>>, %arg5: memref<1x256x128xbf16, #tpu.memory_space<vmem>>, %arg6: memref<2x256x512xbf16, #tpu.memory_space<vmem>>, %arg7: memref<1x128x512xf32, #tpu.memory_space<vmem>>, %arg8: memref<128x256xbf16, #tpu.memory_space<vmem>>, %arg9: memref<128x512xf32, #tpu.memory_space<vmem>>) attributes {dimension_semantics = [#tpu.dimension_semantics<parallel>, #tpu.dimension_semantics<parallel>, #tpu.dimension_semantics<arbitrary>], iteration_bounds = array<i64: 2, 2, 2>, scalar_prefetch = 0 : i64, scratch_operands = 2 : i64, tpu.core_type = #tpu.core_type<tc>, window_params = [{transform_indices = @transform_0, window_bounds = array<i64: 1, 128, 256>}, {transform_indices = @transform_1, window_bounds = array<i64: 1, 256, 128>}, {transform_indices = @transform_2, window_bounds = array<i64: 1, 256, 128>}, {pipeline_mode = #tpu.pipeline_mode<synchronous>, transform_indices = @transform_3, window_bounds = array<i64: 2, 256, 512>}, {transform_indices = @transform_4, window_bounds = array<i64: 1, 128, 512>}]} {
    %c0_i32 = arith.constant 0 : i32
    %0 = arith.cmpi eq, %arg2, %c0_i32 : i32
    %1 = arith.extui %0 : i1 to i32
    %c0_i32_0 = arith.constant 0 : i32
    %2 = arith.cmpi ne, %1, %c0_i32_0 : i32
    scf.if %2 {
      %cst_31 = arith.constant 0.000000e+00 : f32
      %62 = vector.broadcast %cst_31 : f32 to vector<128x512xf32>
      %c0_32 = arith.constant 0 : index
      %c0_33 = arith.constant 0 : index
      %63 = vector.load %arg9[%c0_32, %c0_33] : memref<128x512xf32, #tpu.memory_space<vmem>>, vector<128x512xf32>
      tpu.vector_store %arg9[%c0_32, %c0_33], %62 {strides = array<i32>} : memref<128x512xf32, #tpu.memory_space<vmem>>, vector<128x512xf32>,
    } else {
    }
    %c0 = arith.constant 0 : index
    %c0_1 = arith.constant 0 : index
    %c0_2 = arith.constant 0 : index
    %3 = vector.load %arg3[%c0, %c0_1, %c0_2] : memref<1x128x256xbf16, #tpu.memory_space<vmem>>, vector<1x128x256xbf16>
    %4 = vector.shape_cast %3 : vector<1x128x256xbf16> to vector<128x256xbf16>
    %c0_3 = arith.constant 0 : index
    %c0_4 = arith.constant 0 : index
    %c0_5 = arith.constant 0 : index
    %5 = vector.load %arg4[%c0_3, %c0_4, %c0_5] : memref<1x256x128xbf16, #tpu.memory_space<vmem>>, vector<1x256x128xbf16>
    %6 = vector.shape_cast %5 : vector<1x256x128xbf16> to vector<256x128xbf16>
    %c0_6 = arith.constant 0 : index
    %c0_7 = arith.constant 0 : index
    %c0_8 = arith.constant 0 : index
    %7 = vector.load %arg5[%c0_6, %c0_7, %c0_8] : memref<1x256x128xbf16, #tpu.memory_space<vmem>>, vector<1x256x128xbf16>
    %8 = vector.shape_cast %7 : vector<1x256x128xbf16> to vector<256x128xbf16>
    %9 = tpu.iota {dimensions = array<i32: 0>} : vector<128x256xi32>
    %c128_i32 = arith.constant 128 : i32
    %10 = arith.muli %arg1, %c128_i32 : i32
    %11 = vector.broadcast %10 : i32 to vector<128x256xi32>
    %12 = arith.addi %9, %11 : vector<128x256xi32>
    %13 = tpu.iota {dimensions = array<i32: 1>} : vector<128x256xi32>
    %14 = arith.cmpi sle, %13, %12 : vector<128x256xi32>
    %15 = vector.extract_strided_slice %4 {offsets = [0, 0], sizes = [128, 128], strides = [1, 1]} : vector<128x256xbf16> to vector<128x128xbf16>
    %cst = arith.constant dense<0.000000e+00> : vector<128x256xf32>
    %16 = tpu.matmul %15, %6, %cst {dimension_numbers = #tpu.dot_dimension_numbers<[1], [1], [0], [0], [0, 0, 1, 0], [], []>} : vector<128x128xbf16>, vector<256x128xbf16>, vector<128x256xf32> -> vector<128x256xf32>
    %cst_9 = arith.constant -1.000000e+30 : f32
    %17 = vector.broadcast %cst_9 : f32 to vector<128x256xf32>
    %18 = arith.select %14, %16, %17 : vector<128x256xi1>, vector<128x256xf32>
    %cst_10 = arith.constant dense<0xFF800000> : vector<128xf32>
    %19 = vector.multi_reduction <maximumf>, %18, %cst_10 [1] : vector<128x256xf32> to vector<128xf32>
    %20 = vector.shape_cast %19 : vector<128xf32> to vector<128x1xf32>
    %21 = vector.broadcast %20 : vector<128x1xf32> to vector<128x256xf32>
    %22 = arith.subf %18, %21 : vector<128x256xf32>
    %23 = math.exp %22 : vector<128x256xf32>
    %cst_11 = arith.constant dense<0.000000e+00> : vector<128xf32>
    %24 = vector.multi_reduction <add>, %23, %cst_11 [1] : vector<128x256xf32> to vector<128xf32>
    %25 = vector.shape_cast %24 : vector<128xf32> to vector<128x1xf32>
    %26 = arith.truncf %23 : vector<128x256xf32> to vector<128x256xbf16>
    %cst_12 = arith.constant dense<0.000000e+00> : vector<128x128xf32>
    %27 = tpu.matmul %26, %8, %cst_12 {dimension_numbers = #tpu.dot_dimension_numbers<[1], [0], [0], [1], [0, 0, 1, 1], [], []>} : vector<128x256xbf16>, vector<256x128xbf16>, vector<128x128xf32> -> vector<128x128xf32>
    %28 = tpu.reciprocal %25 {approx = true} : vector<128x1xf32> -> vector<128x1xf32>
    %29 = vector.broadcast %28 : vector<128x1xf32> to vector<128x128xf32>
    %30 = arith.mulf %27, %29 : vector<128x128xf32>
    %31 = arith.truncf %30 : vector<128x128xf32> to vector<128x128xbf16>
    %c0_13 = arith.constant 0 : index
    %c0_14 = arith.constant 0 : index
    %32 = vector.load %arg8[%c0_13, %c0_14] : memref<128x256xbf16, #tpu.memory_space<vmem>>, vector<128x128xbf16>
    tpu.vector_store %arg8[%c0_13, %c0_14], %31 {strides = array<i32>} : memref<128x256xbf16, #tpu.memory_space<vmem>>, vector<128x128xbf16>,
    %33 = vector.extract_strided_slice %4 {offsets = [0, 128], sizes = [128, 128], strides = [1, 1]} : vector<128x256xbf16> to vector<128x128xbf16>
    %cst_15 = arith.constant dense<0.000000e+00> : vector<128x256xf32>
    %34 = tpu.matmul %33, %6, %cst_15 {dimension_numbers = #tpu.dot_dimension_numbers<[1], [1], [0], [0], [0, 0, 1, 0], [], []>} : vector<128x128xbf16>, vector<256x128xbf16>, vector<128x256xf32> -> vector<128x256xf32>
    %cst_16 = arith.constant -1.000000e+30 : f32
    %35 = vector.broadcast %cst_16 : f32 to vector<128x256xf32>
    %36 = arith.select %14, %34, %35 : vector<128x256xi1>, vector<128x256xf32>
    %cst_17 = arith.constant dense<0xFF800000> : vector<128xf32>
    %37 = vector.multi_reduction <maximumf>, %36, %cst_17 [1] : vector<128x256xf32> to vector<128xf32>
    %38 = vector.shape_cast %37 : vector<128xf32> to vector<128x1xf32>
    %39 = vector.broadcast %38 : vector<128x1xf32> to vector<128x256xf32>
    %40 = arith.subf %36, %39 : vector<128x256xf32>
    %41 = math.exp %40 : vector<128x256xf32>
    %cst_18 = arith.constant dense<0.000000e+00> : vector<128xf32>
    %42 = vector.multi_reduction <add>, %41, %cst_18 [1] : vector<128x256xf32> to vector<128xf32>
    %43 = vector.shape_cast %42 : vector<128xf32> to vector<128x1xf32>
    %44 = arith.truncf %41 : vector<128x256xf32> to vector<128x256xbf16>
    %cst_19 = arith.constant dense<0.000000e+00> : vector<128x128xf32>
    %45 = tpu.matmul %44, %8, %cst_19 {dimension_numbers = #tpu.dot_dimension_numbers<[1], [0], [0], [1], [0, 0, 1, 1], [], []>} : vector<128x256xbf16>, vector<256x128xbf16>, vector<128x128xf32> -> vector<128x128xf32>
    %46 = tpu.reciprocal %43 {approx = true} : vector<128x1xf32> -> vector<128x1xf32>
    %47 = vector.broadcast %46 : vector<128x1xf32> to vector<128x128xf32>
    %48 = arith.mulf %45, %47 : vector<128x128xf32>
    %49 = arith.truncf %48 : vector<128x128xf32> to vector<128x128xbf16>
    %c0_20 = arith.constant 0 : index
    %c128 = arith.constant 128 : index
    %50 = vector.load %arg8[%c0_20, %c128] : memref<128x256xbf16, #tpu.memory_space<vmem>>, vector<128x128xbf16>
    tpu.vector_store %arg8[%c0_20, %c128], %49 {strides = array<i32>} : memref<128x256xbf16, #tpu.memory_space<vmem>>, vector<128x128xbf16>,
    %c0_21 = arith.constant 0 : index
    %c0_22 = arith.constant 0 : index
    %51 = vector.load %arg9[%c0_21, %c0_22] : memref<128x512xf32, #tpu.memory_space<vmem>>, vector<128x512xf32>
    %c0_23 = arith.constant 0 : index
    %c0_24 = arith.constant 0 : index
    %52 = vector.load %arg8[%c0_23, %c0_24] : memref<128x256xbf16, #tpu.memory_space<vmem>>, vector<128x256xbf16>
    %53 = arith.index_cast %arg2 : i32 to index
    %c0_25 = arith.constant 0 : index
    %c0_26 = arith.constant 0 : index
    %54 = vector.load %arg6[%53, %c0_25, %c0_26] : memref<2x256x512xbf16, #tpu.memory_space<vmem>>, vector<1x256x512xbf16>
    %55 = vector.shape_cast %54 : vector<1x256x512xbf16> to vector<256x512xbf16>
    %cst_27 = arith.constant dense<0.000000e+00> : vector<128x512xf32>
    %56 = tpu.matmul %52, %55, %cst_27 {dimension_numbers = #tpu.dot_dimension_numbers<[1], [0], [0], [1], [0, 0, 1, 1], [], []>} : vector<128x256xbf16>, vector<256x512xbf16>, vector<128x512xf32> -> vector<128x512xf32>
    %57 = arith.addf %51, %56 : vector<128x512xf32>
    %c0_28 = arith.constant 0 : index
    %c0_29 = arith.constant 0 : index
    %58 = vector.load %arg9[%c0_28, %c0_29] : memref<128x512xf32, #tpu.memory_space<vmem>>, vector<128x512xf32>
    tpu.vector_store %arg9[%c0_28, %c0_29], %57 {strides = array<i32>} : memref<128x512xf32, #tpu.memory_space<vmem>>, vector<128x512xf32>,
    %c1_i32 = arith.constant 1 : i32
    %59 = arith.cmpi eq, %arg2, %c1_i32 : i32
    %60 = arith.extui %59 : i1 to i32
    %c0_i32_30 = arith.constant 0 : i32
    %61 = arith.cmpi ne, %60, %c0_i32_30 : i32
    scf.if %61 {
      %c0_31 = arith.constant 0 : index
      %c0_32 = arith.constant 0 : index
      %62 = vector.load %arg9[%c0_31, %c0_32] : memref<128x512xf32, #tpu.memory_space<vmem>>, vector<128x512xf32>
      %c0_33 = arith.constant 0 : index
      %c0_34 = arith.constant 0 : index
      %c0_35 = arith.constant 0 : index
      %63 = vector.load %arg7[%c0_33, %c0_34, %c0_35] : memref<1x128x512xf32, #tpu.memory_space<vmem>>, vector<1x128x512xf32>
      %64 = vector.shape_cast %63 : vector<1x128x512xf32> to vector<128x512xf32>
      %65 = vector.shape_cast %62 : vector<128x512xf32> to vector<1x128x512xf32>
      tpu.vector_store %arg7[%c0_33, %c0_34, %c0_35], %65 {strides = array<i32>} : memref<1x128x512xf32, #tpu.memory_space<vmem>>, vector<1x128x512xf32>,
    } else {
    }
    return
  }
  func.func @transform_0(%arg0: i32, %arg1: i32, %arg2: i32) -> (i32, i32, i32) {
    %c0_i32 = arith.constant 0 : i32
    return %arg0, %arg1, %arg2 : i32, i32, i32
  }
  func.func @transform_1(%arg0: i32, %arg1: i32, %arg2: i32) -> (i32, i32, i32) {
    %c0_i32 = arith.constant 0 : i32
    %c0_i32_0 = arith.constant 0 : i32
    return %arg0, %c0_i32, %arg2 : i32, i32, i32
  }
  func.func @transform_2(%arg0: i32, %arg1: i32, %arg2: i32) -> (i32, i32, i32) {
    %c0_i32 = arith.constant 0 : i32
    %c0_i32_0 = arith.constant 0 : i32
    return %arg0, %c0_i32, %arg2 : i32, i32, i32
  }
  func.func @transform_3(%arg0: i32, %arg1: i32, %arg2: i32) -> (i32, i32, i32) {
    %c0_i32 = arith.constant 0 : i32
    %c0_i32_0 = arith.constant 0 : i32
    %c0_i32_1 = arith.constant 0 : i32
    %c0_i32_2 = arith.constant 0 : i32
    return %c0_i32, %c0_i32_0, %c0_i32_1 : i32, i32, i32
  }
  func.func @transform_4(%arg0: i32, %arg1: i32, %arg2: i32) -> (i32, i32, i32) {
    %c0_i32 = arith.constant 0 : i32
    %c0_i32_0 = arith.constant 0 : i32
    return %arg0, %arg1, %c0_i32 : i32, i32, i32
  }
}

module attributes {stable_mosaic.version = 11 : i64} {
  func.func @qkv_rope_kernel(%arg0: i32, %arg1: i32, %arg2: memref<1x128x512xbf16, #tpu.memory_space<vmem>>, %arg3: memref<512x1024xbf16, #tpu.memory_space<vmem>>, %arg4: memref<128x128xf32, #tpu.memory_space<vmem>>, %arg5: memref<128x128xf32, #tpu.memory_space<vmem>>, %arg6: memref<1x128x512xbf16, #tpu.memory_space<vmem>>, %arg7: memref<1x128x256xbf16, #tpu.memory_space<vmem>>, %arg8: memref<1x128x256xbf16, #tpu.memory_space<vmem>>) attributes {dimension_semantics = [#tpu.dimension_semantics<parallel>, #tpu.dimension_semantics<parallel>], iteration_bounds = array<i64: 2, 2>, scalar_prefetch = 0 : i64, scratch_operands = 0 : i64, tpu.core_type = #tpu.core_type<tc>, window_params = [{transform_indices = @transform_0, window_bounds = array<i64: 1, 128, 512>}, {pipeline_mode = #tpu.pipeline_mode<synchronous>, transform_indices = @transform_1, window_bounds = array<i64: 512, 1024>}, {transform_indices = @transform_2, window_bounds = array<i64: 128, 128>}, {transform_indices = @transform_3, window_bounds = array<i64: 128, 128>}, {transform_indices = @transform_4, window_bounds = array<i64: 1, 128, 512>}, {transform_indices = @transform_5, window_bounds = array<i64: 1, 128, 256>}, {transform_indices = @transform_6, window_bounds = array<i64: 1, 128, 256>}]} {
    %c0 = arith.constant 0 : index
    %c0_0 = arith.constant 0 : index
    %c0_1 = arith.constant 0 : index
    %0 = vector.load %arg2[%c0, %c0_0, %c0_1] : memref<1x128x512xbf16, #tpu.memory_space<vmem>>, vector<1x128x512xbf16>
    %1 = vector.shape_cast %0 : vector<1x128x512xbf16> to vector<128x512xbf16>
    %c0_2 = arith.constant 0 : index
    %c0_3 = arith.constant 0 : index
    %2 = vector.load %arg3[%c0_2, %c0_3] : memref<512x1024xbf16, #tpu.memory_space<vmem>>, vector<512x1024xbf16>
    %cst = arith.constant dense<0.000000e+00> : vector<128x1024xf32>
    %3 = tpu.matmul %1, %2, %cst {dimension_numbers = #tpu.dot_dimension_numbers<[1], [0], [0], [1], [0, 0, 1, 1], [], []>} : vector<128x512xbf16>, vector<512x1024xbf16>, vector<128x1024xf32> -> vector<128x1024xf32>
    %c0_4 = arith.constant 0 : index
    %c0_5 = arith.constant 0 : index
    %4 = vector.load %arg4[%c0_4, %c0_5] : memref<128x128xf32, #tpu.memory_space<vmem>>, vector<128x128xf32>
    %c0_6 = arith.constant 0 : index
    %c0_7 = arith.constant 0 : index
    %5 = vector.load %arg5[%c0_6, %c0_7] : memref<128x128xf32, #tpu.memory_space<vmem>>, vector<128x128xf32>
    %6 = vector.extract_strided_slice %3 {offsets = [0, 0], sizes = [128, 128], strides = [1, 1]} : vector<128x1024xf32> to vector<128x128xf32>
    %7 = arith.mulf %6, %4 : vector<128x128xf32>
    %c64_i32 = arith.constant 64 : i32
    %8 = tpu.dynamic_rotate %6 by %c64_i32 dim 1 : vector<128x128xf32>, i32 -> vector<128x128xf32>
    %9 = arith.mulf %8, %5 : vector<128x128xf32>
    %10 = arith.addf %7, %9 : vector<128x128xf32>
    %11 = arith.truncf %10 : vector<128x128xf32> to vector<128x128xbf16>
    %c0_8 = arith.constant 0 : index
    %c0_9 = arith.constant 0 : index
    %c0_10 = arith.constant 0 : index
    %12 = vector.load %arg6[%c0_8, %c0_9, %c0_10] : memref<1x128x512xbf16, #tpu.memory_space<vmem>>, vector<1x128x128xbf16>
    %13 = vector.shape_cast %12 : vector<1x128x128xbf16> to vector<128x128xbf16>
    %14 = vector.shape_cast %11 : vector<128x128xbf16> to vector<1x128x128xbf16>
    tpu.vector_store %arg6[%c0_8, %c0_9, %c0_10], %14 {strides = array<i32>} : memref<1x128x512xbf16, #tpu.memory_space<vmem>>, vector<1x128x128xbf16>,
    %15 = vector.extract_strided_slice %3 {offsets = [0, 128], sizes = [128, 128], strides = [1, 1]} : vector<128x1024xf32> to vector<128x128xf32>
    %16 = arith.mulf %15, %4 : vector<128x128xf32>
    %c64_i32_11 = arith.constant 64 : i32
    %17 = tpu.dynamic_rotate %15 by %c64_i32_11 dim 1 : vector<128x128xf32>, i32 -> vector<128x128xf32>
    %18 = arith.mulf %17, %5 : vector<128x128xf32>
    %19 = arith.addf %16, %18 : vector<128x128xf32>
    %20 = arith.truncf %19 : vector<128x128xf32> to vector<128x128xbf16>
    %c0_12 = arith.constant 0 : index
    %c0_13 = arith.constant 0 : index
    %c128 = arith.constant 128 : index
    %21 = vector.load %arg6[%c0_12, %c0_13, %c128] : memref<1x128x512xbf16, #tpu.memory_space<vmem>>, vector<1x128x128xbf16>
    %22 = vector.shape_cast %21 : vector<1x128x128xbf16> to vector<128x128xbf16>
    %23 = vector.shape_cast %20 : vector<128x128xbf16> to vector<1x128x128xbf16>
    tpu.vector_store %arg6[%c0_12, %c0_13, %c128], %23 {strides = array<i32>} : memref<1x128x512xbf16, #tpu.memory_space<vmem>>, vector<1x128x128xbf16>,
    %24 = vector.extract_strided_slice %3 {offsets = [0, 256], sizes = [128, 128], strides = [1, 1]} : vector<128x1024xf32> to vector<128x128xf32>
    %25 = arith.mulf %24, %4 : vector<128x128xf32>
    %c64_i32_14 = arith.constant 64 : i32
    %26 = tpu.dynamic_rotate %24 by %c64_i32_14 dim 1 : vector<128x128xf32>, i32 -> vector<128x128xf32>
    %27 = arith.mulf %26, %5 : vector<128x128xf32>
    %28 = arith.addf %25, %27 : vector<128x128xf32>
    %29 = arith.truncf %28 : vector<128x128xf32> to vector<128x128xbf16>
    %c0_15 = arith.constant 0 : index
    %c0_16 = arith.constant 0 : index
    %c256 = arith.constant 256 : index
    %30 = vector.load %arg6[%c0_15, %c0_16, %c256] : memref<1x128x512xbf16, #tpu.memory_space<vmem>>, vector<1x128x128xbf16>
    %31 = vector.shape_cast %30 : vector<1x128x128xbf16> to vector<128x128xbf16>
    %32 = vector.shape_cast %29 : vector<128x128xbf16> to vector<1x128x128xbf16>
    tpu.vector_store %arg6[%c0_15, %c0_16, %c256], %32 {strides = array<i32>} : memref<1x128x512xbf16, #tpu.memory_space<vmem>>, vector<1x128x128xbf16>,
    %33 = vector.extract_strided_slice %3 {offsets = [0, 384], sizes = [128, 128], strides = [1, 1]} : vector<128x1024xf32> to vector<128x128xf32>
    %34 = arith.mulf %33, %4 : vector<128x128xf32>
    %c64_i32_17 = arith.constant 64 : i32
    %35 = tpu.dynamic_rotate %33 by %c64_i32_17 dim 1 : vector<128x128xf32>, i32 -> vector<128x128xf32>
    %36 = arith.mulf %35, %5 : vector<128x128xf32>
    %37 = arith.addf %34, %36 : vector<128x128xf32>
    %38 = arith.truncf %37 : vector<128x128xf32> to vector<128x128xbf16>
    %c0_18 = arith.constant 0 : index
    %c0_19 = arith.constant 0 : index
    %c384 = arith.constant 384 : index
    %39 = vector.load %arg6[%c0_18, %c0_19, %c384] : memref<1x128x512xbf16, #tpu.memory_space<vmem>>, vector<1x128x128xbf16>
    %40 = vector.shape_cast %39 : vector<1x128x128xbf16> to vector<128x128xbf16>
    %41 = vector.shape_cast %38 : vector<128x128xbf16> to vector<1x128x128xbf16>
    tpu.vector_store %arg6[%c0_18, %c0_19, %c384], %41 {strides = array<i32>} : memref<1x128x512xbf16, #tpu.memory_space<vmem>>, vector<1x128x128xbf16>,
    %42 = vector.extract_strided_slice %3 {offsets = [0, 512], sizes = [128, 128], strides = [1, 1]} : vector<128x1024xf32> to vector<128x128xf32>
    %43 = arith.mulf %42, %4 : vector<128x128xf32>
    %c64_i32_20 = arith.constant 64 : i32
    %44 = tpu.dynamic_rotate %42 by %c64_i32_20 dim 1 : vector<128x128xf32>, i32 -> vector<128x128xf32>
    %45 = arith.mulf %44, %5 : vector<128x128xf32>
    %46 = arith.addf %43, %45 : vector<128x128xf32>
    %47 = arith.truncf %46 : vector<128x128xf32> to vector<128x128xbf16>
    %c0_21 = arith.constant 0 : index
    %c0_22 = arith.constant 0 : index
    %c0_23 = arith.constant 0 : index
    %48 = vector.load %arg7[%c0_21, %c0_22, %c0_23] : memref<1x128x256xbf16, #tpu.memory_space<vmem>>, vector<1x128x128xbf16>
    %49 = vector.shape_cast %48 : vector<1x128x128xbf16> to vector<128x128xbf16>
    %50 = vector.shape_cast %47 : vector<128x128xbf16> to vector<1x128x128xbf16>
    tpu.vector_store %arg7[%c0_21, %c0_22, %c0_23], %50 {strides = array<i32>} : memref<1x128x256xbf16, #tpu.memory_space<vmem>>, vector<1x128x128xbf16>,
    %51 = vector.extract_strided_slice %3 {offsets = [0, 640], sizes = [128, 128], strides = [1, 1]} : vector<128x1024xf32> to vector<128x128xf32>
    %52 = arith.mulf %51, %4 : vector<128x128xf32>
    %c64_i32_24 = arith.constant 64 : i32
    %53 = tpu.dynamic_rotate %51 by %c64_i32_24 dim 1 : vector<128x128xf32>, i32 -> vector<128x128xf32>
    %54 = arith.mulf %53, %5 : vector<128x128xf32>
    %55 = arith.addf %52, %54 : vector<128x128xf32>
    %56 = arith.truncf %55 : vector<128x128xf32> to vector<128x128xbf16>
    %c0_25 = arith.constant 0 : index
    %c0_26 = arith.constant 0 : index
    %c128_27 = arith.constant 128 : index
    %57 = vector.load %arg7[%c0_25, %c0_26, %c128_27] : memref<1x128x256xbf16, #tpu.memory_space<vmem>>, vector<1x128x128xbf16>
    %58 = vector.shape_cast %57 : vector<1x128x128xbf16> to vector<128x128xbf16>
    %59 = vector.shape_cast %56 : vector<128x128xbf16> to vector<1x128x128xbf16>
    tpu.vector_store %arg7[%c0_25, %c0_26, %c128_27], %59 {strides = array<i32>} : memref<1x128x256xbf16, #tpu.memory_space<vmem>>, vector<1x128x128xbf16>,
    %60 = vector.extract_strided_slice %3 {offsets = [0, 768], sizes = [128, 256], strides = [1, 1]} : vector<128x1024xf32> to vector<128x256xf32>
    %61 = arith.truncf %60 : vector<128x256xf32> to vector<128x256xbf16>
    %c0_28 = arith.constant 0 : index
    %c0_29 = arith.constant 0 : index
    %c0_30 = arith.constant 0 : index
    %62 = vector.load %arg8[%c0_28, %c0_29, %c0_30] : memref<1x128x256xbf16, #tpu.memory_space<vmem>>, vector<1x128x256xbf16>
    %63 = vector.shape_cast %62 : vector<1x128x256xbf16> to vector<128x256xbf16>
    %64 = vector.shape_cast %61 : vector<128x256xbf16> to vector<1x128x256xbf16>
    tpu.vector_store %arg8[%c0_28, %c0_29, %c0_30], %64 {strides = array<i32>} : memref<1x128x256xbf16, #tpu.memory_space<vmem>>, vector<1x128x256xbf16>,
    return
  }
  func.func @transform_0(%arg0: i32, %arg1: i32) -> (i32, i32, i32) {
    %c0_i32 = arith.constant 0 : i32
    %c0_i32_0 = arith.constant 0 : i32
    return %arg0, %arg1, %c0_i32 : i32, i32, i32
  }
  func.func @transform_1(%arg0: i32, %arg1: i32) -> (i32, i32) {
    %c0_i32 = arith.constant 0 : i32
    %c0_i32_0 = arith.constant 0 : i32
    %c0_i32_1 = arith.constant 0 : i32
    return %c0_i32, %c0_i32_0 : i32, i32
  }
  func.func @transform_2(%arg0: i32, %arg1: i32) -> (i32, i32) {
    %c0_i32 = arith.constant 0 : i32
    %c0_i32_0 = arith.constant 0 : i32
    return %arg1, %c0_i32 : i32, i32
  }
  func.func @transform_3(%arg0: i32, %arg1: i32) -> (i32, i32) {
    %c0_i32 = arith.constant 0 : i32
    %c0_i32_0 = arith.constant 0 : i32
    return %arg1, %c0_i32 : i32, i32
  }
  func.func @transform_4(%arg0: i32, %arg1: i32) -> (i32, i32, i32) {
    %c0_i32 = arith.constant 0 : i32
    %c0_i32_0 = arith.constant 0 : i32
    return %arg0, %arg1, %c0_i32 : i32, i32, i32
  }
  func.func @transform_5(%arg0: i32, %arg1: i32) -> (i32, i32, i32) {
    %c0_i32 = arith.constant 0 : i32
    %c0_i32_0 = arith.constant 0 : i32
    return %arg0, %arg1, %c0_i32 : i32, i32, i32
  }
  func.func @transform_6(%arg0: i32, %arg1: i32) -> (i32, i32, i32) {
    %c0_i32 = arith.constant 0 : i32
    %c0_i32_0 = arith.constant 0 : i32
    return %arg0, %arg1, %c0_i32 : i32, i32, i32
  }
}

</mosaic_0001>

<llo_original>
// kernel: self_attention_forward.3
$region0: #{self_attention_forward.3}
  #allocation0 [shape = 'u32[]', space=smem, size = 0x4, offset = 0x4, fixed_abs, tag = 'smem constant byte address 0x4 - core index']
  #allocation1 [shape = 'u32[144,128]{1,0:T(1,128)}', space=vmem, size = 0x12000, scoped, tag = 'internal scratch']
  #allocation2 [shape = 'bf16[128,256]{1,0:T(16,128)(2,1)}', space=vmem, size = 0x10000, scoped, tag = 'scratch operand']
  #allocation3 [shape = 'f32[128,512]{1,0:T(8,128)}', space=vmem, size = 0x40000, scoped, tag = 'scratch operand']
  %s0 = inlined_call_operand.vmem [shape: bf16[2,256,512], index: 0, kind: input, shape index: {}]
  %s1 = inlined_call_operand.vmem [shape: bf16[2,256,256], index: 1, kind: input, shape index: {}]
  %s2 = inlined_call_operand.vmem [shape: bf16[2,256,256], index: 2, kind: input, shape index: {}]
  %s3 = inlined_call_operand.vmem [shape: bf16[2,256,512], index: 3, kind: input, shape index: {}]
  %s4 = inlined_call_operand.hbm [shape: f32[2,256,512], index: 4, kind: output, shape index: {}]
  %s5 = sld [smem:[#allocation0]]
  $region177: #{self_attention_forward.3} parent=0
    _
  %s7 = ssub.s32 1, %s5
  %s8 = scalar_select 0, %s7, %s5
  $region1: #{self_attention_forward.3} parent=0
    #allocation4 [shape = 'u8[131072]{0}', space=vmem, size = 0x20000, scoped, tag = 'input window, operand 0']
    #allocation5 [shape = 'u8[131072]{0}', space=vmem, size = 0x20000, scoped, tag = 'input window, operand 1']
    #allocation6 [shape = 'u8[131072]{0}', space=vmem, size = 0x20000, scoped, tag = 'input window, operand 2']
    #allocation7 [shape = 'u8[524288]{0}', space=vmem, size = 0x80000, scoped, tag = 'output window, operand 0']
    #allocation8 [shape = 's32[2]{0}', space=sflag, size = 0x8, scoped, tag = 'scoped memory for self_attention_forward.3']
    %9 = vsyncpa [#allocation8], 0
    %s10 = scalar_lea.sflag [#allocation8], 1
    %11 = vsyncpa %s10, 0
    loop: start=0, step=1, limit=10
    $region2: #{self_attention_forward.3} parent=1 // loop_pre_header
      _
    $region3: #{self_attention_forward.3} parent=1 // loop_header
      %s13 = sphi 0, %s17
      %p14 = scmp.ge.s32.totalorder %s13, 10
      %s20 = sphi 0, %s39
      %s21 = sphi 0, %s35
      %s22 = sphi 0, %s31
      %s23 = sphi 0, %s20
      %s24 = sphi 0, %s21
      %s25 = sphi 0, %s22
      %s26 = sphi 0, %s23
      %s27 = sphi 0, %s24
      %s28 = sphi 0, %s25
      %s46 = sphi 0, %s48
      %s49 = sphi 0, %s46
      %s50 = sphi 0, %s49
      %s66 = sphi 0, %s50
      %s74 = sphi 0, %s76
      %s77 = sphi 0, %s74
      %s78 = sphi 0, %s77
      %s94 = sphi 0, %s78
      %s102 = sphi 0, %s104
      %s105 = sphi 0, %s102
      %s106 = sphi 0, %s105
      %s122 = sphi 0, %s106
      %s126 = sphi 0, %s126
      %s128 = sphi 0, %s126
      %s129 = sphi 0, %s128
      %s143 = sphi 0, %s129
      %s151 = sphi 0, %s153
      %s154 = sphi 0, %s151
      %s155 = sphi 0, %s154
      %s171 = sphi 0, %s155
    $region4: #{self_attention_forward.3} parent=1 // loop_header_branch
      %16 = sbr.rel (%p14) target = $region8
    $region5: #{self_attention_forward.3} parent=1 // loop_body
      %s18 = ssub.s32 %s13, 1
      %s19 = ssub.s32 %s13, 2
      %s29 = sadd.s32 1, %s22
      %p30 = scmp.ge.s32.totalorder %s29, 2
      %s31 = scalar_select %p30, 0, %s29
      %s32 = sadd.s32 1, %s21
      %s33 = scalar_select %p30, %s32, %s21
      %p34 = scmp.ge.s32.totalorder %s33, 2
      %s35 = scalar_select %p34, 0, %s33
      %s36 = sadd.s32 1, %s20
      %s37 = scalar_select %p34, %s36, %s20
      %p38 = scmp.ge.s32.totalorder %s37, 2
      %s39 = scalar_select %p38, 0, %s37
      %s40 = ssub.s32 %s20, %s39
      %s41 = ssub.s32 %s21, %s35
      %s42 = sor.u32 %s40, %s41
      %s43 = ssub.s32 %s22, %s31
      %s44 = sor.u32 %s42, %s43
      %p45 = scmp.eq.s32.totalorder %s44, 0
      %s47 = sadd.s32 %s46, 1
      %s48 = scalar_select %p45, %s46, %s47
      %p51 = pneg %p45
      %p52 = scmp.eq.s32.totalorder %s13, 7
      %p53 = por %p51, %p52
      %p54 = scmp.ne.s32.totalorder %s46, %s49
      %p55 = scmp.eq.s32.totalorder %s13, 0
      %p56 = por %p54, %p55
      %p57 = scmp.ne.s32.totalorder %s46, %s49
      %p58 = scmp.eq.s32.totalorder %s18, 7
      %p59 = por %p57, %p58
      %p60 = scmp.ne.s32.totalorder %s49, %s50
      %p61 = scmp.eq.s32.totalorder %s18, 0
      %p62 = por %p60, %p61
      %p63 = scmp.ne.s32.totalorder %s49, %s50
      %p64 = scmp.eq.s32.totalorder %s19, 7
      %p65 = por %p63, %p64
      %p67 = scmp.ne.s32.totalorder %s50, %s66
      %p68 = scmp.eq.s32.totalorder %s19, 0
      %p69 = por %p67, %p68
      %s70 = ssub.s32 %s20, %s39
      %s71 = ssub.s32 %s22, %s31
      %s72 = sor.u32 %s70, %s71
      %p73 = scmp.eq.s32.totalorder %s72, 0
      %s75 = sadd.s32 %s74, 1
      %s76 = scalar_select %p73, %s74, %s75
      %p79 = pneg %p73
      %p80 = scmp.eq.s32.totalorder %s13, 7
      %p81 = por %p79, %p80
      %p82 = scmp.ne.s32.totalorder %s74, %s77
      %p83 = scmp.eq.s32.totalorder %s13, 0
      %p84 = por %p82, %p83
      %p85 = scmp.ne.s32.totalorder %s74, %s77
      %p86 = scmp.eq.s32.totalorder %s18, 7
      %p87 = por %p85, %p86
      %p88 = scmp.ne.s32.totalorder %s77, %s78
      %p89 = scmp.eq.s32.totalorder %s18, 0
      %p90 = por %p88, %p89
      %p91 = scmp.ne.s32.totalorder %s77, %s78
      %p92 = scmp.eq.s32.totalorder %s19, 7
      %p93 = por %p91, %p92
      %p95 = scmp.ne.s32.totalorder %s78, %s94
      %p96 = scmp.eq.s32.totalorder %s19, 0
      %p97 = por %p95, %p96
      %s98 = ssub.s32 %s20, %s39
      %s99 = ssub.s32 %s22, %s31
      %s100 = sor.u32 %s98, %s99
      %p101 = scmp.eq.s32.totalorder %s100, 0
      %s103 = sadd.s32 %s102, 1
      %s104 = scalar_select %p101, %s102, %s103
      %p107 = pneg %p101
      %p108 = scmp.eq.s32.totalorder %s13, 7
      %p109 = por %p107, %p108
      %p110 = scmp.ne.s32.totalorder %s102, %s105
      %p111 = scmp.eq.s32.totalorder %s13, 0
      %p112 = por %p110, %p111
      %p113 = scmp.ne.s32.totalorder %s102, %s105
      %p114 = scmp.eq.s32.totalorder %s18, 7
      %p115 = por %p113, %p114
      %p116 = scmp.ne.s32.totalorder %s105, %s106
      %p117 = scmp.eq.s32.totalorder %s18, 0
      %p118 = por %p116, %p117
      %p119 = scmp.ne.s32.totalorder %s105, %s106
      %p120 = scmp.eq.s32.totalorder %s19, 7
      %p121 = por %p119, %p120
      %p123 = scmp.ne.s32.totalorder %s106, %s122
      %p124 = scmp.eq.s32.totalorder %s19, 0
      %p125 = por %p123, %p124
      %s127 = sadd.s32 %s126, 1
      %p130 = scmp.eq.s32.totalorder %s13, 7
      %p131 = scmp.ne.s32.totalorder %s126, %s128
      %p132 = scmp.eq.s32.totalorder %s13, 0
      %p133 = por %p131, %p132
      %p134 = scmp.ne.s32.totalorder %s126, %s128
      %p135 = scmp.eq.s32.totalorder %s18, 7
      %p136 = por %p134, %p135
      %p137 = scmp.ne.s32.totalorder %s128, %s129
      %p138 = scmp.eq.s32.totalorder %s18, 0
      %p139 = por %p137, %p138
      %p140 = scmp.ne.s32.totalorder %s128, %s129
      %p141 = scmp.eq.s32.totalorder %s19, 7
      %p142 = por %p140, %p141
      %p144 = scmp.ne.s32.totalorder %s129, %s143
      %p145 = scmp.eq.s32.totalorder %s19, 0
      %p146 = por %p144, %p145
      %s147 = ssub.s32 %s20, %s39
      %s148 = ssub.s32 %s21, %s35
      %s149 = sor.u32 %s147, %s148
      %p150 = scmp.eq.s32.totalorder %s149, 0
      %s152 = sadd.s32 %s151, 1
      %s153 = scalar_select %p150, %s151, %s152
      %p156 = pneg %p150
      %p157 = scmp.eq.s32.totalorder %s13, 7
      %p158 = por %p156, %p157
      %p159 = scmp.ne.s32.totalorder %s151, %s154
      %p160 = scmp.eq.s32.totalorder %s13, 0
      %p161 = por %p159, %p160
      %p162 = scmp.ne.s32.totalorder %s151, %s154
      %p163 = scmp.eq.s32.totalorder %s18, 7
      %p164 = por %p162, %p163
      %p165 = scmp.ne.s32.totalorder %s154, %s155
      %p166 = scmp.eq.s32.totalorder %s18, 0
      %p167 = por %p165, %p166
      %p168 = scmp.ne.s32.totalorder %s154, %s155
      %p169 = scmp.eq.s32.totalorder %s19, 7
      %p170 = por %p168, %p169
      %p172 = scmp.ne.s32.totalorder %s155, %s171
      %p173 = scmp.eq.s32.totalorder %s19, 0
      %p174 = por %p172, %p173
      %p175 = scmp.le.s32.totalorder 1, %s13
      %p176 = scmp.lt.s32.totalorder %s13, 9
      %p177 = pnand %p175, %p176
      %p178 = pneg %p177
      // Predicated region
      $region9: #{self_attention_forward.3} parent=5 // pred_check
        _
      $region10: #{self_attention_forward.3} parent=5 // pred_check_branch
        %180 = sbr.rel (%p177) target = $region12
      $region11: #{self_attention_forward.3} parent=5 // pred_region
        %s181 = ssub.s32 %s13, 1
        // Predicated region
        $region13: #{self_attention_forward.3} parent=11 // pred_check
          %p182 = pneg %p139
        $region14: #{self_attention_forward.3} parent=11 // pred_check_branch
          %184 = sbr.rel (%p182) target = $region16
        $region15: #{self_attention_forward.3} parent=11 // pred_region
          _
        $region16: #{self_attention_forward.3} parent=11 // pred_fallthru
          _
      $region12: #{self_attention_forward.3} parent=5 // pred_fallthru
        _
      %p185 = scmp.lt.s32.totalorder %s13, 8
      // Predicated region
      $region17: #{self_attention_forward.3} parent=5 // pred_check
        %p186 = pneg %p185
      $region18: #{self_attention_forward.3} parent=5 // pred_check_branch
        %188 = sbr.rel (%p186) target = $region20
      $region19: #{self_attention_forward.3} parent=5 // pred_region
        // Predicated region
        $region21: #{self_attention_forward.3} parent=19 // pred_check
          %p189 = pneg %p56
        $region22: #{self_attention_forward.3} parent=19 // pred_check_branch
          %191 = sbr.rel (%p189) target = $region24
        $region23: #{self_attention_forward.3} parent=19 // pred_region
          %s192 = sand.u32 %s46, 1
          %s193 = sand.u32 %s46, 1
          %s194 = smul.addr %s193, 128
          %s195 = scalar_lea.vmem [#allocation4], %s194
          %s196 = smul.u32 16, %s21
          %s197 = smul.u32 2, %s22
          %s198 = smul.addr %s196, 4
          %s199 = sadd.s32 %s197, %s198
          %s200 = smul.addr %s20, 128
          %s201 = sadd.s32 %s199, %s200
          %s202 = smul.addr %s201, 4
          %s203 = scalar_lea.vmem %s0, %s202
          // Predicated region
          $region25: #{self_attention_forward.3} parent=23 // pred_check
            _
          $region26: #{self_attention_forward.3} parent=23 // pred_check_branch
            %205 = sbr.rel (0) target = $region28
          $region27: #{self_attention_forward.3} parent=23 // pred_region
            // Predicated region
            $region29: #{self_attention_forward.3} parent=27 // pred_check
              _
            $region30: #{self_attention_forward.3} parent=27 // pred_check_branch
              %207 = sbr.rel (0) target = $region32
            $region31: #{self_attention_forward.3} parent=27 // pred_region
              // Predicated region
              $region44: #{self_attention_forward.3} parent=31 // pred_check
                _
              $region45: #{self_attention_forward.3} parent=31 // pred_check_branch
                %252 = sbr.rel (0) target = $region47
              $region46: #{self_attention_forward.3} parent=31 // pred_region
                loop: start=0, step=1, limit=1
                $region48: #{self_attention_forward.3} parent=46 // loop_pre_header
                  _
                $region49: #{self_attention_forward.3} parent=46 // loop_header
                  %s254 = sphi 0, %s258
                  %p255 = scmp.ge.s32.totalorder %s254, 1
                  %s259 = sphi %s203, %s203
                  %s260 = sphi %s195, %s195
                $region50: #{self_attention_forward.3} parent=46 // loop_header_branch
                  %257 = sbr.rel (%p255) target = $region54
                $region51: #{self_attention_forward.3} parent=46 // loop_body
                  %v261 = vld [vmem:[%s259] sm:$0xff]
                  %262 = vst [vmem:[%s260] sm:$0xff] %v261
                  %v263 = vld [vmem:[%s259 + $0x10] sm:$0xff]
                  %264 = vst [vmem:[%s260 + $0x8] sm:$0xff] %v263
                  %v265 = vld [vmem:[%s259 + $0x20] sm:$0xff]
                  %266 = vst [vmem:[%s260 + $0x10] sm:$0xff] %v265
                  %v267 = vld [vmem:[%s259 + $0x30] sm:$0xff]
                  %268 = vst [vmem:[%s260 + $0x18] sm:$0xff] %v267
                  %v269 = vld [vmem:[%s259 + $0x40] sm:$0xff]
                  %270 = vst [vmem:[%s260 + $0x20] sm:$0xff] %v269
                  %v271 = vld [vmem:[%s259 + $0x50] sm:$0xff]
                  %272 = vst [vmem:[%s260 + $0x28] sm:$0xff] %v271
                  %v273 = vld [vmem:[%s259 + $0x60] sm:$0xff]
                  %274 = vst [vmem:[%s260 + $0x30] sm:$0xff] %v273
                  %v275 = vld [vmem:[%s259 + $0x70] sm:$0xff]
                  %276 = vst [vmem:[%s260 + $0x38] sm:$0xff] %v275
                  %v277 = vld [vmem:[%s259 + $0x80] sm:$0xff]
                  %278 = vst [vmem:[%s260 + $0x40] sm:$0xff] %v277
                  %v279 = vld [vmem:[%s259 + $0x90] sm:$0xff]
                  %280 = vst [vmem:[%s260 + $0x48] sm:$0xff] %v279
                  %v281 = vld [vmem:[%s259 + $0xa0] sm:$0xff]
                  %282 = vst [vmem:[%s260 + $0x50] sm:$0xff] %v281
                  %v283 = vld [vmem:[%s259 + $0xb0] sm:$0xff]
                  %284 = vst [vmem:[%s260 + $0x58] sm:$0xff] %v283
                  %v285 = vld [vmem:[%s259 + $0xc0] sm:$0xff]
                  %286 = vst [vmem:[%s260 + $0x60] sm:$0xff] %v285
                  %v287 = vld [vmem:[%s259 + $0xd0] sm:$0xff]
                  %288 = vst [vmem:[%s260 + $0x68] sm:$0xff] %v287
                  %v289 = vld [vmem:[%s259 + $0xe0] sm:$0xff]
                  %290 = vst [vmem:[%s260 + $0x70] sm:$0xff] %v289
                  %v291 = vld [vmem:[%s259 + $0xf0] sm:$0xff]
                  %292 = vst [vmem:[%s260 + $0x78] sm:$0xff] %v291
                $region52: #{self_attention_forward.3} parent=46 // loop_footer
                  %s258 = sadd.s32 1, %s254
                $region53: #{self_attention_forward.3} parent=46 // loop_footer_branch
                  %253 = sbr.rel target = $region49
                $region54: #{self_attention_forward.3} parent=46 // loop_exit
                  _
              $region47: #{self_attention_forward.3} parent=31 // pred_fallthru
                _
              // Predicated region
              $region55: #{self_attention_forward.3} parent=31 // pred_check
                _
              $region56: #{self_attention_forward.3} parent=31 // pred_check_branch
                %294 = sbr.rel target = $region58
              $region57: #{self_attention_forward.3} parent=31 // pred_region
                _
              $region58: #{self_attention_forward.3} parent=31 // pred_fallthru
                _
            $region32: #{self_attention_forward.3} parent=27 // pred_fallthru
              _
            // Predicated region
            $region33: #{self_attention_forward.3} parent=27 // pred_check
              _
            $region34: #{self_attention_forward.3} parent=27 // pred_check_branch
              %209 = sbr.rel target = $region36
            $region35: #{self_attention_forward.3} parent=27 // pred_region
              loop: start=0, step=1, limit=1
              $region37: #{self_attention_forward.3} parent=35 // loop_pre_header
                _
              $region38: #{self_attention_forward.3} parent=35 // loop_header
                %s212 = sphi 0, %s216
                %p213 = scmp.ge.s32.totalorder %s212, 1
                %s217 = sphi %s203, %s203
                %s218 = sphi %s195, %s195
              $region39: #{self_attention_forward.3} parent=35 // loop_header_branch
                %215 = sbr.rel (%p213) target = $region43
              $region40: #{self_attention_forward.3} parent=35 // loop_body
                %v219 = vld [vmem:[%s217] sm:$0xff]
                %220 = vst [vmem:[%s218] sm:$0xff] %v219
                %v221 = vld [vmem:[%s217 + $0x10] sm:$0xff]
                %222 = vst [vmem:[%s218 + $0x8] sm:$0xff] %v221
                %v223 = vld [vmem:[%s217 + $0x20] sm:$0xff]
                %224 = vst [vmem:[%s218 + $0x10] sm:$0xff] %v223
                %v225 = vld [vmem:[%s217 + $0x30] sm:$0xff]
                %226 = vst [vmem:[%s218 + $0x18] sm:$0xff] %v225
                %v227 = vld [vmem:[%s217 + $0x40] sm:$0xff]
                %228 = vst [vmem:[%s218 + $0x20] sm:$0xff] %v227
                %v229 = vld [vmem:[%s217 + $0x50] sm:$0xff]
                %230 = vst [vmem:[%s218 + $0x28] sm:$0xff] %v229
                %v231 = vld [vmem:[%s217 + $0x60] sm:$0xff]
                %232 = vst [vmem:[%s218 + $0x30] sm:$0xff] %v231
                %v233 = vld [vmem:[%s217 + $0x70] sm:$0xff]
                %234 = vst [vmem:[%s218 + $0x38] sm:$0xff] %v233
                %v235 = vld [vmem:[%s217 + $0x80] sm:$0xff]
                %236 = vst [vmem:[%s218 + $0x40] sm:$0xff] %v235
                %v237 = vld [vmem:[%s217 + $0x90] sm:$0xff]
                %238 = vst [vmem:[%s218 + $0x48] sm:$0xff] %v237
                %v239 = vld [vmem:[%s217 + $0xa0] sm:$0xff]
                %240 = vst [vmem:[%s218 + $0x50] sm:$0xff] %v239
                %v241 = vld [vmem:[%s217 + $0xb0] sm:$0xff]
                %242 = vst [vmem:[%s218 + $0x58] sm:$0xff] %v241
                %v243 = vld [vmem:[%s217 + $0xc0] sm:$0xff]
                %244 = vst [vmem:[%s218 + $0x60] sm:$0xff] %v243
                %v245 = vld [vmem:[%s217 + $0xd0] sm:$0xff]
                %246 = vst [vmem:[%s218 + $0x68] sm:$0xff] %v245
                %v247 = vld [vmem:[%s217 + $0xe0] sm:$0xff]
                %248 = vst [vmem:[%s218 + $0x70] sm:$0xff] %v247
                %v249 = vld [vmem:[%s217 + $0xf0] sm:$0xff]
                %250 = vst [vmem:[%s218 + $0x78] sm:$0xff] %v249
              $region41: #{self_attention_forward.3} parent=35 // loop_footer
                %s216 = sadd.s32 1, %s212
              $region42: #{self_attention_forward.3} parent=35 // loop_footer_branch
                %211 = sbr.rel target = $region38
              $region43: #{self_attention_forward.3} parent=35 // loop_exit
                _
            $region36: #{self_attention_forward.3} parent=27 // pred_fallthru
              _
          $region28: #{self_attention_forward.3} parent=23 // pred_fallthru
            _
          %295 = vnop
        $region24: #{self_attention_forward.3} parent=19 // pred_fallthru
          _
        // Predicated region
        $region59: #{self_attention_forward.3} parent=19 // pred_check
          %p296 = pneg %p84
        $region60: #{self_attention_forward.3} parent=19 // pred_check_branch
          %298 = sbr.rel (%p296) target = $region62
        $region61: #{self_attention_forward.3} parent=19 // pred_region
          %s299 = sand.u32 %s74, 1
          %s300 = sand.u32 %s74, 1
          %s301 = smul.addr %s300, 128
          %s302 = scalar_lea.vmem [#allocation5], %s301
          %s303 = smul.addr %s20, 64
          %s304 = sadd.s32 %s22, %s303
          %s305 = smul.addr %s304, 4
          %s306 = scalar_lea.vmem %s1, %s305
          // Predicated region
          $region63: #{self_attention_forward.3} parent=61 // pred_check
            _
          $region64: #{self_attention_forward.3} parent=61 // pred_check_branch
            %308 = sbr.rel (0) target = $region66
          $region65: #{self_attention_forward.3} parent=61 // pred_region
            // Predicated region
            $region67: #{self_attention_forward.3} parent=65 // pred_check
              _
            $region68: #{self_attention_forward.3} parent=65 // pred_check_branch
              %310 = sbr.rel target = $region70
            $region69: #{self_attention_forward.3} parent=65 // pred_region
              // Predicated region
              $region82: #{self_attention_forward.3} parent=69 // pred_check
                _
              $region83: #{self_attention_forward.3} parent=69 // pred_check_branch
                %387 = sbr.rel (0) target = $region85
              $region84: #{self_attention_forward.3} parent=69 // pred_region
                loop: start=0, step=1, limit=1
                $region86: #{self_attention_forward.3} parent=84 // loop_pre_header
                  _
                $region87: #{self_attention_forward.3} parent=84 // loop_header
                  %s389 = sphi 0, %s393
                  %p390 = scmp.ge.s32.totalorder %s389, 1
                  %s394 = sphi %s306, %s306
                  %s395 = sphi %s302, %s302
                $region88: #{self_attention_forward.3} parent=84 // loop_header_branch
                  %392 = sbr.rel (%p390) target = $region92
                $region89: #{self_attention_forward.3} parent=84 // loop_body
                  _
                $region90: #{self_attention_forward.3} parent=84 // loop_footer
                  %s393 = sadd.s32 1, %s389
                $region91: #{self_attention_forward.3} parent=84 // loop_footer_branch
                  %388 = sbr.rel target = $region87
                $region92: #{self_attention_forward.3} parent=84 // loop_exit
                  _
                loop: start=0, step=1, limit=1
                $region93: #{self_attention_forward.3} parent=84 // loop_pre_header
                  _
                $region94: #{self_attention_forward.3} parent=84 // loop_header
                  %s398 = sphi 0, %s402
                  %p399 = scmp.ge.s32.totalorder %s398, 1
                  %s403 = sphi %s306, %s306
                  %s404 = sphi %s302, %s302
                $region95: #{self_attention_forward.3} parent=84 // loop_header_branch
                  %401 = sbr.rel (%p399) target = $region99
                $region96: #{self_attention_forward.3} parent=84 // loop_body
                  %v405 = vld [vmem:[%s403] sm:$0xf]
                  %406 = vst [vmem:[%s404] sm:$0xf] %v405
                  %v407 = vld [vmem:[%s403 + $0x8] sm:$0xf]
                  %408 = vst [vmem:[%s404 + $0x4] sm:$0xf] %v407
                  %v409 = vld [vmem:[%s403 + $0x10] sm:$0xf]
                  %410 = vst [vmem:[%s404 + $0x8] sm:$0xf] %v409
                  %v411 = vld [vmem:[%s403 + $0x18] sm:$0xf]
                  %412 = vst [vmem:[%s404 + $0xc] sm:$0xf] %v411
                  %v413 = vld [vmem:[%s403 + $0x20] sm:$0xf]
                  %414 = vst [vmem:[%s404 + $0x10] sm:$0xf] %v413
                  %v415 = vld [vmem:[%s403 + $0x28] sm:$0xf]
                  %416 = vst [vmem:[%s404 + $0x14] sm:$0xf] %v415
                  %v417 = vld [vmem:[%s403 + $0x30] sm:$0xf]
                  %418 = vst [vmem:[%s404 + $0x18] sm:$0xf] %v417
                  %v419 = vld [vmem:[%s403 + $0x38] sm:$0xf]
                  %420 = vst [vmem:[%s404 + $0x1c] sm:$0xf] %v419
                  %v421 = vld [vmem:[%s403 + $0x40] sm:$0xf]
                  %422 = vst [vmem:[%s404 + $0x20] sm:$0xf] %v421
                  %v423 = vld [vmem:[%s403 + $0x48] sm:$0xf]
                  %424 = vst [vmem:[%s404 + $0x24] sm:$0xf] %v423
                  %v425 = vld [vmem:[%s403 + $0x50] sm:$0xf]
                  %426 = vst [vmem:[%s404 + $0x28] sm:$0xf] %v425
                  %v427 = vld [vmem:[%s403 + $0x58] sm:$0xf]
                  %428 = vst [vmem:[%s404 + $0x2c] sm:$0xf] %v427
                  %v429 = vld [vmem:[%s403 + $0x60] sm:$0xf]
                  %430 = vst [vmem:[%s404 + $0x30] sm:$0xf] %v429
                  %v431 = vld [vmem:[%s403 + $0x68] sm:$0xf]
                  %432 = vst [vmem:[%s404 + $0x34] sm:$0xf] %v431
                  %v433 = vld [vmem:[%s403 + $0x70] sm:$0xf]
                  %434 = vst [vmem:[%s404 + $0x38] sm:$0xf] %v433
                  %v435 = vld [vmem:[%s403 + $0x78] sm:$0xf]
                  %436 = vst [vmem:[%s404 + $0x3c] sm:$0xf] %v435
                  %v437 = vld [vmem:[%s403 + $0x80] sm:$0xf]
                  %438 = vst [vmem:[%s404 + $0x40] sm:$0xf] %v437
                  %v439 = vld [vmem:[%s403 + $0x88] sm:$0xf]
                  %440 = vst [vmem:[%s404 + $0x44] sm:$0xf] %v439
                  %v441 = vld [vmem:[%s403 + $0x90] sm:$0xf]
                  %442 = vst [vmem:[%s404 + $0x48] sm:$0xf] %v441
                  %v443 = vld [vmem:[%s403 + $0x98] sm:$0xf]
                  %444 = vst [vmem:[%s404 + $0x4c] sm:$0xf] %v443
                  %v445 = vld [vmem:[%s403 + $0xa0] sm:$0xf]
                  %446 = vst [vmem:[%s404 + $0x50] sm:$0xf] %v445
                  %v447 = vld [vmem:[%s403 + $0xa8] sm:$0xf]
                  %448 = vst [vmem:[%s404 + $0x54] sm:$0xf] %v447
                  %v449 = vld [vmem:[%s403 + $0xb0] sm:$0xf]
                  %450 = vst [vmem:[%s404 + $0x58] sm:$0xf] %v449
                  %v451 = vld [vmem:[%s403 + $0xb8] sm:$0xf]
                  %452 = vst [vmem:[%s404 + $0x5c] sm:$0xf] %v451
                  %v453 = vld [vmem:[%s403 + $0xc0] sm:$0xf]
                  %454 = vst [vmem:[%s404 + $0x60] sm:$0xf] %v453
                  %v455 = vld [vmem:[%s403 + $0xc8] sm:$0xf]
                  %456 = vst [vmem:[%s404 + $0x64] sm:$0xf] %v455
                  %v457 = vld [vmem:[%s403 + $0xd0] sm:$0xf]
                  %458 = vst [vmem:[%s404 + $0x68] sm:$0xf] %v457
                  %v459 = vld [vmem:[%s403 + $0xd8] sm:$0xf]
                  %460 = vst [vmem:[%s404 + $0x6c] sm:$0xf] %v459
                  %v461 = vld [vmem:[%s403 + $0xe0] sm:$0xf]
                  %462 = vst [vmem:[%s404 + $0x70] sm:$0xf] %v461
                  %v463 = vld [vmem:[%s403 + $0xe8] sm:$0xf]
                  %464 = vst [vmem:[%s404 + $0x74] sm:$0xf] %v463
                  %v465 = vld [vmem:[%s403 + $0xf0] sm:$0xf]
                  %466 = vst [vmem:[%s404 + $0x78] sm:$0xf] %v465
                  %v467 = vld [vmem:[%s403 + $0xf8] sm:$0xf]
                  %468 = vst [vmem:[%s404 + $0x7c] sm:$0xf] %v467
                $region97: #{self_attention_forward.3} parent=84 // loop_footer
                  %s402 = sadd.s32 1, %s398
                $region98: #{self_attention_forward.3} parent=84 // loop_footer_branch
                  %397 = sbr.rel target = $region94
                $region99: #{self_attention_forward.3} parent=84 // loop_exit
                  _
              $region85: #{self_attention_forward.3} parent=69 // pred_fallthru
                _
            $region70: #{self_attention_forward.3} parent=65 // pred_fallthru
              _
            // Predicated region
            $region71: #{self_attention_forward.3} parent=65 // pred_check
              _
            $region72: #{self_attention_forward.3} parent=65 // pred_check_branch
              %312 = sbr.rel (0) target = $region74
            $region73: #{self_attention_forward.3} parent=65 // pred_region
              loop: start=0, step=1, limit=1
              $region75: #{self_attention_forward.3} parent=73 // loop_pre_header
                _
              $region76: #{self_attention_forward.3} parent=73 // loop_header
                %s315 = sphi 0, %s319
                %p316 = scmp.ge.s32.totalorder %s315, 1
                %s320 = sphi %s306, %s306
                %s321 = sphi %s302, %s302
              $region77: #{self_attention_forward.3} parent=73 // loop_header_branch
                %318 = sbr.rel (%p316) target = $region81
              $region78: #{self_attention_forward.3} parent=73 // loop_body
                %v322 = vld [vmem:[%s320] sm:$0xf]
                %323 = vst [vmem:[%s321] sm:$0xf] %v322
                %v324 = vld [vmem:[%s320 + $0x8] sm:$0xf]
                %325 = vst [vmem:[%s321 + $0x4] sm:$0xf] %v324
                %v326 = vld [vmem:[%s320 + $0x10] sm:$0xf]
                %327 = vst [vmem:[%s321 + $0x8] sm:$0xf] %v326
                %v328 = vld [vmem:[%s320 + $0x18] sm:$0xf]
                %329 = vst [vmem:[%s321 + $0xc] sm:$0xf] %v328
                %v330 = vld [vmem:[%s320 + $0x20] sm:$0xf]
                %331 = vst [vmem:[%s321 + $0x10] sm:$0xf] %v330
                %v332 = vld [vmem:[%s320 + $0x28] sm:$0xf]
                %333 = vst [vmem:[%s321 + $0x14] sm:$0xf] %v332
                %v334 = vld [vmem:[%s320 + $0x30] sm:$0xf]
                %335 = vst [vmem:[%s321 + $0x18] sm:$0xf] %v334
                %v336 = vld [vmem:[%s320 + $0x38] sm:$0xf]
                %337 = vst [vmem:[%s321 + $0x1c] sm:$0xf] %v336
                %v338 = vld [vmem:[%s320 + $0x40] sm:$0xf]
                %339 = vst [vmem:[%s321 + $0x20] sm:$0xf] %v338
                %v340 = vld [vmem:[%s320 + $0x48] sm:$0xf]
                %341 = vst [vmem:[%s321 + $0x24] sm:$0xf] %v340
                %v342 = vld [vmem:[%s320 + $0x50] sm:$0xf]
                %343 = vst [vmem:[%s321 + $0x28] sm:$0xf] %v342
                %v344 = vld [vmem:[%s320 + $0x58] sm:$0xf]
                %345 = vst [vmem:[%s321 + $0x2c] sm:$0xf] %v344
                %v346 = vld [vmem:[%s320 + $0x60] sm:$0xf]
                %347 = vst [vmem:[%s321 + $0x30] sm:$0xf] %v346
                %v348 = vld [vmem:[%s320 + $0x68] sm:$0xf]
                %349 = vst [vmem:[%s321 + $0x34] sm:$0xf] %v348
                %v350 = vld [vmem:[%s320 + $0x70] sm:$0xf]
                %351 = vst [vmem:[%s321 + $0x38] sm:$0xf] %v350
                %v352 = vld [vmem:[%s320 + $0x78] sm:$0xf]
                %353 = vst [vmem:[%s321 + $0x3c] sm:$0xf] %v352
                %v354 = vld [vmem:[%s320 + $0x80] sm:$0xf]
                %355 = vst [vmem:[%s321 + $0x40] sm:$0xf] %v354
                %v356 = vld [vmem:[%s320 + $0x88] sm:$0xf]
                %357 = vst [vmem:[%s321 + $0x44] sm:$0xf] %v356
                %v358 = vld [vmem:[%s320 + $0x90] sm:$0xf]
                %359 = vst [vmem:[%s321 + $0x48] sm:$0xf] %v358
                %v360 = vld [vmem:[%s320 + $0x98] sm:$0xf]
                %361 = vst [vmem:[%s321 + $0x4c] sm:$0xf] %v360
                %v362 = vld [vmem:[%s320 + $0xa0] sm:$0xf]
                %363 = vst [vmem:[%s321 + $0x50] sm:$0xf] %v362
                %v364 = vld [vmem:[%s320 + $0xa8] sm:$0xf]
                %365 = vst [vmem:[%s321 + $0x54] sm:$0xf] %v364
                %v366 = vld [vmem:[%s320 + $0xb0] sm:$0xf]
                %367 = vst [vmem:[%s321 + $0x58] sm:$0xf] %v366
                %v368 = vld [vmem:[%s320 + $0xb8] sm:$0xf]
                %369 = vst [vmem:[%s321 + $0x5c] sm:$0xf] %v368
                %v370 = vld [vmem:[%s320 + $0xc0] sm:$0xf]
                %371 = vst [vmem:[%s321 + $0x60] sm:$0xf] %v370
                %v372 = vld [vmem:[%s320 + $0xc8] sm:$0xf]
                %373 = vst [vmem:[%s321 + $0x64] sm:$0xf] %v372
                %v374 = vld [vmem:[%s320 + $0xd0] sm:$0xf]
                %375 = vst [vmem:[%s321 + $0x68] sm:$0xf] %v374
                %v376 = vld [vmem:[%s320 + $0xd8] sm:$0xf]
                %377 = vst [vmem:[%s321 + $0x6c] sm:$0xf] %v376
                %v378 = vld [vmem:[%s320 + $0xe0] sm:$0xf]
                %379 = vst [vmem:[%s321 + $0x70] sm:$0xf] %v378
                %v380 = vld [vmem:[%s320 + $0xe8] sm:$0xf]
                %381 = vst [vmem:[%s321 + $0x74] sm:$0xf] %v380
                %v382 = vld [vmem:[%s320 + $0xf0] sm:$0xf]
                %383 = vst [vmem:[%s321 + $0x78] sm:$0xf] %v382
                %v384 = vld [vmem:[%s320 + $0xf8] sm:$0xf]
                %385 = vst [vmem:[%s321 + $0x7c] sm:$0xf] %v384
              $region79: #{self_attention_forward.3} parent=73 // loop_footer
                %s319 = sadd.s32 1, %s315
              $region80: #{self_attention_forward.3} parent=73 // loop_footer_branch
                %314 = sbr.rel target = $region76
              $region81: #{self_attention_forward.3} parent=73 // loop_exit
                _
            $region74: #{self_attention_forward.3} parent=65 // pred_fallthru
              _
          $region66: #{self_attention_forward.3} parent=61 // pred_fallthru
            _
          %469 = vnop
        $region62: #{self_attention_forward.3} parent=19 // pred_fallthru
          _
        // Predicated region
        $region100: #{self_attention_forward.3} parent=19 // pred_check
          %p470 = pneg %p112
        $region101: #{self_attention_forward.3} parent=19 // pred_check_branch
          %472 = sbr.rel (%p470) target = $region103
        $region102: #{self_attention_forward.3} parent=19 // pred_region
          %s473 = sand.u32 %s102, 1
          %s474 = sand.u32 %s102, 1
          %s475 = smul.addr %s474, 128
          %s476 = scalar_lea.vmem [#allocation6], %s475
          %s477 = smul.addr %s20, 64
          %s478 = sadd.s32 %s22, %s477
          %s479 = smul.addr %s478, 4
          %s480 = scalar_lea.vmem %s2, %s479
          // Predicated region
          $region104: #{self_attention_forward.3} parent=102 // pred_check
            _
          $region105: #{self_attention_forward.3} parent=102 // pred_check_branch
            %482 = sbr.rel (0) target = $region107
          $region106: #{self_attention_forward.3} parent=102 // pred_region
            // Predicated region
            $region108: #{self_attention_forward.3} parent=106 // pred_check
              _
            $region109: #{self_attention_forward.3} parent=106 // pred_check_branch
              %484 = sbr.rel target = $region111
            $region110: #{self_attention_forward.3} parent=106 // pred_region
              // Predicated region
              $region123: #{self_attention_forward.3} parent=110 // pred_check
                _
              $region124: #{self_attention_forward.3} parent=110 // pred_check_branch
                %561 = sbr.rel (0) target = $region126
              $region125: #{self_attention_forward.3} parent=110 // pred_region
                loop: start=0, step=1, limit=1
                $region127: #{self_attention_forward.3} parent=125 // loop_pre_header
                  _
                $region128: #{self_attention_forward.3} parent=125 // loop_header
                  %s563 = sphi 0, %s567
                  %p564 = scmp.ge.s32.totalorder %s563, 1
                  %s568 = sphi %s480, %s480
                  %s569 = sphi %s476, %s476
                $region129: #{self_attention_forward.3} parent=125 // loop_header_branch
                  %566 = sbr.rel (%p564) target = $region133
                $region130: #{self_attention_forward.3} parent=125 // loop_body
                  _
                $region131: #{self_attention_forward.3} parent=125 // loop_footer
                  %s567 = sadd.s32 1, %s563
                $region132: #{self_attention_forward.3} parent=125 // loop_footer_branch
                  %562 = sbr.rel target = $region128
                $region133: #{self_attention_forward.3} parent=125 // loop_exit
                  _
                loop: start=0, step=1, limit=1
                $region134: #{self_attention_forward.3} parent=125 // loop_pre_header
                  _
                $region135: #{self_attention_forward.3} parent=125 // loop_header
                  %s572 = sphi 0, %s576
                  %p573 = scmp.ge.s32.totalorder %s572, 1
                  %s577 = sphi %s480, %s480
                  %s578 = sphi %s476, %s476
                $region136: #{self_attention_forward.3} parent=125 // loop_header_branch
                  %575 = sbr.rel (%p573) target = $region140
                $region137: #{self_attention_forward.3} parent=125 // loop_body
                  %v579 = vld [vmem:[%s577] sm:$0xf]
                  %580 = vst [vmem:[%s578] sm:$0xf] %v579
                  %v581 = vld [vmem:[%s577 + $0x8] sm:$0xf]
                  %582 = vst [vmem:[%s578 + $0x4] sm:$0xf] %v581
                  %v583 = vld [vmem:[%s577 + $0x10] sm:$0xf]
                  %584 = vst [vmem:[%s578 + $0x8] sm:$0xf] %v583
                  %v585 = vld [vmem:[%s577 + $0x18] sm:$0xf]
                  %586 = vst [vmem:[%s578 + $0xc] sm:$0xf] %v585
                  %v587 = vld [vmem:[%s577 + $0x20] sm:$0xf]
                  %588 = vst [vmem:[%s578 + $0x10] sm:$0xf] %v587
                  %v589 = vld [vmem:[%s577 + $0x28] sm:$0xf]
                  %590 = vst [vmem:[%s578 + $0x14] sm:$0xf] %v589
                  %v591 = vld [vmem:[%s577 + $0x30] sm:$0xf]
                  %592 = vst [vmem:[%s578 + $0x18] sm:$0xf] %v591
                  %v593 = vld [vmem:[%s577 + $0x38] sm:$0xf]
                  %594 = vst [vmem:[%s578 + $0x1c] sm:$0xf] %v593
                  %v595 = vld [vmem:[%s577 + $0x40] sm:$0xf]
                  %596 = vst [vmem:[%s578 + $0x20] sm:$0xf] %v595
                  %v597 = vld [vmem:[%s577 + $0x48] sm:$0xf]
                  %598 = vst [vmem:[%s578 + $0x24] sm:$0xf] %v597
                  %v599 = vld [vmem:[%s577 + $0x50] sm:$0xf]
                  %600 = vst [vmem:[%s578 + $0x28] sm:$0xf] %v599
                  %v601 = vld [vmem:[%s577 + $0x58] sm:$0xf]
                  %602 = vst [vmem:[%s578 + $0x2c] sm:$0xf] %v601
                  %v603 = vld [vmem:[%s577 + $0x60] sm:$0xf]
                  %604 = vst [vmem:[%s578 + $0x30] sm:$0xf] %v603
                  %v605 = vld [vmem:[%s577 + $0x68] sm:$0xf]
                  %606 = vst [vmem:[%s578 + $0x34] sm:$0xf] %v605
                  %v607 = vld [vmem:[%s577 + $0x70] sm:$0xf]
                  %608 = vst [vmem:[%s578 + $0x38] sm:$0xf] %v607
                  %v609 = vld [vmem:[%s577 + $0x78] sm:$0xf]
                  %610 = vst [vmem:[%s578 + $0x3c] sm:$0xf] %v609
                  %v611 = vld [vmem:[%s577 + $0x80] sm:$0xf]
                  %612 = vst [vmem:[%s578 + $0x40] sm:$0xf] %v611
                  %v613 = vld [vmem:[%s577 + $0x88] sm:$0xf]
                  %614 = vst [vmem:[%s578 + $0x44] sm:$0xf] %v613
                  %v615 = vld [vmem:[%s577 + $0x90] sm:$0xf]
                  %616 = vst [vmem:[%s578 + $0x48] sm:$0xf] %v615
                  %v617 = vld [vmem:[%s577 + $0x98] sm:$0xf]
                  %618 = vst [vmem:[%s578 + $0x4c] sm:$0xf] %v617
                  %v619 = vld [vmem:[%s577 + $0xa0] sm:$0xf]
                  %620 = vst [vmem:[%s578 + $0x50] sm:$0xf] %v619
                  %v621 = vld [vmem:[%s577 + $0xa8] sm:$0xf]
                  %622 = vst [vmem:[%s578 + $0x54] sm:$0xf] %v621
                  %v623 = vld [vmem:[%s577 + $0xb0] sm:$0xf]
                  %624 = vst [vmem:[%s578 + $0x58] sm:$0xf] %v623
                  %v625 = vld [vmem:[%s577 + $0xb8] sm:$0xf]
                  %626 = vst [vmem:[%s578 + $0x5c] sm:$0xf] %v625
                  %v627 = vld [vmem:[%s577 + $0xc0] sm:$0xf]
                  %628 = vst [vmem:[%s578 + $0x60] sm:$0xf] %v627
                  %v629 = vld [vmem:[%s577 + $0xc8] sm:$0xf]
                  %630 = vst [vmem:[%s578 + $0x64] sm:$0xf] %v629
                  %v631 = vld [vmem:[%s577 + $0xd0] sm:$0xf]
                  %632 = vst [vmem:[%s578 + $0x68] sm:$0xf] %v631
                  %v633 = vld [vmem:[%s577 + $0xd8] sm:$0xf]
                  %634 = vst [vmem:[%s578 + $0x6c] sm:$0xf] %v633
                  %v635 = vld [vmem:[%s577 + $0xe0] sm:$0xf]
                  %636 = vst [vmem:[%s578 + $0x70] sm:$0xf] %v635
                  %v637 = vld [vmem:[%s577 + $0xe8] sm:$0xf]
                  %638 = vst [vmem:[%s578 + $0x74] sm:$0xf] %v637
                  %v639 = vld [vmem:[%s577 + $0xf0] sm:$0xf]
                  %640 = vst [vmem:[%s578 + $0x78] sm:$0xf] %v639
                  %v641 = vld [vmem:[%s577 + $0xf8] sm:$0xf]
                  %642 = vst [vmem:[%s578 + $0x7c] sm:$0xf] %v641
                $region138: #{self_attention_forward.3} parent=125 // loop_footer
                  %s576 = sadd.s32 1, %s572
                $region139: #{self_attention_forward.3} parent=125 // loop_footer_branch
                  %571 = sbr.rel target = $region135
                $region140: #{self_attention_forward.3} parent=125 // loop_exit
                  _
              $region126: #{self_attention_forward.3} parent=110 // pred_fallthru
                _
            $region111: #{self_attention_forward.3} parent=106 // pred_fallthru
              _
            // Predicated region
            $region112: #{self_attention_forward.3} parent=106 // pred_check
              _
            $region113: #{self_attention_forward.3} parent=106 // pred_check_branch
              %486 = sbr.rel (0) target = $region115
            $region114: #{self_attention_forward.3} parent=106 // pred_region
              loop: start=0, step=1, limit=1
              $region116: #{self_attention_forward.3} parent=114 // loop_pre_header
                _
              $region117: #{self_attention_forward.3} parent=114 // loop_header
                %s489 = sphi 0, %s493
                %p490 = scmp.ge.s32.totalorder %s489, 1
                %s494 = sphi %s480, %s480
                %s495 = sphi %s476, %s476
              $region118: #{self_attention_forward.3} parent=114 // loop_header_branch
                %492 = sbr.rel (%p490) target = $region122
              $region119: #{self_attention_forward.3} parent=114 // loop_body
                %v496 = vld [vmem:[%s494] sm:$0xf]
                %497 = vst [vmem:[%s495] sm:$0xf] %v496
                %v498 = vld [vmem:[%s494 + $0x8] sm:$0xf]
                %499 = vst [vmem:[%s495 + $0x4] sm:$0xf] %v498
                %v500 = vld [vmem:[%s494 + $0x10] sm:$0xf]
                %501 = vst [vmem:[%s495 + $0x8] sm:$0xf] %v500
                %v502 = vld [vmem:[%s494 + $0x18] sm:$0xf]
                %503 = vst [vmem:[%s495 + $0xc] sm:$0xf] %v502
                %v504 = vld [vmem:[%s494 + $0x20] sm:$0xf]
                %505 = vst [vmem:[%s495 + $0x10] sm:$0xf] %v504
                %v506 = vld [vmem:[%s494 + $0x28] sm:$0xf]
                %507 = vst [vmem:[%s495 + $0x14] sm:$0xf] %v506
                %v508 = vld [vmem:[%s494 + $0x30] sm:$0xf]
                %509 = vst [vmem:[%s495 + $0x18] sm:$0xf] %v508
                %v510 = vld [vmem:[%s494 + $0x38] sm:$0xf]
                %511 = vst [vmem:[%s495 + $0x1c] sm:$0xf] %v510
                %v512 = vld [vmem:[%s494 + $0x40] sm:$0xf]
                %513 = vst [vmem:[%s495 + $0x20] sm:$0xf] %v512
                %v514 = vld [vmem:[%s494 + $0x48] sm:$0xf]
                %515 = vst [vmem:[%s495 + $0x24] sm:$0xf] %v514
                %v516 = vld [vmem:[%s494 + $0x50] sm:$0xf]
                %517 = vst [vmem:[%s495 + $0x28] sm:$0xf] %v516
                %v518 = vld [vmem:[%s494 + $0x58] sm:$0xf]
                %519 = vst [vmem:[%s495 + $0x2c] sm:$0xf] %v518
                %v520 = vld [vmem:[%s494 + $0x60] sm:$0xf]
                %521 = vst [vmem:[%s495 + $0x30] sm:$0xf] %v520
                %v522 = vld [vmem:[%s494 + $0x68] sm:$0xf]
                %523 = vst [vmem:[%s495 + $0x34] sm:$0xf] %v522
                %v524 = vld [vmem:[%s494 + $0x70] sm:$0xf]
                %525 = vst [vmem:[%s495 + $0x38] sm:$0xf] %v524
                %v526 = vld [vmem:[%s494 + $0x78] sm:$0xf]
                %527 = vst [vmem:[%s495 + $0x3c] sm:$0xf] %v526
                %v528 = vld [vmem:[%s494 + $0x80] sm:$0xf]
                %529 = vst [vmem:[%s495 + $0x40] sm:$0xf] %v528
                %v530 = vld [vmem:[%s494 + $0x88] sm:$0xf]
                %531 = vst [vmem:[%s495 + $0x44] sm:$0xf] %v530
                %v532 = vld [vmem:[%s494 + $0x90] sm:$0xf]
                %533 = vst [vmem:[%s495 + $0x48] sm:$0xf] %v532
                %v534 = vld [vmem:[%s494 + $0x98] sm:$0xf]
                %535 = vst [vmem:[%s495 + $0x4c] sm:$0xf] %v534
                %v536 = vld [vmem:[%s494 + $0xa0] sm:$0xf]
                %537 = vst [vmem:[%s495 + $0x50] sm:$0xf] %v536
                %v538 = vld [vmem:[%s494 + $0xa8] sm:$0xf]
                %539 = vst [vmem:[%s495 + $0x54] sm:$0xf] %v538
                %v540 = vld [vmem:[%s494 + $0xb0] sm:$0xf]
                %541 = vst [vmem:[%s495 + $0x58] sm:$0xf] %v540
                %v542 = vld [vmem:[%s494 + $0xb8] sm:$0xf]
                %543 = vst [vmem:[%s495 + $0x5c] sm:$0xf] %v542
                %v544 = vld [vmem:[%s494 + $0xc0] sm:$0xf]
                %545 = vst [vmem:[%s495 + $0x60] sm:$0xf] %v544
                %v546 = vld [vmem:[%s494 + $0xc8] sm:$0xf]
                %547 = vst [vmem:[%s495 + $0x64] sm:$0xf] %v546
                %v548 = vld [vmem:[%s494 + $0xd0] sm:$0xf]
                %549 = vst [vmem:[%s495 + $0x68] sm:$0xf] %v548
                %v550 = vld [vmem:[%s494 + $0xd8] sm:$0xf]
                %551 = vst [vmem:[%s495 + $0x6c] sm:$0xf] %v550
                %v552 = vld [vmem:[%s494 + $0xe0] sm:$0xf]
                %553 = vst [vmem:[%s495 + $0x70] sm:$0xf] %v552
                %v554 = vld [vmem:[%s494 + $0xe8] sm:$0xf]
                %555 = vst [vmem:[%s495 + $0x74] sm:$0xf] %v554
                %v556 = vld [vmem:[%s494 + $0xf0] sm:$0xf]
                %557 = vst [vmem:[%s495 + $0x78] sm:$0xf] %v556
                %v558 = vld [vmem:[%s494 + $0xf8] sm:$0xf]
                %559 = vst [vmem:[%s495 + $0x7c] sm:$0xf] %v558
              $region120: #{self_attention_forward.3} parent=114 // loop_footer
                %s493 = sadd.s32 1, %s489
              $region121: #{self_attention_forward.3} parent=114 // loop_footer_branch
                %488 = sbr.rel target = $region117
              $region122: #{self_attention_forward.3} parent=114 // loop_exit
                _
            $region115: #{self_attention_forward.3} parent=106 // pred_fallthru
              _
          $region107: #{self_attention_forward.3} parent=102 // pred_fallthru
            _
          %643 = vnop
        $region103: #{self_attention_forward.3} parent=19 // pred_fallthru
          _
      $region20: #{self_attention_forward.3} parent=5 // pred_fallthru
        _
      %p644 = scmp.le.s32.totalorder 1, %s13
      %p645 = scmp.lt.s32.totalorder %s13, 9
      %p646 = pnand %p644, %p645
      %p647 = pneg %p646
      // Predicated region
      $region141: #{self_attention_forward.3} parent=5 // pred_check
        _
      $region142: #{self_attention_forward.3} parent=5 // pred_check_branch
        %649 = sbr.rel (%p646) target = $region144
      $region143: #{self_attention_forward.3} parent=5 // pred_region
        %s650 = ssub.s32 %s13, 1
        %s651 = sand.u32 %s49, 1
        %s652 = sand.u32 %s49, 1
        %s653 = smul.addr %s652, 128
        %s654 = scalar_lea.vmem [#allocation4], %s653
        // Predicated region
        $region145: #{self_attention_forward.3} parent=143 // pred_check
          %p655 = pneg %p62
        $region146: #{self_attention_forward.3} parent=143 // pred_check_branch
          %657 = sbr.rel (%p655) target = $region148
        $region147: #{self_attention_forward.3} parent=143 // pred_region
          _
        $region148: #{self_attention_forward.3} parent=143 // pred_fallthru
          _
        %s658 = sand.u32 %s77, 1
        %s659 = sand.u32 %s77, 1
        %s660 = smul.addr %s659, 128
        %s661 = scalar_lea.vmem [#allocation5], %s660
        // Predicated region
        $region149: #{self_attention_forward.3} parent=143 // pred_check
          %p662 = pneg %p90
        $region150: #{self_attention_forward.3} parent=143 // pred_check_branch
          %664 = sbr.rel (%p662) target = $region152
        $region151: #{self_attention_forward.3} parent=143 // pred_region
          _
        $region152: #{self_attention_forward.3} parent=143 // pred_fallthru
          _
        %s665 = sand.u32 %s105, 1
        %s666 = sand.u32 %s105, 1
        %s667 = smul.addr %s666, 128
        %s668 = scalar_lea.vmem [#allocation6], %s667
        // Predicated region
        $region153: #{self_attention_forward.3} parent=143 // pred_check
          %p669 = pneg %p118
        $region154: #{self_attention_forward.3} parent=143 // pred_check_branch
          %671 = sbr.rel (%p669) target = $region156
        $region155: #{self_attention_forward.3} parent=143 // pred_region
          _
        $region156: #{self_attention_forward.3} parent=143 // pred_fallthru
          _
        %s672 = sand.u32 %s49, 1
        %s673 = sand.u32 %s49, 1
        %s674 = smul.addr %s673, 128
        %s675 = scalar_lea.vmem [#allocation4], %s674
        %p676 = pneg %p62
        %p677 = pneg %p59
        %s678 = sand.u32 %s77, 1
        %s679 = sand.u32 %s77, 1
        %s680 = smul.addr %s679, 128
        %s681 = scalar_lea.vmem [#allocation5], %s680
        %p682 = pneg %p90
        %p683 = pneg %p87
        %s684 = sand.u32 %s105, 1
        %s685 = sand.u32 %s105, 1
        %s686 = smul.addr %s685, 128
        %s687 = scalar_lea.vmem [#allocation6], %s686
        %p688 = pneg %p118
        %p689 = pneg %p115
        %p690 = pneg %p139
        %p691 = pneg %p136
        %p692 = pneg %p167
        %p693 = pneg %p164
        %s694 = sand.u32 %s154, 1
        %s695 = scalar_lea.sflag [#allocation8], %s694
        %s696 = sand.u32 %s154, 1
        %s697 = smul.addr %s696, 512
        %s698 = scalar_lea.vmem [#allocation7], %s697
        %s699 = smul.u32 16, %s24
        %s700 = smul.u32 2, %s25
        %s701 = smul.u32 16, %s24
        %p703 = scmp.eq.s32.totalorder %s25, 0
        // Predicated region
        $region157: #{self_attention_forward.3} parent=143 // pred_check
          %p704 = pneg %p703
        $region158: #{self_attention_forward.3} parent=143 // pred_check_branch
          %706 = sbr.rel (%p704) target = $region160
        $region159: #{self_attention_forward.3} parent=143 // pred_region
          %707 = vst [vmem:[#allocation3] sm:$0xff] 0.0
          %708 = vst [vmem:[#allocation3 + $0x8] sm:$0xff] 0.0
          %709 = vst [vmem:[#allocation3 + $0x10] sm:$0xff] 0.0
          %710 = vst [vmem:[#allocation3 + $0x18] sm:$0xff] 0.0
          %711 = vst [vmem:[#allocation3 + $0x20] sm:$0xff] 0.0
          %712 = vst [vmem:[#allocation3 + $0x28] sm:$0xff] 0.0
          %713 = vst [vmem:[#allocation3 + $0x30] sm:$0xff] 0.0
          %714 = vst [vmem:[#allocation3 + $0x38] sm:$0xff] 0.0
          %715 = vst [vmem:[#allocation3 + $0x40] sm:$0xff] 0.0
          %716 = vst [vmem:[#allocation3 + $0x48] sm:$0xff] 0.0
          %717 = vst [vmem:[#allocation3 + $0x50] sm:$0xff] 0.0
          %718 = vst [vmem:[#allocation3 + $0x58] sm:$0xff] 0.0
          %719 = vst [vmem:[#allocation3 + $0x60] sm:$0xff] 0.0
          %720 = vst [vmem:[#allocation3 + $0x68] sm:$0xff] 0.0
          %721 = vst [vmem:[#allocation3 + $0x70] sm:$0xff] 0.0
          %722 = vst [vmem:[#allocation3 + $0x78] sm:$0xff] 0.0
          %723 = vst [vmem:[#allocation3 + $0x80] sm:$0xff] 0.0
          %724 = vst [vmem:[#allocation3 + $0x88] sm:$0xff] 0.0
          %725 = vst [vmem:[#allocation3 + $0x90] sm:$0xff] 0.0
          %726 = vst [vmem:[#allocation3 + $0x98] sm:$0xff] 0.0
          %727 = vst [vmem:[#allocation3 + $0xa0] sm:$0xff] 0.0
          %728 = vst [vmem:[#allocation3 + $0xa8] sm:$0xff] 0.0
          %729 = vst [vmem:[#allocation3 + $0xb0] sm:$0xff] 0.0
          %730 = vst [vmem:[#allocation3 + $0xb8] sm:$0xff] 0.0
          %731 = vst [vmem:[#allocation3 + $0xc0] sm:$0xff] 0.0
          %732 = vst [vmem:[#allocation3 + $0xc8] sm:$0xff] 0.0
          %733 = vst [vmem:[#allocation3 + $0xd0] sm:$0xff] 0.0
          %734 = vst [vmem:[#allocation3 + $0xd8] sm:$0xff] 0.0
          %735 = vst [vmem:[#allocation3 + $0xe0] sm:$0xff] 0.0
          %736 = vst [vmem:[#allocation3 + $0xe8] sm:$0xff] 0.0
          %737 = vst [vmem:[#allocation3 + $0xf0] sm:$0xff] 0.0
          %738 = vst [vmem:[#allocation3 + $0xf8] sm:$0xff] 0.0
          %739 = vst [vmem:[#allocation3 + $0x100] sm:$0xff] 0.0
          %740 = vst [vmem:[#allocation3 + $0x108] sm:$0xff] 0.0
          %741 = vst [vmem:[#allocation3 + $0x110] sm:$0xff] 0.0
          %742 = vst [vmem:[#allocation3 + $0x118] sm:$0xff] 0.0
          %743 = vst [vmem:[#allocation3 + $0x120] sm:$0xff] 0.0
          %744 = vst [vmem:[#allocation3 + $0x128] sm:$0xff] 0.0
          %745 = vst [vmem:[#allocation3 + $0x130] sm:$0xff] 0.0
          %746 = vst [vmem:[#allocation3 + $0x138] sm:$0xff] 0.0
          %747 = vst [vmem:[#allocation3 + $0x140] sm:$0xff] 0.0
          %748 = vst [vmem:[#allocation3 + $0x148] sm:$0xff] 0.0
          %749 = vst [vmem:[#allocation3 + $0x150] sm:$0xff] 0.0
          %750 = vst [vmem:[#allocation3 + $0x158] sm:$0xff] 0.0
          %751 = vst [vmem:[#allocation3 + $0x160] sm:$0xff] 0.0
          %752 = vst [vmem:[#allocation3 + $0x168] sm:$0xff] 0.0
          %753 = vst [vmem:[#allocation3 + $0x170] sm:$0xff] 0.0
          %754 = vst [vmem:[#allocation3 + $0x178] sm:$0xff] 0.0
          %755 = vst [vmem:[#allocation3 + $0x180] sm:$0xff] 0.0
          %756 = vst [vmem:[#allocation3 + $0x188] sm:$0xff] 0.0
          %757 = vst [vmem:[#allocation3 + $0x190] sm:$0xff] 0.0
          %758 = vst [vmem:[#allocation3 + $0x198] sm:$0xff] 0.0
          %759 = vst [vmem:[#allocation3 + $0x1a0] sm:$0xff] 0.0
          %760 = vst [vmem:[#allocation3 + $0x1a8] sm:$0xff] 0.0
          %761 = vst [vmem:[#allocation3 + $0x1b0] sm:$0xff] 0.0
          %762 = vst [vmem:[#allocation3 + $0x1b8] sm:$0xff] 0.0
          %763 = vst [vmem:[#allocation3 + $0x1c0] sm:$0xff] 0.0
          %764 = vst [vmem:[#allocation3 + $0x1c8] sm:$0xff] 0.0
          %765 = vst [vmem:[#allocation3 + $0x1d0] sm:$0xff] 0.0
          %766 = vst [vmem:[#allocation3 + $0x1d8] sm:$0xff] 0.0
          %767 = vst [vmem:[#allocation3 + $0x1e0] sm:$0xff] 0.0
          %768 = vst [vmem:[#allocation3 + $0x1e8] sm:$0xff] 0.0
          %769 = vst [vmem:[#allocation3 + $0x1f0] sm:$0xff] 0.0
          %770 = vst [vmem:[#allocation3 + $0x1f8] sm:$0xff] 0.0
        $region160: #{self_attention_forward.3} parent=143 // pred_fallthru
          _
        %v771 = vld [vmem:[%s654] sm:$0xff]
        %v772 = vld [vmem:[%s654 + $0x8] sm:$0xff]
        %v773 = vld [vmem:[%s654 + $0x10] sm:$0xff]
        %v774 = vld [vmem:[%s654 + $0x18] sm:$0xff]
        %v775 = vld [vmem:[%s654 + $0x20] sm:$0xff]
        %v776 = vld [vmem:[%s654 + $0x28] sm:$0xff]
        %v777 = vld [vmem:[%s654 + $0x30] sm:$0xff]
        %v778 = vld [vmem:[%s654 + $0x38] sm:$0xff]
        %v779 = vld [vmem:[%s654 + $0x40] sm:$0xff]
        %v780 = vld [vmem:[%s654 + $0x48] sm:$0xff]
        %v781 = vld [vmem:[%s654 + $0x50] sm:$0xff]
        %v782 = vld [vmem:[%s654 + $0x58] sm:$0xff]
        %v783 = vld [vmem:[%s654 + $0x60] sm:$0xff]
        %v784 = vld [vmem:[%s654 + $0x68] sm:$0xff]
        %v785 = vld [vmem:[%s654 + $0x70] sm:$0xff]
        %v786 = vld [vmem:[%s654 + $0x78] sm:$0xff]
        %v787 = vld [vmem:[%s661] sm:$0xf]
        %v788 = vld [vmem:[%s661 + $0x4] sm:$0xf]
        %v789 = vld [vmem:[%s661 + $0x8] sm:$0xf]
        %v790 = vld [vmem:[%s661 + $0xc] sm:$0xf]
        %v791 = vld [vmem:[%s661 + $0x10] sm:$0xf]
        %v792 = vld [vmem:[%s661 + $0x14] sm:$0xf]
        %v793 = vld [vmem:[%s661 + $0x18] sm:$0xf]
        %v794 = vld [vmem:[%s661 + $0x1c] sm:$0xf]
        %v795 = vld [vmem:[%s661 + $0x20] sm:$0xf]
        %v796 = vld [vmem:[%s661 + $0x24] sm:$0xf]
        %v797 = vld [vmem:[%s661 + $0x28] sm:$0xf]
        %v798 = vld [vmem:[%s661 + $0x2c] sm:$0xf]
        %v799 = vld [vmem:[%s661 + $0x30] sm:$0xf]
        %v800 = vld [vmem:[%s661 + $0x34] sm:$0xf]
        %v801 = vld [vmem:[%s661 + $0x38] sm:$0xf]
        %v802 = vld [vmem:[%s661 + $0x3c] sm:$0xf]
        %v803 = vld [vmem:[%s661 + $0x40] sm:$0xf]
        %v804 = vld [vmem:[%s661 + $0x44] sm:$0xf]
        %v805 = vld [vmem:[%s661 + $0x48] sm:$0xf]
        %v806 = vld [vmem:[%s661 + $0x4c] sm:$0xf]
        %v807 = vld [vmem:[%s661 + $0x50] sm:$0xf]
        %v808 = vld [vmem:[%s661 + $0x54] sm:$0xf]
        %v809 = vld [vmem:[%s661 + $0x58] sm:$0xf]
        %v810 = vld [vmem:[%s661 + $0x5c] sm:$0xf]
        %v811 = vld [vmem:[%s661 + $0x60] sm:$0xf]
        %v812 = vld [vmem:[%s661 + $0x64] sm:$0xf]
        %v813 = vld [vmem:[%s661 + $0x68] sm:$0xf]
        %v814 = vld [vmem:[%s661 + $0x6c] sm:$0xf]
        %v815 = vld [vmem:[%s661 + $0x70] sm:$0xf]
        %v816 = vld [vmem:[%s661 + $0x74] sm:$0xf]
        %v817 = vld [vmem:[%s661 + $0x78] sm:$0xf]
        %v818 = vld [vmem:[%s661 + $0x7c] sm:$0xf]
        %v819 = vld [vmem:[%s668] sm:$0xf]
        %v820 = vld [vmem:[%s668 + $0x4] sm:$0xf]
        %v821 = vld [vmem:[%s668 + $0x8] sm:$0xf]
        %v822 = vld [vmem:[%s668 + $0xc] sm:$0xf]
        %v823 = vld [vmem:[%s668 + $0x10] sm:$0xf]
        %v824 = vld [vmem:[%s668 + $0x14] sm:$0xf]
        %v825 = vld [vmem:[%s668 + $0x18] sm:$0xf]
        %v826 = vld [vmem:[%s668 + $0x1c] sm:$0xf]
        %v827 = vld [vmem:[%s668 + $0x20] sm:$0xf]
        %v828 = vld [vmem:[%s668 + $0x24] sm:$0xf]
        %v829 = vld [vmem:[%s668 + $0x28] sm:$0xf]
        %v830 = vld [vmem:[%s668 + $0x2c] sm:$0xf]
        %v831 = vld [vmem:[%s668 + $0x30] sm:$0xf]
        %v832 = vld [vmem:[%s668 + $0x34] sm:$0xf]
        %v833 = vld [vmem:[%s668 + $0x38] sm:$0xf]
        %v834 = vld [vmem:[%s668 + $0x3c] sm:$0xf]
        %v835 = vld [vmem:[%s668 + $0x40] sm:$0xf]
        %v836 = vld [vmem:[%s668 + $0x44] sm:$0xf]
        %v837 = vld [vmem:[%s668 + $0x48] sm:$0xf]
        %v838 = vld [vmem:[%s668 + $0x4c] sm:$0xf]
        %v839 = vld [vmem:[%s668 + $0x50] sm:$0xf]
        %v840 = vld [vmem:[%s668 + $0x54] sm:$0xf]
        %v841 = vld [vmem:[%s668 + $0x58] sm:$0xf]
        %v842 = vld [vmem:[%s668 + $0x5c] sm:$0xf]
        %v843 = vld [vmem:[%s668 + $0x60] sm:$0xf]
        %v844 = vld [vmem:[%s668 + $0x64] sm:$0xf]
        %v845 = vld [vmem:[%s668 + $0x68] sm:$0xf]
        %v846 = vld [vmem:[%s668 + $0x6c] sm:$0xf]
        %v847 = vld [vmem:[%s668 + $0x70] sm:$0xf]
        %v848 = vld [vmem:[%s668 + $0x74] sm:$0xf]
        %v849 = vld [vmem:[%s668 + $0x78] sm:$0xf]
        %v850 = vld [vmem:[%s668 + $0x7c] sm:$0xf]
        %v851 = vlaneseq
        %v852 = vshrl.u32 %v851, 7
        %v853 = vadd.s32 %v852, 8
        %v854 = vadd.s32 %v852, 16
        %v855 = vadd.s32 %v852, 24
        %v856 = vadd.s32 %v852, 32
        %v857 = vadd.s32 %v852, 40
        %v858 = vadd.s32 %v852, 48
        %v859 = vadd.s32 %v852, 56
        %v860 = vadd.s32 %v852, 64
        %v861 = vadd.s32 %v852, 72
        %v862 = vadd.s32 %v852, 80
        %v863 = vadd.s32 %v852, 88
        %v864 = vadd.s32 %v852, 96
        %v865 = vadd.s32 %v852, 104
        %v866 = vadd.s32 %v852, 112
        %v867 = vadd.s32 %v852, 120
        %s868 = smul.u32 %s24, 128
        %v869 = vstv %s868
        %v870 = vadd.s32 %v852, %v869
        %v871 = vadd.s32 %v853, %v869
        %v872 = vadd.s32 %v854, %v869
        %v873 = vadd.s32 %v855, %v869
        %v874 = vadd.s32 %v856, %v869
        %v875 = vadd.s32 %v857, %v869
        %v876 = vadd.s32 %v858, %v869
        %v877 = vadd.s32 %v859, %v869
        %v878 = vadd.s32 %v860, %v869
        %v879 = vadd.s32 %v861, %v869
        %v880 = vadd.s32 %v862, %v869
        %v881 = vadd.s32 %v863, %v869
        %v882 = vadd.s32 %v864, %v869
        %v883 = vadd.s32 %v865, %v869
        %v884 = vadd.s32 %v866, %v869
        %v885 = vadd.s32 %v867, %v869
        %v886 = vlaneseq
        %v887 = vand.u32 %v886, 127
        %v888 = vadd.s32 %v887, 128
        %vm889 = vcmp.le.s32.totalorder %v887, %v870
        %vm890 = vcmp.le.s32.totalorder %v888, %v870
        %vm891 = vcmp.le.s32.totalorder %v887, %v871
        %vm892 = vcmp.le.s32.totalorder %v888, %v871
        %vm893 = vcmp.le.s32.totalorder %v887, %v872
        %vm894 = vcmp.le.s32.totalorder %v888, %v872
        %vm895 = vcmp.le.s32.totalorder %v887, %v873
        %vm896 = vcmp.le.s32.totalorder %v888, %v873
        %vm897 = vcmp.le.s32.totalorder %v887, %v874
        %vm898 = vcmp.le.s32.totalorder %v888, %v874
        %vm899 = vcmp.le.s32.totalorder %v887, %v875
        %vm900 = vcmp.le.s32.totalorder %v888, %v875
        %vm901 = vcmp.le.s32.totalorder %v887, %v876
        %vm902 = vcmp.le.s32.totalorder %v888, %v876
        %vm903 = vcmp.le.s32.totalorder %v887, %v877
        %vm904 = vcmp.le.s32.totalorder %v888, %v877
        %vm905 = vcmp.le.s32.totalorder %v887, %v878
        %vm906 = vcmp.le.s32.totalorder %v888, %v878
        %vm907 = vcmp.le.s32.totalorder %v887, %v879
        %vm908 = vcmp.le.s32.totalorder %v888, %v879
        %vm909 = vcmp.le.s32.totalorder %v887, %v880
        %vm910 = vcmp.le.s32.totalorder %v888, %v880
        %vm911 = vcmp.le.s32.totalorder %v887, %v881
        %vm912 = vcmp.le.s32.totalorder %v888, %v881
        %vm913 = vcmp.le.s32.totalorder %v887, %v882
        %vm914 = vcmp.le.s32.totalorder %v888, %v882
        %vm915 = vcmp.le.s32.totalorder %v887, %v883
        %vm916 = vcmp.le.s32.totalorder %v888, %v883
        %vm917 = vcmp.le.s32.totalorder %v887, %v884
        %vm918 = vcmp.le.s32.totalorder %v888, %v884
        %vm919 = vcmp.le.s32.totalorder %v887, %v885
        %vm920 = vcmp.le.s32.totalorder %v888, %v885
        %v937 = vunpack.c.l.b16 %v771
        %v938 = vunpack.c.l.b16 %v772
        %v939 = vunpack.c.l.b16 %v773
        %v940 = vunpack.c.l.b16 %v774
        %v941 = vunpack.c.l.b16 %v775
        %v942 = vunpack.c.l.b16 %v776
        %v943 = vunpack.c.l.b16 %v777
        %v944 = vunpack.c.l.b16 %v778
        %v945 = vunpack.c.l.b16 %v779
        %v946 = vunpack.c.l.b16 %v780
        %v947 = vunpack.c.l.b16 %v781
        %v948 = vunpack.c.l.b16 %v782
        %v949 = vunpack.c.l.b16 %v783
        %v950 = vunpack.c.l.b16 %v784
        %v951 = vunpack.c.l.b16 %v785
        %v952 = vunpack.c.l.b16 %v786
        %v953 = vpack.c.b16 %v938, %v937
        %v954 = vpack.c.b16 %v940, %v939
        %v955 = vpack.c.b16 %v942, %v941
        %v956 = vpack.c.b16 %v944, %v943
        %v957 = vpack.c.b16 %v946, %v945
        %v958 = vpack.c.b16 %v948, %v947
        %v959 = vpack.c.b16 %v950, %v949
        %v960 = vpack.c.b16 %v952, %v951
        %v1001 = vunpack.c.l.b16 %v787
        %v1002 = vunpack.c.l.b16 %v788
        %v1003 = vunpack.c.l.b16 %v789
        %v1004 = vunpack.c.l.b16 %v790
        %v1005 = vunpack.c.l.b16 %v791
        %v1006 = vunpack.c.l.b16 %v792
        %v1007 = vunpack.c.l.b16 %v793
        %v1008 = vunpack.c.l.b16 %v794
        %v1009 = vunpack.c.l.b16 %v795
        %v1010 = vunpack.c.l.b16 %v796
        %v1011 = vunpack.c.l.b16 %v797
        %v1012 = vunpack.c.l.b16 %v798
        %v1013 = vunpack.c.l.b16 %v799
        %v1014 = vunpack.c.l.b16 %v800
        %v1015 = vunpack.c.l.b16 %v801
        %v1016 = vunpack.c.l.b16 %v802
        %v1017 = vunpack.c.l.b16 %v803
        %v1018 = vunpack.c.l.b16 %v804
        %v1019 = vunpack.c.l.b16 %v805
        %v1020 = vunpack.c.l.b16 %v806
        %v1021 = vunpack.c.l.b16 %v807
        %v1022 = vunpack.c.l.b16 %v808
        %v1023 = vunpack.c.l.b16 %v809
        %v1024 = vunpack.c.l.b16 %v810
        %v1025 = vunpack.c.l.b16 %v811
        %v1026 = vunpack.c.l.b16 %v812
        %v1027 = vunpack.c.l.b16 %v813
        %v1028 = vunpack.c.l.b16 %v814
        %v1029 = vunpack.c.l.b16 %v815
        %v1030 = vunpack.c.l.b16 %v816
        %v1031 = vunpack.c.l.b16 %v817
        %v1032 = vunpack.c.l.b16 %v818
        %v1033 = vpack.c.b16 %v1002, %v1001
        %v1034 = vpack.c.b16 %v1004, %v1003
        %v1035 = vpack.c.b16 %v1006, %v1005
        %v1036 = vpack.c.b16 %v1008, %v1007
        %v1037 = vpack.c.b16 %v1010, %v1009
        %v1038 = vpack.c.b16 %v1012, %v1011
        %v1039 = vpack.c.b16 %v1014, %v1013
        %v1040 = vpack.c.b16 %v1016, %v1015
        %v1041 = vpack.c.b16 %v1018, %v1017
        %v1042 = vpack.c.b16 %v1020, %v1019
        %v1043 = vpack.c.b16 %v1022, %v1021
        %v1044 = vpack.c.b16 %v1024, %v1023
        %v1045 = vpack.c.b16 %v1026, %v1025
        %v1046 = vpack.c.b16 %v1028, %v1027
        %v1047 = vpack.c.b16 %v1030, %v1029
        %v1048 = vpack.c.b16 %v1032, %v1031
        %1065 = vmatprep.subr.bf16.mxu0 0
        %1066 = vmatpush1.bf16.xpose.msra.mxu0 %v1033
        %1067 = vmatprep.subr.bf16.mxu0 0
        %1068 = vmatpush1.bf16.xpose.msra.mxu0 %v1034
        %1069 = vmatprep.subr.bf16.mxu0 0
        %1070 = vmatpush1.bf16.xpose.msra.mxu0 %v1035
        %1071 = vmatprep.subr.bf16.mxu0 0
        %1072 = vmatpush1.bf16.xpose.msra.mxu0 %v1036
        %1073 = vmatprep.subr.bf16.mxu0 0
        %1074 = vmatpush1.bf16.xpose.msra.mxu0 %v1037
        %1075 = vmatprep.subr.bf16.mxu0 0
        %1076 = vmatpush1.bf16.xpose.msra.mxu0 %v1038
        %1077 = vmatprep.subr.bf16.mxu0 0
        %1078 = vmatpush1.bf16.xpose.msra.mxu0 %v1039
        %1079 = vmatprep.subr.bf16.mxu0 0
        %1080 = vmatpush1.bf16.xpose.msra.mxu0 %v1040
        %1081 = vmatprep.subr.bf16.mxu0 0
        %1082 = vmatpush1.bf16.xpose.msra.mxu0 %v1041
        %1083 = vmatprep.subr.bf16.mxu0 0
        %1084 = vmatpush1.bf16.xpose.msra.mxu0 %v1042
        %1085 = vmatprep.subr.bf16.mxu0 0
        %1086 = vmatpush1.bf16.xpose.msra.mxu0 %v1043
        %1087 = vmatprep.subr.bf16.mxu0 0
        %1088 = vmatpush1.bf16.xpose.msra.mxu0 %v1044
        %1089 = vmatprep.subr.bf16.mxu0 0
        %1090 = vmatpush1.bf16.xpose.msra.mxu0 %v1045
        %1091 = vmatprep.subr.bf16.mxu0 0
        %1092 = vmatpush1.bf16.xpose.msra.mxu0 %v1046
        %1093 = vmatprep.subr.bf16.mxu0 0
        %1094 = vmatpush1.bf16.xpose.msra.mxu0 %v1047
        %1095 = vmatprep.subr.bf16.mxu0 0
        %1096 = vmatpush1.bf16.xpose.msra.mxu0 %v1048
        %1097 = vmatprep.mubr.bf16.mxu0 0
        %1098 = vmatmul.mubr.bf16.gmra.mrb[0].mxu0 %v953
        %v1099 = vpop.f32.mrb[0].mxu0
        %v1100 = vadd.f32 0.0, %v1099
        %v1101 = vpop.f32.mrb[0].mxu0
        %v1102 = vadd.f32 0.0, %v1101
        %v1103 = vpop.f32.mrb[0].mxu0
        %v1104 = vadd.f32 0.0, %v1103
        %v1105 = vpop.f32.mrb[0].mxu0
        %v1106 = vadd.f32 0.0, %v1105
        %1107 = vmatprep.mubr.bf16.mxu0 0
        %1108 = vmatmul.mubr.bf16.gmra.mrb[0].mxu0 %v954
        %v1109 = vpop.f32.mrb[0].mxu0
        %v1110 = vadd.f32 0.0, %v1109
        %v1111 = vpop.f32.mrb[0].mxu0
        %v1112 = vadd.f32 0.0, %v1111
        %v1113 = vpop.f32.mrb[0].mxu0
        %v1114 = vadd.f32 0.0, %v1113
        %v1115 = vpop.f32.mrb[0].mxu0
        %v1116 = vadd.f32 0.0, %v1115
        %1117 = vmatprep.mubr.bf16.mxu0 0
        %1118 = vmatmul.mubr.bf16.gmra.mrb[0].mxu0 %v955
        %v1119 = vpop.f32.mrb[0].mxu0
        %v1120 = vadd.f32 0.0, %v1119
        %v1121 = vpop.f32.mrb[0].mxu0
        %v1122 = vadd.f32 0.0, %v1121
        %v1123 = vpop.f32.mrb[0].mxu0
        %v1124 = vadd.f32 0.0, %v1123
        %v1125 = vpop.f32.mrb[0].mxu0
        %v1126 = vadd.f32 0.0, %v1125
        %1127 = vmatprep.mubr.bf16.mxu0 0
        %1128 = vmatmul.mubr.bf16.gmra.mrb[0].mxu0 %v956
        %v1129 = vpop.f32.mrb[0].mxu0
        %v1130 = vadd.f32 0.0, %v1129
        %v1131 = vpop.f32.mrb[0].mxu0
        %v1132 = vadd.f32 0.0, %v1131
        %v1133 = vpop.f32.mrb[0].mxu0
        %v1134 = vadd.f32 0.0, %v1133
        %v1135 = vpop.f32.mrb[0].mxu0
        %v1136 = vadd.f32 0.0, %v1135
        %1137 = vmatprep.mubr.bf16.mxu0 0
        %1138 = vmatmul.mubr.bf16.gmra.mrb[0].mxu0 %v957
        %v1139 = vpop.f32.mrb[0].mxu0
        %v1140 = vadd.f32 0.0, %v1139
        %v1141 = vpop.f32.mrb[0].mxu0
        %v1142 = vadd.f32 0.0, %v1141
        %v1143 = vpop.f32.mrb[0].mxu0
        %v1144 = vadd.f32 0.0, %v1143
        %v1145 = vpop.f32.mrb[0].mxu0
        %v1146 = vadd.f32 0.0, %v1145
        %1147 = vmatprep.mubr.bf16.mxu0 0
        %1148 = vmatmul.mubr.bf16.gmra.mrb[0].mxu0 %v958
        %v1149 = vpop.f32.mrb[0].mxu0
        %v1150 = vadd.f32 0.0, %v1149
        %v1151 = vpop.f32.mrb[0].mxu0
        %v1152 = vadd.f32 0.0, %v1151
        %v1153 = vpop.f32.mrb[0].mxu0
        %v1154 = vadd.f32 0.0, %v1153
        %v1155 = vpop.f32.mrb[0].mxu0
        %v1156 = vadd.f32 0.0, %v1155
        %1157 = vmatprep.mubr.bf16.mxu0 0
        %1158 = vmatmul.mubr.bf16.gmra.mrb[0].mxu0 %v959
        %v1159 = vpop.f32.mrb[0].mxu0
        %v1160 = vadd.f32 0.0, %v1159
        %v1161 = vpop.f32.mrb[0].mxu0
        %v1162 = vadd.f32 0.0, %v1161
        %v1163 = vpop.f32.mrb[0].mxu0
        %v1164 = vadd.f32 0.0, %v1163
        %v1165 = vpop.f32.mrb[0].mxu0
        %v1166 = vadd.f32 0.0, %v1165
        %1167 = vmatprep.mubr.bf16.mxu0 0
        %1168 = vmatmul.mubr.bf16.gmra.mrb[0].mxu0 %v960
        %v1169 = vpop.f32.mrb[0].mxu0
        %v1170 = vadd.f32 0.0, %v1169
        %v1171 = vpop.f32.mrb[0].mxu0
        %v1172 = vadd.f32 0.0, %v1171
        %v1173 = vpop.f32.mrb[0].mxu0
        %v1174 = vadd.f32 0.0, %v1173
        %v1175 = vpop.f32.mrb[0].mxu0
        %v1176 = vadd.f32 0.0, %v1175
        %1177 = vdwg.mxu0
        %v1178 = vsel %vm889, %v1100, -1e+30
        %v1179 = vsel %vm890, %v1102, -1e+30
        %v1180 = vsel %vm891, %v1104, -1e+30
        %v1181 = vsel %vm892, %v1106, -1e+30
        %v1182 = vsel %vm893, %v1110, -1e+30
        %v1183 = vsel %vm894, %v1112, -1e+30
        %v1184 = vsel %vm895, %v1114, -1e+30
        %v1185 = vsel %vm896, %v1116, -1e+30
        %v1186 = vsel %vm897, %v1120, -1e+30
        %v1187 = vsel %vm898, %v1122, -1e+30
        %v1188 = vsel %vm899, %v1124, -1e+30
        %v1189 = vsel %vm900, %v1126, -1e+30
        %v1190 = vsel %vm901, %v1130, -1e+30
        %v1191 = vsel %vm902, %v1132, -1e+30
        %v1192 = vsel %vm903, %v1134, -1e+30
        %v1193 = vsel %vm904, %v1136, -1e+30
        %v1194 = vsel %vm905, %v1140, -1e+30
        %v1195 = vsel %vm906, %v1142, -1e+30
        %v1196 = vsel %vm907, %v1144, -1e+30
        %v1197 = vsel %vm908, %v1146, -1e+30
        %v1198 = vsel %vm909, %v1150, -1e+30
        %v1199 = vsel %vm910, %v1152, -1e+30
        %v1200 = vsel %vm911, %v1154, -1e+30
        %v1201 = vsel %vm912, %v1156, -1e+30
        %v1202 = vsel %vm913, %v1160, -1e+30
        %v1203 = vsel %vm914, %v1162, -1e+30
        %v1204 = vsel %vm915, %v1164, -1e+30
        %v1205 = vsel %vm916, %v1166, -1e+30
        %v1206 = vsel %vm917, %v1170, -1e+30
        %v1207 = vsel %vm918, %v1172, -1e+30
        %v1208 = vsel %vm919, %v1174, -1e+30
        %v1209 = vsel %vm920, %v1176, -1e+30
        %v1210 = vmax.f32 %v1178, %v1179
        %1211 = vmax.xlane.f32.xlu0 %v1210
        %v1212 = vpop.xlane.xlu0 %1211
        %v1213 = vmax.f32 %v1180, %v1181
        %1214 = vmax.xlane.f32.xlu0 %v1213
        %v1215 = vpop.xlane.xlu0 %1214
        %v1216 = vmax.f32 %v1182, %v1183
        %1217 = vmax.xlane.f32.xlu0 %v1216
        %v1218 = vpop.xlane.xlu0 %1217
        %v1219 = vmax.f32 %v1184, %v1185
        %1220 = vmax.xlane.f32.xlu0 %v1219
        %v1221 = vpop.xlane.xlu0 %1220
        %v1222 = vmax.f32 %v1186, %v1187
        %1223 = vmax.xlane.f32.xlu0 %v1222
        %v1224 = vpop.xlane.xlu0 %1223
        %v1225 = vmax.f32 %v1188, %v1189
        %1226 = vmax.xlane.f32.xlu0 %v1225
        %v1227 = vpop.xlane.xlu0 %1226
        %v1228 = vmax.f32 %v1190, %v1191
        %1229 = vmax.xlane.f32.xlu0 %v1228
        %v1230 = vpop.xlane.xlu0 %1229
        %v1231 = vmax.f32 %v1192, %v1193
        %1232 = vmax.xlane.f32.xlu0 %v1231
        %v1233 = vpop.xlane.xlu0 %1232
        %v1234 = vmax.f32 %v1194, %v1195
        %1235 = vmax.xlane.f32.xlu0 %v1234
        %v1236 = vpop.xlane.xlu0 %1235
        %v1237 = vmax.f32 %v1196, %v1197
        %1238 = vmax.xlane.f32.xlu0 %v1237
        %v1239 = vpop.xlane.xlu0 %1238
        %v1240 = vmax.f32 %v1198, %v1199
        %1241 = vmax.xlane.f32.xlu0 %v1240
        %v1242 = vpop.xlane.xlu0 %1241
        %v1243 = vmax.f32 %v1200, %v1201
        %1244 = vmax.xlane.f32.xlu0 %v1243
        %v1245 = vpop.xlane.xlu0 %1244
        %v1246 = vmax.f32 %v1202, %v1203
        %1247 = vmax.xlane.f32.xlu0 %v1246
        %v1248 = vpop.xlane.xlu0 %1247
        %v1249 = vmax.f32 %v1204, %v1205
        %1250 = vmax.xlane.f32.xlu0 %v1249
        %v1251 = vpop.xlane.xlu0 %1250
        %v1252 = vmax.f32 %v1206, %v1207
        %1253 = vmax.xlane.f32.xlu0 %v1252
        %v1254 = vpop.xlane.xlu0 %1253
        %v1255 = vmax.f32 %v1208, %v1209
        %1256 = vmax.xlane.f32.xlu0 %v1255
        %v1257 = vpop.xlane.xlu0 %1256
        %v1258 = vsub.f32 %v1178, %v1212
        %v1259 = vsub.f32 %v1179, %v1212
        %v1260 = vsub.f32 %v1180, %v1215
        %v1261 = vsub.f32 %v1181, %v1215
        %v1262 = vsub.f32 %v1182, %v1218
        %v1263 = vsub.f32 %v1183, %v1218
        %v1264 = vsub.f32 %v1184, %v1221
        %v1265 = vsub.f32 %v1185, %v1221
        %v1266 = vsub.f32 %v1186, %v1224
        %v1267 = vsub.f32 %v1187, %v1224
        %v1268 = vsub.f32 %v1188, %v1227
        %v1269 = vsub.f32 %v1189, %v1227
        %v1270 = vsub.f32 %v1190, %v1230
        %v1271 = vsub.f32 %v1191, %v1230
        %v1272 = vsub.f32 %v1192, %v1233
        %v1273 = vsub.f32 %v1193, %v1233
        %v1274 = vsub.f32 %v1194, %v1236
        %v1275 = vsub.f32 %v1195, %v1236
        %v1276 = vsub.f32 %v1196, %v1239
        %v1277 = vsub.f32 %v1197, %v1239
        %v1278 = vsub.f32 %v1198, %v1242
        %v1279 = vsub.f32 %v1199, %v1242
        %v1280 = vsub.f32 %v1200, %v1245
        %v1281 = vsub.f32 %v1201, %v1245
        %v1282 = vsub.f32 %v1202, %v1248
        %v1283 = vsub.f32 %v1203, %v1248
        %v1284 = vsub.f32 %v1204, %v1251
        %v1285 = vsub.f32 %v1205, %v1251
        %v1286 = vsub.f32 %v1206, %v1254
        %v1287 = vsub.f32 %v1207, %v1254
        %v1288 = vsub.f32 %v1208, %v1257
        %v1289 = vsub.f32 %v1209, %v1257
        %v1290 = vmul.f32 %v1258, 1.442695
        %v1291 = vpow.pop %v1290
        %v1292 = vmul.f32 %v1259, 1.442695
        %v1293 = vpow.pop %v1292
        %v1294 = vmul.f32 %v1260, 1.442695
        %v1295 = vpow.pop %v1294
        %v1296 = vmul.f32 %v1261, 1.442695
        %v1297 = vpow.pop %v1296
        %v1298 = vmul.f32 %v1262, 1.442695
        %v1299 = vpow.pop %v1298
        %v1300 = vmul.f32 %v1263, 1.442695
        %v1301 = vpow.pop %v1300
        %v1302 = vmul.f32 %v1264, 1.442695
        %v1303 = vpow.pop %v1302
        %v1304 = vmul.f32 %v1265, 1.442695
        %v1305 = vpow.pop %v1304
        %v1306 = vmul.f32 %v1266, 1.442695
        %v1307 = vpow.pop %v1306
        %v1308 = vmul.f32 %v1267, 1.442695
        %v1309 = vpow.pop %v1308
        %v1310 = vmul.f32 %v1268, 1.442695
        %v1311 = vpow.pop %v1310
        %v1312 = vmul.f32 %v1269, 1.442695
        %v1313 = vpow.pop %v1312
        %v1314 = vmul.f32 %v1270, 1.442695
        %v1315 = vpow.pop %v1314
        %v1316 = vmul.f32 %v1271, 1.442695
        %v1317 = vpow.pop %v1316
        %v1318 = vmul.f32 %v1272, 1.442695
        %v1319 = vpow.pop %v1318
        %v1320 = vmul.f32 %v1273, 1.442695
        %v1321 = vpow.pop %v1320
        %v1322 = vmul.f32 %v1274, 1.442695
        %v1323 = vpow.pop %v1322
        %v1324 = vmul.f32 %v1275, 1.442695
        %v1325 = vpow.pop %v1324
        %v1326 = vmul.f32 %v1276, 1.442695
        %v1327 = vpow.pop %v1326
        %v1328 = vmul.f32 %v1277, 1.442695
        %v1329 = vpow.pop %v1328
        %v1330 = vmul.f32 %v1278, 1.442695
        %v1331 = vpow.pop %v1330
        %v1332 = vmul.f32 %v1279, 1.442695
        %v1333 = vpow.pop %v1332
        %v1334 = vmul.f32 %v1280, 1.442695
        %v1335 = vpow.pop %v1334
        %v1336 = vmul.f32 %v1281, 1.442695
        %v1337 = vpow.pop %v1336
        %v1338 = vmul.f32 %v1282, 1.442695
        %v1339 = vpow.pop %v1338
        %v1340 = vmul.f32 %v1283, 1.442695
        %v1341 = vpow.pop %v1340
        %v1342 = vmul.f32 %v1284, 1.442695
        %v1343 = vpow.pop %v1342
        %v1344 = vmul.f32 %v1285, 1.442695
        %v1345 = vpow.pop %v1344
        %v1346 = vmul.f32 %v1286, 1.442695
        %v1347 = vpow.pop %v1346
        %v1348 = vmul.f32 %v1287, 1.442695
        %v1349 = vpow.pop %v1348
        %v1350 = vmul.f32 %v1288, 1.442695
        %v1351 = vpow.pop %v1350
        %v1352 = vmul.f32 %v1289, 1.442695
        %v1353 = vpow.pop %v1352
        %v1354 = vadd.f32 %v1291, %v1293
        %1355 = vadd.xlane.f32.xlu0 %v1354
        %v1356 = vpop.xlane.xlu0 %1355
        %v1357 = vadd.f32 %v1295, %v1297
        %1358 = vadd.xlane.f32.xlu0 %v1357
        %v1359 = vpop.xlane.xlu0 %1358
        %v1360 = vadd.f32 %v1299, %v1301
        %1361 = vadd.xlane.f32.xlu0 %v1360
        %v1362 = vpop.xlane.xlu0 %1361
        %v1363 = vadd.f32 %v1303, %v1305
        %1364 = vadd.xlane.f32.xlu0 %v1363
        %v1365 = vpop.xlane.xlu0 %1364
        %v1366 = vadd.f32 %v1307, %v1309
        %1367 = vadd.xlane.f32.xlu0 %v1366
        %v1368 = vpop.xlane.xlu0 %1367
        %v1369 = vadd.f32 %v1311, %v1313
        %1370 = vadd.xlane.f32.xlu0 %v1369
        %v1371 = vpop.xlane.xlu0 %1370
        %v1372 = vadd.f32 %v1315, %v1317
        %1373 = vadd.xlane.f32.xlu0 %v1372
        %v1374 = vpop.xlane.xlu0 %1373
        %v1375 = vadd.f32 %v1319, %v1321
        %1376 = vadd.xlane.f32.xlu0 %v1375
        %v1377 = vpop.xlane.xlu0 %1376
        %v1378 = vadd.f32 %v1323, %v1325
        %1379 = vadd.xlane.f32.xlu0 %v1378
        %v1380 = vpop.xlane.xlu0 %1379
        %v1381 = vadd.f32 %v1327, %v1329
        %1382 = vadd.xlane.f32.xlu0 %v1381
        %v1383 = vpop.xlane.xlu0 %1382
        %v1384 = vadd.f32 %v1331, %v1333
        %1385 = vadd.xlane.f32.xlu0 %v1384
        %v1386 = vpop.xlane.xlu0 %1385
        %v1387 = vadd.f32 %v1335, %v1337
        %1388 = vadd.xlane.f32.xlu0 %v1387
        %v1389 = vpop.xlane.xlu0 %1388
        %v1390 = vadd.f32 %v1339, %v1341
        %1391 = vadd.xlane.f32.xlu0 %v1390
        %v1392 = vpop.xlane.xlu0 %1391
        %v1393 = vadd.f32 %v1343, %v1345
        %1394 = vadd.xlane.f32.xlu0 %v1393
        %v1395 = vpop.xlane.xlu0 %1394
        %v1396 = vadd.f32 %v1347, %v1349
        %1397 = vadd.xlane.f32.xlu0 %v1396
        %v1398 = vpop.xlane.xlu0 %1397
        %v1399 = vadd.f32 %v1351, %v1353
        %1400 = vadd.xlane.f32.xlu0 %v1399
        %v1401 = vpop.xlane.xlu0 %1400
        %v1402 = vpack.c.bf16 %v1295, %v1291
        %v1403 = vpack.c.bf16 %v1297, %v1293
        %v1404 = vpack.c.bf16 %v1303, %v1299
        %v1405 = vpack.c.bf16 %v1305, %v1301
        %v1406 = vpack.c.bf16 %v1311, %v1307
        %v1407 = vpack.c.bf16 %v1313, %v1309
        %v1408 = vpack.c.bf16 %v1319, %v1315
        %v1409 = vpack.c.bf16 %v1321, %v1317
        %v1410 = vpack.c.bf16 %v1327, %v1323
        %v1411 = vpack.c.bf16 %v1329, %v1325
        %v1412 = vpack.c.bf16 %v1335, %v1331
        %v1413 = vpack.c.bf16 %v1337, %v1333
        %v1414 = vpack.c.bf16 %v1343, %v1339
        %v1415 = vpack.c.bf16 %v1345, %v1341
        %v1416 = vpack.c.bf16 %v1351, %v1347
        %v1417 = vpack.c.bf16 %v1353, %v1349
        %v1450 = vunpack.c.l.b16 %v819
        %v1451 = vunpack.c.l.b16 %v820
        %v1452 = vunpack.c.l.b16 %v821
        %v1453 = vunpack.c.l.b16 %v822
        %v1454 = vunpack.c.l.b16 %v823
        %v1455 = vunpack.c.l.b16 %v824
        %v1456 = vunpack.c.l.b16 %v825
        %v1457 = vunpack.c.l.b16 %v826
        %v1458 = vunpack.c.l.b16 %v827
        %v1459 = vunpack.c.l.b16 %v828
        %v1460 = vunpack.c.l.b16 %v829
        %v1461 = vunpack.c.l.b16 %v830
        %v1462 = vunpack.c.l.b16 %v831
        %v1463 = vunpack.c.l.b16 %v832
        %v1464 = vunpack.c.l.b16 %v833
        %v1465 = vunpack.c.l.b16 %v834
        %v1466 = vunpack.c.l.b16 %v835
        %v1467 = vunpack.c.l.b16 %v836
        %v1468 = vunpack.c.l.b16 %v837
        %v1469 = vunpack.c.l.b16 %v838
        %v1470 = vunpack.c.l.b16 %v839
        %v1471 = vunpack.c.l.b16 %v840
        %v1472 = vunpack.c.l.b16 %v841
        %v1473 = vunpack.c.l.b16 %v842
        %v1474 = vunpack.c.l.b16 %v843
        %v1475 = vunpack.c.l.b16 %v844
        %v1476 = vunpack.c.l.b16 %v845
        %v1477 = vunpack.c.l.b16 %v846
        %v1478 = vunpack.c.l.b16 %v847
        %v1479 = vunpack.c.l.b16 %v848
        %v1480 = vunpack.c.l.b16 %v849
        %v1481 = vunpack.c.l.b16 %v850
        %v1482 = vpack.c.b16 %v1451, %v1450
        %v1483 = vpack.c.b16 %v1453, %v1452
        %v1484 = vpack.c.b16 %v1455, %v1454
        %v1485 = vpack.c.b16 %v1457, %v1456
        %v1486 = vpack.c.b16 %v1459, %v1458
        %v1487 = vpack.c.b16 %v1461, %v1460
        %v1488 = vpack.c.b16 %v1463, %v1462
        %v1489 = vpack.c.b16 %v1465, %v1464
        %v1490 = vpack.c.b16 %v1467, %v1466
        %v1491 = vpack.c.b16 %v1469, %v1468
        %v1492 = vpack.c.b16 %v1471, %v1470
        %v1493 = vpack.c.b16 %v1473, %v1472
        %v1494 = vpack.c.b16 %v1475, %v1474
        %v1495 = vpack.c.b16 %v1477, %v1476
        %v1496 = vpack.c.b16 %v1479, %v1478
        %v1497 = vpack.c.b16 %v1481, %v1480
        %1514 = vmatprep.subr.bf16.mxu0 0
        %1515 = vmatpush1.bf16.msra.mxu0 %v1482
        %1516 = vmatprep.subr.bf16.mxu0 0
        %1517 = vmatpush1.bf16.msra.mxu0 %v1483
        %1518 = vmatprep.subr.bf16.mxu0 0
        %1519 = vmatpush1.bf16.msra.mxu0 %v1484
        %1520 = vmatprep.subr.bf16.mxu0 0
        %1521 = vmatpush1.bf16.msra.mxu0 %v1485
        %1522 = vmatprep.subr.bf16.mxu0 0
        %1523 = vmatpush1.bf16.msra.mxu0 %v1486
        %1524 = vmatprep.subr.bf16.mxu0 0
        %1525 = vmatpush1.bf16.msra.mxu0 %v1487
        %1526 = vmatprep.subr.bf16.mxu0 0
        %1527 = vmatpush1.bf16.msra.mxu0 %v1488
        %1528 = vmatprep.subr.bf16.mxu0 0
        %1529 = vmatpush1.bf16.msra.mxu0 %v1489
        %1530 = vmatprep.subr.bf16.mxu0 0
        %1531 = vmatpush1.bf16.msra.mxu0 %v1490
        %1532 = vmatprep.subr.bf16.mxu0 0
        %1533 = vmatpush1.bf16.msra.mxu0 %v1491
        %1534 = vmatprep.subr.bf16.mxu0 0
        %1535 = vmatpush1.bf16.msra.mxu0 %v1492
        %1536 = vmatprep.subr.bf16.mxu0 0
        %1537 = vmatpush1.bf16.msra.mxu0 %v1493
        %1538 = vmatprep.subr.bf16.mxu0 0
        %1539 = vmatpush1.bf16.msra.mxu0 %v1494
        %1540 = vmatprep.subr.bf16.mxu0 0
        %1541 = vmatpush1.bf16.msra.mxu0 %v1495
        %1542 = vmatprep.subr.bf16.mxu0 0
        %1543 = vmatpush1.bf16.msra.mxu0 %v1496
        %1544 = vmatprep.subr.bf16.mxu0 0
        %1545 = vmatpush1.bf16.msra.mxu0 %v1497
        %1546 = vmatprep.mubr.bf16.mxu0 %v1403
        %1547 = vmatmul.mubr.bf16.gmra.mrb[0].mxu0 %v1402
        %v1548 = vpop.f32.mrb[0].mxu0
        %v1549 = vadd.f32 0.0, %v1548
        %v1550 = vpop.f32.mrb[0].mxu0
        %v1551 = vpop.f32.mrb[0].mxu0
        %v1552 = vadd.f32 0.0, %v1551
        %v1553 = vpop.f32.mrb[0].mxu0
        %1554 = vmatprep.mubr.bf16.mxu0 %v1405
        %1555 = vmatmul.mubr.bf16.gmra.mrb[0].mxu0 %v1404
        %v1556 = vpop.f32.mrb[0].mxu0
        %v1557 = vadd.f32 0.0, %v1556
        %v1558 = vpop.f32.mrb[0].mxu0
        %v1559 = vpop.f32.mrb[0].mxu0
        %v1560 = vadd.f32 0.0, %v1559
        %v1561 = vpop.f32.mrb[0].mxu0
        %1562 = vmatprep.mubr.bf16.mxu0 %v1407
        %1563 = vmatmul.mubr.bf16.gmra.mrb[0].mxu0 %v1406
        %v1564 = vpop.f32.mrb[0].mxu0
        %v1565 = vadd.f32 0.0, %v1564
        %v1566 = vpop.f32.mrb[0].mxu0
        %v1567 = vpop.f32.mrb[0].mxu0
        %v1568 = vadd.f32 0.0, %v1567
        %v1569 = vpop.f32.mrb[0].mxu0
        %1570 = vmatprep.mubr.bf16.mxu0 %v1409
        %1571 = vmatmul.mubr.bf16.gmra.mrb[0].mxu0 %v1408
        %v1572 = vpop.f32.mrb[0].mxu0
        %v1573 = vadd.f32 0.0, %v1572
        %v1574 = vpop.f32.mrb[0].mxu0
        %v1575 = vpop.f32.mrb[0].mxu0
        %v1576 = vadd.f32 0.0, %v1575
        %v1577 = vpop.f32.mrb[0].mxu0
        %1578 = vmatprep.mubr.bf16.mxu0 %v1411
        %1579 = vmatmul.mubr.bf16.gmra.mrb[0].mxu0 %v1410
        %v1580 = vpop.f32.mrb[0].mxu0
        %v1581 = vadd.f32 0.0, %v1580
        %v1582 = vpop.f32.mrb[0].mxu0
        %v1583 = vpop.f32.mrb[0].mxu0
        %v1584 = vadd.f32 0.0, %v1583
        %v1585 = vpop.f32.mrb[0].mxu0
        %1586 = vmatprep.mubr.bf16.mxu0 %v1413
        %1587 = vmatmul.mubr.bf16.gmra.mrb[0].mxu0 %v1412
        %v1588 = vpop.f32.mrb[0].mxu0
        %v1589 = vadd.f32 0.0, %v1588
        %v1590 = vpop.f32.mrb[0].mxu0
        %v1591 = vpop.f32.mrb[0].mxu0
        %v1592 = vadd.f32 0.0, %v1591
        %v1593 = vpop.f32.mrb[0].mxu0
        %1594 = vmatprep.mubr.bf16.mxu0 %v1415
        %1595 = vmatmul.mubr.bf16.gmra.mrb[0].mxu0 %v1414
        %v1596 = vpop.f32.mrb[0].mxu0
        %v1597 = vadd.f32 0.0, %v1596
        %v1598 = vpop.f32.mrb[0].mxu0
        %v1599 = vpop.f32.mrb[0].mxu0
        %v1600 = vadd.f32 0.0, %v1599
        %v1601 = vpop.f32.mrb[0].mxu0
        %1602 = vmatprep.mubr.bf16.mxu0 %v1417
        %1603 = vmatmul.mubr.bf16.gmra.mrb[0].mxu0 %v1416
        %v1604 = vpop.f32.mrb[0].mxu0
        %v1605 = vadd.f32 0.0, %v1604
        %v1606 = vpop.f32.mrb[0].mxu0
        %v1607 = vpop.f32.mrb[0].mxu0
        %v1608 = vadd.f32 0.0, %v1607
        %v1609 = vpop.f32.mrb[0].mxu0
        %1610 = vdwg.mxu0
        %v1611 = vrcp.pop %v1356
        %v1612 = vrcp.pop %v1359
        %v1613 = vrcp.pop %v1362
        %v1614 = vrcp.pop %v1365
        %v1615 = vrcp.pop %v1368
        %v1616 = vrcp.pop %v1371
        %v1617 = vrcp.pop %v1374
        %v1618 = vrcp.pop %v1377
        %v1619 = vrcp.pop %v1380
        %v1620 = vrcp.pop %v1383
        %v1621 = vrcp.pop %v1386
        %v1622 = vrcp.pop %v1389
        %v1623 = vrcp.pop %v1392
        %v1624 = vrcp.pop %v1395
        %v1625 = vrcp.pop %v1398
        %v1626 = vrcp.pop %v1401
        %v1627 = vmul.f32 %v1549, %v1611
        %v1628 = vmul.f32 %v1552, %v1612
        %v1629 = vmul.f32 %v1557, %v1613
        %v1630 = vmul.f32 %v1560, %v1614
        %v1631 = vmul.f32 %v1565, %v1615
        %v1632 = vmul.f32 %v1568, %v1616
        %v1633 = vmul.f32 %v1573, %v1617
        %v1634 = vmul.f32 %v1576, %v1618
        %v1635 = vmul.f32 %v1581, %v1619
        %v1636 = vmul.f32 %v1584, %v1620
        %v1637 = vmul.f32 %v1589, %v1621
        %v1638 = vmul.f32 %v1592, %v1622
        %v1639 = vmul.f32 %v1597, %v1623
        %v1640 = vmul.f32 %v1600, %v1624
        %v1641 = vmul.f32 %v1605, %v1625
        %v1642 = vmul.f32 %v1608, %v1626
        %v1643 = vpack.c.bf16 %v1628, %v1627
        %v1644 = vpack.c.bf16 %v1630, %v1629
        %v1645 = vpack.c.bf16 %v1632, %v1631
        %v1646 = vpack.c.bf16 %v1634, %v1633
        %v1647 = vpack.c.bf16 %v1636, %v1635
        %v1648 = vpack.c.bf16 %v1638, %v1637
        %v1649 = vpack.c.bf16 %v1640, %v1639
        %v1650 = vpack.c.bf16 %v1642, %v1641
        %1651 = vst [vmem:[#allocation2] sm:$0xff] %v1643
        %1652 = vst [vmem:[#allocation2 + $0x10] sm:$0xff] %v1644
        %1653 = vst [vmem:[#allocation2 + $0x20] sm:$0xff] %v1645
        %1654 = vst [vmem:[#allocation2 + $0x30] sm:$0xff] %v1646
        %1655 = vst [vmem:[#allocation2 + $0x40] sm:$0xff] %v1647
        %1656 = vst [vmem:[#allocation2 + $0x50] sm:$0xff] %v1648
        %1657 = vst [vmem:[#allocation2 + $0x60] sm:$0xff] %v1649
        %1658 = vst [vmem:[#allocation2 + $0x70] sm:$0xff] %v1650
        %v1659 = vunpack.c.h.b16 %v771
        %v1660 = vunpack.c.h.b16 %v772
        %v1661 = vunpack.c.h.b16 %v773
        %v1662 = vunpack.c.h.b16 %v774
        %v1663 = vunpack.c.h.b16 %v775
        %v1664 = vunpack.c.h.b16 %v776
        %v1665 = vunpack.c.h.b16 %v777
        %v1666 = vunpack.c.h.b16 %v778
        %v1667 = vunpack.c.h.b16 %v779
        %v1668 = vunpack.c.h.b16 %v780
        %v1669 = vunpack.c.h.b16 %v781
        %v1670 = vunpack.c.h.b16 %v782
        %v1671 = vunpack.c.h.b16 %v783
        %v1672 = vunpack.c.h.b16 %v784
        %v1673 = vunpack.c.h.b16 %v785
        %v1674 = vunpack.c.h.b16 %v786
        %v1675 = vpack.c.b16 %v1660, %v1659
        %v1676 = vpack.c.b16 %v1662, %v1661
        %v1677 = vpack.c.b16 %v1664, %v1663
        %v1678 = vpack.c.b16 %v1666, %v1665
        %v1679 = vpack.c.b16 %v1668, %v1667
        %v1680 = vpack.c.b16 %v1670, %v1669
        %v1681 = vpack.c.b16 %v1672, %v1671
        %v1682 = vpack.c.b16 %v1674, %v1673
        %1691 = vmatprep.subr.bf16.mxu0 0
        %1692 = vmatpush1.bf16.xpose.msra.mxu0 %v1033
        %1693 = vmatprep.subr.bf16.mxu0 0
        %1694 = vmatpush1.bf16.xpose.msra.mxu0 %v1034
        %1695 = vmatprep.subr.bf16.mxu0 0
        %1696 = vmatpush1.bf16.xpose.msra.mxu0 %v1035
        %1697 = vmatprep.subr.bf16.mxu0 0
        %1698 = vmatpush1.bf16.xpose.msra.mxu0 %v1036
        %1699 = vmatprep.subr.bf16.mxu0 0
        %1700 = vmatpush1.bf16.xpose.msra.mxu0 %v1037
        %1701 = vmatprep.subr.bf16.mxu0 0
        %1702 = vmatpush1.bf16.xpose.msra.mxu0 %v1038
        %1703 = vmatprep.subr.bf16.mxu0 0
        %1704 = vmatpush1.bf16.xpose.msra.mxu0 %v1039
        %1705 = vmatprep.subr.bf16.mxu0 0
        %1706 = vmatpush1.bf16.xpose.msra.mxu0 %v1040
        %1707 = vmatprep.subr.bf16.mxu0 0
        %1708 = vmatpush1.bf16.xpose.msra.mxu0 %v1041
        %1709 = vmatprep.subr.bf16.mxu0 0
        %1710 = vmatpush1.bf16.xpose.msra.mxu0 %v1042
        %1711 = vmatprep.subr.bf16.mxu0 0
        %1712 = vmatpush1.bf16.xpose.msra.mxu0 %v1043
        %1713 = vmatprep.subr.bf16.mxu0 0
        %1714 = vmatpush1.bf16.xpose.msra.mxu0 %v1044
        %1715 = vmatprep.subr.bf16.mxu0 0
        %1716 = vmatpush1.bf16.xpose.msra.mxu0 %v1045
        %1717 = vmatprep.subr.bf16.mxu0 0
        %1718 = vmatpush1.bf16.xpose.msra.mxu0 %v1046
        %1719 = vmatprep.subr.bf16.mxu0 0
        %1720 = vmatpush1.bf16.xpose.msra.mxu0 %v1047
        %1721 = vmatprep.subr.bf16.mxu0 0
        %1722 = vmatpush1.bf16.xpose.msra.mxu0 %v1048
        %1723 = vmatprep.mubr.bf16.mxu0 0
        %1724 = vmatmul.mubr.bf16.gmra.mrb[0].mxu0 %v1675
        %v1725 = vpop.f32.mrb[0].mxu0
        %v1726 = vadd.f32 0.0, %v1725
        %v1727 = vpop.f32.mrb[0].mxu0
        %v1728 = vadd.f32 0.0, %v1727
        %v1729 = vpop.f32.mrb[0].mxu0
        %v1730 = vadd.f32 0.0, %v1729
        %v1731 = vpop.f32.mrb[0].mxu0
        %v1732 = vadd.f32 0.0, %v1731
        %1733 = vmatprep.mubr.bf16.mxu0 0
        %1734 = vmatmul.mubr.bf16.gmra.mrb[0].mxu0 %v1676
        %v1735 = vpop.f32.mrb[0].mxu0
        %v1736 = vadd.f32 0.0, %v1735
        %v1737 = vpop.f32.mrb[0].mxu0
        %v1738 = vadd.f32 0.0, %v1737
        %v1739 = vpop.f32.mrb[0].mxu0
        %v1740 = vadd.f32 0.0, %v1739
        %v1741 = vpop.f32.mrb[0].mxu0
        %v1742 = vadd.f32 0.0, %v1741
        %1743 = vmatprep.mubr.bf16.mxu0 0
        %1744 = vmatmul.mubr.bf16.gmra.mrb[0].mxu0 %v1677
        %v1745 = vpop.f32.mrb[0].mxu0
        %v1746 = vadd.f32 0.0, %v1745
        %v1747 = vpop.f32.mrb[0].mxu0
        %v1748 = vadd.f32 0.0, %v1747
        %v1749 = vpop.f32.mrb[0].mxu0
        %v1750 = vadd.f32 0.0, %v1749
        %v1751 = vpop.f32.mrb[0].mxu0
        %v1752 = vadd.f32 0.0, %v1751
        %1753 = vmatprep.mubr.bf16.mxu0 0
        %1754 = vmatmul.mubr.bf16.gmra.mrb[0].mxu0 %v1678
        %v1755 = vpop.f32.mrb[0].mxu0
        %v1756 = vadd.f32 0.0, %v1755
        %v1757 = vpop.f32.mrb[0].mxu0
        %v1758 = vadd.f32 0.0, %v1757
        %v1759 = vpop.f32.mrb[0].mxu0
        %v1760 = vadd.f32 0.0, %v1759
        %v1761 = vpop.f32.mrb[0].mxu0
        %v1762 = vadd.f32 0.0, %v1761
        %1763 = vmatprep.mubr.bf16.mxu0 0
        %1764 = vmatmul.mubr.bf16.gmra.mrb[0].mxu0 %v1679
        %v1765 = vpop.f32.mrb[0].mxu0
        %v1766 = vadd.f32 0.0, %v1765
        %v1767 = vpop.f32.mrb[0].mxu0
        %v1768 = vadd.f32 0.0, %v1767
        %v1769 = vpop.f32.mrb[0].mxu0
        %v1770 = vadd.f32 0.0, %v1769
        %v1771 = vpop.f32.mrb[0].mxu0
        %v1772 = vadd.f32 0.0, %v1771
        %1773 = vmatprep.mubr.bf16.mxu0 0
        %1774 = vmatmul.mubr.bf16.gmra.mrb[0].mxu0 %v1680
        %v1775 = vpop.f32.mrb[0].mxu0
        %v1776 = vadd.f32 0.0, %v1775
        %v1777 = vpop.f32.mrb[0].mxu0
        %v1778 = vadd.f32 0.0, %v1777
        %v1779 = vpop.f32.mrb[0].mxu0
        %v1780 = vadd.f32 0.0, %v1779
        %v1781 = vpop.f32.mrb[0].mxu0
        %v1782 = vadd.f32 0.0, %v1781
        %1783 = vmatprep.mubr.bf16.mxu0 0
        %1784 = vmatmul.mubr.bf16.gmra.mrb[0].mxu0 %v1681
        %v1785 = vpop.f32.mrb[0].mxu0
        %v1786 = vadd.f32 0.0, %v1785
        %v1787 = vpop.f32.mrb[0].mxu0
        %v1788 = vadd.f32 0.0, %v1787
        %v1789 = vpop.f32.mrb[0].mxu0
        %v1790 = vadd.f32 0.0, %v1789
        %v1791 = vpop.f32.mrb[0].mxu0
        %v1792 = vadd.f32 0.0, %v1791
        %1793 = vmatprep.mubr.bf16.mxu0 0
        %1794 = vmatmul.mubr.bf16.gmra.mrb[0].mxu0 %v1682
        %v1795 = vpop.f32.mrb[0].mxu0
        %v1796 = vadd.f32 0.0, %v1795
        %v1797 = vpop.f32.mrb[0].mxu0
        %v1798 = vadd.f32 0.0, %v1797
        %v1799 = vpop.f32.mrb[0].mxu0
        %v1800 = vadd.f32 0.0, %v1799
        %v1801 = vpop.f32.mrb[0].mxu0
        %v1802 = vadd.f32 0.0, %v1801
        %1803 = vdwg.mxu0
        %v1804 = vsel %vm889, %v1726, -1e+30
        %v1805 = vsel %vm890, %v1728, -1e+30
        %v1806 = vsel %vm891, %v1730, -1e+30
        %v1807 = vsel %vm892, %v1732, -1e+30
        %v1808 = vsel %vm893, %v1736, -1e+30
        %v1809 = vsel %vm894, %v1738, -1e+30
        %v1810 = vsel %vm895, %v1740, -1e+30
        %v1811 = vsel %vm896, %v1742, -1e+30
        %v1812 = vsel %vm897, %v1746, -1e+30
        %v1813 = vsel %vm898, %v1748, -1e+30
        %v1814 = vsel %vm899, %v1750, -1e+30
        %v1815 = vsel %vm900, %v1752, -1e+30
        %v1816 = vsel %vm901, %v1756, -1e+30
        %v1817 = vsel %vm902, %v1758, -1e+30
        %v1818 = vsel %vm903, %v1760, -1e+30
        %v1819 = vsel %vm904, %v1762, -1e+30
        %v1820 = vsel %vm905, %v1766, -1e+30
        %v1821 = vsel %vm906, %v1768, -1e+30
        %v1822 = vsel %vm907, %v1770, -1e+30
        %v1823 = vsel %vm908, %v1772, -1e+30
        %v1824 = vsel %vm909, %v1776, -1e+30
        %v1825 = vsel %vm910, %v1778, -1e+30
        %v1826 = vsel %vm911, %v1780, -1e+30
        %v1827 = vsel %vm912, %v1782, -1e+30
        %v1828 = vsel %vm913, %v1786, -1e+30
        %v1829 = vsel %vm914, %v1788, -1e+30
        %v1830 = vsel %vm915, %v1790, -1e+30
        %v1831 = vsel %vm916, %v1792, -1e+30
        %v1832 = vsel %vm917, %v1796, -1e+30
        %v1833 = vsel %vm918, %v1798, -1e+30
        %v1834 = vsel %vm919, %v1800, -1e+30
        %v1835 = vsel %vm920, %v1802, -1e+30
        %v1836 = vmax.f32 %v1804, %v1805
        %1837 = vmax.xlane.f32.xlu0 %v1836
        %v1838 = vpop.xlane.xlu0 %1837
        %v1839 = vmax.f32 %v1806, %v1807
        %1840 = vmax.xlane.f32.xlu0 %v1839
        %v1841 = vpop.xlane.xlu0 %1840
        %v1842 = vmax.f32 %v1808, %v1809
        %1843 = vmax.xlane.f32.xlu0 %v1842
        %v1844 = vpop.xlane.xlu0 %1843
        %v1845 = vmax.f32 %v1810, %v1811
        %1846 = vmax.xlane.f32.xlu0 %v1845
        %v1847 = vpop.xlane.xlu0 %1846
        %v1848 = vmax.f32 %v1812, %v1813
        %1849 = vmax.xlane.f32.xlu0 %v1848
        %v1850 = vpop.xlane.xlu0 %1849
        %v1851 = vmax.f32 %v1814, %v1815
        %1852 = vmax.xlane.f32.xlu0 %v1851
        %v1853 = vpop.xlane.xlu0 %1852
        %v1854 = vmax.f32 %v1816, %v1817
        %1855 = vmax.xlane.f32.xlu0 %v1854
        %v1856 = vpop.xlane.xlu0 %1855
        %v1857 = vmax.f32 %v1818, %v1819
        %1858 = vmax.xlane.f32.xlu0 %v1857
        %v1859 = vpop.xlane.xlu0 %1858
        %v1860 = vmax.f32 %v1820, %v1821
        %1861 = vmax.xlane.f32.xlu0 %v1860
        %v1862 = vpop.xlane.xlu0 %1861
        %v1863 = vmax.f32 %v1822, %v1823
        %1864 = vmax.xlane.f32.xlu0 %v1863
        %v1865 = vpop.xlane.xlu0 %1864
        %v1866 = vmax.f32 %v1824, %v1825
        %1867 = vmax.xlane.f32.xlu0 %v1866
        %v1868 = vpop.xlane.xlu0 %1867
        %v1869 = vmax.f32 %v1826, %v1827
        %1870 = vmax.xlane.f32.xlu0 %v1869
        %v1871 = vpop.xlane.xlu0 %1870
        %v1872 = vmax.f32 %v1828, %v1829
        %1873 = vmax.xlane.f32.xlu0 %v1872
        %v1874 = vpop.xlane.xlu0 %1873
        %v1875 = vmax.f32 %v1830, %v1831
        %1876 = vmax.xlane.f32.xlu0 %v1875
        %v1877 = vpop.xlane.xlu0 %1876
        %v1878 = vmax.f32 %v1832, %v1833
        %1879 = vmax.xlane.f32.xlu0 %v1878
        %v1880 = vpop.xlane.xlu0 %1879
        %v1881 = vmax.f32 %v1834, %v1835
        %1882 = vmax.xlane.f32.xlu0 %v1881
        %v1883 = vpop.xlane.xlu0 %1882
        %v1884 = vsub.f32 %v1804, %v1838
        %v1885 = vsub.f32 %v1805, %v1838
        %v1886 = vsub.f32 %v1806, %v1841
        %v1887 = vsub.f32 %v1807, %v1841
        %v1888 = vsub.f32 %v1808, %v1844
        %v1889 = vsub.f32 %v1809, %v1844
        %v1890 = vsub.f32 %v1810, %v1847
        %v1891 = vsub.f32 %v1811, %v1847
        %v1892 = vsub.f32 %v1812, %v1850
        %v1893 = vsub.f32 %v1813, %v1850
        %v1894 = vsub.f32 %v1814, %v1853
        %v1895 = vsub.f32 %v1815, %v1853
        %v1896 = vsub.f32 %v1816, %v1856
        %v1897 = vsub.f32 %v1817, %v1856
        %v1898 = vsub.f32 %v1818, %v1859
        %v1899 = vsub.f32 %v1819, %v1859
        %v1900 = vsub.f32 %v1820, %v1862
        %v1901 = vsub.f32 %v1821, %v1862
        %v1902 = vsub.f32 %v1822, %v1865
        %v1903 = vsub.f32 %v1823, %v1865
        %v1904 = vsub.f32 %v1824, %v1868
        %v1905 = vsub.f32 %v1825, %v1868
        %v1906 = vsub.f32 %v1826, %v1871
        %v1907 = vsub.f32 %v1827, %v1871
        %v1908 = vsub.f32 %v1828, %v1874
        %v1909 = vsub.f32 %v1829, %v1874
        %v1910 = vsub.f32 %v1830, %v1877
        %v1911 = vsub.f32 %v1831, %v1877
        %v1912 = vsub.f32 %v1832, %v1880
        %v1913 = vsub.f32 %v1833, %v1880
        %v1914 = vsub.f32 %v1834, %v1883
        %v1915 = vsub.f32 %v1835, %v1883
        %v1916 = vmul.f32 %v1884, 1.442695
        %v1917 = vpow.pop %v1916
        %v1918 = vmul.f32 %v1885, 1.442695
        %v1919 = vpow.pop %v1918
        %v1920 = vmul.f32 %v1886, 1.442695
        %v1921 = vpow.pop %v1920
        %v1922 = vmul.f32 %v1887, 1.442695
        %v1923 = vpow.pop %v1922
        %v1924 = vmul.f32 %v1888, 1.442695
        %v1925 = vpow.pop %v1924
        %v1926 = vmul.f32 %v1889, 1.442695
        %v1927 = vpow.pop %v1926
        %v1928 = vmul.f32 %v1890, 1.442695
        %v1929 = vpow.pop %v1928
        %v1930 = vmul.f32 %v1891, 1.442695
        %v1931 = vpow.pop %v1930
        %v1932 = vmul.f32 %v1892, 1.442695
        %v1933 = vpow.pop %v1932
        %v1934 = vmul.f32 %v1893, 1.442695
        %v1935 = vpow.pop %v1934
        %v1936 = vmul.f32 %v1894, 1.442695
        %v1937 = vpow.pop %v1936
        %v1938 = vmul.f32 %v1895, 1.442695
        %v1939 = vpow.pop %v1938
        %v1940 = vmul.f32 %v1896, 1.442695
        %v1941 = vpow.pop %v1940
        %v1942 = vmul.f32 %v1897, 1.442695
        %v1943 = vpow.pop %v1942
        %v1944 = vmul.f32 %v1898, 1.442695
        %v1945 = vpow.pop %v1944
        %v1946 = vmul.f32 %v1899, 1.442695
        %v1947 = vpow.pop %v1946
        %v1948 = vmul.f32 %v1900, 1.442695
        %v1949 = vpow.pop %v1948
        %v1950 = vmul.f32 %v1901, 1.442695
        %v1951 = vpow.pop %v1950
        %v1952 = vmul.f32 %v1902, 1.442695
        %v1953 = vpow.pop %v1952
        %v1954 = vmul.f32 %v1903, 1.442695
        %v1955 = vpow.pop %v1954
        %v1956 = vmul.f32 %v1904, 1.442695
        %v1957 = vpow.pop %v1956
        %v1958 = vmul.f32 %v1905, 1.442695
        %v1959 = vpow.pop %v1958
        %v1960 = vmul.f32 %v1906, 1.442695
        %v1961 = vpow.pop %v1960
        %v1962 = vmul.f32 %v1907, 1.442695
        %v1963 = vpow.pop %v1962
        %v1964 = vmul.f32 %v1908, 1.442695
        %v1965 = vpow.pop %v1964
        %v1966 = vmul.f32 %v1909, 1.442695
        %v1967 = vpow.pop %v1966
        %v1968 = vmul.f32 %v1910, 1.442695
        %v1969 = vpow.pop %v1968
        %v1970 = vmul.f32 %v1911, 1.442695
        %v1971 = vpow.pop %v1970
        %v1972 = vmul.f32 %v1912, 1.442695
        %v1973 = vpow.pop %v1972
        %v1974 = vmul.f32 %v1913, 1.442695
        %v1975 = vpow.pop %v1974
        %v1976 = vmul.f32 %v1914, 1.442695
        %v1977 = vpow.pop %v1976
        %v1978 = vmul.f32 %v1915, 1.442695
        %v1979 = vpow.pop %v1978
        %v1980 = vadd.f32 %v1917, %v1919
        %1981 = vadd.xlane.f32.xlu0 %v1980
        %v1982 = vpop.xlane.xlu0 %1981
        %v1983 = vadd.f32 %v1921, %v1923
        %1984 = vadd.xlane.f32.xlu0 %v1983
        %v1985 = vpop.xlane.xlu0 %1984
        %v1986 = vadd.f32 %v1925, %v1927
        %1987 = vadd.xlane.f32.xlu0 %v1986
        %v1988 = vpop.xlane.xlu0 %1987
        %v1989 = vadd.f32 %v1929, %v1931
        %1990 = vadd.xlane.f32.xlu0 %v1989
        %v1991 = vpop.xlane.xlu0 %1990
        %v1992 = vadd.f32 %v1933, %v1935
        %1993 = vadd.xlane.f32.xlu0 %v1992
        %v1994 = vpop.xlane.xlu0 %1993
        %v1995 = vadd.f32 %v1937, %v1939
        %1996 = vadd.xlane.f32.xlu0 %v1995
        %v1997 = vpop.xlane.xlu0 %1996
        %v1998 = vadd.f32 %v1941, %v1943
        %1999 = vadd.xlane.f32.xlu0 %v1998
        %v2000 = vpop.xlane.xlu0 %1999
        %v2001 = vadd.f32 %v1945, %v1947
        %2002 = vadd.xlane.f32.xlu0 %v2001
        %v2003 = vpop.xlane.xlu0 %2002
        %v2004 = vadd.f32 %v1949, %v1951
        %2005 = vadd.xlane.f32.xlu0 %v2004
        %v2006 = vpop.xlane.xlu0 %2005
        %v2007 = vadd.f32 %v1953, %v1955
        %2008 = vadd.xlane.f32.xlu0 %v2007
        %v2009 = vpop.xlane.xlu0 %2008
        %v2010 = vadd.f32 %v1957, %v1959
        %2011 = vadd.xlane.f32.xlu0 %v2010
        %v2012 = vpop.xlane.xlu0 %2011
        %v2013 = vadd.f32 %v1961, %v1963
        %2014 = vadd.xlane.f32.xlu0 %v2013
        %v2015 = vpop.xlane.xlu0 %2014
        %v2016 = vadd.f32 %v1965, %v1967
        %2017 = vadd.xlane.f32.xlu0 %v2016
        %v2018 = vpop.xlane.xlu0 %2017
        %v2019 = vadd.f32 %v1969, %v1971
        %2020 = vadd.xlane.f32.xlu0 %v2019
        %v2021 = vpop.xlane.xlu0 %2020
        %v2022 = vadd.f32 %v1973, %v1975
        %2023 = vadd.xlane.f32.xlu0 %v2022
        %v2024 = vpop.xlane.xlu0 %2023
        %v2025 = vadd.f32 %v1977, %v1979
        %2026 = vadd.xlane.f32.xlu0 %v2025
        %v2027 = vpop.xlane.xlu0 %2026
        %v2028 = vpack.c.bf16 %v1921, %v1917
        %v2029 = vpack.c.bf16 %v1923, %v1919
        %v2030 = vpack.c.bf16 %v1929, %v1925
        %v2031 = vpack.c.bf16 %v1931, %v1927
        %v2032 = vpack.c.bf16 %v1937, %v1933
        %v2033 = vpack.c.bf16 %v1939, %v1935
        %v2034 = vpack.c.bf16 %v1945, %v1941
        %v2035 = vpack.c.bf16 %v1947, %v1943
        %v2036 = vpack.c.bf16 %v1953, %v1949
        %v2037 = vpack.c.bf16 %v1955, %v1951
        %v2038 = vpack.c.bf16 %v1961, %v1957
        %v2039 = vpack.c.bf16 %v1963, %v1959
        %v2040 = vpack.c.bf16 %v1969, %v1965
        %v2041 = vpack.c.bf16 %v1971, %v1967
        %v2042 = vpack.c.bf16 %v1977, %v1973
        %v2043 = vpack.c.bf16 %v1979, %v1975
        %2044 = vmatprep.subr.bf16.mxu0 0
        %2045 = vmatpush1.bf16.msra.mxu0 %v1482
        %2046 = vmatprep.subr.bf16.mxu0 0
        %2047 = vmatpush1.bf16.msra.mxu0 %v1483
        %2048 = vmatprep.subr.bf16.mxu0 0
        %2049 = vmatpush1.bf16.msra.mxu0 %v1484
        %2050 = vmatprep.subr.bf16.mxu0 0
        %2051 = vmatpush1.bf16.msra.mxu0 %v1485
        %2052 = vmatprep.subr.bf16.mxu0 0
        %2053 = vmatpush1.bf16.msra.mxu0 %v1486
        %2054 = vmatprep.subr.bf16.mxu0 0
        %2055 = vmatpush1.bf16.msra.mxu0 %v1487
        %2056 = vmatprep.subr.bf16.mxu0 0
        %2057 = vmatpush1.bf16.msra.mxu0 %v1488
        %2058 = vmatprep.subr.bf16.mxu0 0
        %2059 = vmatpush1.bf16.msra.mxu0 %v1489
        %2060 = vmatprep.subr.bf16.mxu0 0
        %2061 = vmatpush1.bf16.msra.mxu0 %v1490
        %2062 = vmatprep.subr.bf16.mxu0 0
        %2063 = vmatpush1.bf16.msra.mxu0 %v1491
        %2064 = vmatprep.subr.bf16.mxu0 0
        %2065 = vmatpush1.bf16.msra.mxu0 %v1492
        %2066 = vmatprep.subr.bf16.mxu0 0
        %2067 = vmatpush1.bf16.msra.mxu0 %v1493
        %2068 = vmatprep.subr.bf16.mxu0 0
        %2069 = vmatpush1.bf16.msra.mxu0 %v1494
        %2070 = vmatprep.subr.bf16.mxu0 0
        %2071 = vmatpush1.bf16.msra.mxu0 %v1495
        %2072 = vmatprep.subr.bf16.mxu0 0
        %2073 = vmatpush1.bf16.msra.mxu0 %v1496
        %2074 = vmatprep.subr.bf16.mxu0 0
        %2075 = vmatpush1.bf16.msra.mxu0 %v1497
        %2076 = vmatprep.mubr.bf16.mxu0 %v2029
        %2077 = vmatmul.mubr.bf16.gmra.mrb[0].mxu0 %v2028
        %v2078 = vpop.f32.mrb[0].mxu0
        %v2079 = vadd.f32 0.0, %v2078
        %v2080 = vpop.f32.mrb[0].mxu0
        %v2081 = vpop.f32.mrb[0].mxu0
        %v2082 = vadd.f32 0.0, %v2081
        %v2083 = vpop.f32.mrb[0].mxu0
        %2084 = vmatprep.mubr.bf16.mxu0 %v2031
        %2085 = vmatmul.mubr.bf16.gmra.mrb[0].mxu0 %v2030
        %v2086 = vpop.f32.mrb[0].mxu0
        %v2087 = vadd.f32 0.0, %v2086
        %v2088 = vpop.f32.mrb[0].mxu0
        %v2089 = vpop.f32.mrb[0].mxu0
        %v2090 = vadd.f32 0.0, %v2089
        %v2091 = vpop.f32.mrb[0].mxu0
        %2092 = vmatprep.mubr.bf16.mxu0 %v2033
        %2093 = vmatmul.mubr.bf16.gmra.mrb[0].mxu0 %v2032
        %v2094 = vpop.f32.mrb[0].mxu0
        %v2095 = vadd.f32 0.0, %v2094
        %v2096 = vpop.f32.mrb[0].mxu0
        %v2097 = vpop.f32.mrb[0].mxu0
        %v2098 = vadd.f32 0.0, %v2097
        %v2099 = vpop.f32.mrb[0].mxu0
        %2100 = vmatprep.mubr.bf16.mxu0 %v2035
        %2101 = vmatmul.mubr.bf16.gmra.mrb[0].mxu0 %v2034
        %v2102 = vpop.f32.mrb[0].mxu0
        %v2103 = vadd.f32 0.0, %v2102
        %v2104 = vpop.f32.mrb[0].mxu0
        %v2105 = vpop.f32.mrb[0].mxu0
        %v2106 = vadd.f32 0.0, %v2105
        %v2107 = vpop.f32.mrb[0].mxu0
        %2108 = vmatprep.mubr.bf16.mxu0 %v2037
        %2109 = vmatmul.mubr.bf16.gmra.mrb[0].mxu0 %v2036
        %v2110 = vpop.f32.mrb[0].mxu0
        %v2111 = vadd.f32 0.0, %v2110
        %v2112 = vpop.f32.mrb[0].mxu0
        %v2113 = vpop.f32.mrb[0].mxu0
        %v2114 = vadd.f32 0.0, %v2113
        %v2115 = vpop.f32.mrb[0].mxu0
        %2116 = vmatprep.mubr.bf16.mxu0 %v2039
        %2117 = vmatmul.mubr.bf16.gmra.mrb[0].mxu0 %v2038
        %v2118 = vpop.f32.mrb[0].mxu0
        %v2119 = vadd.f32 0.0, %v2118
        %v2120 = vpop.f32.mrb[0].mxu0
        %v2121 = vpop.f32.mrb[0].mxu0
        %v2122 = vadd.f32 0.0, %v2121
        %v2123 = vpop.f32.mrb[0].mxu0
        %2124 = vmatprep.mubr.bf16.mxu0 %v2041
        %2125 = vmatmul.mubr.bf16.gmra.mrb[0].mxu0 %v2040
        %v2126 = vpop.f32.mrb[0].mxu0
        %v2127 = vadd.f32 0.0, %v2126
        %v2128 = vpop.f32.mrb[0].mxu0
        %v2129 = vpop.f32.mrb[0].mxu0
        %v2130 = vadd.f32 0.0, %v2129
        %v2131 = vpop.f32.mrb[0].mxu0
        %2132 = vmatprep.mubr.bf16.mxu0 %v2043
        %2133 = vmatmul.mubr.bf16.gmra.mrb[0].mxu0 %v2042
        %v2134 = vpop.f32.mrb[0].mxu0
        %v2135 = vadd.f32 0.0, %v2134
        %v2136 = vpop.f32.mrb[0].mxu0
        %v2137 = vpop.f32.mrb[0].mxu0
        %v2138 = vadd.f32 0.0, %v2137
        %v2139 = vpop.f32.mrb[0].mxu0
        %2140 = vdwg.mxu0
        %v2141 = vrcp.pop %v1982
        %v2142 = vrcp.pop %v1985
        %v2143 = vrcp.pop %v1988
        %v2144 = vrcp.pop %v1991
        %v2145 = vrcp.pop %v1994
        %v2146 = vrcp.pop %v1997
        %v2147 = vrcp.pop %v2000
        %v2148 = vrcp.pop %v2003
        %v2149 = vrcp.pop %v2006
        %v2150 = vrcp.pop %v2009
        %v2151 = vrcp.pop %v2012
        %v2152 = vrcp.pop %v2015
        %v2153 = vrcp.pop %v2018
        %v2154 = vrcp.pop %v2021
        %v2155 = vrcp.pop %v2024
        %v2156 = vrcp.pop %v2027
        %v2157 = vmul.f32 %v2079, %v2141
        %v2158 = vmul.f32 %v2082, %v2142
        %v2159 = vmul.f32 %v2087, %v2143
        %v2160 = vmul.f32 %v2090, %v2144
        %v2161 = vmul.f32 %v2095, %v2145
        %v2162 = vmul.f32 %v2098, %v2146
        %v2163 = vmul.f32 %v2103, %v2147
        %v2164 = vmul.f32 %v2106, %v2148
        %v2165 = vmul.f32 %v2111, %v2149
        %v2166 = vmul.f32 %v2114, %v2150
        %v2167 = vmul.f32 %v2119, %v2151
        %v2168 = vmul.f32 %v2122, %v2152
        %v2169 = vmul.f32 %v2127, %v2153
        %v2170 = vmul.f32 %v2130, %v2154
        %v2171 = vmul.f32 %v2135, %v2155
        %v2172 = vmul.f32 %v2138, %v2156
        %v2173 = vpack.c.bf16 %v2158, %v2157
        %v2174 = vpack.c.bf16 %v2160, %v2159
        %v2175 = vpack.c.bf16 %v2162, %v2161
        %v2176 = vpack.c.bf16 %v2164, %v2163
        %v2177 = vpack.c.bf16 %v2166, %v2165
        %v2178 = vpack.c.bf16 %v2168, %v2167
        %v2179 = vpack.c.bf16 %v2170, %v2169
        %v2180 = vpack.c.bf16 %v2172, %v2171
        %2181 = vst [vmem:[#allocation2 + $0x8] sm:$0xff] %v2173
        %2182 = vst [vmem:[#allocation2 + $0x18] sm:$0xff] %v2174
        %2183 = vst [vmem:[#allocation2 + $0x28] sm:$0xff] %v2175
        %2184 = vst [vmem:[#allocation2 + $0x38] sm:$0xff] %v2176
        %2185 = vst [vmem:[#allocation2 + $0x48] sm:$0xff] %v2177
        %2186 = vst [vmem:[#allocation2 + $0x58] sm:$0xff] %v2178
        %2187 = vst [vmem:[#allocation2 + $0x68] sm:$0xff] %v2179
        %2188 = vst [vmem:[#allocation2 + $0x78] sm:$0xff] %v2180
        %v2189 = vld [vmem:[#allocation3] sm:$0xff]
        %v2190 = vld [vmem:[#allocation3 + $0x8] sm:$0xff]
        %v2191 = vld [vmem:[#allocation3 + $0x10] sm:$0xff]
        %v2192 = vld [vmem:[#allocation3 + $0x18] sm:$0xff]
        %v2193 = vld [vmem:[#allocation3 + $0x20] sm:$0xff]
        %v2194 = vld [vmem:[#allocation3 + $0x28] sm:$0xff]
        %v2195 = vld [vmem:[#allocation3 + $0x30] sm:$0xff]
        %v2196 = vld [vmem:[#allocation3 + $0x38] sm:$0xff]
        %v2197 = vld [vmem:[#allocation3 + $0x40] sm:$0xff]
        %v2198 = vld [vmem:[#allocation3 + $0x48] sm:$0xff]
        %v2199 = vld [vmem:[#allocation3 + $0x50] sm:$0xff]
        %v2200 = vld [vmem:[#allocation3 + $0x58] sm:$0xff]
        %v2201 = vld [vmem:[#allocation3 + $0x60] sm:$0xff]
        %v2202 = vld [vmem:[#allocation3 + $0x68] sm:$0xff]
        %v2203 = vld [vmem:[#allocation3 + $0x70] sm:$0xff]
        %v2204 = vld [vmem:[#allocation3 + $0x78] sm:$0xff]
        %v2205 = vld [vmem:[#allocation3 + $0x80] sm:$0xff]
        %v2206 = vld [vmem:[#allocation3 + $0x88] sm:$0xff]
        %v2207 = vld [vmem:[#allocation3 + $0x90] sm:$0xff]
        %v2208 = vld [vmem:[#allocation3 + $0x98] sm:$0xff]
        %v2209 = vld [vmem:[#allocation3 + $0xa0] sm:$0xff]
        %v2210 = vld [vmem:[#allocation3 + $0xa8] sm:$0xff]
        %v2211 = vld [vmem:[#allocation3 + $0xb0] sm:$0xff]
        %v2212 = vld [vmem:[#allocation3 + $0xb8] sm:$0xff]
        %v2213 = vld [vmem:[#allocation3 + $0xc0] sm:$0xff]
        %v2214 = vld [vmem:[#allocation3 + $0xc8] sm:$0xff]
        %v2215 = vld [vmem:[#allocation3 + $0xd0] sm:$0xff]
        %v2216 = vld [vmem:[#allocation3 + $0xd8] sm:$0xff]
        %v2217 = vld [vmem:[#allocation3 + $0xe0] sm:$0xff]
        %v2218 = vld [vmem:[#allocation3 + $0xe8] sm:$0xff]
        %v2219 = vld [vmem:[#allocation3 + $0xf0] sm:$0xff]
        %v2220 = vld [vmem:[#allocation3 + $0xf8] sm:$0xff]
        %v2221 = vld [vmem:[#allocation3 + $0x100] sm:$0xff]
        %v2222 = vld [vmem:[#allocation3 + $0x108] sm:$0xff]
        %v2223 = vld [vmem:[#allocation3 + $0x110] sm:$0xff]
        %v2224 = vld [vmem:[#allocation3 + $0x118] sm:$0xff]
        %v2225 = vld [vmem:[#allocation3 + $0x120] sm:$0xff]
        %v2226 = vld [vmem:[#allocation3 + $0x128] sm:$0xff]
        %v2227 = vld [vmem:[#allocation3 + $0x130] sm:$0xff]
        %v2228 = vld [vmem:[#allocation3 + $0x138] sm:$0xff]
        %v2229 = vld [vmem:[#allocation3 + $0x140] sm:$0xff]
        %v2230 = vld [vmem:[#allocation3 + $0x148] sm:$0xff]
        %v2231 = vld [vmem:[#allocation3 + $0x150] sm:$0xff]
        %v2232 = vld [vmem:[#allocation3 + $0x158] sm:$0xff]
        %v2233 = vld [vmem:[#allocation3 + $0x160] sm:$0xff]
        %v2234 = vld [vmem:[#allocation3 + $0x168] sm:$0xff]
        %v2235 = vld [vmem:[#allocation3 + $0x170] sm:$0xff]
        %v2236 = vld [vmem:[#allocation3 + $0x178] sm:$0xff]
        %v2237 = vld [vmem:[#allocation3 + $0x180] sm:$0xff]
        %v2238 = vld [vmem:[#allocation3 + $0x188] sm:$0xff]
        %v2239 = vld [vmem:[#allocation3 + $0x190] sm:$0xff]
        %v2240 = vld [vmem:[#allocation3 + $0x198] sm:$0xff]
        %v2241 = vld [vmem:[#allocation3 + $0x1a0] sm:$0xff]
        %v2242 = vld [vmem:[#allocation3 + $0x1a8] sm:$0xff]
        %v2243 = vld [vmem:[#allocation3 + $0x1b0] sm:$0xff]
        %v2244 = vld [vmem:[#allocation3 + $0x1b8] sm:$0xff]
        %v2245 = vld [vmem:[#allocation3 + $0x1c0] sm:$0xff]
        %v2246 = vld [vmem:[#allocation3 + $0x1c8] sm:$0xff]
        %v2247 = vld [vmem:[#allocation3 + $0x1d0] sm:$0xff]
        %v2248 = vld [vmem:[#allocation3 + $0x1d8] sm:$0xff]
        %v2249 = vld [vmem:[#allocation3 + $0x1e0] sm:$0xff]
        %v2250 = vld [vmem:[#allocation3 + $0x1e8] sm:$0xff]
        %v2251 = vld [vmem:[#allocation3 + $0x1f0] sm:$0xff]
        %v2252 = vld [vmem:[#allocation3 + $0x1f8] sm:$0xff]
        %v2253 = vld [vmem:[#allocation2] sm:$0xff]
        %v2254 = vld [vmem:[#allocation2 + $0x8] sm:$0xff]
        %v2255 = vld [vmem:[#allocation2 + $0x10] sm:$0xff]
        %v2256 = vld [vmem:[#allocation2 + $0x18] sm:$0xff]
        %v2257 = vld [vmem:[#allocation2 + $0x20] sm:$0xff]
        %v2258 = vld [vmem:[#allocation2 + $0x28] sm:$0xff]
        %v2259 = vld [vmem:[#allocation2 + $0x30] sm:$0xff]
        %v2260 = vld [vmem:[#allocation2 + $0x38] sm:$0xff]
        %v2261 = vld [vmem:[#allocation2 + $0x40] sm:$0xff]
        %v2262 = vld [vmem:[#allocation2 + $0x48] sm:$0xff]
        %v2263 = vld [vmem:[#allocation2 + $0x50] sm:$0xff]
        %v2264 = vld [vmem:[#allocation2 + $0x58] sm:$0xff]
        %v2265 = vld [vmem:[#allocation2 + $0x60] sm:$0xff]
        %v2266 = vld [vmem:[#allocation2 + $0x68] sm:$0xff]
        %v2267 = vld [vmem:[#allocation2 + $0x70] sm:$0xff]
        %v2268 = vld [vmem:[#allocation2 + $0x78] sm:$0xff]
        %s2269 = smul.u32 %s25, 128
        %s2270 = smul.addr %s2269, 4
        %s2271 = scalar_lea.vmem %s3, %s2270
        %v2272 = vld [vmem:[%s2271] sm:$0xff]
        %v2273 = vld [vmem:[%s2271 + $0x8] sm:$0xff]
        %v2274 = vld [vmem:[%s2271 + $0x10] sm:$0xff]
        %v2275 = vld [vmem:[%s2271 + $0x18] sm:$0xff]
        %v2276 = vld [vmem:[%s2271 + $0x20] sm:$0xff]
        %v2277 = vld [vmem:[%s2271 + $0x28] sm:$0xff]
        %v2278 = vld [vmem:[%s2271 + $0x30] sm:$0xff]
        %v2279 = vld [vmem:[%s2271 + $0x38] sm:$0xff]
        %v2280 = vld [vmem:[%s2271 + $0x40] sm:$0xff]
        %v2281 = vld [vmem:[%s2271 + $0x48] sm:$0xff]
        %v2282 = vld [vmem:[%s2271 + $0x50] sm:$0xff]
        %v2283 = vld [vmem:[%s2271 + $0x58] sm:$0xff]
        %v2284 = vld [vmem:[%s2271 + $0x60] sm:$0xff]
        %v2285 = vld [vmem:[%s2271 + $0x68] sm:$0xff]
        %v2286 = vld [vmem:[%s2271 + $0x70] sm:$0xff]
        %v2287 = vld [vmem:[%s2271 + $0x78] sm:$0xff]
        %v2288 = vld [vmem:[%s2271 + $0x80] sm:$0xff]
        %v2289 = vld [vmem:[%s2271 + $0x88] sm:$0xff]
        %v2290 = vld [vmem:[%s2271 + $0x90] sm:$0xff]
        %v2291 = vld [vmem:[%s2271 + $0x98] sm:$0xff]
        %v2292 = vld [vmem:[%s2271 + $0xa0] sm:$0xff]
        %v2293 = vld [vmem:[%s2271 + $0xa8] sm:$0xff]
        %v2294 = vld [vmem:[%s2271 + $0xb0] sm:$0xff]
        %v2295 = vld [vmem:[%s2271 + $0xb8] sm:$0xff]
        %v2296 = vld [vmem:[%s2271 + $0xc0] sm:$0xff]
        %v2297 = vld [vmem:[%s2271 + $0xc8] sm:$0xff]
        %v2298 = vld [vmem:[%s2271 + $0xd0] sm:$0xff]
        %v2299 = vld [vmem:[%s2271 + $0xd8] sm:$0xff]
        %v2300 = vld [vmem:[%s2271 + $0xe0] sm:$0xff]
        %v2301 = vld [vmem:[%s2271 + $0xe8] sm:$0xff]
        %v2302 = vld [vmem:[%s2271 + $0xf0] sm:$0xff]
        %v2303 = vld [vmem:[%s2271 + $0xf8] sm:$0xff]
        %v2304 = vld [vmem:[%s2271 + $0x100] sm:$0xff]
        %v2305 = vld [vmem:[%s2271 + $0x108] sm:$0xff]
        %v2306 = vld [vmem:[%s2271 + $0x110] sm:$0xff]
        %v2307 = vld [vmem:[%s2271 + $0x118] sm:$0xff]
        %v2308 = vld [vmem:[%s2271 + $0x120] sm:$0xff]
        %v2309 = vld [vmem:[%s2271 + $0x128] sm:$0xff]
        %v2310 = vld [vmem:[%s2271 + $0x130] sm:$0xff]
        %v2311 = vld [vmem:[%s2271 + $0x138] sm:$0xff]
        %v2312 = vld [vmem:[%s2271 + $0x140] sm:$0xff]
        %v2313 = vld [vmem:[%s2271 + $0x148] sm:$0xff]
        %v2314 = vld [vmem:[%s2271 + $0x150] sm:$0xff]
        %v2315 = vld [vmem:[%s2271 + $0x158] sm:$0xff]
        %v2316 = vld [vmem:[%s2271 + $0x160] sm:$0xff]
        %v2317 = vld [vmem:[%s2271 + $0x168] sm:$0xff]
        %v2318 = vld [vmem:[%s2271 + $0x170] sm:$0xff]
        %v2319 = vld [vmem:[%s2271 + $0x178] sm:$0xff]
        %v2320 = vld [vmem:[%s2271 + $0x180] sm:$0xff]
        %v2321 = vld [vmem:[%s2271 + $0x188] sm:$0xff]
        %v2322 = vld [vmem:[%s2271 + $0x190] sm:$0xff]
        %v2323 = vld [vmem:[%s2271 + $0x198] sm:$0xff]
        %v2324 = vld [vmem:[%s2271 + $0x1a0] sm:$0xff]
        %v2325 = vld [vmem:[%s2271 + $0x1a8] sm:$0xff]
        %v2326 = vld [vmem:[%s2271 + $0x1b0] sm:$0xff]
        %v2327 = vld [vmem:[%s2271 + $0x1b8] sm:$0xff]
        %v2328 = vld [vmem:[%s2271 + $0x1c0] sm:$0xff]
        %v2329 = vld [vmem:[%s2271 + $0x1c8] sm:$0xff]
        %v2330 = vld [vmem:[%s2271 + $0x1d0] sm:$0xff]
        %v2331 = vld [vmem:[%s2271 + $0x1d8] sm:$0xff]
        %v2332 = vld [vmem:[%s2271 + $0x1e0] sm:$0xff]
        %v2333 = vld [vmem:[%s2271 + $0x1e8] sm:$0xff]
        %v2334 = vld [vmem:[%s2271 + $0x1f0] sm:$0xff]
        %v2335 = vld [vmem:[%s2271 + $0x1f8] sm:$0xff]
        %v2400 = vunpack.c.l.b16 %v2272
        %v2401 = vunpack.c.h.b16 %v2272
        %v2402 = vunpack.c.l.b16 %v2273
        %v2403 = vunpack.c.h.b16 %v2273
        %v2404 = vunpack.c.l.b16 %v2274
        %v2405 = vunpack.c.h.b16 %v2274
        %v2406 = vunpack.c.l.b16 %v2275
        %v2407 = vunpack.c.h.b16 %v2275
        %v2408 = vunpack.c.l.b16 %v2276
        %v2409 = vunpack.c.h.b16 %v2276
        %v2410 = vunpack.c.l.b16 %v2277
        %v2411 = vunpack.c.h.b16 %v2277
        %v2412 = vunpack.c.l.b16 %v2278
        %v2413 = vunpack.c.h.b16 %v2278
        %v2414 = vunpack.c.l.b16 %v2279
        %v2415 = vunpack.c.h.b16 %v2279
        %v2416 = vunpack.c.l.b16 %v2280
        %v2417 = vunpack.c.h.b16 %v2280
        %v2418 = vunpack.c.l.b16 %v2281
        %v2419 = vunpack.c.h.b16 %v2281
        %v2420 = vunpack.c.l.b16 %v2282
        %v2421 = vunpack.c.h.b16 %v2282
        %v2422 = vunpack.c.l.b16 %v2283
        %v2423 = vunpack.c.h.b16 %v2283
        %v2424 = vunpack.c.l.b16 %v2284
        %v2425 = vunpack.c.h.b16 %v2284
        %v2426 = vunpack.c.l.b16 %v2285
        %v2427 = vunpack.c.h.b16 %v2285
        %v2428 = vunpack.c.l.b16 %v2286
        %v2429 = vunpack.c.h.b16 %v2286
        %v2430 = vunpack.c.l.b16 %v2287
        %v2431 = vunpack.c.h.b16 %v2287
        %v2432 = vunpack.c.l.b16 %v2288
        %v2433 = vunpack.c.h.b16 %v2288
        %v2434 = vunpack.c.l.b16 %v2289
        %v2435 = vunpack.c.h.b16 %v2289
        %v2436 = vunpack.c.l.b16 %v2290
        %v2437 = vunpack.c.h.b16 %v2290
        %v2438 = vunpack.c.l.b16 %v2291
        %v2439 = vunpack.c.h.b16 %v2291
        %v2440 = vunpack.c.l.b16 %v2292
        %v2441 = vunpack.c.h.b16 %v2292
        %v2442 = vunpack.c.l.b16 %v2293
        %v2443 = vunpack.c.h.b16 %v2293
        %v2444 = vunpack.c.l.b16 %v2294
        %v2445 = vunpack.c.h.b16 %v2294
        %v2446 = vunpack.c.l.b16 %v2295
        %v2447 = vunpack.c.h.b16 %v2295
        %v2448 = vunpack.c.l.b16 %v2296
        %v2449 = vunpack.c.h.b16 %v2296
        %v2450 = vunpack.c.l.b16 %v2297
        %v2451 = vunpack.c.h.b16 %v2297
        %v2452 = vunpack.c.l.b16 %v2298
        %v2453 = vunpack.c.h.b16 %v2298
        %v2454 = vunpack.c.l.b16 %v2299
        %v2455 = vunpack.c.h.b16 %v2299
        %v2456 = vunpack.c.l.b16 %v2300
        %v2457 = vunpack.c.h.b16 %v2300
        %v2458 = vunpack.c.l.b16 %v2301
        %v2459 = vunpack.c.h.b16 %v2301
        %v2460 = vunpack.c.l.b16 %v2302
        %v2461 = vunpack.c.h.b16 %v2302
        %v2462 = vunpack.c.l.b16 %v2303
        %v2463 = vunpack.c.h.b16 %v2303
        %v2464 = vunpack.c.l.b16 %v2304
        %v2465 = vunpack.c.h.b16 %v2304
        %v2466 = vunpack.c.l.b16 %v2305
        %v2467 = vunpack.c.h.b16 %v2305
        %v2468 = vunpack.c.l.b16 %v2306
        %v2469 = vunpack.c.h.b16 %v2306
        %v2470 = vunpack.c.l.b16 %v2307
        %v2471 = vunpack.c.h.b16 %v2307
        %v2472 = vunpack.c.l.b16 %v2308
        %v2473 = vunpack.c.h.b16 %v2308
        %v2474 = vunpack.c.l.b16 %v2309
        %v2475 = vunpack.c.h.b16 %v2309
        %v2476 = vunpack.c.l.b16 %v2310
        %v2477 = vunpack.c.h.b16 %v2310
        %v2478 = vunpack.c.l.b16 %v2311
        %v2479 = vunpack.c.h.b16 %v2311
        %v2480 = vunpack.c.l.b16 %v2312
        %v2481 = vunpack.c.h.b16 %v2312
        %v2482 = vunpack.c.l.b16 %v2313
        %v2483 = vunpack.c.h.b16 %v2313
        %v2484 = vunpack.c.l.b16 %v2314
        %v2485 = vunpack.c.h.b16 %v2314
        %v2486 = vunpack.c.l.b16 %v2315
        %v2487 = vunpack.c.h.b16 %v2315
        %v2488 = vunpack.c.l.b16 %v2316
        %v2489 = vunpack.c.h.b16 %v2316
        %v2490 = vunpack.c.l.b16 %v2317
        %v2491 = vunpack.c.h.b16 %v2317
        %v2492 = vunpack.c.l.b16 %v2318
        %v2493 = vunpack.c.h.b16 %v2318
        %v2494 = vunpack.c.l.b16 %v2319
        %v2495 = vunpack.c.h.b16 %v2319
        %v2496 = vunpack.c.l.b16 %v2320
        %v2497 = vunpack.c.h.b16 %v2320
        %v2498 = vunpack.c.l.b16 %v2321
        %v2499 = vunpack.c.h.b16 %v2321
        %v2500 = vunpack.c.l.b16 %v2322
        %v2501 = vunpack.c.h.b16 %v2322
        %v2502 = vunpack.c.l.b16 %v2323
        %v2503 = vunpack.c.h.b16 %v2323
        %v2504 = vunpack.c.l.b16 %v2324
        %v2505 = vunpack.c.h.b16 %v2324
        %v2506 = vunpack.c.l.b16 %v2325
        %v2507 = vunpack.c.h.b16 %v2325
        %v2508 = vunpack.c.l.b16 %v2326
        %v2509 = vunpack.c.h.b16 %v2326
        %v2510 = vunpack.c.l.b16 %v2327
        %v2511 = vunpack.c.h.b16 %v2327
        %v2512 = vunpack.c.l.b16 %v2328
        %v2513 = vunpack.c.h.b16 %v2328
        %v2514 = vunpack.c.l.b16 %v2329
        %v2515 = vunpack.c.h.b16 %v2329
        %v2516 = vunpack.c.l.b16 %v2330
        %v2517 = vunpack.c.h.b16 %v2330
        %v2518 = vunpack.c.l.b16 %v2331
        %v2519 = vunpack.c.h.b16 %v2331
        %v2520 = vunpack.c.l.b16 %v2332
        %v2521 = vunpack.c.h.b16 %v2332
        %v2522 = vunpack.c.l.b16 %v2333
        %v2523 = vunpack.c.h.b16 %v2333
        %v2524 = vunpack.c.l.b16 %v2334
        %v2525 = vunpack.c.h.b16 %v2334
        %v2526 = vunpack.c.l.b16 %v2335
        %v2527 = vunpack.c.h.b16 %v2335
        %v2528 = vpack.c.b16 %v2404, %v2400
        %v2529 = vpack.c.b16 %v2405, %v2401
        %v2530 = vpack.c.b16 %v2406, %v2402
        %v2531 = vpack.c.b16 %v2407, %v2403
        %v2532 = vpack.c.b16 %v2412, %v2408
        %v2533 = vpack.c.b16 %v2413, %v2409
        %v2534 = vpack.c.b16 %v2414, %v2410
        %v2535 = vpack.c.b16 %v2415, %v2411
        %v2536 = vpack.c.b16 %v2420, %v2416
        %v2537 = vpack.c.b16 %v2421, %v2417
        %v2538 = vpack.c.b16 %v2422, %v2418
        %v2539 = vpack.c.b16 %v2423, %v2419
        %v2540 = vpack.c.b16 %v2428, %v2424
        %v2541 = vpack.c.b16 %v2429, %v2425
        %v2542 = vpack.c.b16 %v2430, %v2426
        %v2543 = vpack.c.b16 %v2431, %v2427
        %v2544 = vpack.c.b16 %v2436, %v2432
        %v2545 = vpack.c.b16 %v2437, %v2433
        %v2546 = vpack.c.b16 %v2438, %v2434
        %v2547 = vpack.c.b16 %v2439, %v2435
        %v2548 = vpack.c.b16 %v2444, %v2440
        %v2549 = vpack.c.b16 %v2445, %v2441
        %v2550 = vpack.c.b16 %v2446, %v2442
        %v2551 = vpack.c.b16 %v2447, %v2443
        %v2552 = vpack.c.b16 %v2452, %v2448
        %v2553 = vpack.c.b16 %v2453, %v2449
        %v2554 = vpack.c.b16 %v2454, %v2450
        %v2555 = vpack.c.b16 %v2455, %v2451
        %v2556 = vpack.c.b16 %v2460, %v2456
        %v2557 = vpack.c.b16 %v2461, %v2457
        %v2558 = vpack.c.b16 %v2462, %v2458
        %v2559 = vpack.c.b16 %v2463, %v2459
        %v2560 = vpack.c.b16 %v2468, %v2464
        %v2561 = vpack.c.b16 %v2469, %v2465
        %v2562 = vpack.c.b16 %v2470, %v2466
        %v2563 = vpack.c.b16 %v2471, %v2467
        %v2564 = vpack.c.b16 %v2476, %v2472
        %v2565 = vpack.c.b16 %v2477, %v2473
        %v2566 = vpack.c.b16 %v2478, %v2474
        %v2567 = vpack.c.b16 %v2479, %v2475
        %v2568 = vpack.c.b16 %v2484, %v2480
        %v2569 = vpack.c.b16 %v2485, %v2481
        %v2570 = vpack.c.b16 %v2486, %v2482
        %v2571 = vpack.c.b16 %v2487, %v2483
        %v2572 = vpack.c.b16 %v2492, %v2488
        %v2573 = vpack.c.b16 %v2493, %v2489
        %v2574 = vpack.c.b16 %v2494, %v2490
        %v2575 = vpack.c.b16 %v2495, %v2491
        %v2576 = vpack.c.b16 %v2500, %v2496
        %v2577 = vpack.c.b16 %v2501, %v2497
        %v2578 = vpack.c.b16 %v2502, %v2498
        %v2579 = vpack.c.b16 %v2503, %v2499
        %v2580 = vpack.c.b16 %v2508, %v2504
        %v2581 = vpack.c.b16 %v2509, %v2505
        %v2582 = vpack.c.b16 %v2510, %v2506
        %v2583 = vpack.c.b16 %v2511, %v2507
        %v2584 = vpack.c.b16 %v2516, %v2512
        %v2585 = vpack.c.b16 %v2517, %v2513
        %v2586 = vpack.c.b16 %v2518, %v2514
        %v2587 = vpack.c.b16 %v2519, %v2515
        %v2588 = vpack.c.b16 %v2524, %v2520
        %v2589 = vpack.c.b16 %v2525, %v2521
        %v2590 = vpack.c.b16 %v2526, %v2522
        %v2591 = vpack.c.b16 %v2527, %v2523
        %2656 = vmatprep.subr.bf16.mxu0 %v2529
        %2657 = vmatpush1.bf16.msra.mxu0 %v2528
        %2658 = vmatprep.subr.bf16.mxu0 %v2533
        %2659 = vmatpush1.bf16.msra.mxu0 %v2532
        %2660 = vmatprep.subr.bf16.mxu0 %v2537
        %2661 = vmatpush1.bf16.msra.mxu0 %v2536
        %2662 = vmatprep.subr.bf16.mxu0 %v2541
        %2663 = vmatpush1.bf16.msra.mxu0 %v2540
        %2664 = vmatprep.subr.bf16.mxu0 %v2545
        %2665 = vmatpush1.bf16.msra.mxu0 %v2544
        %2666 = vmatprep.subr.bf16.mxu0 %v2549
        %2667 = vmatpush1.bf16.msra.mxu0 %v2548
        %2668 = vmatprep.subr.bf16.mxu0 %v2553
        %2669 = vmatpush1.bf16.msra.mxu0 %v2552
        %2670 = vmatprep.subr.bf16.mxu0 %v2557
        %2671 = vmatpush1.bf16.msra.mxu0 %v2556
        %2672 = vmatprep.subr.bf16.mxu0 %v2561
        %2673 = vmatpush1.bf16.msra.mxu0 %v2560
        %2674 = vmatprep.subr.bf16.mxu0 %v2565
        %2675 = vmatpush1.bf16.msra.mxu0 %v2564
        %2676 = vmatprep.subr.bf16.mxu0 %v2569
        %2677 = vmatpush1.bf16.msra.mxu0 %v2568
        %2678 = vmatprep.subr.bf16.mxu0 %v2573
        %2679 = vmatpush1.bf16.msra.mxu0 %v2572
        %2680 = vmatprep.subr.bf16.mxu0 %v2577
        %2681 = vmatpush1.bf16.msra.mxu0 %v2576
        %2682 = vmatprep.subr.bf16.mxu0 %v2581
        %2683 = vmatpush1.bf16.msra.mxu0 %v2580
        %2684 = vmatprep.subr.bf16.mxu0 %v2585
        %2685 = vmatpush1.bf16.msra.mxu0 %v2584
        %2686 = vmatprep.subr.bf16.mxu0 %v2589
        %2687 = vmatpush1.bf16.msra.mxu0 %v2588
        %2688 = vmatprep.mubr.bf16.mxu0 %v2254
        %2689 = vmatmul.mubr.bf16.gmra.mrb[0].mxu0 %v2253
        %v2690 = vpop.f32.mrb[0].mxu0
        %v2691 = vadd.f32 0.0, %v2690
        %v2692 = vpop.f32.mrb[0].mxu0
        %v2693 = vadd.f32 0.0, %v2692
        %v2694 = vpop.f32.mrb[0].mxu0
        %v2695 = vadd.f32 0.0, %v2694
        %v2696 = vpop.f32.mrb[0].mxu0
        %v2697 = vadd.f32 0.0, %v2696
        %2698 = vmatprep.mubr.bf16.mxu0 %v2256
        %2699 = vmatmul.mubr.bf16.gmra.mrb[0].mxu0 %v2255
        %v2700 = vpop.f32.mrb[0].mxu0
        %v2701 = vadd.f32 0.0, %v2700
        %v2702 = vpop.f32.mrb[0].mxu0
        %v2703 = vadd.f32 0.0, %v2702
        %v2704 = vpop.f32.mrb[0].mxu0
        %v2705 = vadd.f32 0.0, %v2704
        %v2706 = vpop.f32.mrb[0].mxu0
        %v2707 = vadd.f32 0.0, %v2706
        %2708 = vmatprep.mubr.bf16.mxu0 %v2258
        %2709 = vmatmul.mubr.bf16.gmra.mrb[0].mxu0 %v2257
        %v2710 = vpop.f32.mrb[0].mxu0
        %v2711 = vadd.f32 0.0, %v2710
        %v2712 = vpop.f32.mrb[0].mxu0
        %v2713 = vadd.f32 0.0, %v2712
        %v2714 = vpop.f32.mrb[0].mxu0
        %v2715 = vadd.f32 0.0, %v2714
        %v2716 = vpop.f32.mrb[0].mxu0
        %v2717 = vadd.f32 0.0, %v2716
        %2718 = vmatprep.mubr.bf16.mxu0 %v2260
        %2719 = vmatmul.mubr.bf16.gmra.mrb[0].mxu0 %v2259
        %v2720 = vpop.f32.mrb[0].mxu0
        %v2721 = vadd.f32 0.0, %v2720
        %v2722 = vpop.f32.mrb[0].mxu0
        %v2723 = vadd.f32 0.0, %v2722
        %v2724 = vpop.f32.mrb[0].mxu0
        %v2725 = vadd.f32 0.0, %v2724
        %v2726 = vpop.f32.mrb[0].mxu0
        %v2727 = vadd.f32 0.0, %v2726
        %2728 = vmatprep.mubr.bf16.mxu0 %v2262
        %2729 = vmatmul.mubr.bf16.gmra.mrb[0].mxu0 %v2261
        %v2730 = vpop.f32.mrb[0].mxu0
        %v2731 = vadd.f32 0.0, %v2730
        %v2732 = vpop.f32.mrb[0].mxu0
        %v2733 = vadd.f32 0.0, %v2732
        %v2734 = vpop.f32.mrb[0].mxu0
        %v2735 = vadd.f32 0.0, %v2734
        %v2736 = vpop.f32.mrb[0].mxu0
        %v2737 = vadd.f32 0.0, %v2736
        %2738 = vmatprep.mubr.bf16.mxu0 %v2264
        %2739 = vmatmul.mubr.bf16.gmra.mrb[0].mxu0 %v2263
        %v2740 = vpop.f32.mrb[0].mxu0
        %v2741 = vadd.f32 0.0, %v2740
        %v2742 = vpop.f32.mrb[0].mxu0
        %v2743 = vadd.f32 0.0, %v2742
        %v2744 = vpop.f32.mrb[0].mxu0
        %v2745 = vadd.f32 0.0, %v2744
        %v2746 = vpop.f32.mrb[0].mxu0
        %v2747 = vadd.f32 0.0, %v2746
        %2748 = vmatprep.mubr.bf16.mxu0 %v2266
        %2749 = vmatmul.mubr.bf16.gmra.mrb[0].mxu0 %v2265
        %v2750 = vpop.f32.mrb[0].mxu0
        %v2751 = vadd.f32 0.0, %v2750
        %v2752 = vpop.f32.mrb[0].mxu0
        %v2753 = vadd.f32 0.0, %v2752
        %v2754 = vpop.f32.mrb[0].mxu0
        %v2755 = vadd.f32 0.0, %v2754
        %v2756 = vpop.f32.mrb[0].mxu0
        %v2757 = vadd.f32 0.0, %v2756
        %2758 = vmatprep.mubr.bf16.mxu0 %v2268
        %2759 = vmatmul.mubr.bf16.gmra.mrb[0].mxu0 %v2267
        %v2760 = vpop.f32.mrb[0].mxu0
        %v2761 = vadd.f32 0.0, %v2760
        %v2762 = vpop.f32.mrb[0].mxu0
        %v2763 = vadd.f32 0.0, %v2762
        %v2764 = vpop.f32.mrb[0].mxu0
        %v2765 = vadd.f32 0.0, %v2764
        %v2766 = vpop.f32.mrb[0].mxu0
        %v2767 = vadd.f32 0.0, %v2766
        %2768 = vdwg.mxu0
        %2769 = vmatprep.subr.bf16.mxu0 %v2531
        %2770 = vmatpush1.bf16.msra.mxu0 %v2530
        %2771 = vmatprep.subr.bf16.mxu0 %v2535
        %2772 = vmatpush1.bf16.msra.mxu0 %v2534
        %2773 = vmatprep.subr.bf16.mxu0 %v2539
        %2774 = vmatpush1.bf16.msra.mxu0 %v2538
        %2775 = vmatprep.subr.bf16.mxu0 %v2543
        %2776 = vmatpush1.bf16.msra.mxu0 %v2542
        %2777 = vmatprep.subr.bf16.mxu0 %v2547
        %2778 = vmatpush1.bf16.msra.mxu0 %v2546
        %2779 = vmatprep.subr.bf16.mxu0 %v2551
        %2780 = vmatpush1.bf16.msra.mxu0 %v2550
        %2781 = vmatprep.subr.bf16.mxu0 %v2555
        %2782 = vmatpush1.bf16.msra.mxu0 %v2554
        %2783 = vmatprep.subr.bf16.mxu0 %v2559
        %2784 = vmatpush1.bf16.msra.mxu0 %v2558
        %2785 = vmatprep.subr.bf16.mxu0 %v2563
        %2786 = vmatpush1.bf16.msra.mxu0 %v2562
        %2787 = vmatprep.subr.bf16.mxu0 %v2567
        %2788 = vmatpush1.bf16.msra.mxu0 %v2566
        %2789 = vmatprep.subr.bf16.mxu0 %v2571
        %2790 = vmatpush1.bf16.msra.mxu0 %v2570
        %2791 = vmatprep.subr.bf16.mxu0 %v2575
        %2792 = vmatpush1.bf16.msra.mxu0 %v2574
        %2793 = vmatprep.subr.bf16.mxu0 %v2579
        %2794 = vmatpush1.bf16.msra.mxu0 %v2578
        %2795 = vmatprep.subr.bf16.mxu0 %v2583
        %2796 = vmatpush1.bf16.msra.mxu0 %v2582
        %2797 = vmatprep.subr.bf16.mxu0 %v2587
        %2798 = vmatpush1.bf16.msra.mxu0 %v2586
        %2799 = vmatprep.subr.bf16.mxu0 %v2591
        %2800 = vmatpush1.bf16.msra.mxu0 %v2590
        %2801 = vmatprep.mubr.bf16.mxu0 %v2254
        %2802 = vmatmul.mubr.bf16.gmra.mrb[0].mxu0 %v2253
        %v2803 = vpop.f32.mrb[0].mxu0
        %v2804 = vadd.f32 0.0, %v2803
        %v2805 = vpop.f32.mrb[0].mxu0
        %v2806 = vadd.f32 0.0, %v2805
        %v2807 = vpop.f32.mrb[0].mxu0
        %v2808 = vadd.f32 0.0, %v2807
        %v2809 = vpop.f32.mrb[0].mxu0
        %v2810 = vadd.f32 0.0, %v2809
        %2811 = vmatprep.mubr.bf16.mxu0 %v2256
        %2812 = vmatmul.mubr.bf16.gmra.mrb[0].mxu0 %v2255
        %v2813 = vpop.f32.mrb[0].mxu0
        %v2814 = vadd.f32 0.0, %v2813
        %v2815 = vpop.f32.mrb[0].mxu0
        %v2816 = vadd.f32 0.0, %v2815
        %v2817 = vpop.f32.mrb[0].mxu0
        %v2818 = vadd.f32 0.0, %v2817
        %v2819 = vpop.f32.mrb[0].mxu0
        %v2820 = vadd.f32 0.0, %v2819
        %2821 = vmatprep.mubr.bf16.mxu0 %v2258
        %2822 = vmatmul.mubr.bf16.gmra.mrb[0].mxu0 %v2257
        %v2823 = vpop.f32.mrb[0].mxu0
        %v2824 = vadd.f32 0.0, %v2823
        %v2825 = vpop.f32.mrb[0].mxu0
        %v2826 = vadd.f32 0.0, %v2825
        %v2827 = vpop.f32.mrb[0].mxu0
        %v2828 = vadd.f32 0.0, %v2827
        %v2829 = vpop.f32.mrb[0].mxu0
        %v2830 = vadd.f32 0.0, %v2829
        %2831 = vmatprep.mubr.bf16.mxu0 %v2260
        %2832 = vmatmul.mubr.bf16.gmra.mrb[0].mxu0 %v2259
        %v2833 = vpop.f32.mrb[0].mxu0
        %v2834 = vadd.f32 0.0, %v2833
        %v2835 = vpop.f32.mrb[0].mxu0
        %v2836 = vadd.f32 0.0, %v2835
        %v2837 = vpop.f32.mrb[0].mxu0
        %v2838 = vadd.f32 0.0, %v2837
        %v2839 = vpop.f32.mrb[0].mxu0
        %v2840 = vadd.f32 0.0, %v2839
        %2841 = vmatprep.mubr.bf16.mxu0 %v2262
        %2842 = vmatmul.mubr.bf16.gmra.mrb[0].mxu0 %v2261
        %v2843 = vpop.f32.mrb[0].mxu0
        %v2844 = vadd.f32 0.0, %v2843
        %v2845 = vpop.f32.mrb[0].mxu0
        %v2846 = vadd.f32 0.0, %v2845
        %v2847 = vpop.f32.mrb[0].mxu0
        %v2848 = vadd.f32 0.0, %v2847
        %v2849 = vpop.f32.mrb[0].mxu0
        %v2850 = vadd.f32 0.0, %v2849
        %2851 = vmatprep.mubr.bf16.mxu0 %v2264
        %2852 = vmatmul.mubr.bf16.gmra.mrb[0].mxu0 %v2263
        %v2853 = vpop.f32.mrb[0].mxu0
        %v2854 = vadd.f32 0.0, %v2853
        %v2855 = vpop.f32.mrb[0].mxu0
        %v2856 = vadd.f32 0.0, %v2855
        %v2857 = vpop.f32.mrb[0].mxu0
        %v2858 = vadd.f32 0.0, %v2857
        %v2859 = vpop.f32.mrb[0].mxu0
        %v2860 = vadd.f32 0.0, %v2859
        %2861 = vmatprep.mubr.bf16.mxu0 %v2266
        %2862 = vmatmul.mubr.bf16.gmra.mrb[0].mxu0 %v2265
        %v2863 = vpop.f32.mrb[0].mxu0
        %v2864 = vadd.f32 0.0, %v2863
        %v2865 = vpop.f32.mrb[0].mxu0
        %v2866 = vadd.f32 0.0, %v2865
        %v2867 = vpop.f32.mrb[0].mxu0
        %v2868 = vadd.f32 0.0, %v2867
        %v2869 = vpop.f32.mrb[0].mxu0
        %v2870 = vadd.f32 0.0, %v2869
        %2871 = vmatprep.mubr.bf16.mxu0 %v2268
        %2872 = vmatmul.mubr.bf16.gmra.mrb[0].mxu0 %v2267
        %v2873 = vpop.f32.mrb[0].mxu0
        %v2874 = vadd.f32 0.0, %v2873
        %v2875 = vpop.f32.mrb[0].mxu0
        %v2876 = vadd.f32 0.0, %v2875
        %v2877 = vpop.f32.mrb[0].mxu0
        %v2878 = vadd.f32 0.0, %v2877
        %v2879 = vpop.f32.mrb[0].mxu0
        %v2880 = vadd.f32 0.0, %v2879
        %2881 = vdwg.mxu0
        %v2882 = vadd.f32 %v2189, %v2691
        %v2883 = vadd.f32 %v2190, %v2693
        %v2884 = vadd.f32 %v2191, %v2804
        %v2885 = vadd.f32 %v2192, %v2806
        %v2886 = vadd.f32 %v2193, %v2695
        %v2887 = vadd.f32 %v2194, %v2697
        %v2888 = vadd.f32 %v2195, %v2808
        %v2889 = vadd.f32 %v2196, %v2810
        %v2890 = vadd.f32 %v2197, %v2701
        %v2891 = vadd.f32 %v2198, %v2703
        %v2892 = vadd.f32 %v2199, %v2814
        %v2893 = vadd.f32 %v2200, %v2816
        %v2894 = vadd.f32 %v2201, %v2705
        %v2895 = vadd.f32 %v2202, %v2707
        %v2896 = vadd.f32 %v2203, %v2818
        %v2897 = vadd.f32 %v2204, %v2820
        %v2898 = vadd.f32 %v2205, %v2711
        %v2899 = vadd.f32 %v2206, %v2713
        %v2900 = vadd.f32 %v2207, %v2824
        %v2901 = vadd.f32 %v2208, %v2826
        %v2902 = vadd.f32 %v2209, %v2715
        %v2903 = vadd.f32 %v2210, %v2717
        %v2904 = vadd.f32 %v2211, %v2828
        %v2905 = vadd.f32 %v2212, %v2830
        %v2906 = vadd.f32 %v2213, %v2721
        %v2907 = vadd.f32 %v2214, %v2723
        %v2908 = vadd.f32 %v2215, %v2834
        %v2909 = vadd.f32 %v2216, %v2836
        %v2910 = vadd.f32 %v2217, %v2725
        %v2911 = vadd.f32 %v2218, %v2727
        %v2912 = vadd.f32 %v2219, %v2838
        %v2913 = vadd.f32 %v2220, %v2840
        %v2914 = vadd.f32 %v2221, %v2731
        %v2915 = vadd.f32 %v2222, %v2733
        %v2916 = vadd.f32 %v2223, %v2844
        %v2917 = vadd.f32 %v2224, %v2846
        %v2918 = vadd.f32 %v2225, %v2735
        %v2919 = vadd.f32 %v2226, %v2737
        %v2920 = vadd.f32 %v2227, %v2848
        %v2921 = vadd.f32 %v2228, %v2850
        %v2922 = vadd.f32 %v2229, %v2741
        %v2923 = vadd.f32 %v2230, %v2743
        %v2924 = vadd.f32 %v2231, %v2854
        %v2925 = vadd.f32 %v2232, %v2856
        %v2926 = vadd.f32 %v2233, %v2745
        %v2927 = vadd.f32 %v2234, %v2747
        %v2928 = vadd.f32 %v2235, %v2858
        %v2929 = vadd.f32 %v2236, %v2860
        %v2930 = vadd.f32 %v2237, %v2751
        %v2931 = vadd.f32 %v2238, %v2753
        %v2932 = vadd.f32 %v2239, %v2864
        %v2933 = vadd.f32 %v2240, %v2866
        %v2934 = vadd.f32 %v2241, %v2755
        %v2935 = vadd.f32 %v2242, %v2757
        %v2936 = vadd.f32 %v2243, %v2868
        %v2937 = vadd.f32 %v2244, %v2870
        %v2938 = vadd.f32 %v2245, %v2761
        %v2939 = vadd.f32 %v2246, %v2763
        %v2940 = vadd.f32 %v2247, %v2874
        %v2941 = vadd.f32 %v2248, %v2876
        %v2942 = vadd.f32 %v2249, %v2765
        %v2943 = vadd.f32 %v2250, %v2767
        %v2944 = vadd.f32 %v2251, %v2878
        %v2945 = vadd.f32 %v2252, %v2880
        %2946 = vst [vmem:[#allocation3] sm:$0xff] %v2882
        %2947 = vst [vmem:[#allocation3 + $0x8] sm:$0xff] %v2883
        %2948 = vst [vmem:[#allocation3 + $0x10] sm:$0xff] %v2884
        %2949 = vst [vmem:[#allocation3 + $0x18] sm:$0xff] %v2885
        %2950 = vst [vmem:[#allocation3 + $0x20] sm:$0xff] %v2886
        %2951 = vst [vmem:[#allocation3 + $0x28] sm:$0xff] %v2887
        %2952 = vst [vmem:[#allocation3 + $0x30] sm:$0xff] %v2888
        %2953 = vst [vmem:[#allocation3 + $0x38] sm:$0xff] %v2889
        %2954 = vst [vmem:[#allocation3 + $0x40] sm:$0xff] %v2890
        %2955 = vst [vmem:[#allocation3 + $0x48] sm:$0xff] %v2891
        %2956 = vst [vmem:[#allocation3 + $0x50] sm:$0xff] %v2892
        %2957 = vst [vmem:[#allocation3 + $0x58] sm:$0xff] %v2893
        %2958 = vst [vmem:[#allocation3 + $0x60] sm:$0xff] %v2894
        %2959 = vst [vmem:[#allocation3 + $0x68] sm:$0xff] %v2895
        %2960 = vst [vmem:[#allocation3 + $0x70] sm:$0xff] %v2896
        %2961 = vst [vmem:[#allocation3 + $0x78] sm:$0xff] %v2897
        %2962 = vst [vmem:[#allocation3 + $0x80] sm:$0xff] %v2898
        %2963 = vst [vmem:[#allocation3 + $0x88] sm:$0xff] %v2899
        %2964 = vst [vmem:[#allocation3 + $0x90] sm:$0xff] %v2900
        %2965 = vst [vmem:[#allocation3 + $0x98] sm:$0xff] %v2901
        %2966 = vst [vmem:[#allocation3 + $0xa0] sm:$0xff] %v2902
        %2967 = vst [vmem:[#allocation3 + $0xa8] sm:$0xff] %v2903
        %2968 = vst [vmem:[#allocation3 + $0xb0] sm:$0xff] %v2904
        %2969 = vst [vmem:[#allocation3 + $0xb8] sm:$0xff] %v2905
        %2970 = vst [vmem:[#allocation3 + $0xc0] sm:$0xff] %v2906
        %2971 = vst [vmem:[#allocation3 + $0xc8] sm:$0xff] %v2907
        %2972 = vst [vmem:[#allocation3 + $0xd0] sm:$0xff] %v2908
        %2973 = vst [vmem:[#allocation3 + $0xd8] sm:$0xff] %v2909
        %2974 = vst [vmem:[#allocation3 + $0xe0] sm:$0xff] %v2910
        %2975 = vst [vmem:[#allocation3 + $0xe8] sm:$0xff] %v2911
        %2976 = vst [vmem:[#allocation3 + $0xf0] sm:$0xff] %v2912
        %2977 = vst [vmem:[#allocation3 + $0xf8] sm:$0xff] %v2913
        %2978 = vst [vmem:[#allocation3 + $0x100] sm:$0xff] %v2914
        %2979 = vst [vmem:[#allocation3 + $0x108] sm:$0xff] %v2915
        %2980 = vst [vmem:[#allocation3 + $0x110] sm:$0xff] %v2916
        %2981 = vst [vmem:[#allocation3 + $0x118] sm:$0xff] %v2917
        %2982 = vst [vmem:[#allocation3 + $0x120] sm:$0xff] %v2918
        %2983 = vst [vmem:[#allocation3 + $0x128] sm:$0xff] %v2919
        %2984 = vst [vmem:[#allocation3 + $0x130] sm:$0xff] %v2920
        %2985 = vst [vmem:[#allocation3 + $0x138] sm:$0xff] %v2921
        %2986 = vst [vmem:[#allocation3 + $0x140] sm:$0xff] %v2922
        %2987 = vst [vmem:[#allocation3 + $0x148] sm:$0xff] %v2923
        %2988 = vst [vmem:[#allocation3 + $0x150] sm:$0xff] %v2924
        %2989 = vst [vmem:[#allocation3 + $0x158] sm:$0xff] %v2925
        %2990 = vst [vmem:[#allocation3 + $0x160] sm:$0xff] %v2926
        %2991 = vst [vmem:[#allocation3 + $0x168] sm:$0xff] %v2927
        %2992 = vst [vmem:[#allocation3 + $0x170] sm:$0xff] %v2928
        %2993 = vst [vmem:[#allocation3 + $0x178] sm:$0xff] %v2929
        %2994 = vst [vmem:[#allocation3 + $0x180] sm:$0xff] %v2930
        %2995 = vst [vmem:[#allocation3 + $0x188] sm:$0xff] %v2931
        %2996 = vst [vmem:[#allocation3 + $0x190] sm:$0xff] %v2932
        %2997 = vst [vmem:[#allocation3 + $0x198] sm:$0xff] %v2933
        %2998 = vst [vmem:[#allocation3 + $0x1a0] sm:$0xff] %v2934
        %2999 = vst [vmem:[#allocation3 + $0x1a8] sm:$0xff] %v2935
        %3000 = vst [vmem:[#allocation3 + $0x1b0] sm:$0xff] %v2936
        %3001 = vst [vmem:[#allocation3 + $0x1b8] sm:$0xff] %v2937
        %3002 = vst [vmem:[#allocation3 + $0x1c0] sm:$0xff] %v2938
        %3003 = vst [vmem:[#allocation3 + $0x1c8] sm:$0xff] %v2939
        %3004 = vst [vmem:[#allocation3 + $0x1d0] sm:$0xff] %v2940
        %3005 = vst [vmem:[#allocation3 + $0x1d8] sm:$0xff] %v2941
        %3006 = vst [vmem:[#allocation3 + $0x1e0] sm:$0xff] %v2942
        %3007 = vst [vmem:[#allocation3 + $0x1e8] sm:$0xff] %v2943
        %3008 = vst [vmem:[#allocation3 + $0x1f0] sm:$0xff] %v2944
        %3009 = vst [vmem:[#allocation3 + $0x1f8] sm:$0xff] %v2945
        %p3010 = scmp.eq.s32.totalorder %s25, 1
        // Predicated region
        $region161: #{self_attention_forward.3} parent=143 // pred_check
          %p3011 = pneg %p3010
        $region162: #{self_attention_forward.3} parent=143 // pred_check_branch
          %3013 = sbr.rel (%p3011) target = $region164
        $region163: #{self_attention_forward.3} parent=143 // pred_region
          %v3014 = vld [vmem:[#allocation3] sm:$0xff]
          %v3015 = vld [vmem:[#allocation3 + $0x8] sm:$0xff]
          %v3016 = vld [vmem:[#allocation3 + $0x10] sm:$0xff]
          %v3017 = vld [vmem:[#allocation3 + $0x18] sm:$0xff]
          %v3018 = vld [vmem:[#allocation3 + $0x20] sm:$0xff]
          %v3019 = vld [vmem:[#allocation3 + $0x28] sm:$0xff]
          %v3020 = vld [vmem:[#allocation3 + $0x30] sm:$0xff]
          %v3021 = vld [vmem:[#allocation3 + $0x38] sm:$0xff]
          %v3022 = vld [vmem:[#allocation3 + $0x40] sm:$0xff]
          %v3023 = vld [vmem:[#allocation3 + $0x48] sm:$0xff]
          %v3024 = vld [vmem:[#allocation3 + $0x50] sm:$0xff]
          %v3025 = vld [vmem:[#allocation3 + $0x58] sm:$0xff]
          %v3026 = vld [vmem:[#allocation3 + $0x60] sm:$0xff]
          %v3027 = vld [vmem:[#allocation3 + $0x68] sm:$0xff]
          %v3028 = vld [vmem:[#allocation3 + $0x70] sm:$0xff]
          %v3029 = vld [vmem:[#allocation3 + $0x78] sm:$0xff]
          %v3030 = vld [vmem:[#allocation3 + $0x80] sm:$0xff]
          %v3031 = vld [vmem:[#allocation3 + $0x88] sm:$0xff]
          %v3032 = vld [vmem:[#allocation3 + $0x90] sm:$0xff]
          %v3033 = vld [vmem:[#allocation3 + $0x98] sm:$0xff]
          %v3034 = vld [vmem:[#allocation3 + $0xa0] sm:$0xff]
          %v3035 = vld [vmem:[#allocation3 + $0xa8] sm:$0xff]
          %v3036 = vld [vmem:[#allocation3 + $0xb0] sm:$0xff]
          %v3037 = vld [vmem:[#allocation3 + $0xb8] sm:$0xff]
          %v3038 = vld [vmem:[#allocation3 + $0xc0] sm:$0xff]
          %v3039 = vld [vmem:[#allocation3 + $0xc8] sm:$0xff]
          %v3040 = vld [vmem:[#allocation3 + $0xd0] sm:$0xff]
          %v3041 = vld [vmem:[#allocation3 + $0xd8] sm:$0xff]
          %v3042 = vld [vmem:[#allocation3 + $0xe0] sm:$0xff]
          %v3043 = vld [vmem:[#allocation3 + $0xe8] sm:$0xff]
          %v3044 = vld [vmem:[#allocation3 + $0xf0] sm:$0xff]
          %v3045 = vld [vmem:[#allocation3 + $0xf8] sm:$0xff]
          %v3046 = vld [vmem:[#allocation3 + $0x100] sm:$0xff]
          %v3047 = vld [vmem:[#allocation3 + $0x108] sm:$0xff]
          %v3048 = vld [vmem:[#allocation3 + $0x110] sm:$0xff]
          %v3049 = vld [vmem:[#allocation3 + $0x118] sm:$0xff]
          %v3050 = vld [vmem:[#allocation3 + $0x120] sm:$0xff]
          %v3051 = vld [vmem:[#allocation3 + $0x128] sm:$0xff]
          %v3052 = vld [vmem:[#allocation3 + $0x130] sm:$0xff]
          %v3053 = vld [vmem:[#allocation3 + $0x138] sm:$0xff]
          %v3054 = vld [vmem:[#allocation3 + $0x140] sm:$0xff]
          %v3055 = vld [vmem:[#allocation3 + $0x148] sm:$0xff]
          %v3056 = vld [vmem:[#allocation3 + $0x150] sm:$0xff]
          %v3057 = vld [vmem:[#allocation3 + $0x158] sm:$0xff]
          %v3058 = vld [vmem:[#allocation3 + $0x160] sm:$0xff]
          %v3059 = vld [vmem:[#allocation3 + $0x168] sm:$0xff]
          %v3060 = vld [vmem:[#allocation3 + $0x170] sm:$0xff]
          %v3061 = vld [vmem:[#allocation3 + $0x178] sm:$0xff]
          %v3062 = vld [vmem:[#allocation3 + $0x180] sm:$0xff]
          %v3063 = vld [vmem:[#allocation3 + $0x188] sm:$0xff]
          %v3064 = vld [vmem:[#allocation3 + $0x190] sm:$0xff]
          %v3065 = vld [vmem:[#allocation3 + $0x198] sm:$0xff]
          %v3066 = vld [vmem:[#allocation3 + $0x1a0] sm:$0xff]
          %v3067 = vld [vmem:[#allocation3 + $0x1a8] sm:$0xff]
          %v3068 = vld [vmem:[#allocation3 + $0x1b0] sm:$0xff]
          %v3069 = vld [vmem:[#allocation3 + $0x1b8] sm:$0xff]
          %v3070 = vld [vmem:[#allocation3 + $0x1c0] sm:$0xff]
          %v3071 = vld [vmem:[#allocation3 + $0x1c8] sm:$0xff]
          %v3072 = vld [vmem:[#allocation3 + $0x1d0] sm:$0xff]
          %v3073 = vld [vmem:[#allocation3 + $0x1d8] sm:$0xff]
          %v3074 = vld [vmem:[#allocation3 + $0x1e0] sm:$0xff]
          %v3075 = vld [vmem:[#allocation3 + $0x1e8] sm:$0xff]
          %v3076 = vld [vmem:[#allocation3 + $0x1f0] sm:$0xff]
          %v3077 = vld [vmem:[#allocation3 + $0x1f8] sm:$0xff]
          %3078 = vst [vmem:[%s698] sm:$0xff] %v3014
          %3079 = vst [vmem:[%s698 + $0x8] sm:$0xff] %v3015
          %3080 = vst [vmem:[%s698 + $0x10] sm:$0xff] %v3016
          %3081 = vst [vmem:[%s698 + $0x18] sm:$0xff] %v3017
          %3082 = vst [vmem:[%s698 + $0x20] sm:$0xff] %v3018
          %3083 = vst [vmem:[%s698 + $0x28] sm:$0xff] %v3019
          %3084 = vst [vmem:[%s698 + $0x30] sm:$0xff] %v3020
          %3085 = vst [vmem:[%s698 + $0x38] sm:$0xff] %v3021
          %3086 = vst [vmem:[%s698 + $0x40] sm:$0xff] %v3022
          %3087 = vst [vmem:[%s698 + $0x48] sm:$0xff] %v3023
          %3088 = vst [vmem:[%s698 + $0x50] sm:$0xff] %v3024
          %3089 = vst [vmem:[%s698 + $0x58] sm:$0xff] %v3025
          %3090 = vst [vmem:[%s698 + $0x60] sm:$0xff] %v3026
          %3091 = vst [vmem:[%s698 + $0x68] sm:$0xff] %v3027
          %3092 = vst [vmem:[%s698 + $0x70] sm:$0xff] %v3028
          %3093 = vst [vmem:[%s698 + $0x78] sm:$0xff] %v3029
          %3094 = vst [vmem:[%s698 + $0x80] sm:$0xff] %v3030
          %3095 = vst [vmem:[%s698 + $0x88] sm:$0xff] %v3031
          %3096 = vst [vmem:[%s698 + $0x90] sm:$0xff] %v3032
          %3097 = vst [vmem:[%s698 + $0x98] sm:$0xff] %v3033
          %3098 = vst [vmem:[%s698 + $0xa0] sm:$0xff] %v3034
          %3099 = vst [vmem:[%s698 + $0xa8] sm:$0xff] %v3035
          %3100 = vst [vmem:[%s698 + $0xb0] sm:$0xff] %v3036
          %3101 = vst [vmem:[%s698 + $0xb8] sm:$0xff] %v3037
          %3102 = vst [vmem:[%s698 + $0xc0] sm:$0xff] %v3038
          %3103 = vst [vmem:[%s698 + $0xc8] sm:$0xff] %v3039
          %3104 = vst [vmem:[%s698 + $0xd0] sm:$0xff] %v3040
          %3105 = vst [vmem:[%s698 + $0xd8] sm:$0xff] %v3041
          %3106 = vst [vmem:[%s698 + $0xe0] sm:$0xff] %v3042
          %3107 = vst [vmem:[%s698 + $0xe8] sm:$0xff] %v3043
          %3108 = vst [vmem:[%s698 + $0xf0] sm:$0xff] %v3044
          %3109 = vst [vmem:[%s698 + $0xf8] sm:$0xff] %v3045
          %3110 = vst [vmem:[%s698 + $0x100] sm:$0xff] %v3046
          %3111 = vst [vmem:[%s698 + $0x108] sm:$0xff] %v3047
          %3112 = vst [vmem:[%s698 + $0x110] sm:$0xff] %v3048
          %3113 = vst [vmem:[%s698 + $0x118] sm:$0xff] %v3049
          %3114 = vst [vmem:[%s698 + $0x120] sm:$0xff] %v3050
          %3115 = vst [vmem:[%s698 + $0x128] sm:$0xff] %v3051
          %3116 = vst [vmem:[%s698 + $0x130] sm:$0xff] %v3052
          %3117 = vst [vmem:[%s698 + $0x138] sm:$0xff] %v3053
          %3118 = vst [vmem:[%s698 + $0x140] sm:$0xff] %v3054
          %3119 = vst [vmem:[%s698 + $0x148] sm:$0xff] %v3055
          %3120 = vst [vmem:[%s698 + $0x150] sm:$0xff] %v3056
          %3121 = vst [vmem:[%s698 + $0x158] sm:$0xff] %v3057
          %3122 = vst [vmem:[%s698 + $0x160] sm:$0xff] %v3058
          %3123 = vst [vmem:[%s698 + $0x168] sm:$0xff] %v3059
          %3124 = vst [vmem:[%s698 + $0x170] sm:$0xff] %v3060
          %3125 = vst [vmem:[%s698 + $0x178] sm:$0xff] %v3061
          %3126 = vst [vmem:[%s698 + $0x180] sm:$0xff] %v3062
          %3127 = vst [vmem:[%s698 + $0x188] sm:$0xff] %v3063
          %3128 = vst [vmem:[%s698 + $0x190] sm:$0xff] %v3064
          %3129 = vst [vmem:[%s698 + $0x198] sm:$0xff] %v3065
          %3130 = vst [vmem:[%s698 + $0x1a0] sm:$0xff] %v3066
          %3131 = vst [vmem:[%s698 + $0x1a8] sm:$0xff] %v3067
          %3132 = vst [vmem:[%s698 + $0x1b0] sm:$0xff] %v3068
          %3133 = vst [vmem:[%s698 + $0x1b8] sm:$0xff] %v3069
          %3134 = vst [vmem:[%s698 + $0x1c0] sm:$0xff] %v3070
          %3135 = vst [vmem:[%s698 + $0x1c8] sm:$0xff] %v3071
          %3136 = vst [vmem:[%s698 + $0x1d0] sm:$0xff] %v3072
          %3137 = vst [vmem:[%s698 + $0x1d8] sm:$0xff] %v3073
          %3138 = vst [vmem:[%s698 + $0x1e0] sm:$0xff] %v3074
          %3139 = vst [vmem:[%s698 + $0x1e8] sm:$0xff] %v3075
          %3140 = vst [vmem:[%s698 + $0x1f0] sm:$0xff] %v3076
          %3141 = vst [vmem:[%s698 + $0x1f8] sm:$0xff] %v3077
        $region164: #{self_attention_forward.3} parent=143 // pred_fallthru
          _
        %s3142 = sand.u32 %s154, 1
        %s3143 = scalar_lea.sflag [#allocation8], %s3142
        %s3144 = sand.u32 %s154, 1
        %s3145 = smul.addr %s3144, 512
        %s3146 = scalar_lea.vmem [#allocation7], %s3145
        // Predicated region
        $region165: #{self_attention_forward.3} parent=143 // pred_check
          %p3147 = pneg %p164
        $region166: #{self_attention_forward.3} parent=143 // pred_check_branch
          %3149 = sbr.rel (%p3147) target = $region168
        $region167: #{self_attention_forward.3} parent=143 // pred_region
          %s3150 = smul.u32 16, %s24
          %s3152 = ssub.s32 8192, 8192
          %3153 = vsyncadd %s3143, %s3152
          %s3154 = smul.addr %s3150, 4
          %s3155 = smul.addr %s23, 128
          %s3156 = sadd.s32 %s3154, %s3155
          %s3157 = smul.addr %s3156, 128
          %s3158 = scalar_lea.hbm %s4, %s3157
          %s3159 = sshll.u32 %s3146, 4
          %s3160 = int_to_ptr.vmem [resolvable:$true] %s3159
          %3165 = dma.vmem_to_hbm [thread:$0]  %s3160, 8192, %s3158, %s3143, 512, 512, 32
        $region168: #{self_attention_forward.3} parent=143 // pred_fallthru
          _
      $region144: #{self_attention_forward.3} parent=5 // pred_fallthru
        _
      %p3166 = scmp.le.s32.totalorder 2, %s13
      // Predicated region
      $region169: #{self_attention_forward.3} parent=5 // pred_check
        %p3167 = pneg %p3166
      $region170: #{self_attention_forward.3} parent=5 // pred_check_branch
        %3169 = sbr.rel (%p3167) target = $region172
      $region171: #{self_attention_forward.3} parent=5 // pred_region
        %s3170 = ssub.s32 %s13, 2
        // Predicated region
        $region173: #{self_attention_forward.3} parent=171 // pred_check
          %p3171 = pneg %p170
        $region174: #{self_attention_forward.3} parent=171 // pred_check_branch
          %3173 = sbr.rel (%p3171) target = $region176
        $region175: #{self_attention_forward.3} parent=171 // pred_region
          %s3174 = sand.u32 %s155, 1
          %s3175 = scalar_lea.sflag [#allocation8], %s3174
          %s3176 = sand.u32 %s155, 1
          %s3177 = smul.addr %s3176, 512
          %s3178 = scalar_lea.vmem [#allocation7], %s3177
          %3179 = dma.done %s3175, 8192
        $region176: #{self_attention_forward.3} parent=171 // pred_fallthru
          _
      $region172: #{self_attention_forward.3} parent=5 // pred_fallthru
        _
    $region6: #{self_attention_forward.3} parent=1 // loop_footer
      %s17 = sadd.s32 1, %s13
    $region7: #{self_attention_forward.3} parent=1 // loop_footer_branch
      %12 = sbr.rel target = $region3
    $region8: #{self_attention_forward.3} parent=1 // loop_exit
      _
    %3180 = vsyncpa [#allocation8], 1
    %s3181 = scalar_lea.sflag [#allocation8], 1
    %3182 = vsyncpa %s3181, 1

// kernel: self_attention_forward.2
$region0: #{self_attention_forward.2}
  #allocation0 [shape = 'u32[]', space=smem, size = 0x4, offset = 0x4, fixed_abs, tag = 'smem constant byte address 0x4 - core index']
  #allocation1 [shape = 'u32[144,128]{1,0:T(1,128)}', space=vmem, size = 0x12000, scoped, tag = 'internal scratch']
  %s0 = inlined_call_operand.vmem [shape: bf16[2,256,512], index: 0, kind: input, shape index: {}]
  %s1 = inlined_call_operand.vmem [shape: bf16[512,1024], index: 1, kind: input, shape index: {}]
  %s2 = inlined_call_operand.vmem [shape: f32[256,128], index: 2, kind: input, shape index: {}]
  %s3 = inlined_call_operand.vmem [shape: f32[256,128], index: 3, kind: input, shape index: {}]
  %s4 = inlined_call_operand.vmem [shape: bf16[2,256,512], index: 4, kind: output, shape index: {0}]
  %s5 = inlined_call_operand.vmem [shape: bf16[2,256,256], index: 5, kind: output, shape index: {1}]
  %s6 = inlined_call_operand.vmem [shape: bf16[2,256,256], index: 6, kind: output, shape index: {2}]
  %7 = xla_tuple %s4, %s5, %s6
  %s8 = sld [smem:[#allocation0]]
  $region65: #{self_attention_forward.2} parent=0
    _
  %s10 = ssub.s32 1, %s8
  %s11 = scalar_select 0, %s10, %s8
  loop: start=0, step=1, limit=6
  $region2: #{self_attention_forward.2} parent=0 // loop_pre_header
    _
  $region3: #{self_attention_forward.2} parent=0 // loop_header
    %s13 = sphi 0, %s17
    %p14 = scmp.ge.s32.totalorder %s13, 6
    %s20 = sphi 0, %s32
    %s21 = sphi 0, %s28
    %s22 = sphi 0, %s20
    %s23 = sphi 0, %s21
    %s24 = sphi 0, %s22
    %s25 = sphi 0, %s23
    %s37 = sphi 0, %s39
    %s40 = sphi 0, %s37
    %s41 = sphi 0, %s40
    %s57 = sphi 0, %s41
    %s61 = sphi 0, %s61
    %s63 = sphi 0, %s61
    %s64 = sphi 0, %s63
    %s78 = sphi 0, %s64
    %s84 = sphi 0, %s86
    %s87 = sphi 0, %s84
    %s88 = sphi 0, %s87
    %s104 = sphi 0, %s88
    %s110 = sphi 0, %s112
    %s113 = sphi 0, %s110
    %s114 = sphi 0, %s113
    %s130 = sphi 0, %s114
    %s138 = sphi 0, %s140
    %s141 = sphi 0, %s138
    %s142 = sphi 0, %s141
    %s158 = sphi 0, %s142
    %s166 = sphi 0, %s168
    %s169 = sphi 0, %s166
    %s170 = sphi 0, %s169
    %s186 = sphi 0, %s170
    %s194 = sphi 0, %s196
    %s197 = sphi 0, %s194
    %s198 = sphi 0, %s197
    %s214 = sphi 0, %s198
  $region4: #{self_attention_forward.2} parent=0 // loop_header_branch
    %16 = sbr.rel (%p14) target = $region8
  $region5: #{self_attention_forward.2} parent=0 // loop_body
    %s18 = ssub.s32 %s13, 1
    %s19 = ssub.s32 %s13, 2
    %s26 = sadd.s32 1, %s21
    %p27 = scmp.ge.s32.totalorder %s26, 2
    %s28 = scalar_select %p27, 0, %s26
    %s29 = sadd.s32 1, %s20
    %s30 = scalar_select %p27, %s29, %s20
    %p31 = scmp.ge.s32.totalorder %s30, 2
    %s32 = scalar_select %p31, 0, %s30
    %s33 = ssub.s32 %s20, %s32
    %s34 = ssub.s32 %s21, %s28
    %s35 = sor.u32 %s33, %s34
    %p36 = scmp.eq.s32.totalorder %s35, 0
    %s38 = sadd.s32 %s37, 1
    %s39 = scalar_select %p36, %s37, %s38
    %p42 = pneg %p36
    %p43 = scmp.eq.s32.totalorder %s13, 3
    %p44 = por %p42, %p43
    %p45 = scmp.ne.s32.totalorder %s37, %s40
    %p46 = scmp.eq.s32.totalorder %s13, 0
    %p47 = por %p45, %p46
    %p48 = scmp.ne.s32.totalorder %s37, %s40
    %p49 = scmp.eq.s32.totalorder %s18, 3
    %p50 = por %p48, %p49
    %p51 = scmp.ne.s32.totalorder %s40, %s41
    %p52 = scmp.eq.s32.totalorder %s18, 0
    %p53 = por %p51, %p52
    %p54 = scmp.ne.s32.totalorder %s40, %s41
    %p55 = scmp.eq.s32.totalorder %s19, 3
    %p56 = por %p54, %p55
    %p58 = scmp.ne.s32.totalorder %s41, %s57
    %p59 = scmp.eq.s32.totalorder %s19, 0
    %p60 = por %p58, %p59
    %s62 = sadd.s32 %s61, 1
    %p65 = scmp.eq.s32.totalorder %s13, 3
    %p66 = scmp.ne.s32.totalorder %s61, %s63
    %p67 = scmp.eq.s32.totalorder %s13, 0
    %p68 = por %p66, %p67
    %p69 = scmp.ne.s32.totalorder %s61, %s63
    %p70 = scmp.eq.s32.totalorder %s18, 3
    %p71 = por %p69, %p70
    %p72 = scmp.ne.s32.totalorder %s63, %s64
    %p73 = scmp.eq.s32.totalorder %s18, 0
    %p74 = por %p72, %p73
    %p75 = scmp.ne.s32.totalorder %s63, %s64
    %p76 = scmp.eq.s32.totalorder %s19, 3
    %p77 = por %p75, %p76
    %p79 = scmp.ne.s32.totalorder %s64, %s78
    %p80 = scmp.eq.s32.totalorder %s19, 0
    %p81 = por %p79, %p80
    %s82 = ssub.s32 %s21, %s28
    %p83 = scmp.eq.s32.totalorder %s82, 0
    %s85 = sadd.s32 %s84, 1
    %s86 = scalar_select %p83, %s84, %s85
    %p89 = pneg %p83
    %p90 = scmp.eq.s32.totalorder %s13, 3
    %p91 = por %p89, %p90
    %p92 = scmp.ne.s32.totalorder %s84, %s87
    %p93 = scmp.eq.s32.totalorder %s13, 0
    %p94 = por %p92, %p93
    %p95 = scmp.ne.s32.totalorder %s84, %s87
    %p96 = scmp.eq.s32.totalorder %s18, 3
    %p97 = por %p95, %p96
    %p98 = scmp.ne.s32.totalorder %s87, %s88
    %p99 = scmp.eq.s32.totalorder %s18, 0
    %p100 = por %p98, %p99
    %p101 = scmp.ne.s32.totalorder %s87, %s88
    %p102 = scmp.eq.s32.totalorder %s19, 3
    %p103 = por %p101, %p102
    %p105 = scmp.ne.s32.totalorder %s88, %s104
    %p106 = scmp.eq.s32.totalorder %s19, 0
    %p107 = por %p105, %p106
    %s108 = ssub.s32 %s21, %s28
    %p109 = scmp.eq.s32.totalorder %s108, 0
    %s111 = sadd.s32 %s110, 1
    %s112 = scalar_select %p109, %s110, %s111
    %p115 = pneg %p109
    %p116 = scmp.eq.s32.totalorder %s13, 3
    %p117 = por %p115, %p116
    %p118 = scmp.ne.s32.totalorder %s110, %s113
    %p119 = scmp.eq.s32.totalorder %s13, 0
    %p120 = por %p118, %p119
    %p121 = scmp.ne.s32.totalorder %s110, %s113
    %p122 = scmp.eq.s32.totalorder %s18, 3
    %p123 = por %p121, %p122
    %p124 = scmp.ne.s32.totalorder %s113, %s114
    %p125 = scmp.eq.s32.totalorder %s18, 0
    %p126 = por %p124, %p125
    %p127 = scmp.ne.s32.totalorder %s113, %s114
    %p128 = scmp.eq.s32.totalorder %s19, 3
    %p129 = por %p127, %p128
    %p131 = scmp.ne.s32.totalorder %s114, %s130
    %p132 = scmp.eq.s32.totalorder %s19, 0
    %p133 = por %p131, %p132
    %s134 = ssub.s32 %s20, %s32
    %s135 = ssub.s32 %s21, %s28
    %s136 = sor.u32 %s134, %s135
    %p137 = scmp.eq.s32.totalorder %s136, 0
    %s139 = sadd.s32 %s138, 1
    %s140 = scalar_select %p137, %s138, %s139
    %p143 = pneg %p137
    %p144 = scmp.eq.s32.totalorder %s13, 3
    %p145 = por %p143, %p144
    %p146 = scmp.ne.s32.totalorder %s138, %s141
    %p147 = scmp.eq.s32.totalorder %s13, 0
    %p148 = por %p146, %p147
    %p149 = scmp.ne.s32.totalorder %s138, %s141
    %p150 = scmp.eq.s32.totalorder %s18, 3
    %p151 = por %p149, %p150
    %p152 = scmp.ne.s32.totalorder %s141, %s142
    %p153 = scmp.eq.s32.totalorder %s18, 0
    %p154 = por %p152, %p153
    %p155 = scmp.ne.s32.totalorder %s141, %s142
    %p156 = scmp.eq.s32.totalorder %s19, 3
    %p157 = por %p155, %p156
    %p159 = scmp.ne.s32.totalorder %s142, %s158
    %p160 = scmp.eq.s32.totalorder %s19, 0
    %p161 = por %p159, %p160
    %s162 = ssub.s32 %s20, %s32
    %s163 = ssub.s32 %s21, %s28
    %s164 = sor.u32 %s162, %s163
    %p165 = scmp.eq.s32.totalorder %s164, 0
    %s167 = sadd.s32 %s166, 1
    %s168 = scalar_select %p165, %s166, %s167
    %p171 = pneg %p165
    %p172 = scmp.eq.s32.totalorder %s13, 3
    %p173 = por %p171, %p172
    %p174 = scmp.ne.s32.totalorder %s166, %s169
    %p175 = scmp.eq.s32.totalorder %s13, 0
    %p176 = por %p174, %p175
    %p177 = scmp.ne.s32.totalorder %s166, %s169
    %p178 = scmp.eq.s32.totalorder %s18, 3
    %p179 = por %p177, %p178
    %p180 = scmp.ne.s32.totalorder %s169, %s170
    %p181 = scmp.eq.s32.totalorder %s18, 0
    %p182 = por %p180, %p181
    %p183 = scmp.ne.s32.totalorder %s169, %s170
    %p184 = scmp.eq.s32.totalorder %s19, 3
    %p185 = por %p183, %p184
    %p187 = scmp.ne.s32.totalorder %s170, %s186
    %p188 = scmp.eq.s32.totalorder %s19, 0
    %p189 = por %p187, %p188
    %s190 = ssub.s32 %s20, %s32
    %s191 = ssub.s32 %s21, %s28
    %s192 = sor.u32 %s190, %s191
    %p193 = scmp.eq.s32.totalorder %s192, 0
    %s195 = sadd.s32 %s194, 1
    %s196 = scalar_select %p193, %s194, %s195
    %p199 = pneg %p193
    %p200 = scmp.eq.s32.totalorder %s13, 3
    %p201 = por %p199, %p200
    %p202 = scmp.ne.s32.totalorder %s194, %s197
    %p203 = scmp.eq.s32.totalorder %s13, 0
    %p204 = por %p202, %p203
    %p205 = scmp.ne.s32.totalorder %s194, %s197
    %p206 = scmp.eq.s32.totalorder %s18, 3
    %p207 = por %p205, %p206
    %p208 = scmp.ne.s32.totalorder %s197, %s198
    %p209 = scmp.eq.s32.totalorder %s18, 0
    %p210 = por %p208, %p209
    %p211 = scmp.ne.s32.totalorder %s197, %s198
    %p212 = scmp.eq.s32.totalorder %s19, 3
    %p213 = por %p211, %p212
    %p215 = scmp.ne.s32.totalorder %s198, %s214
    %p216 = scmp.eq.s32.totalorder %s19, 0
    %p217 = por %p215, %p216
    %p218 = scmp.le.s32.totalorder 1, %s13
    %p219 = scmp.lt.s32.totalorder %s13, 5
    %p220 = pnand %p218, %p219
    %p221 = pneg %p220
    // Predicated region
    $region9: #{self_attention_forward.2} parent=5 // pred_check
      _
    $region10: #{self_attention_forward.2} parent=5 // pred_check_branch
      %223 = sbr.rel (%p220) target = $region12
    $region11: #{self_attention_forward.2} parent=5 // pred_region
      %s224 = ssub.s32 %s13, 1
      // Predicated region
      $region13: #{self_attention_forward.2} parent=11 // pred_check
        %p225 = pneg %p74
      $region14: #{self_attention_forward.2} parent=11 // pred_check_branch
        %227 = sbr.rel (%p225) target = $region16
      $region15: #{self_attention_forward.2} parent=11 // pred_region
        _
      $region16: #{self_attention_forward.2} parent=11 // pred_fallthru
        _
    $region12: #{self_attention_forward.2} parent=5 // pred_fallthru
      _
    %p228 = scmp.lt.s32.totalorder %s13, 4
    // Predicated region
    $region17: #{self_attention_forward.2} parent=5 // pred_check
      %p229 = pneg %p228
    $region18: #{self_attention_forward.2} parent=5 // pred_check_branch
      %231 = sbr.rel (%p229) target = $region20
    $region19: #{self_attention_forward.2} parent=5 // pred_region
      // Predicated region
      $region21: #{self_attention_forward.2} parent=19 // pred_check
        %p232 = pneg %p47
      $region22: #{self_attention_forward.2} parent=19 // pred_check_branch
        %234 = sbr.rel (%p232) target = $region24
      $region23: #{self_attention_forward.2} parent=19 // pred_region
        %s235 = smul.u32 16, %s21
        %p236 = scmp.lt.s32.totalorder %s20, 1
        %s237 = scalar_select %p236, %s20, 1
        %p238 = scmp.lt.s32.totalorder %s235, 31
        %s239 = scalar_select %p238, %s235, 31
        %s240 = smul.addr %s239, 4
        %s241 = smul.addr %s237, 128
        %s242 = sadd.s32 %s240, %s241
        %s243 = smul.addr %s242, 4
        %s244 = scalar_lea.vmem %s0, %s243
        %s245 = smul.u32 16, %s21
      $region24: #{self_attention_forward.2} parent=19 // pred_fallthru
        _
      // Predicated region
      $region25: #{self_attention_forward.2} parent=19 // pred_check
        %p246 = pneg %p94
      $region26: #{self_attention_forward.2} parent=19 // pred_check_branch
        %248 = sbr.rel (%p246) target = $region28
      $region27: #{self_attention_forward.2} parent=19 // pred_region
        %s249 = smul.u32 16, %s21
        %p250 = scmp.lt.s32.totalorder %s249, 31
        %s251 = scalar_select %p250, %s249, 31
        %s252 = smul.addr %s251, 8
        %s253 = scalar_lea.vmem %s2, %s252
        %s254 = smul.u32 16, %s21
      $region28: #{self_attention_forward.2} parent=19 // pred_fallthru
        _
      // Predicated region
      $region29: #{self_attention_forward.2} parent=19 // pred_check
        %p255 = pneg %p120
      $region30: #{self_attention_forward.2} parent=19 // pred_check_branch
        %257 = sbr.rel (%p255) target = $region32
      $region31: #{self_attention_forward.2} parent=19 // pred_region
        %s258 = smul.u32 16, %s21
        %p259 = scmp.lt.s32.totalorder %s258, 31
        %s260 = scalar_select %p259, %s258, 31
        %s261 = smul.addr %s260, 8
        %s262 = scalar_lea.vmem %s3, %s261
        %s263 = smul.u32 16, %s21
      $region32: #{self_attention_forward.2} parent=19 // pred_fallthru
        _
    $region20: #{self_attention_forward.2} parent=5 // pred_fallthru
      _
    %p264 = scmp.le.s32.totalorder 1, %s13
    %p265 = scmp.lt.s32.totalorder %s13, 5
    %p266 = pnand %p264, %p265
    %p267 = pneg %p266
    // Predicated region
    $region33: #{self_attention_forward.2} parent=5 // pred_check
      _
    $region34: #{self_attention_forward.2} parent=5 // pred_check_branch
      %269 = sbr.rel (%p266) target = $region36
    $region35: #{self_attention_forward.2} parent=5 // pred_region
      %s270 = ssub.s32 %s13, 1
      %s271 = smul.u32 16, %s23
      %p272 = scmp.lt.s32.totalorder %s22, 1
      %s273 = scalar_select %p272, %s22, 1
      %p274 = scmp.lt.s32.totalorder %s271, 31
      %s275 = scalar_select %p274, %s271, 31
      %s276 = smul.addr %s275, 4
      %s277 = smul.addr %s273, 128
      %s278 = sadd.s32 %s276, %s277
      %s279 = smul.addr %s278, 4
      %s280 = scalar_lea.vmem %s0, %s279
      %p281 = pneg %p53
      %p282 = pneg %p50
      %p283 = pneg %p74
      %p284 = pneg %p71
      %s285 = smul.u32 16, %s23
      %p286 = scmp.lt.s32.totalorder %s285, 31
      %s287 = scalar_select %p286, %s285, 31
      %s288 = smul.addr %s287, 8
      %s289 = scalar_lea.vmem %s2, %s288
      %p290 = pneg %p100
      %p291 = pneg %p97
      %s292 = smul.u32 16, %s23
      %p293 = scmp.lt.s32.totalorder %s292, 31
      %s294 = scalar_select %p293, %s292, 31
      %s295 = smul.addr %s294, 8
      %s296 = scalar_lea.vmem %s3, %s295
      %p297 = pneg %p126
      %p298 = pneg %p123
      %p299 = pneg %p154
      %p300 = pneg %p151
      %s301 = smul.u32 16, %s23
      %p302 = scmp.lt.s32.totalorder %s22, 1
      %s303 = scalar_select %p302, %s22, 1
      %p304 = scmp.lt.s32.totalorder %s301, 31
      %s305 = scalar_select %p304, %s301, 31
      %s306 = smul.addr %s305, 4
      %s307 = smul.addr %s303, 128
      %s308 = sadd.s32 %s306, %s307
      %s309 = smul.addr %s308, 4
      %s310 = scalar_lea.vmem %s4, %s309
      %p311 = pneg %p182
      %p312 = pneg %p179
      %s313 = smul.u32 16, %s23
      %p314 = scmp.lt.s32.totalorder %s22, 1
      %s315 = scalar_select %p314, %s22, 1
      %p316 = scmp.lt.s32.totalorder %s313, 31
      %s317 = scalar_select %p316, %s313, 31
      %s318 = smul.addr %s317, 2
      %s319 = smul.addr %s315, 64
      %s320 = sadd.s32 %s318, %s319
      %s321 = smul.addr %s320, 4
      %s322 = scalar_lea.vmem %s5, %s321
      %p323 = pneg %p210
      %p324 = pneg %p207
      %s325 = smul.u32 16, %s23
      %p326 = scmp.lt.s32.totalorder %s22, 1
      %s327 = scalar_select %p326, %s22, 1
      %p328 = scmp.lt.s32.totalorder %s325, 31
      %s329 = scalar_select %p328, %s325, 31
      %s330 = smul.addr %s329, 2
      %s331 = smul.addr %s327, 64
      %s332 = sadd.s32 %s330, %s331
      %s333 = smul.addr %s332, 4
      %s334 = scalar_lea.vmem %s6, %s333
      %s335 = smul.u32 16, %s23
      %p336 = scmp.lt.s32.totalorder %s22, 1
      %s337 = scalar_select %p336, %s22, 1
      %p338 = scmp.lt.s32.totalorder %s335, 31
      %s339 = scalar_select %p338, %s335, 31
      %s340 = smul.addr %s339, 4
      %s341 = smul.addr %s337, 128
      %s342 = sadd.s32 %s340, %s341
      %s343 = smul.addr %s342, 4
      %s344 = scalar_lea.vmem %s0, %s343
      %s345 = smul.u32 16, %s23
      %s346 = smul.u32 16, %s23
      %p347 = scmp.lt.s32.totalorder %s346, 31
      %s348 = scalar_select %p347, %s346, 31
      %s349 = smul.addr %s348, 8
      %s350 = scalar_lea.vmem %s2, %s349
      %s351 = smul.u32 16, %s23
      %s352 = smul.u32 16, %s23
      %p353 = scmp.lt.s32.totalorder %s352, 31
      %s354 = scalar_select %p353, %s352, 31
      %s355 = smul.addr %s354, 8
      %s356 = scalar_lea.vmem %s3, %s355
      %s357 = smul.u32 16, %s23
      %s358 = smul.u32 16, %s23
      %p359 = scmp.lt.s32.totalorder %s22, 1
      %s360 = scalar_select %p359, %s22, 1
      %p361 = scmp.lt.s32.totalorder %s358, 31
      %s362 = scalar_select %p361, %s358, 31
      %s363 = smul.addr %s362, 4
      %s364 = smul.addr %s360, 128
      %s365 = sadd.s32 %s363, %s364
      %s366 = smul.addr %s365, 4
      %s367 = scalar_lea.vmem %s4, %s366
      %s368 = smul.u32 16, %s23
      %s369 = smul.u32 16, %s23
      %p370 = scmp.lt.s32.totalorder %s22, 1
      %s371 = scalar_select %p370, %s22, 1
      %p372 = scmp.lt.s32.totalorder %s369, 31
      %s373 = scalar_select %p372, %s369, 31
      %s374 = smul.addr %s373, 2
      %s375 = smul.addr %s371, 64
      %s376 = sadd.s32 %s374, %s375
      %s377 = smul.addr %s376, 4
      %s378 = scalar_lea.vmem %s5, %s377
      %s379 = smul.u32 16, %s23
      %s380 = smul.u32 16, %s23
      %p381 = scmp.lt.s32.totalorder %s22, 1
      %s382 = scalar_select %p381, %s22, 1
      %p383 = scmp.lt.s32.totalorder %s380, 31
      %s384 = scalar_select %p383, %s380, 31
      %s385 = smul.addr %s384, 2
      %s386 = smul.addr %s382, 64
      %s387 = sadd.s32 %s385, %s386
      %s388 = smul.addr %s387, 4
      %s389 = scalar_lea.vmem %s6, %s388
      %s390 = smul.u32 16, %s23
      %v391 = vld [vmem:[%s344] sm:$0xff]
      %v392 = vld [vmem:[%s344 + $0x8] sm:$0xff]
      %v393 = vld [vmem:[%s344 + $0x10] sm:$0xff]
      %v394 = vld [vmem:[%s344 + $0x18] sm:$0xff]
      %v395 = vld [vmem:[%s344 + $0x20] sm:$0xff]
      %v396 = vld [vmem:[%s344 + $0x28] sm:$0xff]
      %v397 = vld [vmem:[%s344 + $0x30] sm:$0xff]
      %v398 = vld [vmem:[%s344 + $0x38] sm:$0xff]
      %v399 = vld [vmem:[%s344 + $0x40] sm:$0xff]
      %v400 = vld [vmem:[%s344 + $0x48] sm:$0xff]
      %v401 = vld [vmem:[%s344 + $0x50] sm:$0xff]
      %v402 = vld [vmem:[%s344 + $0x58] sm:$0xff]
      %v403 = vld [vmem:[%s344 + $0x60] sm:$0xff]
      %v404 = vld [vmem:[%s344 + $0x68] sm:$0xff]
      %v405 = vld [vmem:[%s344 + $0x70] sm:$0xff]
      %v406 = vld [vmem:[%s344 + $0x78] sm:$0xff]
      %v407 = vld [vmem:[%s344 + $0x80] sm:$0xff]
      %v408 = vld [vmem:[%s344 + $0x88] sm:$0xff]
      %v409 = vld [vmem:[%s344 + $0x90] sm:$0xff]
      %v410 = vld [vmem:[%s344 + $0x98] sm:$0xff]
      %v411 = vld [vmem:[%s344 + $0xa0] sm:$0xff]
      %v412 = vld [vmem:[%s344 + $0xa8] sm:$0xff]
      %v413 = vld [vmem:[%s344 + $0xb0] sm:$0xff]
      %v414 = vld [vmem:[%s344 + $0xb8] sm:$0xff]
      %v415 = vld [vmem:[%s344 + $0xc0] sm:$0xff]
      %v416 = vld [vmem:[%s344 + $0xc8] sm:$0xff]
      %v417 = vld [vmem:[%s344 + $0xd0] sm:$0xff]
      %v418 = vld [vmem:[%s344 + $0xd8] sm:$0xff]
      %v419 = vld [vmem:[%s344 + $0xe0] sm:$0xff]
      %v420 = vld [vmem:[%s344 + $0xe8] sm:$0xff]
      %v421 = vld [vmem:[%s344 + $0xf0] sm:$0xff]
      %v422 = vld [vmem:[%s344 + $0xf8] sm:$0xff]
      %v423 = vld [vmem:[%s1] sm:$0xff]
      %v424 = vld [vmem:[%s1 + $0x8] sm:$0xff]
      %v425 = vld [vmem:[%s1 + $0x10] sm:$0xff]
      %v426 = vld [vmem:[%s1 + $0x18] sm:$0xff]
      %v427 = vld [vmem:[%s1 + $0x20] sm:$0xff]
      %v428 = vld [vmem:[%s1 + $0x28] sm:$0xff]
      %v429 = vld [vmem:[%s1 + $0x30] sm:$0xff]
      %v430 = vld [vmem:[%s1 + $0x38] sm:$0xff]
      %v431 = vld [vmem:[%s1 + $0x40] sm:$0xff]
      %v432 = vld [vmem:[%s1 + $0x48] sm:$0xff]
      %v433 = vld [vmem:[%s1 + $0x50] sm:$0xff]
      %v434 = vld [vmem:[%s1 + $0x58] sm:$0xff]
      %v435 = vld [vmem:[%s1 + $0x60] sm:$0xff]
      %v436 = vld [vmem:[%s1 + $0x68] sm:$0xff]
      %v437 = vld [vmem:[%s1 + $0x70] sm:$0xff]
      %v438 = vld [vmem:[%s1 + $0x78] sm:$0xff]
      %v439 = vld [vmem:[%s1 + $0x80] sm:$0xff]
      %v440 = vld [vmem:[%s1 + $0x88] sm:$0xff]
      %v441 = vld [vmem:[%s1 + $0x90] sm:$0xff]
      %v442 = vld [vmem:[%s1 + $0x98] sm:$0xff]
      %v443 = vld [vmem:[%s1 + $0xa0] sm:$0xff]
      %v444 = vld [vmem:[%s1 + $0xa8] sm:$0xff]
      %v445 = vld [vmem:[%s1 + $0xb0] sm:$0xff]
      %v446 = vld [vmem:[%s1 + $0xb8] sm:$0xff]
      %v447 = vld [vmem:[%s1 + $0xc0] sm:$0xff]
      %v448 = vld [vmem:[%s1 + $0xc8] sm:$0xff]
      %v449 = vld [vmem:[%s1 + $0xd0] sm:$0xff]
      %v450 = vld [vmem:[%s1 + $0xd8] sm:$0xff]
      %v451 = vld [vmem:[%s1 + $0xe0] sm:$0xff]
      %v452 = vld [vmem:[%s1 + $0xe8] sm:$0xff]
      %v453 = vld [vmem:[%s1 + $0xf0] sm:$0xff]
      %v454 = vld [vmem:[%s1 + $0xf8] sm:$0xff]
      %v455 = vld [vmem:[%s1 + $0x100] sm:$0xff]
      %v456 = vld [vmem:[%s1 + $0x108] sm:$0xff]
      %v457 = vld [vmem:[%s1 + $0x110] sm:$0xff]
      %v458 = vld [vmem:[%s1 + $0x118] sm:$0xff]
      %v459 = vld [vmem:[%s1 + $0x120] sm:$0xff]
      %v460 = vld [vmem:[%s1 + $0x128] sm:$0xff]
      %v461 = vld [vmem:[%s1 + $0x130] sm:$0xff]
      %v462 = vld [vmem:[%s1 + $0x138] sm:$0xff]
      %v463 = vld [vmem:[%s1 + $0x140] sm:$0xff]
      %v464 = vld [vmem:[%s1 + $0x148] sm:$0xff]
      %v465 = vld [vmem:[%s1 + $0x150] sm:$0xff]
      %v466 = vld [vmem:[%s1 + $0x158] sm:$0xff]
      %v467 = vld [vmem:[%s1 + $0x160] sm:$0xff]
      %v468 = vld [vmem:[%s1 + $0x168] sm:$0xff]
      %v469 = vld [vmem:[%s1 + $0x170] sm:$0xff]
      %v470 = vld [vmem:[%s1 + $0x178] sm:$0xff]
      %v471 = vld [vmem:[%s1 + $0x180] sm:$0xff]
      %v472 = vld [vmem:[%s1 + $0x188] sm:$0xff]
      %v473 = vld [vmem:[%s1 + $0x190] sm:$0xff]
      %v474 = vld [vmem:[%s1 + $0x198] sm:$0xff]
      %v475 = vld [vmem:[%s1 + $0x1a0] sm:$0xff]
      %v476 = vld [vmem:[%s1 + $0x1a8] sm:$0xff]
      %v477 = vld [vmem:[%s1 + $0x1b0] sm:$0xff]
      %v478 = vld [vmem:[%s1 + $0x1b8] sm:$0xff]
      %v479 = vld [vmem:[%s1 + $0x1c0] sm:$0xff]
      %v480 = vld [vmem:[%s1 + $0x1c8] sm:$0xff]
      %v481 = vld [vmem:[%s1 + $0x1d0] sm:$0xff]
      %v482 = vld [vmem:[%s1 + $0x1d8] sm:$0xff]
      %v483 = vld [vmem:[%s1 + $0x1e0] sm:$0xff]
      %v484 = vld [vmem:[%s1 + $0x1e8] sm:$0xff]
      %v485 = vld [vmem:[%s1 + $0x1f0] sm:$0xff]
      %v486 = vld [vmem:[%s1 + $0x1f8] sm:$0xff]
      %v487 = vld [vmem:[%s1 + $0x200] sm:$0xff]
      %v488 = vld [vmem:[%s1 + $0x208] sm:$0xff]
      %v489 = vld [vmem:[%s1 + $0x210] sm:$0xff]
      %v490 = vld [vmem:[%s1 + $0x218] sm:$0xff]
      %v491 = vld [vmem:[%s1 + $0x220] sm:$0xff]
      %v492 = vld [vmem:[%s1 + $0x228] sm:$0xff]
      %v493 = vld [vmem:[%s1 + $0x230] sm:$0xff]
      %v494 = vld [vmem:[%s1 + $0x238] sm:$0xff]
      %v495 = vld [vmem:[%s1 + $0x240] sm:$0xff]
      %v496 = vld [vmem:[%s1 + $0x248] sm:$0xff]
      %v497 = vld [vmem:[%s1 + $0x250] sm:$0xff]
      %v498 = vld [vmem:[%s1 + $0x258] sm:$0xff]
      %v499 = vld [vmem:[%s1 + $0x260] sm:$0xff]
      %v500 = vld [vmem:[%s1 + $0x268] sm:$0xff]
      %v501 = vld [vmem:[%s1 + $0x270] sm:$0xff]
      %v502 = vld [vmem:[%s1 + $0x278] sm:$0xff]
      %v503 = vld [vmem:[%s1 + $0x280] sm:$0xff]
      %v504 = vld [vmem:[%s1 + $0x288] sm:$0xff]
      %v505 = vld [vmem:[%s1 + $0x290] sm:$0xff]
      %v506 = vld [vmem:[%s1 + $0x298] sm:$0xff]
      %v507 = vld [vmem:[%s1 + $0x2a0] sm:$0xff]
      %v508 = vld [vmem:[%s1 + $0x2a8] sm:$0xff]
      %v509 = vld [vmem:[%s1 + $0x2b0] sm:$0xff]
      %v510 = vld [vmem:[%s1 + $0x2b8] sm:$0xff]
      %v511 = vld [vmem:[%s1 + $0x2c0] sm:$0xff]
      %v512 = vld [vmem:[%s1 + $0x2c8] sm:$0xff]
      %v513 = vld [vmem:[%s1 + $0x2d0] sm:$0xff]
      %v514 = vld [vmem:[%s1 + $0x2d8] sm:$0xff]
      %v515 = vld [vmem:[%s1 + $0x2e0] sm:$0xff]
      %v516 = vld [vmem:[%s1 + $0x2e8] sm:$0xff]
      %v517 = vld [vmem:[%s1 + $0x2f0] sm:$0xff]
      %v518 = vld [vmem:[%s1 + $0x2f8] sm:$0xff]
      %v519 = vld [vmem:[%s1 + $0x300] sm:$0xff]
      %v520 = vld [vmem:[%s1 + $0x308] sm:$0xff]
      %v521 = vld [vmem:[%s1 + $0x310] sm:$0xff]
      %v522 = vld [vmem:[%s1 + $0x318] sm:$0xff]
      %v523 = vld [vmem:[%s1 + $0x320] sm:$0xff]
      %v524 = vld [vmem:[%s1 + $0x328] sm:$0xff]
      %v525 = vld [vmem:[%s1 + $0x330] sm:$0xff]
      %v526 = vld [vmem:[%s1 + $0x338] sm:$0xff]
      %v527 = vld [vmem:[%s1 + $0x340] sm:$0xff]
      %v528 = vld [vmem:[%s1 + $0x348] sm:$0xff]
      %v529 = vld [vmem:[%s1 + $0x350] sm:$0xff]
      %v530 = vld [vmem:[%s1 + $0x358] sm:$0xff]
      %v531 = vld [vmem:[%s1 + $0x360] sm:$0xff]
      %v532 = vld [vmem:[%s1 + $0x368] sm:$0xff]
      %v533 = vld [vmem:[%s1 + $0x370] sm:$0xff]
      %v534 = vld [vmem:[%s1 + $0x378] sm:$0xff]
      %v535 = vld [vmem:[%s1 + $0x380] sm:$0xff]
      %v536 = vld [vmem:[%s1 + $0x388] sm:$0xff]
      %v537 = vld [vmem:[%s1 + $0x390] sm:$0xff]
      %v538 = vld [vmem:[%s1 + $0x398] sm:$0xff]
      %v539 = vld [vmem:[%s1 + $0x3a0] sm:$0xff]
      %v540 = vld [vmem:[%s1 + $0x3a8] sm:$0xff]
      %v541 = vld [vmem:[%s1 + $0x3b0] sm:$0xff]
      %v542 = vld [vmem:[%s1 + $0x3b8] sm:$0xff]
      %v543 = vld [vmem:[%s1 + $0x3c0] sm:$0xff]
      %v544 = vld [vmem:[%s1 + $0x3c8] sm:$0xff]
      %v545 = vld [vmem:[%s1 + $0x3d0] sm:$0xff]
      %v546 = vld [vmem:[%s1 + $0x3d8] sm:$0xff]
      %v547 = vld [vmem:[%s1 + $0x3e0] sm:$0xff]
      %v548 = vld [vmem:[%s1 + $0x3e8] sm:$0xff]
      %v549 = vld [vmem:[%s1 + $0x3f0] sm:$0xff]
      %v550 = vld [vmem:[%s1 + $0x3f8] sm:$0xff]
      %v551 = vld [vmem:[%s1 + $0x400] sm:$0xff]
      %v552 = vld [vmem:[%s1 + $0x408] sm:$0xff]
      %v553 = vld [vmem:[%s1 + $0x410] sm:$0xff]
      %v554 = vld [vmem:[%s1 + $0x418] sm:$0xff]
      %v555 = vld [vmem:[%s1 + $0x420] sm:$0xff]
      %v556 = vld [vmem:[%s1 + $0x428] sm:$0xff]
      %v557 = vld [vmem:[%s1 + $0x430] sm:$0xff]
      %v558 = vld [vmem:[%s1 + $0x438] sm:$0xff]
      %v559 = vld [vmem:[%s1 + $0x440] sm:$0xff]
      %v560 = vld [vmem:[%s1 + $0x448] sm:$0xff]
      %v561 = vld [vmem:[%s1 + $0x450] sm:$0xff]
      %v562 = vld [vmem:[%s1 + $0x458] sm:$0xff]
      %v563 = vld [vmem:[%s1 + $0x460] sm:$0xff]
      %v564 = vld [vmem:[%s1 + $0x468] sm:$0xff]
      %v565 = vld [vmem:[%s1 + $0x470] sm:$0xff]
      %v566 = vld [vmem:[%s1 + $0x478] sm:$0xff]
      %v567 = vld [vmem:[%s1 + $0x480] sm:$0xff]
      %v568 = vld [vmem:[%s1 + $0x488] sm:$0xff]
      %v569 = vld [vmem:[%s1 + $0x490] sm:$0xff]
      %v570 = vld [vmem:[%s1 + $0x498] sm:$0xff]
      %v571 = vld [vmem:[%s1 + $0x4a0] sm:$0xff]
      %v572 = vld [vmem:[%s1 + $0x4a8] sm:$0xff]
      %v573 = vld [vmem:[%s1 + $0x4b0] sm:$0xff]
      %v574 = vld [vmem:[%s1 + $0x4b8] sm:$0xff]
      %v575 = vld [vmem:[%s1 + $0x4c0] sm:$0xff]
      %v576 = vld [vmem:[%s1 + $0x4c8] sm:$0xff]
      %v577 = vld [vmem:[%s1 + $0x4d0] sm:$0xff]
      %v578 = vld [vmem:[%s1 + $0x4d8] sm:$0xff]
      %v579 = vld [vmem:[%s1 + $0x4e0] sm:$0xff]
      %v580 = vld [vmem:[%s1 + $0x4e8] sm:$0xff]
      %v581 = vld [vmem:[%s1 + $0x4f0] sm:$0xff]
      %v582 = vld [vmem:[%s1 + $0x4f8] sm:$0xff]
      %v583 = vld [vmem:[%s1 + $0x500] sm:$0xff]
      %v584 = vld [vmem:[%s1 + $0x508] sm:$0xff]
      %v585 = vld [vmem:[%s1 + $0x510] sm:$0xff]
      %v586 = vld [vmem:[%s1 + $0x518] sm:$0xff]
      %v587 = vld [vmem:[%s1 + $0x520] sm:$0xff]
      %v588 = vld [vmem:[%s1 + $0x528] sm:$0xff]
      %v589 = vld [vmem:[%s1 + $0x530] sm:$0xff]
      %v590 = vld [vmem:[%s1 + $0x538] sm:$0xff]
      %v591 = vld [vmem:[%s1 + $0x540] sm:$0xff]
      %v592 = vld [vmem:[%s1 + $0x548] sm:$0xff]
      %v593 = vld [vmem:[%s1 + $0x550] sm:$0xff]
      %v594 = vld [vmem:[%s1 + $0x558] sm:$0xff]
      %v595 = vld [vmem:[%s1 + $0x560] sm:$0xff]
      %v596 = vld [vmem:[%s1 + $0x568] sm:$0xff]
      %v597 = vld [vmem:[%s1 + $0x570] sm:$0xff]
      %v598 = vld [vmem:[%s1 + $0x578] sm:$0xff]
      %v599 = vld [vmem:[%s1 + $0x580] sm:$0xff]
      %v600 = vld [vmem:[%s1 + $0x588] sm:$0xff]
      %v601 = vld [vmem:[%s1 + $0x590] sm:$0xff]
      %v602 = vld [vmem:[%s1 + $0x598] sm:$0xff]
      %v603 = vld [vmem:[%s1 + $0x5a0] sm:$0xff]
      %v604 = vld [vmem:[%s1 + $0x5a8] sm:$0xff]
      %v605 = vld [vmem:[%s1 + $0x5b0] sm:$0xff]
      %v606 = vld [vmem:[%s1 + $0x5b8] sm:$0xff]
      %v607 = vld [vmem:[%s1 + $0x5c0] sm:$0xff]
      %v608 = vld [vmem:[%s1 + $0x5c8] sm:$0xff]
      %v609 = vld [vmem:[%s1 + $0x5d0] sm:$0xff]
      %v610 = vld [vmem:[%s1 + $0x5d8] sm:$0xff]
      %v611 = vld [vmem:[%s1 + $0x5e0] sm:$0xff]
      %v612 = vld [vmem:[%s1 + $0x5e8] sm:$0xff]
      %v613 = vld [vmem:[%s1 + $0x5f0] sm:$0xff]
      %v614 = vld [vmem:[%s1 + $0x5f8] sm:$0xff]
      %v615 = vld [vmem:[%s1 + $0x600] sm:$0xff]
      %v616 = vld [vmem:[%s1 + $0x608] sm:$0xff]
      %v617 = vld [vmem:[%s1 + $0x610] sm:$0xff]
      %v618 = vld [vmem:[%s1 + $0x618] sm:$0xff]
      %v619 = vld [vmem:[%s1 + $0x620] sm:$0xff]
      %v620 = vld [vmem:[%s1 + $0x628] sm:$0xff]
      %v621 = vld [vmem:[%s1 + $0x630] sm:$0xff]
      %v622 = vld [vmem:[%s1 + $0x638] sm:$0xff]
      %v623 = vld [vmem:[%s1 + $0x640] sm:$0xff]
      %v624 = vld [vmem:[%s1 + $0x648] sm:$0xff]
      %v625 = vld [vmem:[%s1 + $0x650] sm:$0xff]
      %v626 = vld [vmem:[%s1 + $0x658] sm:$0xff]
      %v627 = vld [vmem:[%s1 + $0x660] sm:$0xff]
      %v628 = vld [vmem:[%s1 + $0x668] sm:$0xff]
      %v629 = vld [vmem:[%s1 + $0x670] sm:$0xff]
      %v630 = vld [vmem:[%s1 + $0x678] sm:$0xff]
      %v631 = vld [vmem:[%s1 + $0x680] sm:$0xff]
      %v632 = vld [vmem:[%s1 + $0x688] sm:$0xff]
      %v633 = vld [vmem:[%s1 + $0x690] sm:$0xff]
      %v634 = vld [vmem:[%s1 + $0x698] sm:$0xff]
      %v635 = vld [vmem:[%s1 + $0x6a0] sm:$0xff]
      %v636 = vld [vmem:[%s1 + $0x6a8] sm:$0xff]
      %v637 = vld [vmem:[%s1 + $0x6b0] sm:$0xff]
      %v638 = vld [vmem:[%s1 + $0x6b8] sm:$0xff]
      %v639 = vld [vmem:[%s1 + $0x6c0] sm:$0xff]
      %v640 = vld [vmem:[%s1 + $0x6c8] sm:$0xff]
      %v641 = vld [vmem:[%s1 + $0x6d0] sm:$0xff]
      %v642 = vld [vmem:[%s1 + $0x6d8] sm:$0xff]
      %v643 = vld [vmem:[%s1 + $0x6e0] sm:$0xff]
      %v644 = vld [vmem:[%s1 + $0x6e8] sm:$0xff]
      %v645 = vld [vmem:[%s1 + $0x6f0] sm:$0xff]
      %v646 = vld [vmem:[%s1 + $0x6f8] sm:$0xff]
      %v647 = vld [vmem:[%s1 + $0x700] sm:$0xff]
      %v648 = vld [vmem:[%s1 + $0x708] sm:$0xff]
      %v649 = vld [vmem:[%s1 + $0x710] sm:$0xff]
      %v650 = vld [vmem:[%s1 + $0x718] sm:$0xff]
      %v651 = vld [vmem:[%s1 + $0x720] sm:$0xff]
      %v652 = vld [vmem:[%s1 + $0x728] sm:$0xff]
      %v653 = vld [vmem:[%s1 + $0x730] sm:$0xff]
      %v654 = vld [vmem:[%s1 + $0x738] sm:$0xff]
      %v655 = vld [vmem:[%s1 + $0x740] sm:$0xff]
      %v656 = vld [vmem:[%s1 + $0x748] sm:$0xff]
      %v657 = vld [vmem:[%s1 + $0x750] sm:$0xff]
      %v658 = vld [vmem:[%s1 + $0x758] sm:$0xff]
      %v659 = vld [vmem:[%s1 + $0x760] sm:$0xff]
      %v660 = vld [vmem:[%s1 + $0x768] sm:$0xff]
      %v661 = vld [vmem:[%s1 + $0x770] sm:$0xff]
      %v662 = vld [vmem:[%s1 + $0x778] sm:$0xff]
      %v663 = vld [vmem:[%s1 + $0x780] sm:$0xff]
      %v664 = vld [vmem:[%s1 + $0x788] sm:$0xff]
      %v665 = vld [vmem:[%s1 + $0x790] sm:$0xff]
      %v666 = vld [vmem:[%s1 + $0x798] sm:$0xff]
      %v667 = vld [vmem:[%s1 + $0x7a0] sm:$0xff]
      %v668 = vld [vmem:[%s1 + $0x7a8] sm:$0xff]
      %v669 = vld [vmem:[%s1 + $0x7b0] sm:$0xff]
      %v670 = vld [vmem:[%s1 + $0x7b8] sm:$0xff]
      %v671 = vld [vmem:[%s1 + $0x7c0] sm:$0xff]
      %v672 = vld [vmem:[%s1 + $0x7c8] sm:$0xff]
      %v673 = vld [vmem:[%s1 + $0x7d0] sm:$0xff]
      %v674 = vld [vmem:[%s1 + $0x7d8] sm:$0xff]
      %v675 = vld [vmem:[%s1 + $0x7e0] sm:$0xff]
      %v676 = vld [vmem:[%s1 + $0x7e8] sm:$0xff]
      %v677 = vld [vmem:[%s1 + $0x7f0] sm:$0xff]
      %v678 = vld [vmem:[%s1 + $0x7f8] sm:$0xff]
      %v711 = vunpack.c.l.b16 %v391
      %v712 = vunpack.c.h.b16 %v391
      %v713 = vunpack.c.l.b16 %v392
      %v714 = vunpack.c.h.b16 %v392
      %v715 = vunpack.c.l.b16 %v393
      %v716 = vunpack.c.h.b16 %v393
      %v717 = vunpack.c.l.b16 %v394
      %v718 = vunpack.c.h.b16 %v394
      %v719 = vunpack.c.l.b16 %v395
      %v720 = vunpack.c.h.b16 %v395
      %v721 = vunpack.c.l.b16 %v396
      %v722 = vunpack.c.h.b16 %v396
      %v723 = vunpack.c.l.b16 %v397
      %v724 = vunpack.c.h.b16 %v397
      %v725 = vunpack.c.l.b16 %v398
      %v726 = vunpack.c.h.b16 %v398
      %v727 = vunpack.c.l.b16 %v399
      %v728 = vunpack.c.h.b16 %v399
      %v729 = vunpack.c.l.b16 %v400
      %v730 = vunpack.c.h.b16 %v400
      %v731 = vunpack.c.l.b16 %v401
      %v732 = vunpack.c.h.b16 %v401
      %v733 = vunpack.c.l.b16 %v402
      %v734 = vunpack.c.h.b16 %v402
      %v735 = vunpack.c.l.b16 %v403
      %v736 = vunpack.c.h.b16 %v403
      %v737 = vunpack.c.l.b16 %v404
      %v738 = vunpack.c.h.b16 %v404
      %v739 = vunpack.c.l.b16 %v405
      %v740 = vunpack.c.h.b16 %v405
      %v741 = vunpack.c.l.b16 %v406
      %v742 = vunpack.c.h.b16 %v406
      %v743 = vunpack.c.l.b16 %v407
      %v744 = vunpack.c.h.b16 %v407
      %v745 = vunpack.c.l.b16 %v408
      %v746 = vunpack.c.h.b16 %v408
      %v747 = vunpack.c.l.b16 %v409
      %v748 = vunpack.c.h.b16 %v409
      %v749 = vunpack.c.l.b16 %v410
      %v750 = vunpack.c.h.b16 %v410
      %v751 = vunpack.c.l.b16 %v411
      %v752 = vunpack.c.h.b16 %v411
      %v753 = vunpack.c.l.b16 %v412
      %v754 = vunpack.c.h.b16 %v412
      %v755 = vunpack.c.l.b16 %v413
      %v756 = vunpack.c.h.b16 %v413
      %v757 = vunpack.c.l.b16 %v414
      %v758 = vunpack.c.h.b16 %v414
      %v759 = vunpack.c.l.b16 %v415
      %v760 = vunpack.c.h.b16 %v415
      %v761 = vunpack.c.l.b16 %v416
      %v762 = vunpack.c.h.b16 %v416
      %v763 = vunpack.c.l.b16 %v417
      %v764 = vunpack.c.h.b16 %v417
      %v765 = vunpack.c.l.b16 %v418
      %v766 = vunpack.c.h.b16 %v418
      %v767 = vunpack.c.l.b16 %v419
      %v768 = vunpack.c.h.b16 %v419
      %v769 = vunpack.c.l.b16 %v420
      %v770 = vunpack.c.h.b16 %v420
      %v771 = vunpack.c.l.b16 %v421
      %v772 = vunpack.c.h.b16 %v421
      %v773 = vunpack.c.l.b16 %v422
      %v774 = vunpack.c.h.b16 %v422
      %v775 = vpack.c.b16 %v715, %v711
      %v776 = vpack.c.b16 %v716, %v712
      %v777 = vpack.c.b16 %v717, %v713
      %v778 = vpack.c.b16 %v718, %v714
      %v779 = vpack.c.b16 %v723, %v719
      %v780 = vpack.c.b16 %v724, %v720
      %v781 = vpack.c.b16 %v725, %v721
      %v782 = vpack.c.b16 %v726, %v722
      %v783 = vpack.c.b16 %v731, %v727
      %v784 = vpack.c.b16 %v732, %v728
      %v785 = vpack.c.b16 %v733, %v729
      %v786 = vpack.c.b16 %v734, %v730
      %v787 = vpack.c.b16 %v739, %v735
      %v788 = vpack.c.b16 %v740, %v736
      %v789 = vpack.c.b16 %v741, %v737
      %v790 = vpack.c.b16 %v742, %v738
      %v791 = vpack.c.b16 %v747, %v743
      %v792 = vpack.c.b16 %v748, %v744
      %v793 = vpack.c.b16 %v749, %v745
      %v794 = vpack.c.b16 %v750, %v746
      %v795 = vpack.c.b16 %v755, %v751
      %v796 = vpack.c.b16 %v756, %v752
      %v797 = vpack.c.b16 %v757, %v753
      %v798 = vpack.c.b16 %v758, %v754
      %v799 = vpack.c.b16 %v763, %v759
      %v800 = vpack.c.b16 %v764, %v760
      %v801 = vpack.c.b16 %v765, %v761
      %v802 = vpack.c.b16 %v766, %v762
      %v803 = vpack.c.b16 %v771, %v767
      %v804 = vpack.c.b16 %v772, %v768
      %v805 = vpack.c.b16 %v773, %v769
      %v806 = vpack.c.b16 %v774, %v770
      %v1095 = vunpack.c.l.b16 %v423
      %v1096 = vunpack.c.h.b16 %v423
      %v1097 = vunpack.c.l.b16 %v424
      %v1098 = vunpack.c.h.b16 %v424
      %v1099 = vunpack.c.l.b16 %v425
      %v1100 = vunpack.c.h.b16 %v425
      %v1101 = vunpack.c.l.b16 %v426
      %v1102 = vunpack.c.h.b16 %v426
      %v1103 = vunpack.c.l.b16 %v427
      %v1104 = vunpack.c.h.b16 %v427
      %v1105 = vunpack.c.l.b16 %v428
      %v1106 = vunpack.c.h.b16 %v428
      %v1107 = vunpack.c.l.b16 %v429
      %v1108 = vunpack.c.h.b16 %v429
      %v1109 = vunpack.c.l.b16 %v430
      %v1110 = vunpack.c.h.b16 %v430
      %v1111 = vunpack.c.l.b16 %v431
      %v1112 = vunpack.c.h.b16 %v431
      %v1113 = vunpack.c.l.b16 %v432
      %v1114 = vunpack.c.h.b16 %v432
      %v1115 = vunpack.c.l.b16 %v433
      %v1116 = vunpack.c.h.b16 %v433
      %v1117 = vunpack.c.l.b16 %v434
      %v1118 = vunpack.c.h.b16 %v434
      %v1119 = vunpack.c.l.b16 %v435
      %v1120 = vunpack.c.h.b16 %v435
      %v1121 = vunpack.c.l.b16 %v436
      %v1122 = vunpack.c.h.b16 %v436
      %v1123 = vunpack.c.l.b16 %v437
      %v1124 = vunpack.c.h.b16 %v437
      %v1125 = vunpack.c.l.b16 %v438
      %v1126 = vunpack.c.h.b16 %v438
      %v1127 = vunpack.c.l.b16 %v439
      %v1128 = vunpack.c.h.b16 %v439
      %v1129 = vunpack.c.l.b16 %v440
      %v1130 = vunpack.c.h.b16 %v440
      %v1131 = vunpack.c.l.b16 %v441
      %v1132 = vunpack.c.h.b16 %v441
      %v1133 = vunpack.c.l.b16 %v442
      %v1134 = vunpack.c.h.b16 %v442
      %v1135 = vunpack.c.l.b16 %v443
      %v1136 = vunpack.c.h.b16 %v443
      %v1137 = vunpack.c.l.b16 %v444
      %v1138 = vunpack.c.h.b16 %v444
      %v1139 = vunpack.c.l.b16 %v445
      %v1140 = vunpack.c.h.b16 %v445
      %v1141 = vunpack.c.l.b16 %v446
      %v1142 = vunpack.c.h.b16 %v446
      %v1143 = vunpack.c.l.b16 %v447
      %v1144 = vunpack.c.h.b16 %v447
      %v1145 = vunpack.c.l.b16 %v448
      %v1146 = vunpack.c.h.b16 %v448
      %v1147 = vunpack.c.l.b16 %v449
      %v1148 = vunpack.c.h.b16 %v449
      %v1149 = vunpack.c.l.b16 %v450
      %v1150 = vunpack.c.h.b16 %v450
      %v1151 = vunpack.c.l.b16 %v451
      %v1152 = vunpack.c.h.b16 %v451
      %v1153 = vunpack.c.l.b16 %v452
      %v1154 = vunpack.c.h.b16 %v452
      %v1155 = vunpack.c.l.b16 %v453
      %v1156 = vunpack.c.h.b16 %v453
      %v1157 = vunpack.c.l.b16 %v454
      %v1158 = vunpack.c.h.b16 %v454
      %v1159 = vunpack.c.l.b16 %v455
      %v1160 = vunpack.c.h.b16 %v455
      %v1161 = vunpack.c.l.b16 %v456
      %v1162 = vunpack.c.h.b16 %v456
      %v1163 = vunpack.c.l.b16 %v457
      %v1164 = vunpack.c.h.b16 %v457
      %v1165 = vunpack.c.l.b16 %v458
      %v1166 = vunpack.c.h.b16 %v458
      %v1167 = vunpack.c.l.b16 %v459
      %v1168 = vunpack.c.h.b16 %v459
      %v1169 = vunpack.c.l.b16 %v460
      %v1170 = vunpack.c.h.b16 %v460
      %v1171 = vunpack.c.l.b16 %v461
      %v1172 = vunpack.c.h.b16 %v461
      %v1173 = vunpack.c.l.b16 %v462
      %v1174 = vunpack.c.h.b16 %v462
      %v1175 = vunpack.c.l.b16 %v463
      %v1176 = vunpack.c.h.b16 %v463
      %v1177 = vunpack.c.l.b16 %v464
      %v1178 = vunpack.c.h.b16 %v464
      %v1179 = vunpack.c.l.b16 %v465
      %v1180 = vunpack.c.h.b16 %v465
      %v1181 = vunpack.c.l.b16 %v466
      %v1182 = vunpack.c.h.b16 %v466
      %v1183 = vunpack.c.l.b16 %v467
      %v1184 = vunpack.c.h.b16 %v467
      %v1185 = vunpack.c.l.b16 %v468
      %v1186 = vunpack.c.h.b16 %v468
      %v1187 = vunpack.c.l.b16 %v469
      %v1188 = vunpack.c.h.b16 %v469
      %v1189 = vunpack.c.l.b16 %v470
      %v1190 = vunpack.c.h.b16 %v470
      %v1191 = vunpack.c.l.b16 %v471
      %v1192 = vunpack.c.h.b16 %v471
      %v1193 = vunpack.c.l.b16 %v472
      %v1194 = vunpack.c.h.b16 %v472
      %v1195 = vunpack.c.l.b16 %v473
      %v1196 = vunpack.c.h.b16 %v473
      %v1197 = vunpack.c.l.b16 %v474
      %v1198 = vunpack.c.h.b16 %v474
      %v1199 = vunpack.c.l.b16 %v475
      %v1200 = vunpack.c.h.b16 %v475
      %v1201 = vunpack.c.l.b16 %v476
      %v1202 = vunpack.c.h.b16 %v476
      %v1203 = vunpack.c.l.b16 %v477
      %v1204 = vunpack.c.h.b16 %v477
      %v1205 = vunpack.c.l.b16 %v478
      %v1206 = vunpack.c.h.b16 %v478
      %v1207 = vunpack.c.l.b16 %v479
      %v1208 = vunpack.c.h.b16 %v479
      %v1209 = vunpack.c.l.b16 %v480
      %v1210 = vunpack.c.h.b16 %v480
      %v1211 = vunpack.c.l.b16 %v481
      %v1212 = vunpack.c.h.b16 %v481
      %v1213 = vunpack.c.l.b16 %v482
      %v1214 = vunpack.c.h.b16 %v482
      %v1215 = vunpack.c.l.b16 %v483
      %v1216 = vunpack.c.h.b16 %v483
      %v1217 = vunpack.c.l.b16 %v484
      %v1218 = vunpack.c.h.b16 %v484
      %v1219 = vunpack.c.l.b16 %v485
      %v1220 = vunpack.c.h.b16 %v485
      %v1221 = vunpack.c.l.b16 %v486
      %v1222 = vunpack.c.h.b16 %v486
      %v1223 = vunpack.c.l.b16 %v487
      %v1224 = vunpack.c.h.b16 %v487
      %v1225 = vunpack.c.l.b16 %v488
      %v1226 = vunpack.c.h.b16 %v488
      %v1227 = vunpack.c.l.b16 %v489
      %v1228 = vunpack.c.h.b16 %v489
      %v1229 = vunpack.c.l.b16 %v490
      %v1230 = vunpack.c.h.b16 %v490
      %v1231 = vunpack.c.l.b16 %v491
      %v1232 = vunpack.c.h.b16 %v491
      %v1233 = vunpack.c.l.b16 %v492
      %v1234 = vunpack.c.h.b16 %v492
      %v1235 = vunpack.c.l.b16 %v493
      %v1236 = vunpack.c.h.b16 %v493
      %v1237 = vunpack.c.l.b16 %v494
      %v1238 = vunpack.c.h.b16 %v494
      %v1239 = vunpack.c.l.b16 %v495
      %v1240 = vunpack.c.h.b16 %v495
      %v1241 = vunpack.c.l.b16 %v496
      %v1242 = vunpack.c.h.b16 %v496
      %v1243 = vunpack.c.l.b16 %v497
      %v1244 = vunpack.c.h.b16 %v497
      %v1245 = vunpack.c.l.b16 %v498
      %v1246 = vunpack.c.h.b16 %v498
      %v1247 = vunpack.c.l.b16 %v499
      %v1248 = vunpack.c.h.b16 %v499
      %v1249 = vunpack.c.l.b16 %v500
      %v1250 = vunpack.c.h.b16 %v500
      %v1251 = vunpack.c.l.b16 %v501
      %v1252 = vunpack.c.h.b16 %v501
      %v1253 = vunpack.c.l.b16 %v502
      %v1254 = vunpack.c.h.b16 %v502
      %v1255 = vunpack.c.l.b16 %v503
      %v1256 = vunpack.c.h.b16 %v503
      %v1257 = vunpack.c.l.b16 %v504
      %v1258 = vunpack.c.h.b16 %v504
      %v1259 = vunpack.c.l.b16 %v505
      %v1260 = vunpack.c.h.b16 %v505
      %v1261 = vunpack.c.l.b16 %v506
      %v1262 = vunpack.c.h.b16 %v506
      %v1263 = vunpack.c.l.b16 %v507
      %v1264 = vunpack.c.h.b16 %v507
      %v1265 = vunpack.c.l.b16 %v508
      %v1266 = vunpack.c.h.b16 %v508
      %v1267 = vunpack.c.l.b16 %v509
      %v1268 = vunpack.c.h.b16 %v509
      %v1269 = vunpack.c.l.b16 %v510
      %v1270 = vunpack.c.h.b16 %v510
      %v1271 = vunpack.c.l.b16 %v511
      %v1272 = vunpack.c.h.b16 %v511
      %v1273 = vunpack.c.l.b16 %v512
      %v1274 = vunpack.c.h.b16 %v512
      %v1275 = vunpack.c.l.b16 %v513
      %v1276 = vunpack.c.h.b16 %v513
      %v1277 = vunpack.c.l.b16 %v514
      %v1278 = vunpack.c.h.b16 %v514
      %v1279 = vunpack.c.l.b16 %v515
      %v1280 = vunpack.c.h.b16 %v515
      %v1281 = vunpack.c.l.b16 %v516
      %v1282 = vunpack.c.h.b16 %v516
      %v1283 = vunpack.c.l.b16 %v517
      %v1284 = vunpack.c.h.b16 %v517
      %v1285 = vunpack.c.l.b16 %v518
      %v1286 = vunpack.c.h.b16 %v518
      %v1287 = vunpack.c.l.b16 %v519
      %v1288 = vunpack.c.h.b16 %v519
      %v1289 = vunpack.c.l.b16 %v520
      %v1290 = vunpack.c.h.b16 %v520
      %v1291 = vunpack.c.l.b16 %v521
      %v1292 = vunpack.c.h.b16 %v521
      %v1293 = vunpack.c.l.b16 %v522
      %v1294 = vunpack.c.h.b16 %v522
      %v1295 = vunpack.c.l.b16 %v523
      %v1296 = vunpack.c.h.b16 %v523
      %v1297 = vunpack.c.l.b16 %v524
      %v1298 = vunpack.c.h.b16 %v524
      %v1299 = vunpack.c.l.b16 %v525
      %v1300 = vunpack.c.h.b16 %v525
      %v1301 = vunpack.c.l.b16 %v526
      %v1302 = vunpack.c.h.b16 %v526
      %v1303 = vunpack.c.l.b16 %v527
      %v1304 = vunpack.c.h.b16 %v527
      %v1305 = vunpack.c.l.b16 %v528
      %v1306 = vunpack.c.h.b16 %v528
      %v1307 = vunpack.c.l.b16 %v529
      %v1308 = vunpack.c.h.b16 %v529
      %v1309 = vunpack.c.l.b16 %v530
      %v1310 = vunpack.c.h.b16 %v530
      %v1311 = vunpack.c.l.b16 %v531
      %v1312 = vunpack.c.h.b16 %v531
      %v1313 = vunpack.c.l.b16 %v532
      %v1314 = vunpack.c.h.b16 %v532
      %v1315 = vunpack.c.l.b16 %v533
      %v1316 = vunpack.c.h.b16 %v533
      %v1317 = vunpack.c.l.b16 %v534
      %v1318 = vunpack.c.h.b16 %v534
      %v1319 = vunpack.c.l.b16 %v535
      %v1320 = vunpack.c.h.b16 %v535
      %v1321 = vunpack.c.l.b16 %v536
      %v1322 = vunpack.c.h.b16 %v536
      %v1323 = vunpack.c.l.b16 %v537
      %v1324 = vunpack.c.h.b16 %v537
      %v1325 = vunpack.c.l.b16 %v538
      %v1326 = vunpack.c.h.b16 %v538
      %v1327 = vunpack.c.l.b16 %v539
      %v1328 = vunpack.c.h.b16 %v539
      %v1329 = vunpack.c.l.b16 %v540
      %v1330 = vunpack.c.h.b16 %v540
      %v1331 = vunpack.c.l.b16 %v541
      %v1332 = vunpack.c.h.b16 %v541
      %v1333 = vunpack.c.l.b16 %v542
      %v1334 = vunpack.c.h.b16 %v542
      %v1335 = vunpack.c.l.b16 %v543
      %v1336 = vunpack.c.h.b16 %v543
      %v1337 = vunpack.c.l.b16 %v544
      %v1338 = vunpack.c.h.b16 %v544
      %v1339 = vunpack.c.l.b16 %v545
      %v1340 = vunpack.c.h.b16 %v545
      %v1341 = vunpack.c.l.b16 %v546
      %v1342 = vunpack.c.h.b16 %v546
      %v1343 = vunpack.c.l.b16 %v547
      %v1344 = vunpack.c.h.b16 %v547
      %v1345 = vunpack.c.l.b16 %v548
      %v1346 = vunpack.c.h.b16 %v548
      %v1347 = vunpack.c.l.b16 %v549
      %v1348 = vunpack.c.h.b16 %v549
      %v1349 = vunpack.c.l.b16 %v550
      %v1350 = vunpack.c.h.b16 %v550
      %v1351 = vunpack.c.l.b16 %v551
      %v1352 = vunpack.c.h.b16 %v551
      %v1353 = vunpack.c.l.b16 %v552
      %v1354 = vunpack.c.h.b16 %v552
      %v1355 = vunpack.c.l.b16 %v553
      %v1356 = vunpack.c.h.b16 %v553
      %v1357 = vunpack.c.l.b16 %v554
      %v1358 = vunpack.c.h.b16 %v554
      %v1359 = vunpack.c.l.b16 %v555
      %v1360 = vunpack.c.h.b16 %v555
      %v1361 = vunpack.c.l.b16 %v556
      %v1362 = vunpack.c.h.b16 %v556
      %v1363 = vunpack.c.l.b16 %v557
      %v1364 = vunpack.c.h.b16 %v557
      %v1365 = vunpack.c.l.b16 %v558
      %v1366 = vunpack.c.h.b16 %v558
      %v1367 = vunpack.c.l.b16 %v559
      %v1368 = vunpack.c.h.b16 %v559
      %v1369 = vunpack.c.l.b16 %v560
      %v1370 = vunpack.c.h.b16 %v560
      %v1371 = vunpack.c.l.b16 %v561
      %v1372 = vunpack.c.h.b16 %v561
      %v1373 = vunpack.c.l.b16 %v562
      %v1374 = vunpack.c.h.b16 %v562
      %v1375 = vunpack.c.l.b16 %v563
      %v1376 = vunpack.c.h.b16 %v563
      %v1377 = vunpack.c.l.b16 %v564
      %v1378 = vunpack.c.h.b16 %v564
      %v1379 = vunpack.c.l.b16 %v565
      %v1380 = vunpack.c.h.b16 %v565
      %v1381 = vunpack.c.l.b16 %v566
      %v1382 = vunpack.c.h.b16 %v566
      %v1383 = vunpack.c.l.b16 %v567
      %v1384 = vunpack.c.h.b16 %v567
      %v1385 = vunpack.c.l.b16 %v568
      %v1386 = vunpack.c.h.b16 %v568
      %v1387 = vunpack.c.l.b16 %v569
      %v1388 = vunpack.c.h.b16 %v569
      %v1389 = vunpack.c.l.b16 %v570
      %v1390 = vunpack.c.h.b16 %v570
      %v1391 = vunpack.c.l.b16 %v571
      %v1392 = vunpack.c.h.b16 %v571
      %v1393 = vunpack.c.l.b16 %v572
      %v1394 = vunpack.c.h.b16 %v572
      %v1395 = vunpack.c.l.b16 %v573
      %v1396 = vunpack.c.h.b16 %v573
      %v1397 = vunpack.c.l.b16 %v574
      %v1398 = vunpack.c.h.b16 %v574
      %v1399 = vunpack.c.l.b16 %v575
      %v1400 = vunpack.c.h.b16 %v575
      %v1401 = vunpack.c.l.b16 %v576
      %v1402 = vunpack.c.h.b16 %v576
      %v1403 = vunpack.c.l.b16 %v577
      %v1404 = vunpack.c.h.b16 %v577
      %v1405 = vunpack.c.l.b16 %v578
      %v1406 = vunpack.c.h.b16 %v578
      %v1407 = vunpack.c.l.b16 %v579
      %v1408 = vunpack.c.h.b16 %v579
      %v1409 = vunpack.c.l.b16 %v580
      %v1410 = vunpack.c.h.b16 %v580
      %v1411 = vunpack.c.l.b16 %v581
      %v1412 = vunpack.c.h.b16 %v581
      %v1413 = vunpack.c.l.b16 %v582
      %v1414 = vunpack.c.h.b16 %v582
      %v1415 = vunpack.c.l.b16 %v583
      %v1416 = vunpack.c.h.b16 %v583
      %v1417 = vunpack.c.l.b16 %v584
      %v1418 = vunpack.c.h.b16 %v584
      %v1419 = vunpack.c.l.b16 %v585
      %v1420 = vunpack.c.h.b16 %v585
      %v1421 = vunpack.c.l.b16 %v586
      %v1422 = vunpack.c.h.b16 %v586
      %v1423 = vunpack.c.l.b16 %v587
      %v1424 = vunpack.c.h.b16 %v587
      %v1425 = vunpack.c.l.b16 %v588
      %v1426 = vunpack.c.h.b16 %v588
      %v1427 = vunpack.c.l.b16 %v589
      %v1428 = vunpack.c.h.b16 %v589
      %v1429 = vunpack.c.l.b16 %v590
      %v1430 = vunpack.c.h.b16 %v590
      %v1431 = vunpack.c.l.b16 %v591
      %v1432 = vunpack.c.h.b16 %v591
      %v1433 = vunpack.c.l.b16 %v592
      %v1434 = vunpack.c.h.b16 %v592
      %v1435 = vunpack.c.l.b16 %v593
      %v1436 = vunpack.c.h.b16 %v593
      %v1437 = vunpack.c.l.b16 %v594
      %v1438 = vunpack.c.h.b16 %v594
      %v1439 = vunpack.c.l.b16 %v595
      %v1440 = vunpack.c.h.b16 %v595
      %v1441 = vunpack.c.l.b16 %v596
      %v1442 = vunpack.c.h.b16 %v596
      %v1443 = vunpack.c.l.b16 %v597
      %v1444 = vunpack.c.h.b16 %v597
      %v1445 = vunpack.c.l.b16 %v598
      %v1446 = vunpack.c.h.b16 %v598
      %v1447 = vunpack.c.l.b16 %v599
      %v1448 = vunpack.c.h.b16 %v599
      %v1449 = vunpack.c.l.b16 %v600
      %v1450 = vunpack.c.h.b16 %v600
      %v1451 = vunpack.c.l.b16 %v601
      %v1452 = vunpack.c.h.b16 %v601
      %v1453 = vunpack.c.l.b16 %v602
      %v1454 = vunpack.c.h.b16 %v602
      %v1455 = vunpack.c.l.b16 %v603
      %v1456 = vunpack.c.h.b16 %v603
      %v1457 = vunpack.c.l.b16 %v604
      %v1458 = vunpack.c.h.b16 %v604
      %v1459 = vunpack.c.l.b16 %v605
      %v1460 = vunpack.c.h.b16 %v605
      %v1461 = vunpack.c.l.b16 %v606
      %v1462 = vunpack.c.h.b16 %v606
      %v1463 = vunpack.c.l.b16 %v607
      %v1464 = vunpack.c.h.b16 %v607
      %v1465 = vunpack.c.l.b16 %v608
      %v1466 = vunpack.c.h.b16 %v608
      %v1467 = vunpack.c.l.b16 %v609
      %v1468 = vunpack.c.h.b16 %v609
      %v1469 = vunpack.c.l.b16 %v610
      %v1470 = vunpack.c.h.b16 %v610
      %v1471 = vunpack.c.l.b16 %v611
      %v1472 = vunpack.c.h.b16 %v611
      %v1473 = vunpack.c.l.b16 %v612
      %v1474 = vunpack.c.h.b16 %v612
      %v1475 = vunpack.c.l.b16 %v613
      %v1476 = vunpack.c.h.b16 %v613
      %v1477 = vunpack.c.l.b16 %v614
      %v1478 = vunpack.c.h.b16 %v614
      %v1479 = vunpack.c.l.b16 %v615
      %v1480 = vunpack.c.h.b16 %v615
      %v1481 = vunpack.c.l.b16 %v616
      %v1482 = vunpack.c.h.b16 %v616
      %v1483 = vunpack.c.l.b16 %v617
      %v1484 = vunpack.c.h.b16 %v617
      %v1485 = vunpack.c.l.b16 %v618
      %v1486 = vunpack.c.h.b16 %v618
      %v1487 = vunpack.c.l.b16 %v619
      %v1488 = vunpack.c.h.b16 %v619
      %v1489 = vunpack.c.l.b16 %v620
      %v1490 = vunpack.c.h.b16 %v620
      %v1491 = vunpack.c.l.b16 %v621
      %v1492 = vunpack.c.h.b16 %v621
      %v1493 = vunpack.c.l.b16 %v622
      %v1494 = vunpack.c.h.b16 %v622
      %v1495 = vunpack.c.l.b16 %v623
      %v1496 = vunpack.c.h.b16 %v623
      %v1497 = vunpack.c.l.b16 %v624
      %v1498 = vunpack.c.h.b16 %v624
      %v1499 = vunpack.c.l.b16 %v625
      %v1500 = vunpack.c.h.b16 %v625
      %v1501 = vunpack.c.l.b16 %v626
      %v1502 = vunpack.c.h.b16 %v626
      %v1503 = vunpack.c.l.b16 %v627
      %v1504 = vunpack.c.h.b16 %v627
      %v1505 = vunpack.c.l.b16 %v628
      %v1506 = vunpack.c.h.b16 %v628
      %v1507 = vunpack.c.l.b16 %v629
      %v1508 = vunpack.c.h.b16 %v629
      %v1509 = vunpack.c.l.b16 %v630
      %v1510 = vunpack.c.h.b16 %v630
      %v1511 = vunpack.c.l.b16 %v631
      %v1512 = vunpack.c.h.b16 %v631
      %v1513 = vunpack.c.l.b16 %v632
      %v1514 = vunpack.c.h.b16 %v632
      %v1515 = vunpack.c.l.b16 %v633
      %v1516 = vunpack.c.h.b16 %v633
      %v1517 = vunpack.c.l.b16 %v634
      %v1518 = vunpack.c.h.b16 %v634
      %v1519 = vunpack.c.l.b16 %v635
      %v1520 = vunpack.c.h.b16 %v635
      %v1521 = vunpack.c.l.b16 %v636
      %v1522 = vunpack.c.h.b16 %v636
      %v1523 = vunpack.c.l.b16 %v637
      %v1524 = vunpack.c.h.b16 %v637
      %v1525 = vunpack.c.l.b16 %v638
      %v1526 = vunpack.c.h.b16 %v638
      %v1527 = vunpack.c.l.b16 %v639
      %v1528 = vunpack.c.h.b16 %v639
      %v1529 = vunpack.c.l.b16 %v640
      %v1530 = vunpack.c.h.b16 %v640
      %v1531 = vunpack.c.l.b16 %v641
      %v1532 = vunpack.c.h.b16 %v641
      %v1533 = vunpack.c.l.b16 %v642
      %v1534 = vunpack.c.h.b16 %v642
      %v1535 = vunpack.c.l.b16 %v643
      %v1536 = vunpack.c.h.b16 %v643
      %v1537 = vunpack.c.l.b16 %v644
      %v1538 = vunpack.c.h.b16 %v644
      %v1539 = vunpack.c.l.b16 %v645
      %v1540 = vunpack.c.h.b16 %v645
      %v1541 = vunpack.c.l.b16 %v646
      %v1542 = vunpack.c.h.b16 %v646
      %v1543 = vunpack.c.l.b16 %v647
      %v1544 = vunpack.c.h.b16 %v647
      %v1545 = vunpack.c.l.b16 %v648
      %v1546 = vunpack.c.h.b16 %v648
      %v1547 = vunpack.c.l.b16 %v649
      %v1548 = vunpack.c.h.b16 %v649
      %v1549 = vunpack.c.l.b16 %v650
      %v1550 = vunpack.c.h.b16 %v650
      %v1551 = vunpack.c.l.b16 %v651
      %v1552 = vunpack.c.h.b16 %v651
      %v1553 = vunpack.c.l.b16 %v652
      %v1554 = vunpack.c.h.b16 %v652
      %v1555 = vunpack.c.l.b16 %v653
      %v1556 = vunpack.c.h.b16 %v653
      %v1557 = vunpack.c.l.b16 %v654
      %v1558 = vunpack.c.h.b16 %v654
      %v1559 = vunpack.c.l.b16 %v655
      %v1560 = vunpack.c.h.b16 %v655
      %v1561 = vunpack.c.l.b16 %v656
      %v1562 = vunpack.c.h.b16 %v656
      %v1563 = vunpack.c.l.b16 %v657
      %v1564 = vunpack.c.h.b16 %v657
      %v1565 = vunpack.c.l.b16 %v658
      %v1566 = vunpack.c.h.b16 %v658
      %v1567 = vunpack.c.l.b16 %v659
      %v1568 = vunpack.c.h.b16 %v659
      %v1569 = vunpack.c.l.b16 %v660
      %v1570 = vunpack.c.h.b16 %v660
      %v1571 = vunpack.c.l.b16 %v661
      %v1572 = vunpack.c.h.b16 %v661
      %v1573 = vunpack.c.l.b16 %v662
      %v1574 = vunpack.c.h.b16 %v662
      %v1575 = vunpack.c.l.b16 %v663
      %v1576 = vunpack.c.h.b16 %v663
      %v1577 = vunpack.c.l.b16 %v664
      %v1578 = vunpack.c.h.b16 %v664
      %v1579 = vunpack.c.l.b16 %v665
      %v1580 = vunpack.c.h.b16 %v665
      %v1581 = vunpack.c.l.b16 %v666
      %v1582 = vunpack.c.h.b16 %v666
      %v1583 = vunpack.c.l.b16 %v667
      %v1584 = vunpack.c.h.b16 %v667
      %v1585 = vunpack.c.l.b16 %v668
      %v1586 = vunpack.c.h.b16 %v668
      %v1587 = vunpack.c.l.b16 %v669
      %v1588 = vunpack.c.h.b16 %v669
      %v1589 = vunpack.c.l.b16 %v670
      %v1590 = vunpack.c.h.b16 %v670
      %v1591 = vunpack.c.l.b16 %v671
      %v1592 = vunpack.c.h.b16 %v671
      %v1593 = vunpack.c.l.b16 %v672
      %v1594 = vunpack.c.h.b16 %v672
      %v1595 = vunpack.c.l.b16 %v673
      %v1596 = vunpack.c.h.b16 %v673
      %v1597 = vunpack.c.l.b16 %v674
      %v1598 = vunpack.c.h.b16 %v674
      %v1599 = vunpack.c.l.b16 %v675
      %v1600 = vunpack.c.h.b16 %v675
      %v1601 = vunpack.c.l.b16 %v676
      %v1602 = vunpack.c.h.b16 %v676
      %v1603 = vunpack.c.l.b16 %v677
      %v1604 = vunpack.c.h.b16 %v677
      %v1605 = vunpack.c.l.b16 %v678
      %v1606 = vunpack.c.h.b16 %v678
      %v1607 = vpack.c.b16 %v1103, %v1095
      %v1608 = vpack.c.b16 %v1104, %v1096
      %v1609 = vpack.c.b16 %v1105, %v1097
      %v1610 = vpack.c.b16 %v1106, %v1098
      %v1611 = vpack.c.b16 %v1107, %v1099
      %v1612 = vpack.c.b16 %v1108, %v1100
      %v1613 = vpack.c.b16 %v1109, %v1101
      %v1614 = vpack.c.b16 %v1110, %v1102
      %v1615 = vpack.c.b16 %v1119, %v1111
      %v1616 = vpack.c.b16 %v1120, %v1112
      %v1617 = vpack.c.b16 %v1121, %v1113
      %v1618 = vpack.c.b16 %v1122, %v1114
      %v1619 = vpack.c.b16 %v1123, %v1115
      %v1620 = vpack.c.b16 %v1124, %v1116
      %v1621 = vpack.c.b16 %v1125, %v1117
      %v1622 = vpack.c.b16 %v1126, %v1118
      %v1623 = vpack.c.b16 %v1135, %v1127
      %v1624 = vpack.c.b16 %v1136, %v1128
      %v1625 = vpack.c.b16 %v1137, %v1129
      %v1626 = vpack.c.b16 %v1138, %v1130
      %v1627 = vpack.c.b16 %v1139, %v1131
      %v1628 = vpack.c.b16 %v1140, %v1132
      %v1629 = vpack.c.b16 %v1141, %v1133
      %v1630 = vpack.c.b16 %v1142, %v1134
      %v1631 = vpack.c.b16 %v1151, %v1143
      %v1632 = vpack.c.b16 %v1152, %v1144
      %v1633 = vpack.c.b16 %v1153, %v1145
      %v1634 = vpack.c.b16 %v1154, %v1146
      %v1635 = vpack.c.b16 %v1155, %v1147
      %v1636 = vpack.c.b16 %v1156, %v1148
      %v1637 = vpack.c.b16 %v1157, %v1149
      %v1638 = vpack.c.b16 %v1158, %v1150
      %v1639 = vpack.c.b16 %v1167, %v1159
      %v1640 = vpack.c.b16 %v1168, %v1160
      %v1641 = vpack.c.b16 %v1169, %v1161
      %v1642 = vpack.c.b16 %v1170, %v1162
      %v1643 = vpack.c.b16 %v1171, %v1163
      %v1644 = vpack.c.b16 %v1172, %v1164
      %v1645 = vpack.c.b16 %v1173, %v1165
      %v1646 = vpack.c.b16 %v1174, %v1166
      %v1647 = vpack.c.b16 %v1183, %v1175
      %v1648 = vpack.c.b16 %v1184, %v1176
      %v1649 = vpack.c.b16 %v1185, %v1177
      %v1650 = vpack.c.b16 %v1186, %v1178
      %v1651 = vpack.c.b16 %v1187, %v1179
      %v1652 = vpack.c.b16 %v1188, %v1180
      %v1653 = vpack.c.b16 %v1189, %v1181
      %v1654 = vpack.c.b16 %v1190, %v1182
      %v1655 = vpack.c.b16 %v1199, %v1191
      %v1656 = vpack.c.b16 %v1200, %v1192
      %v1657 = vpack.c.b16 %v1201, %v1193
      %v1658 = vpack.c.b16 %v1202, %v1194
      %v1659 = vpack.c.b16 %v1203, %v1195
      %v1660 = vpack.c.b16 %v1204, %v1196
      %v1661 = vpack.c.b16 %v1205, %v1197
      %v1662 = vpack.c.b16 %v1206, %v1198
      %v1663 = vpack.c.b16 %v1215, %v1207
      %v1664 = vpack.c.b16 %v1216, %v1208
      %v1665 = vpack.c.b16 %v1217, %v1209
      %v1666 = vpack.c.b16 %v1218, %v1210
      %v1667 = vpack.c.b16 %v1219, %v1211
      %v1668 = vpack.c.b16 %v1220, %v1212
      %v1669 = vpack.c.b16 %v1221, %v1213
      %v1670 = vpack.c.b16 %v1222, %v1214
      %v1671 = vpack.c.b16 %v1231, %v1223
      %v1672 = vpack.c.b16 %v1232, %v1224
      %v1673 = vpack.c.b16 %v1233, %v1225
      %v1674 = vpack.c.b16 %v1234, %v1226
      %v1675 = vpack.c.b16 %v1235, %v1227
      %v1676 = vpack.c.b16 %v1236, %v1228
      %v1677 = vpack.c.b16 %v1237, %v1229
      %v1678 = vpack.c.b16 %v1238, %v1230
      %v1679 = vpack.c.b16 %v1247, %v1239
      %v1680 = vpack.c.b16 %v1248, %v1240
      %v1681 = vpack.c.b16 %v1249, %v1241
      %v1682 = vpack.c.b16 %v1250, %v1242
      %v1683 = vpack.c.b16 %v1251, %v1243
      %v1684 = vpack.c.b16 %v1252, %v1244
      %v1685 = vpack.c.b16 %v1253, %v1245
      %v1686 = vpack.c.b16 %v1254, %v1246
      %v1687 = vpack.c.b16 %v1263, %v1255
      %v1688 = vpack.c.b16 %v1264, %v1256
      %v1689 = vpack.c.b16 %v1265, %v1257
      %v1690 = vpack.c.b16 %v1266, %v1258
      %v1691 = vpack.c.b16 %v1267, %v1259
      %v1692 = vpack.c.b16 %v1268, %v1260
      %v1693 = vpack.c.b16 %v1269, %v1261
      %v1694 = vpack.c.b16 %v1270, %v1262
      %v1695 = vpack.c.b16 %v1279, %v1271
      %v1696 = vpack.c.b16 %v1280, %v1272
      %v1697 = vpack.c.b16 %v1281, %v1273
      %v1698 = vpack.c.b16 %v1282, %v1274
      %v1699 = vpack.c.b16 %v1283, %v1275
      %v1700 = vpack.c.b16 %v1284, %v1276
      %v1701 = vpack.c.b16 %v1285, %v1277
      %v1702 = vpack.c.b16 %v1286, %v1278
      %v1703 = vpack.c.b16 %v1295, %v1287
      %v1704 = vpack.c.b16 %v1296, %v1288
      %v1705 = vpack.c.b16 %v1297, %v1289
      %v1706 = vpack.c.b16 %v1298, %v1290
      %v1707 = vpack.c.b16 %v1299, %v1291
      %v1708 = vpack.c.b16 %v1300, %v1292
      %v1709 = vpack.c.b16 %v1301, %v1293
      %v1710 = vpack.c.b16 %v1302, %v1294
      %v1711 = vpack.c.b16 %v1311, %v1303
      %v1712 = vpack.c.b16 %v1312, %v1304
      %v1713 = vpack.c.b16 %v1313, %v1305
      %v1714 = vpack.c.b16 %v1314, %v1306
      %v1715 = vpack.c.b16 %v1315, %v1307
      %v1716 = vpack.c.b16 %v1316, %v1308
      %v1717 = vpack.c.b16 %v1317, %v1309
      %v1718 = vpack.c.b16 %v1318, %v1310
      %v1719 = vpack.c.b16 %v1327, %v1319
      %v1720 = vpack.c.b16 %v1328, %v1320
      %v1721 = vpack.c.b16 %v1329, %v1321
      %v1722 = vpack.c.b16 %v1330, %v1322
      %v1723 = vpack.c.b16 %v1331, %v1323
      %v1724 = vpack.c.b16 %v1332, %v1324
      %v1725 = vpack.c.b16 %v1333, %v1325
      %v1726 = vpack.c.b16 %v1334, %v1326
      %v1727 = vpack.c.b16 %v1343, %v1335
      %v1728 = vpack.c.b16 %v1344, %v1336
      %v1729 = vpack.c.b16 %v1345, %v1337
      %v1730 = vpack.c.b16 %v1346, %v1338
      %v1731 = vpack.c.b16 %v1347, %v1339
      %v1732 = vpack.c.b16 %v1348, %v1340
      %v1733 = vpack.c.b16 %v1349, %v1341
      %v1734 = vpack.c.b16 %v1350, %v1342
      %v1735 = vpack.c.b16 %v1359, %v1351
      %v1736 = vpack.c.b16 %v1360, %v1352
      %v1737 = vpack.c.b16 %v1361, %v1353
      %v1738 = vpack.c.b16 %v1362, %v1354
      %v1739 = vpack.c.b16 %v1363, %v1355
      %v1740 = vpack.c.b16 %v1364, %v1356
      %v1741 = vpack.c.b16 %v1365, %v1357
      %v1742 = vpack.c.b16 %v1366, %v1358
      %v1743 = vpack.c.b16 %v1375, %v1367
      %v1744 = vpack.c.b16 %v1376, %v1368
      %v1745 = vpack.c.b16 %v1377, %v1369
      %v1746 = vpack.c.b16 %v1378, %v1370
      %v1747 = vpack.c.b16 %v1379, %v1371
      %v1748 = vpack.c.b16 %v1380, %v1372
      %v1749 = vpack.c.b16 %v1381, %v1373
      %v1750 = vpack.c.b16 %v1382, %v1374
      %v1751 = vpack.c.b16 %v1391, %v1383
      %v1752 = vpack.c.b16 %v1392, %v1384
      %v1753 = vpack.c.b16 %v1393, %v1385
      %v1754 = vpack.c.b16 %v1394, %v1386
      %v1755 = vpack.c.b16 %v1395, %v1387
      %v1756 = vpack.c.b16 %v1396, %v1388
      %v1757 = vpack.c.b16 %v1397, %v1389
      %v1758 = vpack.c.b16 %v1398, %v1390
      %v1759 = vpack.c.b16 %v1407, %v1399
      %v1760 = vpack.c.b16 %v1408, %v1400
      %v1761 = vpack.c.b16 %v1409, %v1401
      %v1762 = vpack.c.b16 %v1410, %v1402
      %v1763 = vpack.c.b16 %v1411, %v1403
      %v1764 = vpack.c.b16 %v1412, %v1404
      %v1765 = vpack.c.b16 %v1413, %v1405
      %v1766 = vpack.c.b16 %v1414, %v1406
      %v1767 = vpack.c.b16 %v1423, %v1415
      %v1768 = vpack.c.b16 %v1424, %v1416
      %v1769 = vpack.c.b16 %v1425, %v1417
      %v1770 = vpack.c.b16 %v1426, %v1418
      %v1771 = vpack.c.b16 %v1427, %v1419
      %v1772 = vpack.c.b16 %v1428, %v1420
      %v1773 = vpack.c.b16 %v1429, %v1421
      %v1774 = vpack.c.b16 %v1430, %v1422
      %v1775 = vpack.c.b16 %v1439, %v1431
      %v1776 = vpack.c.b16 %v1440, %v1432
      %v1777 = vpack.c.b16 %v1441, %v1433
      %v1778 = vpack.c.b16 %v1442, %v1434
      %v1779 = vpack.c.b16 %v1443, %v1435
      %v1780 = vpack.c.b16 %v1444, %v1436
      %v1781 = vpack.c.b16 %v1445, %v1437
      %v1782 = vpack.c.b16 %v1446, %v1438
      %v1783 = vpack.c.b16 %v1455, %v1447
      %v1784 = vpack.c.b16 %v1456, %v1448
      %v1785 = vpack.c.b16 %v1457, %v1449
      %v1786 = vpack.c.b16 %v1458, %v1450
      %v1787 = vpack.c.b16 %v1459, %v1451
      %v1788 = vpack.c.b16 %v1460, %v1452
      %v1789 = vpack.c.b16 %v1461, %v1453
      %v1790 = vpack.c.b16 %v1462, %v1454
      %v1791 = vpack.c.b16 %v1471, %v1463
      %v1792 = vpack.c.b16 %v1472, %v1464
      %v1793 = vpack.c.b16 %v1473, %v1465
      %v1794 = vpack.c.b16 %v1474, %v1466
      %v1795 = vpack.c.b16 %v1475, %v1467
      %v1796 = vpack.c.b16 %v1476, %v1468
      %v1797 = vpack.c.b16 %v1477, %v1469
      %v1798 = vpack.c.b16 %v1478, %v1470
      %v1799 = vpack.c.b16 %v1487, %v1479
      %v1800 = vpack.c.b16 %v1488, %v1480
      %v1801 = vpack.c.b16 %v1489, %v1481
      %v1802 = vpack.c.b16 %v1490, %v1482
      %v1803 = vpack.c.b16 %v1491, %v1483
      %v1804 = vpack.c.b16 %v1492, %v1484
      %v1805 = vpack.c.b16 %v1493, %v1485
      %v1806 = vpack.c.b16 %v1494, %v1486
      %v1807 = vpack.c.b16 %v1503, %v1495
      %v1808 = vpack.c.b16 %v1504, %v1496
      %v1809 = vpack.c.b16 %v1505, %v1497
      %v1810 = vpack.c.b16 %v1506, %v1498
      %v1811 = vpack.c.b16 %v1507, %v1499
      %v1812 = vpack.c.b16 %v1508, %v1500
      %v1813 = vpack.c.b16 %v1509, %v1501
      %v1814 = vpack.c.b16 %v1510, %v1502
      %v1815 = vpack.c.b16 %v1519, %v1511
      %v1816 = vpack.c.b16 %v1520, %v1512
      %v1817 = vpack.c.b16 %v1521, %v1513
      %v1818 = vpack.c.b16 %v1522, %v1514
      %v1819 = vpack.c.b16 %v1523, %v1515
      %v1820 = vpack.c.b16 %v1524, %v1516
      %v1821 = vpack.c.b16 %v1525, %v1517
      %v1822 = vpack.c.b16 %v1526, %v1518
      %v1823 = vpack.c.b16 %v1535, %v1527
      %v1824 = vpack.c.b16 %v1536, %v1528
      %v1825 = vpack.c.b16 %v1537, %v1529
      %v1826 = vpack.c.b16 %v1538, %v1530
      %v1827 = vpack.c.b16 %v1539, %v1531
      %v1828 = vpack.c.b16 %v1540, %v1532
      %v1829 = vpack.c.b16 %v1541, %v1533
      %v1830 = vpack.c.b16 %v1542, %v1534
      %v1831 = vpack.c.b16 %v1551, %v1543
      %v1832 = vpack.c.b16 %v1552, %v1544
      %v1833 = vpack.c.b16 %v1553, %v1545
      %v1834 = vpack.c.b16 %v1554, %v1546
      %v1835 = vpack.c.b16 %v1555, %v1547
      %v1836 = vpack.c.b16 %v1556, %v1548
      %v1837 = vpack.c.b16 %v1557, %v1549
      %v1838 = vpack.c.b16 %v1558, %v1550
      %v1839 = vpack.c.b16 %v1567, %v1559
      %v1840 = vpack.c.b16 %v1568, %v1560
      %v1841 = vpack.c.b16 %v1569, %v1561
      %v1842 = vpack.c.b16 %v1570, %v1562
      %v1843 = vpack.c.b16 %v1571, %v1563
      %v1844 = vpack.c.b16 %v1572, %v1564
      %v1845 = vpack.c.b16 %v1573, %v1565
      %v1846 = vpack.c.b16 %v1574, %v1566
      %v1847 = vpack.c.b16 %v1583, %v1575
      %v1848 = vpack.c.b16 %v1584, %v1576
      %v1849 = vpack.c.b16 %v1585, %v1577
      %v1850 = vpack.c.b16 %v1586, %v1578
      %v1851 = vpack.c.b16 %v1587, %v1579
      %v1852 = vpack.c.b16 %v1588, %v1580
      %v1853 = vpack.c.b16 %v1589, %v1581
      %v1854 = vpack.c.b16 %v1590, %v1582
      %v1855 = vpack.c.b16 %v1599, %v1591
      %v1856 = vpack.c.b16 %v1600, %v1592
      %v1857 = vpack.c.b16 %v1601, %v1593
      %v1858 = vpack.c.b16 %v1602, %v1594
      %v1859 = vpack.c.b16 %v1603, %v1595
      %v1860 = vpack.c.b16 %v1604, %v1596
      %v1861 = vpack.c.b16 %v1605, %v1597
      %v1862 = vpack.c.b16 %v1606, %v1598
      %2119 = vmatprep.subr.bf16.mxu0 %v1608
      %2120 = vmatpush1.bf16.msra.mxu0 %v1607
      %2121 = vmatprep.subr.bf16.mxu0 %v1616
      %2122 = vmatpush1.bf16.msra.mxu0 %v1615
      %2123 = vmatprep.subr.bf16.mxu0 %v1624
      %2124 = vmatpush1.bf16.msra.mxu0 %v1623
      %2125 = vmatprep.subr.bf16.mxu0 %v1632
      %2126 = vmatpush1.bf16.msra.mxu0 %v1631
      %2127 = vmatprep.subr.bf16.mxu0 %v1640
      %2128 = vmatpush1.bf16.msra.mxu0 %v1639
      %2129 = vmatprep.subr.bf16.mxu0 %v1648
      %2130 = vmatpush1.bf16.msra.mxu0 %v1647
      %2131 = vmatprep.subr.bf16.mxu0 %v1656
      %2132 = vmatpush1.bf16.msra.mxu0 %v1655
      %2133 = vmatprep.subr.bf16.mxu0 %v1664
      %2134 = vmatpush1.bf16.msra.mxu0 %v1663
      %2135 = vmatprep.subr.bf16.mxu0 %v1672
      %2136 = vmatpush1.bf16.msra.mxu0 %v1671
      %2137 = vmatprep.subr.bf16.mxu0 %v1680
      %2138 = vmatpush1.bf16.msra.mxu0 %v1679
      %2139 = vmatprep.subr.bf16.mxu0 %v1688
      %2140 = vmatpush1.bf16.msra.mxu0 %v1687
      %2141 = vmatprep.subr.bf16.mxu0 %v1696
      %2142 = vmatpush1.bf16.msra.mxu0 %v1695
      %2143 = vmatprep.subr.bf16.mxu0 %v1704
      %2144 = vmatpush1.bf16.msra.mxu0 %v1703
      %2145 = vmatprep.subr.bf16.mxu0 %v1712
      %2146 = vmatpush1.bf16.msra.mxu0 %v1711
      %2147 = vmatprep.subr.bf16.mxu0 %v1720
      %2148 = vmatpush1.bf16.msra.mxu0 %v1719
      %2149 = vmatprep.subr.bf16.mxu0 %v1728
      %2150 = vmatpush1.bf16.msra.mxu0 %v1727
      %2151 = vmatprep.mubr.bf16.mxu0 %v776
      %2152 = vmatmul.mubr.bf16.gmra.mrb[0].mxu0 %v775
      %v2153 = vpop.f32.mrb[0].mxu0
      %v2154 = vadd.f32 0.0, %v2153
      %v2155 = vpop.f32.mrb[0].mxu0
      %v2156 = vadd.f32 0.0, %v2155
      %v2157 = vpop.f32.mrb[0].mxu0
      %v2158 = vadd.f32 0.0, %v2157
      %v2159 = vpop.f32.mrb[0].mxu0
      %v2160 = vadd.f32 0.0, %v2159
      %2161 = vmatprep.mubr.bf16.mxu0 %v780
      %2162 = vmatmul.mubr.bf16.gmra.mrb[0].mxu0 %v779
      %v2163 = vpop.f32.mrb[0].mxu0
      %v2164 = vadd.f32 0.0, %v2163
      %v2165 = vpop.f32.mrb[0].mxu0
      %v2166 = vadd.f32 0.0, %v2165
      %v2167 = vpop.f32.mrb[0].mxu0
      %v2168 = vadd.f32 0.0, %v2167
      %v2169 = vpop.f32.mrb[0].mxu0
      %v2170 = vadd.f32 0.0, %v2169
      %2171 = vmatprep.mubr.bf16.mxu0 %v784
      %2172 = vmatmul.mubr.bf16.gmra.mrb[0].mxu0 %v783
      %v2173 = vpop.f32.mrb[0].mxu0
      %v2174 = vadd.f32 0.0, %v2173
      %v2175 = vpop.f32.mrb[0].mxu0
      %v2176 = vadd.f32 0.0, %v2175
      %v2177 = vpop.f32.mrb[0].mxu0
      %v2178 = vadd.f32 0.0, %v2177
      %v2179 = vpop.f32.mrb[0].mxu0
      %v2180 = vadd.f32 0.0, %v2179
      %2181 = vmatprep.mubr.bf16.mxu0 %v788
      %2182 = vmatmul.mubr.bf16.gmra.mrb[0].mxu0 %v787
      %v2183 = vpop.f32.mrb[0].mxu0
      %v2184 = vadd.f32 0.0, %v2183
      %v2185 = vpop.f32.mrb[0].mxu0
      %v2186 = vadd.f32 0.0, %v2185
      %v2187 = vpop.f32.mrb[0].mxu0
      %v2188 = vadd.f32 0.0, %v2187
      %v2189 = vpop.f32.mrb[0].mxu0
      %v2190 = vadd.f32 0.0, %v2189
      %2191 = vmatprep.mubr.bf16.mxu0 %v792
      %2192 = vmatmul.mubr.bf16.gmra.mrb[0].mxu0 %v791
      %v2193 = vpop.f32.mrb[0].mxu0
      %v2194 = vadd.f32 0.0, %v2193
      %v2195 = vpop.f32.mrb[0].mxu0
      %v2196 = vadd.f32 0.0, %v2195
      %v2197 = vpop.f32.mrb[0].mxu0
      %v2198 = vadd.f32 0.0, %v2197
      %v2199 = vpop.f32.mrb[0].mxu0
      %v2200 = vadd.f32 0.0, %v2199
      %2201 = vmatprep.mubr.bf16.mxu0 %v796
      %2202 = vmatmul.mubr.bf16.gmra.mrb[0].mxu0 %v795
      %v2203 = vpop.f32.mrb[0].mxu0
      %v2204 = vadd.f32 0.0, %v2203
      %v2205 = vpop.f32.mrb[0].mxu0
      %v2206 = vadd.f32 0.0, %v2205
      %v2207 = vpop.f32.mrb[0].mxu0
      %v2208 = vadd.f32 0.0, %v2207
      %v2209 = vpop.f32.mrb[0].mxu0
      %v2210 = vadd.f32 0.0, %v2209
      %2211 = vmatprep.mubr.bf16.mxu0 %v800
      %2212 = vmatmul.mubr.bf16.gmra.mrb[0].mxu0 %v799
      %v2213 = vpop.f32.mrb[0].mxu0
      %v2214 = vadd.f32 0.0, %v2213
      %v2215 = vpop.f32.mrb[0].mxu0
      %v2216 = vadd.f32 0.0, %v2215
      %v2217 = vpop.f32.mrb[0].mxu0
      %v2218 = vadd.f32 0.0, %v2217
      %v2219 = vpop.f32.mrb[0].mxu0
      %v2220 = vadd.f32 0.0, %v2219
      %2221 = vmatprep.mubr.bf16.mxu0 %v804
      %2222 = vmatmul.mubr.bf16.gmra.mrb[0].mxu0 %v803
      %v2223 = vpop.f32.mrb[0].mxu0
      %v2224 = vadd.f32 0.0, %v2223
      %v2225 = vpop.f32.mrb[0].mxu0
      %v2226 = vadd.f32 0.0, %v2225
      %v2227 = vpop.f32.mrb[0].mxu0
      %v2228 = vadd.f32 0.0, %v2227
      %v2229 = vpop.f32.mrb[0].mxu0
      %v2230 = vadd.f32 0.0, %v2229
      %2231 = vdwg.mxu0
      %2232 = vmatprep.subr.bf16.mxu0 %v1736
      %2233 = vmatpush1.bf16.msra.mxu0 %v1735
      %2234 = vmatprep.subr.bf16.mxu0 %v1744
      %2235 = vmatpush1.bf16.msra.mxu0 %v1743
      %2236 = vmatprep.subr.bf16.mxu0 %v1752
      %2237 = vmatpush1.bf16.msra.mxu0 %v1751
      %2238 = vmatprep.subr.bf16.mxu0 %v1760
      %2239 = vmatpush1.bf16.msra.mxu0 %v1759
      %2240 = vmatprep.subr.bf16.mxu0 %v1768
      %2241 = vmatpush1.bf16.msra.mxu0 %v1767
      %2242 = vmatprep.subr.bf16.mxu0 %v1776
      %2243 = vmatpush1.bf16.msra.mxu0 %v1775
      %2244 = vmatprep.subr.bf16.mxu0 %v1784
      %2245 = vmatpush1.bf16.msra.mxu0 %v1783
      %2246 = vmatprep.subr.bf16.mxu0 %v1792
      %2247 = vmatpush1.bf16.msra.mxu0 %v1791
      %2248 = vmatprep.subr.bf16.mxu0 %v1800
      %2249 = vmatpush1.bf16.msra.mxu0 %v1799
      %2250 = vmatprep.subr.bf16.mxu0 %v1808
      %2251 = vmatpush1.bf16.msra.mxu0 %v1807
      %2252 = vmatprep.subr.bf16.mxu0 %v1816
      %2253 = vmatpush1.bf16.msra.mxu0 %v1815
      %2254 = vmatprep.subr.bf16.mxu0 %v1824
      %2255 = vmatpush1.bf16.msra.mxu0 %v1823
      %2256 = vmatprep.subr.bf16.mxu0 %v1832
      %2257 = vmatpush1.bf16.msra.mxu0 %v1831
      %2258 = vmatprep.subr.bf16.mxu0 %v1840
      %2259 = vmatpush1.bf16.msra.mxu0 %v1839
      %2260 = vmatprep.subr.bf16.mxu0 %v1848
      %2261 = vmatpush1.bf16.msra.mxu0 %v1847
      %2262 = vmatprep.subr.bf16.mxu0 %v1856
      %2263 = vmatpush1.bf16.msra.mxu0 %v1855
      %2264 = vmatprep.mubr.bf16.mxu0 %v778
      %2265 = vmatmul.mubr.bf16.gmra.mrb[0].mxu0 %v777
      %v2266 = vpop.f32.mrb[0].mxu0
      %v2267 = vadd.f32 %v2154, %v2266
      %v2268 = vpop.f32.mrb[0].mxu0
      %v2269 = vadd.f32 %v2156, %v2268
      %v2270 = vpop.f32.mrb[0].mxu0
      %v2271 = vadd.f32 %v2158, %v2270
      %v2272 = vpop.f32.mrb[0].mxu0
      %v2273 = vadd.f32 %v2160, %v2272
      %2274 = vmatprep.mubr.bf16.mxu0 %v782
      %2275 = vmatmul.mubr.bf16.gmra.mrb[0].mxu0 %v781
      %v2276 = vpop.f32.mrb[0].mxu0
      %v2277 = vadd.f32 %v2164, %v2276
      %v2278 = vpop.f32.mrb[0].mxu0
      %v2279 = vadd.f32 %v2166, %v2278
      %v2280 = vpop.f32.mrb[0].mxu0
      %v2281 = vadd.f32 %v2168, %v2280
      %v2282 = vpop.f32.mrb[0].mxu0
      %v2283 = vadd.f32 %v2170, %v2282
      %2284 = vmatprep.mubr.bf16.mxu0 %v786
      %2285 = vmatmul.mubr.bf16.gmra.mrb[0].mxu0 %v785
      %v2286 = vpop.f32.mrb[0].mxu0
      %v2287 = vadd.f32 %v2174, %v2286
      %v2288 = vpop.f32.mrb[0].mxu0
      %v2289 = vadd.f32 %v2176, %v2288
      %v2290 = vpop.f32.mrb[0].mxu0
      %v2291 = vadd.f32 %v2178, %v2290
      %v2292 = vpop.f32.mrb[0].mxu0
      %v2293 = vadd.f32 %v2180, %v2292
      %2294 = vmatprep.mubr.bf16.mxu0 %v790
      %2295 = vmatmul.mubr.bf16.gmra.mrb[0].mxu0 %v789
      %v2296 = vpop.f32.mrb[0].mxu0
      %v2297 = vadd.f32 %v2184, %v2296
      %v2298 = vpop.f32.mrb[0].mxu0
      %v2299 = vadd.f32 %v2186, %v2298
      %v2300 = vpop.f32.mrb[0].mxu0
      %v2301 = vadd.f32 %v2188, %v2300
      %v2302 = vpop.f32.mrb[0].mxu0
      %v2303 = vadd.f32 %v2190, %v2302
      %2304 = vmatprep.mubr.bf16.mxu0 %v794
      %2305 = vmatmul.mubr.bf16.gmra.mrb[0].mxu0 %v793
      %v2306 = vpop.f32.mrb[0].mxu0
      %v2307 = vadd.f32 %v2194, %v2306
      %v2308 = vpop.f32.mrb[0].mxu0
      %v2309 = vadd.f32 %v2196, %v2308
      %v2310 = vpop.f32.mrb[0].mxu0
      %v2311 = vadd.f32 %v2198, %v2310
      %v2312 = vpop.f32.mrb[0].mxu0
      %v2313 = vadd.f32 %v2200, %v2312
      %2314 = vmatprep.mubr.bf16.mxu0 %v798
      %2315 = vmatmul.mubr.bf16.gmra.mrb[0].mxu0 %v797
      %v2316 = vpop.f32.mrb[0].mxu0
      %v2317 = vadd.f32 %v2204, %v2316
      %v2318 = vpop.f32.mrb[0].mxu0
      %v2319 = vadd.f32 %v2206, %v2318
      %v2320 = vpop.f32.mrb[0].mxu0
      %v2321 = vadd.f32 %v2208, %v2320
      %v2322 = vpop.f32.mrb[0].mxu0
      %v2323 = vadd.f32 %v2210, %v2322
      %2324 = vmatprep.mubr.bf16.mxu0 %v802
      %2325 = vmatmul.mubr.bf16.gmra.mrb[0].mxu0 %v801
      %v2326 = vpop.f32.mrb[0].mxu0
      %v2327 = vadd.f32 %v2214, %v2326
      %v2328 = vpop.f32.mrb[0].mxu0
      %v2329 = vadd.f32 %v2216, %v2328
      %v2330 = vpop.f32.mrb[0].mxu0
      %v2331 = vadd.f32 %v2218, %v2330
      %v2332 = vpop.f32.mrb[0].mxu0
      %v2333 = vadd.f32 %v2220, %v2332
      %2334 = vmatprep.mubr.bf16.mxu0 %v806
      %2335 = vmatmul.mubr.bf16.gmra.mrb[0].mxu0 %v805
      %v2336 = vpop.f32.mrb[0].mxu0
      %v2337 = vadd.f32 %v2224, %v2336
      %v2338 = vpop.f32.mrb[0].mxu0
      %v2339 = vadd.f32 %v2226, %v2338
      %v2340 = vpop.f32.mrb[0].mxu0
      %v2341 = vadd.f32 %v2228, %v2340
      %v2342 = vpop.f32.mrb[0].mxu0
      %v2343 = vadd.f32 %v2230, %v2342
      %2344 = vdwg.mxu0
      %2345 = vmatprep.subr.bf16.mxu0 %v1610
      %2346 = vmatpush1.bf16.msra.mxu0 %v1609
      %2347 = vmatprep.subr.bf16.mxu0 %v1618
      %2348 = vmatpush1.bf16.msra.mxu0 %v1617
      %2349 = vmatprep.subr.bf16.mxu0 %v1626
      %2350 = vmatpush1.bf16.msra.mxu0 %v1625
      %2351 = vmatprep.subr.bf16.mxu0 %v1634
      %2352 = vmatpush1.bf16.msra.mxu0 %v1633
      %2353 = vmatprep.subr.bf16.mxu0 %v1642
      %2354 = vmatpush1.bf16.msra.mxu0 %v1641
      %2355 = vmatprep.subr.bf16.mxu0 %v1650
      %2356 = vmatpush1.bf16.msra.mxu0 %v1649
      %2357 = vmatprep.subr.bf16.mxu0 %v1658
      %2358 = vmatpush1.bf16.msra.mxu0 %v1657
      %2359 = vmatprep.subr.bf16.mxu0 %v1666
      %2360 = vmatpush1.bf16.msra.mxu0 %v1665
      %2361 = vmatprep.subr.bf16.mxu0 %v1674
      %2362 = vmatpush1.bf16.msra.mxu0 %v1673
      %2363 = vmatprep.subr.bf16.mxu0 %v1682
      %2364 = vmatpush1.bf16.msra.mxu0 %v1681
      %2365 = vmatprep.subr.bf16.mxu0 %v1690
      %2366 = vmatpush1.bf16.msra.mxu0 %v1689
      %2367 = vmatprep.subr.bf16.mxu0 %v1698
      %2368 = vmatpush1.bf16.msra.mxu0 %v1697
      %2369 = vmatprep.subr.bf16.mxu0 %v1706
      %2370 = vmatpush1.bf16.msra.mxu0 %v1705
      %2371 = vmatprep.subr.bf16.mxu0 %v1714
      %2372 = vmatpush1.bf16.msra.mxu0 %v1713
      %2373 = vmatprep.subr.bf16.mxu0 %v1722
      %2374 = vmatpush1.bf16.msra.mxu0 %v1721
      %2375 = vmatprep.subr.bf16.mxu0 %v1730
      %2376 = vmatpush1.bf16.msra.mxu0 %v1729
      %2377 = vmatprep.mubr.bf16.mxu0 %v776
      %2378 = vmatmul.mubr.bf16.gmra.mrb[0].mxu0 %v775
      %v2379 = vpop.f32.mrb[0].mxu0
      %v2380 = vadd.f32 0.0, %v2379
      %v2381 = vpop.f32.mrb[0].mxu0
      %v2382 = vadd.f32 0.0, %v2381
      %v2383 = vpop.f32.mrb[0].mxu0
      %v2384 = vadd.f32 0.0, %v2383
      %v2385 = vpop.f32.mrb[0].mxu0
      %v2386 = vadd.f32 0.0, %v2385
      %2387 = vmatprep.mubr.bf16.mxu0 %v780
      %2388 = vmatmul.mubr.bf16.gmra.mrb[0].mxu0 %v779
      %v2389 = vpop.f32.mrb[0].mxu0
      %v2390 = vadd.f32 0.0, %v2389
      %v2391 = vpop.f32.mrb[0].mxu0
      %v2392 = vadd.f32 0.0, %v2391
      %v2393 = vpop.f32.mrb[0].mxu0
      %v2394 = vadd.f32 0.0, %v2393
      %v2395 = vpop.f32.mrb[0].mxu0
      %v2396 = vadd.f32 0.0, %v2395
      %2397 = vmatprep.mubr.bf16.mxu0 %v784
      %2398 = vmatmul.mubr.bf16.gmra.mrb[0].mxu0 %v783
      %v2399 = vpop.f32.mrb[0].mxu0
      %v2400 = vadd.f32 0.0, %v2399
      %v2401 = vpop.f32.mrb[0].mxu0
      %v2402 = vadd.f32 0.0, %v2401
      %v2403 = vpop.f32.mrb[0].mxu0
      %v2404 = vadd.f32 0.0, %v2403
      %v2405 = vpop.f32.mrb[0].mxu0
      %v2406 = vadd.f32 0.0, %v2405
      %2407 = vmatprep.mubr.bf16.mxu0 %v788
      %2408 = vmatmul.mubr.bf16.gmra.mrb[0].mxu0 %v787
      %v2409 = vpop.f32.mrb[0].mxu0
      %v2410 = vadd.f32 0.0, %v2409
      %v2411 = vpop.f32.mrb[0].mxu0
      %v2412 = vadd.f32 0.0, %v2411
      %v2413 = vpop.f32.mrb[0].mxu0
      %v2414 = vadd.f32 0.0, %v2413
      %v2415 = vpop.f32.mrb[0].mxu0
      %v2416 = vadd.f32 0.0, %v2415
      %2417 = vmatprep.mubr.bf16.mxu0 %v792
      %2418 = vmatmul.mubr.bf16.gmra.mrb[0].mxu0 %v791
      %v2419 = vpop.f32.mrb[0].mxu0
      %v2420 = vadd.f32 0.0, %v2419
      %v2421 = vpop.f32.mrb[0].mxu0
      %v2422 = vadd.f32 0.0, %v2421
      %v2423 = vpop.f32.mrb[0].mxu0
      %v2424 = vadd.f32 0.0, %v2423
      %v2425 = vpop.f32.mrb[0].mxu0
      %v2426 = vadd.f32 0.0, %v2425
      %2427 = vmatprep.mubr.bf16.mxu0 %v796
      %2428 = vmatmul.mubr.bf16.gmra.mrb[0].mxu0 %v795
      %v2429 = vpop.f32.mrb[0].mxu0
      %v2430 = vadd.f32 0.0, %v2429
      %v2431 = vpop.f32.mrb[0].mxu0
      %v2432 = vadd.f32 0.0, %v2431
      %v2433 = vpop.f32.mrb[0].mxu0
      %v2434 = vadd.f32 0.0, %v2433
      %v2435 = vpop.f32.mrb[0].mxu0
      %v2436 = vadd.f32 0.0, %v2435
      %2437 = vmatprep.mubr.bf16.mxu0 %v800
      %2438 = vmatmul.mubr.bf16.gmra.mrb[0].mxu0 %v799
      %v2439 = vpop.f32.mrb[0].mxu0
      %v2440 = vadd.f32 0.0, %v2439
      %v2441 = vpop.f32.mrb[0].mxu0
      %v2442 = vadd.f32 0.0, %v2441
      %v2443 = vpop.f32.mrb[0].mxu0
      %v2444 = vadd.f32 0.0, %v2443
      %v2445 = vpop.f32.mrb[0].mxu0
      %v2446 = vadd.f32 0.0, %v2445
      %2447 = vmatprep.mubr.bf16.mxu0 %v804
      %2448 = vmatmul.mubr.bf16.gmra.mrb[0].mxu0 %v803
      %v2449 = vpop.f32.mrb[0].mxu0
      %v2450 = vadd.f32 0.0, %v2449
      %v2451 = vpop.f32.mrb[0].mxu0
      %v2452 = vadd.f32 0.0, %v2451
      %v2453 = vpop.f32.mrb[0].mxu0
      %v2454 = vadd.f32 0.0, %v2453
      %v2455 = vpop.f32.mrb[0].mxu0
      %v2456 = vadd.f32 0.0, %v2455
      %2457 = vdwg.mxu0
      %2458 = vmatprep.subr.bf16.mxu0 %v1738
      %2459 = vmatpush1.bf16.msra.mxu0 %v1737
      %2460 = vmatprep.subr.bf16.mxu0 %v1746
      %2461 = vmatpush1.bf16.msra.mxu0 %v1745
      %2462 = vmatprep.subr.bf16.mxu0 %v1754
      %2463 = vmatpush1.bf16.msra.mxu0 %v1753
      %2464 = vmatprep.subr.bf16.mxu0 %v1762
      %2465 = vmatpush1.bf16.msra.mxu0 %v1761
      %2466 = vmatprep.subr.bf16.mxu0 %v1770
      %2467 = vmatpush1.bf16.msra.mxu0 %v1769
      %2468 = vmatprep.subr.bf16.mxu0 %v1778
      %2469 = vmatpush1.bf16.msra.mxu0 %v1777
      %2470 = vmatprep.subr.bf16.mxu0 %v1786
      %2471 = vmatpush1.bf16.msra.mxu0 %v1785
      %2472 = vmatprep.subr.bf16.mxu0 %v1794
      %2473 = vmatpush1.bf16.msra.mxu0 %v1793
      %2474 = vmatprep.subr.bf16.mxu0 %v1802
      %2475 = vmatpush1.bf16.msra.mxu0 %v1801
      %2476 = vmatprep.subr.bf16.mxu0 %v1810
      %2477 = vmatpush1.bf16.msra.mxu0 %v1809
      %2478 = vmatprep.subr.bf16.mxu0 %v1818
      %2479 = vmatpush1.bf16.msra.mxu0 %v1817
      %2480 = vmatprep.subr.bf16.mxu0 %v1826
      %2481 = vmatpush1.bf16.msra.mxu0 %v1825
      %2482 = vmatprep.subr.bf16.mxu0 %v1834
      %2483 = vmatpush1.bf16.msra.mxu0 %v1833
      %2484 = vmatprep.subr.bf16.mxu0 %v1842
      %2485 = vmatpush1.bf16.msra.mxu0 %v1841
      %2486 = vmatprep.subr.bf16.mxu0 %v1850
      %2487 = vmatpush1.bf16.msra.mxu0 %v1849
      %2488 = vmatprep.subr.bf16.mxu0 %v1858
      %2489 = vmatpush1.bf16.msra.mxu0 %v1857
      %2490 = vmatprep.mubr.bf16.mxu0 %v778
      %2491 = vmatmul.mubr.bf16.gmra.mrb[0].mxu0 %v777
      %v2492 = vpop.f32.mrb[0].mxu0
      %v2493 = vadd.f32 %v2380, %v2492
      %v2494 = vpop.f32.mrb[0].mxu0
      %v2495 = vadd.f32 %v2382, %v2494
      %v2496 = vpop.f32.mrb[0].mxu0
      %v2497 = vadd.f32 %v2384, %v2496
      %v2498 = vpop.f32.mrb[0].mxu0
      %v2499 = vadd.f32 %v2386, %v2498
      %2500 = vmatprep.mubr.bf16.mxu0 %v782
      %2501 = vmatmul.mubr.bf16.gmra.mrb[0].mxu0 %v781
      %v2502 = vpop.f32.mrb[0].mxu0
      %v2503 = vadd.f32 %v2390, %v2502
      %v2504 = vpop.f32.mrb[0].mxu0
      %v2505 = vadd.f32 %v2392, %v2504
      %v2506 = vpop.f32.mrb[0].mxu0
      %v2507 = vadd.f32 %v2394, %v2506
      %v2508 = vpop.f32.mrb[0].mxu0
      %v2509 = vadd.f32 %v2396, %v2508
      %2510 = vmatprep.mubr.bf16.mxu0 %v786
      %2511 = vmatmul.mubr.bf16.gmra.mrb[0].mxu0 %v785
      %v2512 = vpop.f32.mrb[0].mxu0
      %v2513 = vadd.f32 %v2400, %v2512
      %v2514 = vpop.f32.mrb[0].mxu0
      %v2515 = vadd.f32 %v2402, %v2514
      %v2516 = vpop.f32.mrb[0].mxu0
      %v2517 = vadd.f32 %v2404, %v2516
      %v2518 = vpop.f32.mrb[0].mxu0
      %v2519 = vadd.f32 %v2406, %v2518
      %2520 = vmatprep.mubr.bf16.mxu0 %v790
      %2521 = vmatmul.mubr.bf16.gmra.mrb[0].mxu0 %v789
      %v2522 = vpop.f32.mrb[0].mxu0
      %v2523 = vadd.f32 %v2410, %v2522
      %v2524 = vpop.f32.mrb[0].mxu0
      %v2525 = vadd.f32 %v2412, %v2524
      %v2526 = vpop.f32.mrb[0].mxu0
      %v2527 = vadd.f32 %v2414, %v2526
      %v2528 = vpop.f32.mrb[0].mxu0
      %v2529 = vadd.f32 %v2416, %v2528
      %2530 = vmatprep.mubr.bf16.mxu0 %v794
      %2531 = vmatmul.mubr.bf16.gmra.mrb[0].mxu0 %v793
      %v2532 = vpop.f32.mrb[0].mxu0
      %v2533 = vadd.f32 %v2420, %v2532
      %v2534 = vpop.f32.mrb[0].mxu0
      %v2535 = vadd.f32 %v2422, %v2534
      %v2536 = vpop.f32.mrb[0].mxu0
      %v2537 = vadd.f32 %v2424, %v2536
      %v2538 = vpop.f32.mrb[0].mxu0
      %v2539 = vadd.f32 %v2426, %v2538
      %2540 = vmatprep.mubr.bf16.mxu0 %v798
      %2541 = vmatmul.mubr.bf16.gmra.mrb[0].mxu0 %v797
      %v2542 = vpop.f32.mrb[0].mxu0
      %v2543 = vadd.f32 %v2430, %v2542
      %v2544 = vpop.f32.mrb[0].mxu0
      %v2545 = vadd.f32 %v2432, %v2544
      %v2546 = vpop.f32.mrb[0].mxu0
      %v2547 = vadd.f32 %v2434, %v2546
      %v2548 = vpop.f32.mrb[0].mxu0
      %v2549 = vadd.f32 %v2436, %v2548
      %2550 = vmatprep.mubr.bf16.mxu0 %v802
      %2551 = vmatmul.mubr.bf16.gmra.mrb[0].mxu0 %v801
      %v2552 = vpop.f32.mrb[0].mxu0
      %v2553 = vadd.f32 %v2440, %v2552
      %v2554 = vpop.f32.mrb[0].mxu0
      %v2555 = vadd.f32 %v2442, %v2554
      %v2556 = vpop.f32.mrb[0].mxu0
      %v2557 = vadd.f32 %v2444, %v2556
      %v2558 = vpop.f32.mrb[0].mxu0
      %v2559 = vadd.f32 %v2446, %v2558
      %2560 = vmatprep.mubr.bf16.mxu0 %v806
      %2561 = vmatmul.mubr.bf16.gmra.mrb[0].mxu0 %v805
      %v2562 = vpop.f32.mrb[0].mxu0
      %v2563 = vadd.f32 %v2450, %v2562
      %v2564 = vpop.f32.mrb[0].mxu0
      %v2565 = vadd.f32 %v2452, %v2564
      %v2566 = vpop.f32.mrb[0].mxu0
      %v2567 = vadd.f32 %v2454, %v2566
      %v2568 = vpop.f32.mrb[0].mxu0
      %v2569 = vadd.f32 %v2456, %v2568
      %2570 = vdwg.mxu0
      %2571 = vmatprep.subr.bf16.mxu0 %v1612
      %2572 = vmatpush1.bf16.msra.mxu0 %v1611
      %2573 = vmatprep.subr.bf16.mxu0 %v1620
      %2574 = vmatpush1.bf16.msra.mxu0 %v1619
      %2575 = vmatprep.subr.bf16.mxu0 %v1628
      %2576 = vmatpush1.bf16.msra.mxu0 %v1627
      %2577 = vmatprep.subr.bf16.mxu0 %v1636
      %2578 = vmatpush1.bf16.msra.mxu0 %v1635
      %2579 = vmatprep.subr.bf16.mxu0 %v1644
      %2580 = vmatpush1.bf16.msra.mxu0 %v1643
      %2581 = vmatprep.subr.bf16.mxu0 %v1652
      %2582 = vmatpush1.bf16.msra.mxu0 %v1651
      %2583 = vmatprep.subr.bf16.mxu0 %v1660
      %2584 = vmatpush1.bf16.msra.mxu0 %v1659
      %2585 = vmatprep.subr.bf16.mxu0 %v1668
      %2586 = vmatpush1.bf16.msra.mxu0 %v1667
      %2587 = vmatprep.subr.bf16.mxu0 %v1676
      %2588 = vmatpush1.bf16.msra.mxu0 %v1675
      %2589 = vmatprep.subr.bf16.mxu0 %v1684
      %2590 = vmatpush1.bf16.msra.mxu0 %v1683
      %2591 = vmatprep.subr.bf16.mxu0 %v1692
      %2592 = vmatpush1.bf16.msra.mxu0 %v1691
      %2593 = vmatprep.subr.bf16.mxu0 %v1700
      %2594 = vmatpush1.bf16.msra.mxu0 %v1699
      %2595 = vmatprep.subr.bf16.mxu0 %v1708
      %2596 = vmatpush1.bf16.msra.mxu0 %v1707
      %2597 = vmatprep.subr.bf16.mxu0 %v1716
      %2598 = vmatpush1.bf16.msra.mxu0 %v1715
      %2599 = vmatprep.subr.bf16.mxu0 %v1724
      %2600 = vmatpush1.bf16.msra.mxu0 %v1723
      %2601 = vmatprep.subr.bf16.mxu0 %v1732
      %2602 = vmatpush1.bf16.msra.mxu0 %v1731
      %2603 = vmatprep.mubr.bf16.mxu0 %v776
      %2604 = vmatmul.mubr.bf16.gmra.mrb[0].mxu0 %v775
      %v2605 = vpop.f32.mrb[0].mxu0
      %v2606 = vadd.f32 0.0, %v2605
      %v2607 = vpop.f32.mrb[0].mxu0
      %v2608 = vadd.f32 0.0, %v2607
      %v2609 = vpop.f32.mrb[0].mxu0
      %v2610 = vadd.f32 0.0, %v2609
      %v2611 = vpop.f32.mrb[0].mxu0
      %v2612 = vadd.f32 0.0, %v2611
      %2613 = vmatprep.mubr.bf16.mxu0 %v780
      %2614 = vmatmul.mubr.bf16.gmra.mrb[0].mxu0 %v779
      %v2615 = vpop.f32.mrb[0].mxu0
      %v2616 = vadd.f32 0.0, %v2615
      %v2617 = vpop.f32.mrb[0].mxu0
      %v2618 = vadd.f32 0.0, %v2617
      %v2619 = vpop.f32.mrb[0].mxu0
      %v2620 = vadd.f32 0.0, %v2619
      %v2621 = vpop.f32.mrb[0].mxu0
      %v2622 = vadd.f32 0.0, %v2621
      %2623 = vmatprep.mubr.bf16.mxu0 %v784
      %2624 = vmatmul.mubr.bf16.gmra.mrb[0].mxu0 %v783
      %v2625 = vpop.f32.mrb[0].mxu0
      %v2626 = vadd.f32 0.0, %v2625
      %v2627 = vpop.f32.mrb[0].mxu0
      %v2628 = vadd.f32 0.0, %v2627
      %v2629 = vpop.f32.mrb[0].mxu0
      %v2630 = vadd.f32 0.0, %v2629
      %v2631 = vpop.f32.mrb[0].mxu0
      %v2632 = vadd.f32 0.0, %v2631
      %2633 = vmatprep.mubr.bf16.mxu0 %v788
      %2634 = vmatmul.mubr.bf16.gmra.mrb[0].mxu0 %v787
      %v2635 = vpop.f32.mrb[0].mxu0
      %v2636 = vadd.f32 0.0, %v2635
      %v2637 = vpop.f32.mrb[0].mxu0
      %v2638 = vadd.f32 0.0, %v2637
      %v2639 = vpop.f32.mrb[0].mxu0
      %v2640 = vadd.f32 0.0, %v2639
      %v2641 = vpop.f32.mrb[0].mxu0
      %v2642 = vadd.f32 0.0, %v2641
      %2643 = vmatprep.mubr.bf16.mxu0 %v792
      %2644 = vmatmul.mubr.bf16.gmra.mrb[0].mxu0 %v791
      %v2645 = vpop.f32.mrb[0].mxu0
      %v2646 = vadd.f32 0.0, %v2645
      %v2647 = vpop.f32.mrb[0].mxu0
      %v2648 = vadd.f32 0.0, %v2647
      %v2649 = vpop.f32.mrb[0].mxu0
      %v2650 = vadd.f32 0.0, %v2649
      %v2651 = vpop.f32.mrb[0].mxu0
      %v2652 = vadd.f32 0.0, %v2651
      %2653 = vmatprep.mubr.bf16.mxu0 %v796
      %2654 = vmatmul.mubr.bf16.gmra.mrb[0].mxu0 %v795
      %v2655 = vpop.f32.mrb[0].mxu0
      %v2656 = vadd.f32 0.0, %v2655
      %v2657 = vpop.f32.mrb[0].mxu0
      %v2658 = vadd.f32 0.0, %v2657
      %v2659 = vpop.f32.mrb[0].mxu0
      %v2660 = vadd.f32 0.0, %v2659
      %v2661 = vpop.f32.mrb[0].mxu0
      %v2662 = vadd.f32 0.0, %v2661
      %2663 = vmatprep.mubr.bf16.mxu0 %v800
      %2664 = vmatmul.mubr.bf16.gmra.mrb[0].mxu0 %v799
      %v2665 = vpop.f32.mrb[0].mxu0
      %v2666 = vadd.f32 0.0, %v2665
      %v2667 = vpop.f32.mrb[0].mxu0
      %v2668 = vadd.f32 0.0, %v2667
      %v2669 = vpop.f32.mrb[0].mxu0
      %v2670 = vadd.f32 0.0, %v2669
      %v2671 = vpop.f32.mrb[0].mxu0
      %v2672 = vadd.f32 0.0, %v2671
      %2673 = vmatprep.mubr.bf16.mxu0 %v804
      %2674 = vmatmul.mubr.bf16.gmra.mrb[0].mxu0 %v803
      %v2675 = vpop.f32.mrb[0].mxu0
      %v2676 = vadd.f32 0.0, %v2675
      %v2677 = vpop.f32.mrb[0].mxu0
      %v2678 = vadd.f32 0.0, %v2677
      %v2679 = vpop.f32.mrb[0].mxu0
      %v2680 = vadd.f32 0.0, %v2679
      %v2681 = vpop.f32.mrb[0].mxu0
      %v2682 = vadd.f32 0.0, %v2681
      %2683 = vdwg.mxu0
      %2684 = vmatprep.subr.bf16.mxu0 %v1740
      %2685 = vmatpush1.bf16.msra.mxu0 %v1739
      %2686 = vmatprep.subr.bf16.mxu0 %v1748
      %2687 = vmatpush1.bf16.msra.mxu0 %v1747
      %2688 = vmatprep.subr.bf16.mxu0 %v1756
      %2689 = vmatpush1.bf16.msra.mxu0 %v1755
      %2690 = vmatprep.subr.bf16.mxu0 %v1764
      %2691 = vmatpush1.bf16.msra.mxu0 %v1763
      %2692 = vmatprep.subr.bf16.mxu0 %v1772
      %2693 = vmatpush1.bf16.msra.mxu0 %v1771
      %2694 = vmatprep.subr.bf16.mxu0 %v1780
      %2695 = vmatpush1.bf16.msra.mxu0 %v1779
      %2696 = vmatprep.subr.bf16.mxu0 %v1788
      %2697 = vmatpush1.bf16.msra.mxu0 %v1787
      %2698 = vmatprep.subr.bf16.mxu0 %v1796
      %2699 = vmatpush1.bf16.msra.mxu0 %v1795
      %2700 = vmatprep.subr.bf16.mxu0 %v1804
      %2701 = vmatpush1.bf16.msra.mxu0 %v1803
      %2702 = vmatprep.subr.bf16.mxu0 %v1812
      %2703 = vmatpush1.bf16.msra.mxu0 %v1811
      %2704 = vmatprep.subr.bf16.mxu0 %v1820
      %2705 = vmatpush1.bf16.msra.mxu0 %v1819
      %2706 = vmatprep.subr.bf16.mxu0 %v1828
      %2707 = vmatpush1.bf16.msra.mxu0 %v1827
      %2708 = vmatprep.subr.bf16.mxu0 %v1836
      %2709 = vmatpush1.bf16.msra.mxu0 %v1835
      %2710 = vmatprep.subr.bf16.mxu0 %v1844
      %2711 = vmatpush1.bf16.msra.mxu0 %v1843
      %2712 = vmatprep.subr.bf16.mxu0 %v1852
      %2713 = vmatpush1.bf16.msra.mxu0 %v1851
      %2714 = vmatprep.subr.bf16.mxu0 %v1860
      %2715 = vmatpush1.bf16.msra.mxu0 %v1859
      %2716 = vmatprep.mubr.bf16.mxu0 %v778
      %2717 = vmatmul.mubr.bf16.gmra.mrb[0].mxu0 %v777
      %v2718 = vpop.f32.mrb[0].mxu0
      %v2719 = vadd.f32 %v2606, %v2718
      %v2720 = vpop.f32.mrb[0].mxu0
      %v2721 = vadd.f32 %v2608, %v2720
      %v2722 = vpop.f32.mrb[0].mxu0
      %v2723 = vadd.f32 %v2610, %v2722
      %v2724 = vpop.f32.mrb[0].mxu0
      %v2725 = vadd.f32 %v2612, %v2724
      %2726 = vmatprep.mubr.bf16.mxu0 %v782
      %2727 = vmatmul.mubr.bf16.gmra.mrb[0].mxu0 %v781
      %v2728 = vpop.f32.mrb[0].mxu0
      %v2729 = vadd.f32 %v2616, %v2728
      %v2730 = vpop.f32.mrb[0].mxu0
      %v2731 = vadd.f32 %v2618, %v2730
      %v2732 = vpop.f32.mrb[0].mxu0
      %v2733 = vadd.f32 %v2620, %v2732
      %v2734 = vpop.f32.mrb[0].mxu0
      %v2735 = vadd.f32 %v2622, %v2734
      %2736 = vmatprep.mubr.bf16.mxu0 %v786
      %2737 = vmatmul.mubr.bf16.gmra.mrb[0].mxu0 %v785
      %v2738 = vpop.f32.mrb[0].mxu0
      %v2739 = vadd.f32 %v2626, %v2738
      %v2740 = vpop.f32.mrb[0].mxu0
      %v2741 = vadd.f32 %v2628, %v2740
      %v2742 = vpop.f32.mrb[0].mxu0
      %v2743 = vadd.f32 %v2630, %v2742
      %v2744 = vpop.f32.mrb[0].mxu0
      %v2745 = vadd.f32 %v2632, %v2744
      %2746 = vmatprep.mubr.bf16.mxu0 %v790
      %2747 = vmatmul.mubr.bf16.gmra.mrb[0].mxu0 %v789
      %v2748 = vpop.f32.mrb[0].mxu0
      %v2749 = vadd.f32 %v2636, %v2748
      %v2750 = vpop.f32.mrb[0].mxu0
      %v2751 = vadd.f32 %v2638, %v2750
      %v2752 = vpop.f32.mrb[0].mxu0
      %v2753 = vadd.f32 %v2640, %v2752
      %v2754 = vpop.f32.mrb[0].mxu0
      %v2755 = vadd.f32 %v2642, %v2754
      %2756 = vmatprep.mubr.bf16.mxu0 %v794
      %2757 = vmatmul.mubr.bf16.gmra.mrb[0].mxu0 %v793
      %v2758 = vpop.f32.mrb[0].mxu0
      %v2759 = vadd.f32 %v2646, %v2758
      %v2760 = vpop.f32.mrb[0].mxu0
      %v2761 = vadd.f32 %v2648, %v2760
      %v2762 = vpop.f32.mrb[0].mxu0
      %v2763 = vadd.f32 %v2650, %v2762
      %v2764 = vpop.f32.mrb[0].mxu0
      %v2765 = vadd.f32 %v2652, %v2764
      %2766 = vmatprep.mubr.bf16.mxu0 %v798
      %2767 = vmatmul.mubr.bf16.gmra.mrb[0].mxu0 %v797
      %v2768 = vpop.f32.mrb[0].mxu0
      %v2769 = vadd.f32 %v2656, %v2768
      %v2770 = vpop.f32.mrb[0].mxu0
      %v2771 = vadd.f32 %v2658, %v2770
      %v2772 = vpop.f32.mrb[0].mxu0
      %v2773 = vadd.f32 %v2660, %v2772
      %v2774 = vpop.f32.mrb[0].mxu0
      %v2775 = vadd.f32 %v2662, %v2774
      %2776 = vmatprep.mubr.bf16.mxu0 %v802
      %2777 = vmatmul.mubr.bf16.gmra.mrb[0].mxu0 %v801
      %v2778 = vpop.f32.mrb[0].mxu0
      %v2779 = vadd.f32 %v2666, %v2778
      %v2780 = vpop.f32.mrb[0].mxu0
      %v2781 = vadd.f32 %v2668, %v2780
      %v2782 = vpop.f32.mrb[0].mxu0
      %v2783 = vadd.f32 %v2670, %v2782
      %v2784 = vpop.f32.mrb[0].mxu0
      %v2785 = vadd.f32 %v2672, %v2784
      %2786 = vmatprep.mubr.bf16.mxu0 %v806
      %2787 = vmatmul.mubr.bf16.gmra.mrb[0].mxu0 %v805
      %v2788 = vpop.f32.mrb[0].mxu0
      %v2789 = vadd.f32 %v2676, %v2788
      %v2790 = vpop.f32.mrb[0].mxu0
      %v2791 = vadd.f32 %v2678, %v2790
      %v2792 = vpop.f32.mrb[0].mxu0
      %v2793 = vadd.f32 %v2680, %v2792
      %v2794 = vpop.f32.mrb[0].mxu0
      %v2795 = vadd.f32 %v2682, %v2794
      %2796 = vdwg.mxu0
      %2797 = vmatprep.subr.bf16.mxu0 %v1614
      %2798 = vmatpush1.bf16.msra.mxu0 %v1613
      %2799 = vmatprep.subr.bf16.mxu0 %v1622
      %2800 = vmatpush1.bf16.msra.mxu0 %v1621
      %2801 = vmatprep.subr.bf16.mxu0 %v1630
      %2802 = vmatpush1.bf16.msra.mxu0 %v1629
      %2803 = vmatprep.subr.bf16.mxu0 %v1638
      %2804 = vmatpush1.bf16.msra.mxu0 %v1637
      %2805 = vmatprep.subr.bf16.mxu0 %v1646
      %2806 = vmatpush1.bf16.msra.mxu0 %v1645
      %2807 = vmatprep.subr.bf16.mxu0 %v1654
      %2808 = vmatpush1.bf16.msra.mxu0 %v1653
      %2809 = vmatprep.subr.bf16.mxu0 %v1662
      %2810 = vmatpush1.bf16.msra.mxu0 %v1661
      %2811 = vmatprep.subr.bf16.mxu0 %v1670
      %2812 = vmatpush1.bf16.msra.mxu0 %v1669
      %2813 = vmatprep.subr.bf16.mxu0 %v1678
      %2814 = vmatpush1.bf16.msra.mxu0 %v1677
      %2815 = vmatprep.subr.bf16.mxu0 %v1686
      %2816 = vmatpush1.bf16.msra.mxu0 %v1685
      %2817 = vmatprep.subr.bf16.mxu0 %v1694
      %2818 = vmatpush1.bf16.msra.mxu0 %v1693
      %2819 = vmatprep.subr.bf16.mxu0 %v1702
      %2820 = vmatpush1.bf16.msra.mxu0 %v1701
      %2821 = vmatprep.subr.bf16.mxu0 %v1710
      %2822 = vmatpush1.bf16.msra.mxu0 %v1709
      %2823 = vmatprep.subr.bf16.mxu0 %v1718
      %2824 = vmatpush1.bf16.msra.mxu0 %v1717
      %2825 = vmatprep.subr.bf16.mxu0 %v1726
      %2826 = vmatpush1.bf16.msra.mxu0 %v1725
      %2827 = vmatprep.subr.bf16.mxu0 %v1734
      %2828 = vmatpush1.bf16.msra.mxu0 %v1733
      %2829 = vmatprep.mubr.bf16.mxu0 %v776
      %2830 = vmatmul.mubr.bf16.gmra.mrb[0].mxu0 %v775
      %v2831 = vpop.f32.mrb[0].mxu0
      %v2832 = vadd.f32 0.0, %v2831
      %v2833 = vpop.f32.mrb[0].mxu0
      %v2834 = vadd.f32 0.0, %v2833
      %v2835 = vpop.f32.mrb[0].mxu0
      %v2836 = vadd.f32 0.0, %v2835
      %v2837 = vpop.f32.mrb[0].mxu0
      %v2838 = vadd.f32 0.0, %v2837
      %2839 = vmatprep.mubr.bf16.mxu0 %v780
      %2840 = vmatmul.mubr.bf16.gmra.mrb[0].mxu0 %v779
      %v2841 = vpop.f32.mrb[0].mxu0
      %v2842 = vadd.f32 0.0, %v2841
      %v2843 = vpop.f32.mrb[0].mxu0
      %v2844 = vadd.f32 0.0, %v2843
      %v2845 = vpop.f32.mrb[0].mxu0
      %v2846 = vadd.f32 0.0, %v2845
      %v2847 = vpop.f32.mrb[0].mxu0
      %v2848 = vadd.f32 0.0, %v2847
      %2849 = vmatprep.mubr.bf16.mxu0 %v784
      %2850 = vmatmul.mubr.bf16.gmra.mrb[0].mxu0 %v783
      %v2851 = vpop.f32.mrb[0].mxu0
      %v2852 = vadd.f32 0.0, %v2851
      %v2853 = vpop.f32.mrb[0].mxu0
      %v2854 = vadd.f32 0.0, %v2853
      %v2855 = vpop.f32.mrb[0].mxu0
      %v2856 = vadd.f32 0.0, %v2855
      %v2857 = vpop.f32.mrb[0].mxu0
      %v2858 = vadd.f32 0.0, %v2857
      %2859 = vmatprep.mubr.bf16.mxu0 %v788
      %2860 = vmatmul.mubr.bf16.gmra.mrb[0].mxu0 %v787
      %v2861 = vpop.f32.mrb[0].mxu0
      %v2862 = vadd.f32 0.0, %v2861
      %v2863 = vpop.f32.mrb[0].mxu0
      %v2864 = vadd.f32 0.0, %v2863
      %v2865 = vpop.f32.mrb[0].mxu0
      %v2866 = vadd.f32 0.0, %v2865
      %v2867 = vpop.f32.mrb[0].mxu0
      %v2868 = vadd.f32 0.0, %v2867
      %2869 = vmatprep.mubr.bf16.mxu0 %v792
      %2870 = vmatmul.mubr.bf16.gmra.mrb[0].mxu0 %v791
      %v2871 = vpop.f32.mrb[0].mxu0
      %v2872 = vadd.f32 0.0, %v2871
      %v2873 = vpop.f32.mrb[0].mxu0
      %v2874 = vadd.f32 0.0, %v2873
      %v2875 = vpop.f32.mrb[0].mxu0
      %v2876 = vadd.f32 0.0, %v2875
      %v2877 = vpop.f32.mrb[0].mxu0
      %v2878 = vadd.f32 0.0, %v2877
      %2879 = vmatprep.mubr.bf16.mxu0 %v796
      %2880 = vmatmul.mubr.bf16.gmra.mrb[0].mxu0 %v795
      %v2881 = vpop.f32.mrb[0].mxu0
      %v2882 = vadd.f32 0.0, %v2881
      %v2883 = vpop.f32.mrb[0].mxu0
      %v2884 = vadd.f32 0.0, %v2883
      %v2885 = vpop.f32.mrb[0].mxu0
      %v2886 = vadd.f32 0.0, %v2885
      %v2887 = vpop.f32.mrb[0].mxu0
      %v2888 = vadd.f32 0.0, %v2887
      %2889 = vmatprep.mubr.bf16.mxu0 %v800
      %2890 = vmatmul.mubr.bf16.gmra.mrb[0].mxu0 %v799
      %v2891 = vpop.f32.mrb[0].mxu0
      %v2892 = vadd.f32 0.0, %v2891
      %v2893 = vpop.f32.mrb[0].mxu0
      %v2894 = vadd.f32 0.0, %v2893
      %v2895 = vpop.f32.mrb[0].mxu0
      %v2896 = vadd.f32 0.0, %v2895
      %v2897 = vpop.f32.mrb[0].mxu0
      %v2898 = vadd.f32 0.0, %v2897
      %2899 = vmatprep.mubr.bf16.mxu0 %v804
      %2900 = vmatmul.mubr.bf16.gmra.mrb[0].mxu0 %v803
      %v2901 = vpop.f32.mrb[0].mxu0
      %v2902 = vadd.f32 0.0, %v2901
      %v2903 = vpop.f32.mrb[0].mxu0
      %v2904 = vadd.f32 0.0, %v2903
      %v2905 = vpop.f32.mrb[0].mxu0
      %v2906 = vadd.f32 0.0, %v2905
      %v2907 = vpop.f32.mrb[0].mxu0
      %v2908 = vadd.f32 0.0, %v2907
      %2909 = vdwg.mxu0
      %2910 = vmatprep.subr.bf16.mxu0 %v1742
      %2911 = vmatpush1.bf16.msra.mxu0 %v1741
      %2912 = vmatprep.subr.bf16.mxu0 %v1750
      %2913 = vmatpush1.bf16.msra.mxu0 %v1749
      %2914 = vmatprep.subr.bf16.mxu0 %v1758
      %2915 = vmatpush1.bf16.msra.mxu0 %v1757
      %2916 = vmatprep.subr.bf16.mxu0 %v1766
      %2917 = vmatpush1.bf16.msra.mxu0 %v1765
      %2918 = vmatprep.subr.bf16.mxu0 %v1774
      %2919 = vmatpush1.bf16.msra.mxu0 %v1773
      %2920 = vmatprep.subr.bf16.mxu0 %v1782
      %2921 = vmatpush1.bf16.msra.mxu0 %v1781
      %2922 = vmatprep.subr.bf16.mxu0 %v1790
      %2923 = vmatpush1.bf16.msra.mxu0 %v1789
      %2924 = vmatprep.subr.bf16.mxu0 %v1798
      %2925 = vmatpush1.bf16.msra.mxu0 %v1797
      %2926 = vmatprep.subr.bf16.mxu0 %v1806
      %2927 = vmatpush1.bf16.msra.mxu0 %v1805
      %2928 = vmatprep.subr.bf16.mxu0 %v1814
      %2929 = vmatpush1.bf16.msra.mxu0 %v1813
      %2930 = vmatprep.subr.bf16.mxu0 %v1822
      %2931 = vmatpush1.bf16.msra.mxu0 %v1821
      %2932 = vmatprep.subr.bf16.mxu0 %v1830
      %2933 = vmatpush1.bf16.msra.mxu0 %v1829
      %2934 = vmatprep.subr.bf16.mxu0 %v1838
      %2935 = vmatpush1.bf16.msra.mxu0 %v1837
      %2936 = vmatprep.subr.bf16.mxu0 %v1846
      %2937 = vmatpush1.bf16.msra.mxu0 %v1845
      %2938 = vmatprep.subr.bf16.mxu0 %v1854
      %2939 = vmatpush1.bf16.msra.mxu0 %v1853
      %2940 = vmatprep.subr.bf16.mxu0 %v1862
      %2941 = vmatpush1.bf16.msra.mxu0 %v1861
      %2942 = vmatprep.mubr.bf16.mxu0 %v778
      %2943 = vmatmul.mubr.bf16.gmra.mrb[0].mxu0 %v777
      %v2944 = vpop.f32.mrb[0].mxu0
      %v2945 = vadd.f32 %v2832, %v2944
      %v2946 = vpop.f32.mrb[0].mxu0
      %v2947 = vadd.f32 %v2834, %v2946
      %v2948 = vpop.f32.mrb[0].mxu0
      %v2949 = vadd.f32 %v2836, %v2948
      %v2950 = vpop.f32.mrb[0].mxu0
      %v2951 = vadd.f32 %v2838, %v2950
      %2952 = vmatprep.mubr.bf16.mxu0 %v782
      %2953 = vmatmul.mubr.bf16.gmra.mrb[0].mxu0 %v781
      %v2954 = vpop.f32.mrb[0].mxu0
      %v2955 = vadd.f32 %v2842, %v2954
      %v2956 = vpop.f32.mrb[0].mxu0
      %v2957 = vadd.f32 %v2844, %v2956
      %v2958 = vpop.f32.mrb[0].mxu0
      %v2959 = vadd.f32 %v2846, %v2958
      %v2960 = vpop.f32.mrb[0].mxu0
      %v2961 = vadd.f32 %v2848, %v2960
      %2962 = vmatprep.mubr.bf16.mxu0 %v786
      %2963 = vmatmul.mubr.bf16.gmra.mrb[0].mxu0 %v785
      %v2964 = vpop.f32.mrb[0].mxu0
      %v2965 = vadd.f32 %v2852, %v2964
      %v2966 = vpop.f32.mrb[0].mxu0
      %v2967 = vadd.f32 %v2854, %v2966
      %v2968 = vpop.f32.mrb[0].mxu0
      %v2969 = vadd.f32 %v2856, %v2968
      %v2970 = vpop.f32.mrb[0].mxu0
      %v2971 = vadd.f32 %v2858, %v2970
      %2972 = vmatprep.mubr.bf16.mxu0 %v790
      %2973 = vmatmul.mubr.bf16.gmra.mrb[0].mxu0 %v789
      %v2974 = vpop.f32.mrb[0].mxu0
      %v2975 = vadd.f32 %v2862, %v2974
      %v2976 = vpop.f32.mrb[0].mxu0
      %v2977 = vadd.f32 %v2864, %v2976
      %v2978 = vpop.f32.mrb[0].mxu0
      %v2979 = vadd.f32 %v2866, %v2978
      %v2980 = vpop.f32.mrb[0].mxu0
      %v2981 = vadd.f32 %v2868, %v2980
      %2982 = vmatprep.mubr.bf16.mxu0 %v794
      %2983 = vmatmul.mubr.bf16.gmra.mrb[0].mxu0 %v793
      %v2984 = vpop.f32.mrb[0].mxu0
      %v2985 = vadd.f32 %v2872, %v2984
      %v2986 = vpop.f32.mrb[0].mxu0
      %v2987 = vadd.f32 %v2874, %v2986
      %v2988 = vpop.f32.mrb[0].mxu0
      %v2989 = vadd.f32 %v2876, %v2988
      %v2990 = vpop.f32.mrb[0].mxu0
      %v2991 = vadd.f32 %v2878, %v2990
      %2992 = vmatprep.mubr.bf16.mxu0 %v798
      %2993 = vmatmul.mubr.bf16.gmra.mrb[0].mxu0 %v797
      %v2994 = vpop.f32.mrb[0].mxu0
      %v2995 = vadd.f32 %v2882, %v2994
      %v2996 = vpop.f32.mrb[0].mxu0
      %v2997 = vadd.f32 %v2884, %v2996
      %v2998 = vpop.f32.mrb[0].mxu0
      %v2999 = vadd.f32 %v2886, %v2998
      %v3000 = vpop.f32.mrb[0].mxu0
      %v3001 = vadd.f32 %v2888, %v3000
      %3002 = vmatprep.mubr.bf16.mxu0 %v802
      %3003 = vmatmul.mubr.bf16.gmra.mrb[0].mxu0 %v801
      %v3004 = vpop.f32.mrb[0].mxu0
      %v3005 = vadd.f32 %v2892, %v3004
      %v3006 = vpop.f32.mrb[0].mxu0
      %v3007 = vadd.f32 %v2894, %v3006
      %v3008 = vpop.f32.mrb[0].mxu0
      %v3009 = vadd.f32 %v2896, %v3008
      %v3010 = vpop.f32.mrb[0].mxu0
      %v3011 = vadd.f32 %v2898, %v3010
      %3012 = vmatprep.mubr.bf16.mxu0 %v806
      %3013 = vmatmul.mubr.bf16.gmra.mrb[0].mxu0 %v805
      %v3014 = vpop.f32.mrb[0].mxu0
      %v3015 = vadd.f32 %v2902, %v3014
      %v3016 = vpop.f32.mrb[0].mxu0
      %v3017 = vadd.f32 %v2904, %v3016
      %v3018 = vpop.f32.mrb[0].mxu0
      %v3019 = vadd.f32 %v2906, %v3018
      %v3020 = vpop.f32.mrb[0].mxu0
      %v3021 = vadd.f32 %v2908, %v3020
      %3022 = vdwg.mxu0
      %v3023 = vld [vmem:[%s350] sm:$0xff]
      %v3024 = vld [vmem:[%s350 + $0x8] sm:$0xff]
      %v3025 = vld [vmem:[%s350 + $0x10] sm:$0xff]
      %v3026 = vld [vmem:[%s350 + $0x18] sm:$0xff]
      %v3027 = vld [vmem:[%s350 + $0x20] sm:$0xff]
      %v3028 = vld [vmem:[%s350 + $0x28] sm:$0xff]
      %v3029 = vld [vmem:[%s350 + $0x30] sm:$0xff]
      %v3030 = vld [vmem:[%s350 + $0x38] sm:$0xff]
      %v3031 = vld [vmem:[%s350 + $0x40] sm:$0xff]
      %v3032 = vld [vmem:[%s350 + $0x48] sm:$0xff]
      %v3033 = vld [vmem:[%s350 + $0x50] sm:$0xff]
      %v3034 = vld [vmem:[%s350 + $0x58] sm:$0xff]
      %v3035 = vld [vmem:[%s350 + $0x60] sm:$0xff]
      %v3036 = vld [vmem:[%s350 + $0x68] sm:$0xff]
      %v3037 = vld [vmem:[%s350 + $0x70] sm:$0xff]
      %v3038 = vld [vmem:[%s350 + $0x78] sm:$0xff]
      %v3039 = vld [vmem:[%s356] sm:$0xff]
      %v3040 = vld [vmem:[%s356 + $0x8] sm:$0xff]
      %v3041 = vld [vmem:[%s356 + $0x10] sm:$0xff]
      %v3042 = vld [vmem:[%s356 + $0x18] sm:$0xff]
      %v3043 = vld [vmem:[%s356 + $0x20] sm:$0xff]
      %v3044 = vld [vmem:[%s356 + $0x28] sm:$0xff]
      %v3045 = vld [vmem:[%s356 + $0x30] sm:$0xff]
      %v3046 = vld [vmem:[%s356 + $0x38] sm:$0xff]
      %v3047 = vld [vmem:[%s356 + $0x40] sm:$0xff]
      %v3048 = vld [vmem:[%s356 + $0x48] sm:$0xff]
      %v3049 = vld [vmem:[%s356 + $0x50] sm:$0xff]
      %v3050 = vld [vmem:[%s356 + $0x58] sm:$0xff]
      %v3051 = vld [vmem:[%s356 + $0x60] sm:$0xff]
      %v3052 = vld [vmem:[%s356 + $0x68] sm:$0xff]
      %v3053 = vld [vmem:[%s356 + $0x70] sm:$0xff]
      %v3054 = vld [vmem:[%s356 + $0x78] sm:$0xff]
      %v3055 = vmul.f32 %v2267, %v3023
      %v3056 = vmul.f32 %v2271, %v3024
      %v3057 = vmul.f32 %v2277, %v3025
      %v3058 = vmul.f32 %v2281, %v3026
      %v3059 = vmul.f32 %v2287, %v3027
      %v3060 = vmul.f32 %v2291, %v3028
      %v3061 = vmul.f32 %v2297, %v3029
      %v3062 = vmul.f32 %v2301, %v3030
      %v3063 = vmul.f32 %v2307, %v3031
      %v3064 = vmul.f32 %v2311, %v3032
      %v3065 = vmul.f32 %v2317, %v3033
      %v3066 = vmul.f32 %v2321, %v3034
      %v3067 = vmul.f32 %v2327, %v3035
      %v3068 = vmul.f32 %v2331, %v3036
      %v3069 = vmul.f32 %v2337, %v3037
      %v3070 = vmul.f32 %v2341, %v3038
      %3071 = vrot.lane.b32.xlu0 %v2267, 64
      %v3072 = vpop.permute.xlu0 %3071
      %3073 = vrot.lane.b32.xlu0 %v2271, 64
      %v3074 = vpop.permute.xlu0 %3073
      %3075 = vrot.lane.b32.xlu0 %v2277, 64
      %v3076 = vpop.permute.xlu0 %3075
      %3077 = vrot.lane.b32.xlu0 %v2281, 64
      %v3078 = vpop.permute.xlu0 %3077
      %3079 = vrot.lane.b32.xlu0 %v2287, 64
      %v3080 = vpop.permute.xlu0 %3079
      %3081 = vrot.lane.b32.xlu0 %v2291, 64
      %v3082 = vpop.permute.xlu0 %3081
      %3083 = vrot.lane.b32.xlu0 %v2297, 64
      %v3084 = vpop.permute.xlu0 %3083
      %3085 = vrot.lane.b32.xlu0 %v2301, 64
      %v3086 = vpop.permute.xlu0 %3085
      %3087 = vrot.lane.b32.xlu0 %v2307, 64
      %v3088 = vpop.permute.xlu0 %3087
      %3089 = vrot.lane.b32.xlu0 %v2311, 64
      %v3090 = vpop.permute.xlu0 %3089
      %3091 = vrot.lane.b32.xlu0 %v2317, 64
      %v3092 = vpop.permute.xlu0 %3091
      %3093 = vrot.lane.b32.xlu0 %v2321, 64
      %v3094 = vpop.permute.xlu0 %3093
      %3095 = vrot.lane.b32.xlu0 %v2327, 64
      %v3096 = vpop.permute.xlu0 %3095
      %3097 = vrot.lane.b32.xlu0 %v2331, 64
      %v3098 = vpop.permute.xlu0 %3097
      %3099 = vrot.lane.b32.xlu0 %v2337, 64
      %v3100 = vpop.permute.xlu0 %3099
      %3101 = vrot.lane.b32.xlu0 %v2341, 64
      %v3102 = vpop.permute.xlu0 %3101
      %v3103 = vmul.f32 %v3072, %v3039
      %v3104 = vmul.f32 %v3074, %v3040
      %v3105 = vmul.f32 %v3076, %v3041
      %v3106 = vmul.f32 %v3078, %v3042
      %v3107 = vmul.f32 %v3080, %v3043
      %v3108 = vmul.f32 %v3082, %v3044
      %v3109 = vmul.f32 %v3084, %v3045
      %v3110 = vmul.f32 %v3086, %v3046
      %v3111 = vmul.f32 %v3088, %v3047
      %v3112 = vmul.f32 %v3090, %v3048
      %v3113 = vmul.f32 %v3092, %v3049
      %v3114 = vmul.f32 %v3094, %v3050
      %v3115 = vmul.f32 %v3096, %v3051
      %v3116 = vmul.f32 %v3098, %v3052
      %v3117 = vmul.f32 %v3100, %v3053
      %v3118 = vmul.f32 %v3102, %v3054
      %v3119 = vadd.f32 %v3055, %v3103
      %v3120 = vadd.f32 %v3056, %v3104
      %v3121 = vadd.f32 %v3057, %v3105
      %v3122 = vadd.f32 %v3058, %v3106
      %v3123 = vadd.f32 %v3059, %v3107
      %v3124 = vadd.f32 %v3060, %v3108
      %v3125 = vadd.f32 %v3061, %v3109
      %v3126 = vadd.f32 %v3062, %v3110
      %v3127 = vadd.f32 %v3063, %v3111
      %v3128 = vadd.f32 %v3064, %v3112
      %v3129 = vadd.f32 %v3065, %v3113
      %v3130 = vadd.f32 %v3066, %v3114
      %v3131 = vadd.f32 %v3067, %v3115
      %v3132 = vadd.f32 %v3068, %v3116
      %v3133 = vadd.f32 %v3069, %v3117
      %v3134 = vadd.f32 %v3070, %v3118
      %v3135 = vpack.c.bf16 %v3120, %v3119
      %v3136 = vpack.c.bf16 %v3122, %v3121
      %v3137 = vpack.c.bf16 %v3124, %v3123
      %v3138 = vpack.c.bf16 %v3126, %v3125
      %v3139 = vpack.c.bf16 %v3128, %v3127
      %v3140 = vpack.c.bf16 %v3130, %v3129
      %v3141 = vpack.c.bf16 %v3132, %v3131
      %v3142 = vpack.c.bf16 %v3134, %v3133
      %v3151 = vunpack.c.l.b16 %v3135
      %v3152 = vunpack.c.h.b16 %v3135
      %v3153 = vunpack.c.l.b16 %v3136
      %v3154 = vunpack.c.h.b16 %v3136
      %v3155 = vunpack.c.l.b16 %v3137
      %v3156 = vunpack.c.h.b16 %v3137
      %v3157 = vunpack.c.l.b16 %v3138
      %v3158 = vunpack.c.h.b16 %v3138
      %v3159 = vunpack.c.l.b16 %v3139
      %v3160 = vunpack.c.h.b16 %v3139
      %v3161 = vunpack.c.l.b16 %v3140
      %v3162 = vunpack.c.h.b16 %v3140
      %v3163 = vunpack.c.l.b16 %v3141
      %v3164 = vunpack.c.h.b16 %v3141
      %v3165 = vunpack.c.l.b16 %v3142
      %v3166 = vunpack.c.h.b16 %v3142
      %v3167 = vpack.c.b16 %v3151, %v3151
      %v3168 = vpack.c.b16 %v3152, %v3152
      %v3169 = vpack.c.b16 %v3153, %v3153
      %v3170 = vpack.c.b16 %v3154, %v3154
      %v3171 = vpack.c.b16 %v3155, %v3155
      %v3172 = vpack.c.b16 %v3156, %v3156
      %v3173 = vpack.c.b16 %v3157, %v3157
      %v3174 = vpack.c.b16 %v3158, %v3158
      %v3175 = vpack.c.b16 %v3159, %v3159
      %v3176 = vpack.c.b16 %v3160, %v3160
      %v3177 = vpack.c.b16 %v3161, %v3161
      %v3178 = vpack.c.b16 %v3162, %v3162
      %v3179 = vpack.c.b16 %v3163, %v3163
      %v3180 = vpack.c.b16 %v3164, %v3164
      %v3181 = vpack.c.b16 %v3165, %v3165
      %v3182 = vpack.c.b16 %v3166, %v3166
      %3199 = vst [vmem:[%s367] sm:$0xf] %v3167
      %3200 = vst [vmem:[%s367 + $0x10] sm:$0xf] %v3168
      %3201 = vst [vmem:[%s367 + $0x20] sm:$0xf] %v3169
      %3202 = vst [vmem:[%s367 + $0x30] sm:$0xf] %v3170
      %3203 = vst [vmem:[%s367 + $0x40] sm:$0xf] %v3171
      %3204 = vst [vmem:[%s367 + $0x50] sm:$0xf] %v3172
      %3205 = vst [vmem:[%s367 + $0x60] sm:$0xf] %v3173
      %3206 = vst [vmem:[%s367 + $0x70] sm:$0xf] %v3174
      %3207 = vst [vmem:[%s367 + $0x80] sm:$0xf] %v3175
      %3208 = vst [vmem:[%s367 + $0x90] sm:$0xf] %v3176
      %3209 = vst [vmem:[%s367 + $0xa0] sm:$0xf] %v3177
      %3210 = vst [vmem:[%s367 + $0xb0] sm:$0xf] %v3178
      %3211 = vst [vmem:[%s367 + $0xc0] sm:$0xf] %v3179
      %3212 = vst [vmem:[%s367 + $0xd0] sm:$0xf] %v3180
      %3213 = vst [vmem:[%s367 + $0xe0] sm:$0xf] %v3181
      %3214 = vst [vmem:[%s367 + $0xf0] sm:$0xf] %v3182
      %v3215 = vmul.f32 %v2269, %v3023
      %v3216 = vmul.f32 %v2273, %v3024
      %v3217 = vmul.f32 %v2279, %v3025
      %v3218 = vmul.f32 %v2283, %v3026
      %v3219 = vmul.f32 %v2289, %v3027
      %v3220 = vmul.f32 %v2293, %v3028
      %v3221 = vmul.f32 %v2299, %v3029
      %v3222 = vmul.f32 %v2303, %v3030
      %v3223 = vmul.f32 %v2309, %v3031
      %v3224 = vmul.f32 %v2313, %v3032
      %v3225 = vmul.f32 %v2319, %v3033
      %v3226 = vmul.f32 %v2323, %v3034
      %v3227 = vmul.f32 %v2329, %v3035
      %v3228 = vmul.f32 %v2333, %v3036
      %v3229 = vmul.f32 %v2339, %v3037
      %v3230 = vmul.f32 %v2343, %v3038
      %3231 = vrot.lane.b32.xlu0 %v2269, 64
      %v3232 = vpop.permute.xlu0 %3231
      %3233 = vrot.lane.b32.xlu0 %v2273, 64
      %v3234 = vpop.permute.xlu0 %3233
      %3235 = vrot.lane.b32.xlu0 %v2279, 64
      %v3236 = vpop.permute.xlu0 %3235
      %3237 = vrot.lane.b32.xlu0 %v2283, 64
      %v3238 = vpop.permute.xlu0 %3237
      %3239 = vrot.lane.b32.xlu0 %v2289, 64
      %v3240 = vpop.permute.xlu0 %3239
      %3241 = vrot.lane.b32.xlu0 %v2293, 64
      %v3242 = vpop.permute.xlu0 %3241
      %3243 = vrot.lane.b32.xlu0 %v2299, 64
      %v3244 = vpop.permute.xlu0 %3243
      %3245 = vrot.lane.b32.xlu0 %v2303, 64
      %v3246 = vpop.permute.xlu0 %3245
      %3247 = vrot.lane.b32.xlu0 %v2309, 64
      %v3248 = vpop.permute.xlu0 %3247
      %3249 = vrot.lane.b32.xlu0 %v2313, 64
      %v3250 = vpop.permute.xlu0 %3249
      %3251 = vrot.lane.b32.xlu0 %v2319, 64
      %v3252 = vpop.permute.xlu0 %3251
      %3253 = vrot.lane.b32.xlu0 %v2323, 64
      %v3254 = vpop.permute.xlu0 %3253
      %3255 = vrot.lane.b32.xlu0 %v2329, 64
      %v3256 = vpop.permute.xlu0 %3255
      %3257 = vrot.lane.b32.xlu0 %v2333, 64
      %v3258 = vpop.permute.xlu0 %3257
      %3259 = vrot.lane.b32.xlu0 %v2339, 64
      %v3260 = vpop.permute.xlu0 %3259
      %3261 = vrot.lane.b32.xlu0 %v2343, 64
      %v3262 = vpop.permute.xlu0 %3261
      %v3263 = vmul.f32 %v3232, %v3039
      %v3264 = vmul.f32 %v3234, %v3040
      %v3265 = vmul.f32 %v3236, %v3041
      %v3266 = vmul.f32 %v3238, %v3042
      %v3267 = vmul.f32 %v3240, %v3043
      %v3268 = vmul.f32 %v3242, %v3044
      %v3269 = vmul.f32 %v3244, %v3045
      %v3270 = vmul.f32 %v3246, %v3046
      %v3271 = vmul.f32 %v3248, %v3047
      %v3272 = vmul.f32 %v3250, %v3048
      %v3273 = vmul.f32 %v3252, %v3049
      %v3274 = vmul.f32 %v3254, %v3050
      %v3275 = vmul.f32 %v3256, %v3051
      %v3276 = vmul.f32 %v3258, %v3052
      %v3277 = vmul.f32 %v3260, %v3053
      %v3278 = vmul.f32 %v3262, %v3054
      %v3279 = vadd.f32 %v3215, %v3263
      %v3280 = vadd.f32 %v3216, %v3264
      %v3281 = vadd.f32 %v3217, %v3265
      %v3282 = vadd.f32 %v3218, %v3266
      %v3283 = vadd.f32 %v3219, %v3267
      %v3284 = vadd.f32 %v3220, %v3268
      %v3285 = vadd.f32 %v3221, %v3269
      %v3286 = vadd.f32 %v3222, %v3270
      %v3287 = vadd.f32 %v3223, %v3271
      %v3288 = vadd.f32 %v3224, %v3272
      %v3289 = vadd.f32 %v3225, %v3273
      %v3290 = vadd.f32 %v3226, %v3274
      %v3291 = vadd.f32 %v3227, %v3275
      %v3292 = vadd.f32 %v3228, %v3276
      %v3293 = vadd.f32 %v3229, %v3277
      %v3294 = vadd.f32 %v3230, %v3278
      %v3295 = vpack.c.bf16 %v3280, %v3279
      %v3296 = vpack.c.bf16 %v3282, %v3281
      %v3297 = vpack.c.bf16 %v3284, %v3283
      %v3298 = vpack.c.bf16 %v3286, %v3285
      %v3299 = vpack.c.bf16 %v3288, %v3287
      %v3300 = vpack.c.bf16 %v3290, %v3289
      %v3301 = vpack.c.bf16 %v3292, %v3291
      %v3302 = vpack.c.bf16 %v3294, %v3293
      %v3311 = vunpack.c.l.b16 %v3295
      %v3312 = vunpack.c.h.b16 %v3295
      %v3313 = vunpack.c.l.b16 %v3296
      %v3314 = vunpack.c.h.b16 %v3296
      %v3315 = vunpack.c.l.b16 %v3297
      %v3316 = vunpack.c.h.b16 %v3297
      %v3317 = vunpack.c.l.b16 %v3298
      %v3318 = vunpack.c.h.b16 %v3298
      %v3319 = vunpack.c.l.b16 %v3299
      %v3320 = vunpack.c.h.b16 %v3299
      %v3321 = vunpack.c.l.b16 %v3300
      %v3322 = vunpack.c.h.b16 %v3300
      %v3323 = vunpack.c.l.b16 %v3301
      %v3324 = vunpack.c.h.b16 %v3301
      %v3325 = vunpack.c.l.b16 %v3302
      %v3326 = vunpack.c.h.b16 %v3302
      %v3327 = vpack.c.b16 %v3311, %v3311
      %v3328 = vpack.c.b16 %v3312, %v3312
      %v3329 = vpack.c.b16 %v3313, %v3313
      %v3330 = vpack.c.b16 %v3314, %v3314
      %v3331 = vpack.c.b16 %v3315, %v3315
      %v3332 = vpack.c.b16 %v3316, %v3316
      %v3333 = vpack.c.b16 %v3317, %v3317
      %v3334 = vpack.c.b16 %v3318, %v3318
      %v3335 = vpack.c.b16 %v3319, %v3319
      %v3336 = vpack.c.b16 %v3320, %v3320
      %v3337 = vpack.c.b16 %v3321, %v3321
      %v3338 = vpack.c.b16 %v3322, %v3322
      %v3339 = vpack.c.b16 %v3323, %v3323
      %v3340 = vpack.c.b16 %v3324, %v3324
      %v3341 = vpack.c.b16 %v3325, %v3325
      %v3342 = vpack.c.b16 %v3326, %v3326
      %3359 = vst [vmem:[%s367 + $0x4] sm:$0xf] %v3327
      %3360 = vst [vmem:[%s367 + $0x14] sm:$0xf] %v3328
      %3361 = vst [vmem:[%s367 + $0x24] sm:$0xf] %v3329
      %3362 = vst [vmem:[%s367 + $0x34] sm:$0xf] %v3330
      %3363 = vst [vmem:[%s367 + $0x44] sm:$0xf] %v3331
      %3364 = vst [vmem:[%s367 + $0x54] sm:$0xf] %v3332
      %3365 = vst [vmem:[%s367 + $0x64] sm:$0xf] %v3333
      %3366 = vst [vmem:[%s367 + $0x74] sm:$0xf] %v3334
      %3367 = vst [vmem:[%s367 + $0x84] sm:$0xf] %v3335
      %3368 = vst [vmem:[%s367 + $0x94] sm:$0xf] %v3336
      %3369 = vst [vmem:[%s367 + $0xa4] sm:$0xf] %v3337
      %3370 = vst [vmem:[%s367 + $0xb4] sm:$0xf] %v3338
      %3371 = vst [vmem:[%s367 + $0xc4] sm:$0xf] %v3339
      %3372 = vst [vmem:[%s367 + $0xd4] sm:$0xf] %v3340
      %3373 = vst [vmem:[%s367 + $0xe4] sm:$0xf] %v3341
      %3374 = vst [vmem:[%s367 + $0xf4] sm:$0xf] %v3342
      %v3375 = vmul.f32 %v2493, %v3023
      %v3376 = vmul.f32 %v2497, %v3024
      %v3377 = vmul.f32 %v2503, %v3025
      %v3378 = vmul.f32 %v2507, %v3026
      %v3379 = vmul.f32 %v2513, %v3027
      %v3380 = vmul.f32 %v2517, %v3028
      %v3381 = vmul.f32 %v2523, %v3029
      %v3382 = vmul.f32 %v2527, %v3030
      %v3383 = vmul.f32 %v2533, %v3031
      %v3384 = vmul.f32 %v2537, %v3032
      %v3385 = vmul.f32 %v2543, %v3033
      %v3386 = vmul.f32 %v2547, %v3034
      %v3387 = vmul.f32 %v2553, %v3035
      %v3388 = vmul.f32 %v2557, %v3036
      %v3389 = vmul.f32 %v2563, %v3037
      %v3390 = vmul.f32 %v2567, %v3038
      %3391 = vrot.lane.b32.xlu0 %v2493, 64
      %v3392 = vpop.permute.xlu0 %3391
      %3393 = vrot.lane.b32.xlu0 %v2497, 64
      %v3394 = vpop.permute.xlu0 %3393
      %3395 = vrot.lane.b32.xlu0 %v2503, 64
      %v3396 = vpop.permute.xlu0 %3395
      %3397 = vrot.lane.b32.xlu0 %v2507, 64
      %v3398 = vpop.permute.xlu0 %3397
      %3399 = vrot.lane.b32.xlu0 %v2513, 64
      %v3400 = vpop.permute.xlu0 %3399
      %3401 = vrot.lane.b32.xlu0 %v2517, 64
      %v3402 = vpop.permute.xlu0 %3401
      %3403 = vrot.lane.b32.xlu0 %v2523, 64
      %v3404 = vpop.permute.xlu0 %3403
      %3405 = vrot.lane.b32.xlu0 %v2527, 64
      %v3406 = vpop.permute.xlu0 %3405
      %3407 = vrot.lane.b32.xlu0 %v2533, 64
      %v3408 = vpop.permute.xlu0 %3407
      %3409 = vrot.lane.b32.xlu0 %v2537, 64
      %v3410 = vpop.permute.xlu0 %3409
      %3411 = vrot.lane.b32.xlu0 %v2543, 64
      %v3412 = vpop.permute.xlu0 %3411
      %3413 = vrot.lane.b32.xlu0 %v2547, 64
      %v3414 = vpop.permute.xlu0 %3413
      %3415 = vrot.lane.b32.xlu0 %v2553, 64
      %v3416 = vpop.permute.xlu0 %3415
      %3417 = vrot.lane.b32.xlu0 %v2557, 64
      %v3418 = vpop.permute.xlu0 %3417
      %3419 = vrot.lane.b32.xlu0 %v2563, 64
      %v3420 = vpop.permute.xlu0 %3419
      %3421 = vrot.lane.b32.xlu0 %v2567, 64
      %v3422 = vpop.permute.xlu0 %3421
      %v3423 = vmul.f32 %v3392, %v3039
      %v3424 = vmul.f32 %v3394, %v3040
      %v3425 = vmul.f32 %v3396, %v3041
      %v3426 = vmul.f32 %v3398, %v3042
      %v3427 = vmul.f32 %v3400, %v3043
      %v3428 = vmul.f32 %v3402, %v3044
      %v3429 = vmul.f32 %v3404, %v3045
      %v3430 = vmul.f32 %v3406, %v3046
      %v3431 = vmul.f32 %v3408, %v3047
      %v3432 = vmul.f32 %v3410, %v3048
      %v3433 = vmul.f32 %v3412, %v3049
      %v3434 = vmul.f32 %v3414, %v3050
      %v3435 = vmul.f32 %v3416, %v3051
      %v3436 = vmul.f32 %v3418, %v3052
      %v3437 = vmul.f32 %v3420, %v3053
      %v3438 = vmul.f32 %v3422, %v3054
      %v3439 = vadd.f32 %v3375, %v3423
      %v3440 = vadd.f32 %v3376, %v3424
      %v3441 = vadd.f32 %v3377, %v3425
      %v3442 = vadd.f32 %v3378, %v3426
      %v3443 = vadd.f32 %v3379, %v3427
      %v3444 = vadd.f32 %v3380, %v3428
      %v3445 = vadd.f32 %v3381, %v3429
      %v3446 = vadd.f32 %v3382, %v3430
      %v3447 = vadd.f32 %v3383, %v3431
      %v3448 = vadd.f32 %v3384, %v3432
      %v3449 = vadd.f32 %v3385, %v3433
      %v3450 = vadd.f32 %v3386, %v3434
      %v3451 = vadd.f32 %v3387, %v3435
      %v3452 = vadd.f32 %v3388, %v3436
      %v3453 = vadd.f32 %v3389, %v3437
      %v3454 = vadd.f32 %v3390, %v3438
      %v3455 = vpack.c.bf16 %v3440, %v3439
      %v3456 = vpack.c.bf16 %v3442, %v3441
      %v3457 = vpack.c.bf16 %v3444, %v3443
      %v3458 = vpack.c.bf16 %v3446, %v3445
      %v3459 = vpack.c.bf16 %v3448, %v3447
      %v3460 = vpack.c.bf16 %v3450, %v3449
      %v3461 = vpack.c.bf16 %v3452, %v3451
      %v3462 = vpack.c.bf16 %v3454, %v3453
      %v3471 = vunpack.c.l.b16 %v3455
      %v3472 = vunpack.c.h.b16 %v3455
      %v3473 = vunpack.c.l.b16 %v3456
      %v3474 = vunpack.c.h.b16 %v3456
      %v3475 = vunpack.c.l.b16 %v3457
      %v3476 = vunpack.c.h.b16 %v3457
      %v3477 = vunpack.c.l.b16 %v3458
      %v3478 = vunpack.c.h.b16 %v3458
      %v3479 = vunpack.c.l.b16 %v3459
      %v3480 = vunpack.c.h.b16 %v3459
      %v3481 = vunpack.c.l.b16 %v3460
      %v3482 = vunpack.c.h.b16 %v3460
      %v3483 = vunpack.c.l.b16 %v3461
      %v3484 = vunpack.c.h.b16 %v3461
      %v3485 = vunpack.c.l.b16 %v3462
      %v3486 = vunpack.c.h.b16 %v3462
      %v3487 = vpack.c.b16 %v3471, %v3471
      %v3488 = vpack.c.b16 %v3472, %v3472
      %v3489 = vpack.c.b16 %v3473, %v3473
      %v3490 = vpack.c.b16 %v3474, %v3474
      %v3491 = vpack.c.b16 %v3475, %v3475
      %v3492 = vpack.c.b16 %v3476, %v3476
      %v3493 = vpack.c.b16 %v3477, %v3477
      %v3494 = vpack.c.b16 %v3478, %v3478
      %v3495 = vpack.c.b16 %v3479, %v3479
      %v3496 = vpack.c.b16 %v3480, %v3480
      %v3497 = vpack.c.b16 %v3481, %v3481
      %v3498 = vpack.c.b16 %v3482, %v3482
      %v3499 = vpack.c.b16 %v3483, %v3483
      %v3500 = vpack.c.b16 %v3484, %v3484
      %v3501 = vpack.c.b16 %v3485, %v3485
      %v3502 = vpack.c.b16 %v3486, %v3486
      %3519 = vst [vmem:[%s367 + $0x8] sm:$0xf] %v3487
      %3520 = vst [vmem:[%s367 + $0x18] sm:$0xf] %v3488
      %3521 = vst [vmem:[%s367 + $0x28] sm:$0xf] %v3489
      %3522 = vst [vmem:[%s367 + $0x38] sm:$0xf] %v3490
      %3523 = vst [vmem:[%s367 + $0x48] sm:$0xf] %v3491
      %3524 = vst [vmem:[%s367 + $0x58] sm:$0xf] %v3492
      %3525 = vst [vmem:[%s367 + $0x68] sm:$0xf] %v3493
      %3526 = vst [vmem:[%s367 + $0x78] sm:$0xf] %v3494
      %3527 = vst [vmem:[%s367 + $0x88] sm:$0xf] %v3495
      %3528 = vst [vmem:[%s367 + $0x98] sm:$0xf] %v3496
      %3529 = vst [vmem:[%s367 + $0xa8] sm:$0xf] %v3497
      %3530 = vst [vmem:[%s367 + $0xb8] sm:$0xf] %v3498
      %3531 = vst [vmem:[%s367 + $0xc8] sm:$0xf] %v3499
      %3532 = vst [vmem:[%s367 + $0xd8] sm:$0xf] %v3500
      %3533 = vst [vmem:[%s367 + $0xe8] sm:$0xf] %v3501
      %3534 = vst [vmem:[%s367 + $0xf8] sm:$0xf] %v3502
      %v3535 = vmul.f32 %v2495, %v3023
      %v3536 = vmul.f32 %v2499, %v3024
      %v3537 = vmul.f32 %v2505, %v3025
      %v3538 = vmul.f32 %v2509, %v3026
      %v3539 = vmul.f32 %v2515, %v3027
      %v3540 = vmul.f32 %v2519, %v3028
      %v3541 = vmul.f32 %v2525, %v3029
      %v3542 = vmul.f32 %v2529, %v3030
      %v3543 = vmul.f32 %v2535, %v3031
      %v3544 = vmul.f32 %v2539, %v3032
      %v3545 = vmul.f32 %v2545, %v3033
      %v3546 = vmul.f32 %v2549, %v3034
      %v3547 = vmul.f32 %v2555, %v3035
      %v3548 = vmul.f32 %v2559, %v3036
      %v3549 = vmul.f32 %v2565, %v3037
      %v3550 = vmul.f32 %v2569, %v3038
      %3551 = vrot.lane.b32.xlu0 %v2495, 64
      %v3552 = vpop.permute.xlu0 %3551
      %3553 = vrot.lane.b32.xlu0 %v2499, 64
      %v3554 = vpop.permute.xlu0 %3553
      %3555 = vrot.lane.b32.xlu0 %v2505, 64
      %v3556 = vpop.permute.xlu0 %3555
      %3557 = vrot.lane.b32.xlu0 %v2509, 64
      %v3558 = vpop.permute.xlu0 %3557
      %3559 = vrot.lane.b32.xlu0 %v2515, 64
      %v3560 = vpop.permute.xlu0 %3559
      %3561 = vrot.lane.b32.xlu0 %v2519, 64
      %v3562 = vpop.permute.xlu0 %3561
      %3563 = vrot.lane.b32.xlu0 %v2525, 64
      %v3564 = vpop.permute.xlu0 %3563
      %3565 = vrot.lane.b32.xlu0 %v2529, 64
      %v3566 = vpop.permute.xlu0 %3565
      %3567 = vrot.lane.b32.xlu0 %v2535, 64
      %v3568 = vpop.permute.xlu0 %3567
      %3569 = vrot.lane.b32.xlu0 %v2539, 64
      %v3570 = vpop.permute.xlu0 %3569
      %3571 = vrot.lane.b32.xlu0 %v2545, 64
      %v3572 = vpop.permute.xlu0 %3571
      %3573 = vrot.lane.b32.xlu0 %v2549, 64
      %v3574 = vpop.permute.xlu0 %3573
      %3575 = vrot.lane.b32.xlu0 %v2555, 64
      %v3576 = vpop.permute.xlu0 %3575
      %3577 = vrot.lane.b32.xlu0 %v2559, 64
      %v3578 = vpop.permute.xlu0 %3577
      %3579 = vrot.lane.b32.xlu0 %v2565, 64
      %v3580 = vpop.permute.xlu0 %3579
      %3581 = vrot.lane.b32.xlu0 %v2569, 64
      %v3582 = vpop.permute.xlu0 %3581
      %v3583 = vmul.f32 %v3552, %v3039
      %v3584 = vmul.f32 %v3554, %v3040
      %v3585 = vmul.f32 %v3556, %v3041
      %v3586 = vmul.f32 %v3558, %v3042
      %v3587 = vmul.f32 %v3560, %v3043
      %v3588 = vmul.f32 %v3562, %v3044
      %v3589 = vmul.f32 %v3564, %v3045
      %v3590 = vmul.f32 %v3566, %v3046
      %v3591 = vmul.f32 %v3568, %v3047
      %v3592 = vmul.f32 %v3570, %v3048
      %v3593 = vmul.f32 %v3572, %v3049
      %v3594 = vmul.f32 %v3574, %v3050
      %v3595 = vmul.f32 %v3576, %v3051
      %v3596 = vmul.f32 %v3578, %v3052
      %v3597 = vmul.f32 %v3580, %v3053
      %v3598 = vmul.f32 %v3582, %v3054
      %v3599 = vadd.f32 %v3535, %v3583
      %v3600 = vadd.f32 %v3536, %v3584
      %v3601 = vadd.f32 %v3537, %v3585
      %v3602 = vadd.f32 %v3538, %v3586
      %v3603 = vadd.f32 %v3539, %v3587
      %v3604 = vadd.f32 %v3540, %v3588
      %v3605 = vadd.f32 %v3541, %v3589
      %v3606 = vadd.f32 %v3542, %v3590
      %v3607 = vadd.f32 %v3543, %v3591
      %v3608 = vadd.f32 %v3544, %v3592
      %v3609 = vadd.f32 %v3545, %v3593
      %v3610 = vadd.f32 %v3546, %v3594
      %v3611 = vadd.f32 %v3547, %v3595
      %v3612 = vadd.f32 %v3548, %v3596
      %v3613 = vadd.f32 %v3549, %v3597
      %v3614 = vadd.f32 %v3550, %v3598
      %v3615 = vpack.c.bf16 %v3600, %v3599
      %v3616 = vpack.c.bf16 %v3602, %v3601
      %v3617 = vpack.c.bf16 %v3604, %v3603
      %v3618 = vpack.c.bf16 %v3606, %v3605
      %v3619 = vpack.c.bf16 %v3608, %v3607
      %v3620 = vpack.c.bf16 %v3610, %v3609
      %v3621 = vpack.c.bf16 %v3612, %v3611
      %v3622 = vpack.c.bf16 %v3614, %v3613
      %v3631 = vunpack.c.l.b16 %v3615
      %v3632 = vunpack.c.h.b16 %v3615
      %v3633 = vunpack.c.l.b16 %v3616
      %v3634 = vunpack.c.h.b16 %v3616
      %v3635 = vunpack.c.l.b16 %v3617
      %v3636 = vunpack.c.h.b16 %v3617
      %v3637 = vunpack.c.l.b16 %v3618
      %v3638 = vunpack.c.h.b16 %v3618
      %v3639 = vunpack.c.l.b16 %v3619
      %v3640 = vunpack.c.h.b16 %v3619
      %v3641 = vunpack.c.l.b16 %v3620
      %v3642 = vunpack.c.h.b16 %v3620
      %v3643 = vunpack.c.l.b16 %v3621
      %v3644 = vunpack.c.h.b16 %v3621
      %v3645 = vunpack.c.l.b16 %v3622
      %v3646 = vunpack.c.h.b16 %v3622
      %v3647 = vpack.c.b16 %v3631, %v3631
      %v3648 = vpack.c.b16 %v3632, %v3632
      %v3649 = vpack.c.b16 %v3633, %v3633
      %v3650 = vpack.c.b16 %v3634, %v3634
      %v3651 = vpack.c.b16 %v3635, %v3635
      %v3652 = vpack.c.b16 %v3636, %v3636
      %v3653 = vpack.c.b16 %v3637, %v3637
      %v3654 = vpack.c.b16 %v3638, %v3638
      %v3655 = vpack.c.b16 %v3639, %v3639
      %v3656 = vpack.c.b16 %v3640, %v3640
      %v3657 = vpack.c.b16 %v3641, %v3641
      %v3658 = vpack.c.b16 %v3642, %v3642
      %v3659 = vpack.c.b16 %v3643, %v3643
      %v3660 = vpack.c.b16 %v3644, %v3644
      %v3661 = vpack.c.b16 %v3645, %v3645
      %v3662 = vpack.c.b16 %v3646, %v3646
      %3679 = vst [vmem:[%s367 + $0xc] sm:$0xf] %v3647
      %3680 = vst [vmem:[%s367 + $0x1c] sm:$0xf] %v3648
      %3681 = vst [vmem:[%s367 + $0x2c] sm:$0xf] %v3649
      %3682 = vst [vmem:[%s367 + $0x3c] sm:$0xf] %v3650
      %3683 = vst [vmem:[%s367 + $0x4c] sm:$0xf] %v3651
      %3684 = vst [vmem:[%s367 + $0x5c] sm:$0xf] %v3652
      %3685 = vst [vmem:[%s367 + $0x6c] sm:$0xf] %v3653
      %3686 = vst [vmem:[%s367 + $0x7c] sm:$0xf] %v3654
      %3687 = vst [vmem:[%s367 + $0x8c] sm:$0xf] %v3655
      %3688 = vst [vmem:[%s367 + $0x9c] sm:$0xf] %v3656
      %3689 = vst [vmem:[%s367 + $0xac] sm:$0xf] %v3657
      %3690 = vst [vmem:[%s367 + $0xbc] sm:$0xf] %v3658
      %3691 = vst [vmem:[%s367 + $0xcc] sm:$0xf] %v3659
      %3692 = vst [vmem:[%s367 + $0xdc] sm:$0xf] %v3660
      %3693 = vst [vmem:[%s367 + $0xec] sm:$0xf] %v3661
      %3694 = vst [vmem:[%s367 + $0xfc] sm:$0xf] %v3662
      %v3695 = vmul.f32 %v2719, %v3023
      %v3696 = vmul.f32 %v2723, %v3024
      %v3697 = vmul.f32 %v2729, %v3025
      %v3698 = vmul.f32 %v2733, %v3026
      %v3699 = vmul.f32 %v2739, %v3027
      %v3700 = vmul.f32 %v2743, %v3028
      %v3701 = vmul.f32 %v2749, %v3029
      %v3702 = vmul.f32 %v2753, %v3030
      %v3703 = vmul.f32 %v2759, %v3031
      %v3704 = vmul.f32 %v2763, %v3032
      %v3705 = vmul.f32 %v2769, %v3033
      %v3706 = vmul.f32 %v2773, %v3034
      %v3707 = vmul.f32 %v2779, %v3035
      %v3708 = vmul.f32 %v2783, %v3036
      %v3709 = vmul.f32 %v2789, %v3037
      %v3710 = vmul.f32 %v2793, %v3038
      %3711 = vrot.lane.b32.xlu0 %v2719, 64
      %v3712 = vpop.permute.xlu0 %3711
      %3713 = vrot.lane.b32.xlu0 %v2723, 64
      %v3714 = vpop.permute.xlu0 %3713
      %3715 = vrot.lane.b32.xlu0 %v2729, 64
      %v3716 = vpop.permute.xlu0 %3715
      %3717 = vrot.lane.b32.xlu0 %v2733, 64
      %v3718 = vpop.permute.xlu0 %3717
      %3719 = vrot.lane.b32.xlu0 %v2739, 64
      %v3720 = vpop.permute.xlu0 %3719
      %3721 = vrot.lane.b32.xlu0 %v2743, 64
      %v3722 = vpop.permute.xlu0 %3721
      %3723 = vrot.lane.b32.xlu0 %v2749, 64
      %v3724 = vpop.permute.xlu0 %3723
      %3725 = vrot.lane.b32.xlu0 %v2753, 64
      %v3726 = vpop.permute.xlu0 %3725
      %3727 = vrot.lane.b32.xlu0 %v2759, 64
      %v3728 = vpop.permute.xlu0 %3727
      %3729 = vrot.lane.b32.xlu0 %v2763, 64
      %v3730 = vpop.permute.xlu0 %3729
      %3731 = vrot.lane.b32.xlu0 %v2769, 64
      %v3732 = vpop.permute.xlu0 %3731
      %3733 = vrot.lane.b32.xlu0 %v2773, 64
      %v3734 = vpop.permute.xlu0 %3733
      %3735 = vrot.lane.b32.xlu0 %v2779, 64
      %v3736 = vpop.permute.xlu0 %3735
      %3737 = vrot.lane.b32.xlu0 %v2783, 64
      %v3738 = vpop.permute.xlu0 %3737
      %3739 = vrot.lane.b32.xlu0 %v2789, 64
      %v3740 = vpop.permute.xlu0 %3739
      %3741 = vrot.lane.b32.xlu0 %v2793, 64
      %v3742 = vpop.permute.xlu0 %3741
      %v3743 = vmul.f32 %v3712, %v3039
      %v3744 = vmul.f32 %v3714, %v3040
      %v3745 = vmul.f32 %v3716, %v3041
      %v3746 = vmul.f32 %v3718, %v3042
      %v3747 = vmul.f32 %v3720, %v3043
      %v3748 = vmul.f32 %v3722, %v3044
      %v3749 = vmul.f32 %v3724, %v3045
      %v3750 = vmul.f32 %v3726, %v3046
      %v3751 = vmul.f32 %v3728, %v3047
      %v3752 = vmul.f32 %v3730, %v3048
      %v3753 = vmul.f32 %v3732, %v3049
      %v3754 = vmul.f32 %v3734, %v3050
      %v3755 = vmul.f32 %v3736, %v3051
      %v3756 = vmul.f32 %v3738, %v3052
      %v3757 = vmul.f32 %v3740, %v3053
      %v3758 = vmul.f32 %v3742, %v3054
      %v3759 = vadd.f32 %v3695, %v3743
      %v3760 = vadd.f32 %v3696, %v3744
      %v3761 = vadd.f32 %v3697, %v3745
      %v3762 = vadd.f32 %v3698, %v3746
      %v3763 = vadd.f32 %v3699, %v3747
      %v3764 = vadd.f32 %v3700, %v3748
      %v3765 = vadd.f32 %v3701, %v3749
      %v3766 = vadd.f32 %v3702, %v3750
      %v3767 = vadd.f32 %v3703, %v3751
      %v3768 = vadd.f32 %v3704, %v3752
      %v3769 = vadd.f32 %v3705, %v3753
      %v3770 = vadd.f32 %v3706, %v3754
      %v3771 = vadd.f32 %v3707, %v3755
      %v3772 = vadd.f32 %v3708, %v3756
      %v3773 = vadd.f32 %v3709, %v3757
      %v3774 = vadd.f32 %v3710, %v3758
      %v3775 = vpack.c.bf16 %v3760, %v3759
      %v3776 = vpack.c.bf16 %v3762, %v3761
      %v3777 = vpack.c.bf16 %v3764, %v3763
      %v3778 = vpack.c.bf16 %v3766, %v3765
      %v3779 = vpack.c.bf16 %v3768, %v3767
      %v3780 = vpack.c.bf16 %v3770, %v3769
      %v3781 = vpack.c.bf16 %v3772, %v3771
      %v3782 = vpack.c.bf16 %v3774, %v3773
      %v3791 = vunpack.c.l.b16 %v3775
      %v3792 = vunpack.c.h.b16 %v3775
      %v3793 = vunpack.c.l.b16 %v3776
      %v3794 = vunpack.c.h.b16 %v3776
      %v3795 = vunpack.c.l.b16 %v3777
      %v3796 = vunpack.c.h.b16 %v3777
      %v3797 = vunpack.c.l.b16 %v3778
      %v3798 = vunpack.c.h.b16 %v3778
      %v3799 = vunpack.c.l.b16 %v3779
      %v3800 = vunpack.c.h.b16 %v3779
      %v3801 = vunpack.c.l.b16 %v3780
      %v3802 = vunpack.c.h.b16 %v3780
      %v3803 = vunpack.c.l.b16 %v3781
      %v3804 = vunpack.c.h.b16 %v3781
      %v3805 = vunpack.c.l.b16 %v3782
      %v3806 = vunpack.c.h.b16 %v3782
      %v3807 = vpack.c.b16 %v3791, %v3791
      %v3808 = vpack.c.b16 %v3792, %v3792
      %v3809 = vpack.c.b16 %v3793, %v3793
      %v3810 = vpack.c.b16 %v3794, %v3794
      %v3811 = vpack.c.b16 %v3795, %v3795
      %v3812 = vpack.c.b16 %v3796, %v3796
      %v3813 = vpack.c.b16 %v3797, %v3797
      %v3814 = vpack.c.b16 %v3798, %v3798
      %v3815 = vpack.c.b16 %v3799, %v3799
      %v3816 = vpack.c.b16 %v3800, %v3800
      %v3817 = vpack.c.b16 %v3801, %v3801
      %v3818 = vpack.c.b16 %v3802, %v3802
      %v3819 = vpack.c.b16 %v3803, %v3803
      %v3820 = vpack.c.b16 %v3804, %v3804
      %v3821 = vpack.c.b16 %v3805, %v3805
      %v3822 = vpack.c.b16 %v3806, %v3806
      %3839 = vst [vmem:[%s378] sm:$0xf] %v3807
      %3840 = vst [vmem:[%s378 + $0x8] sm:$0xf] %v3808
      %3841 = vst [vmem:[%s378 + $0x10] sm:$0xf] %v3809
      %3842 = vst [vmem:[%s378 + $0x18] sm:$0xf] %v3810
      %3843 = vst [vmem:[%s378 + $0x20] sm:$0xf] %v3811
      %3844 = vst [vmem:[%s378 + $0x28] sm:$0xf] %v3812
      %3845 = vst [vmem:[%s378 + $0x30] sm:$0xf] %v3813
      %3846 = vst [vmem:[%s378 + $0x38] sm:$0xf] %v3814
      %3847 = vst [vmem:[%s378 + $0x40] sm:$0xf] %v3815
      %3848 = vst [vmem:[%s378 + $0x48] sm:$0xf] %v3816
      %3849 = vst [vmem:[%s378 + $0x50] sm:$0xf] %v3817
      %3850 = vst [vmem:[%s378 + $0x58] sm:$0xf] %v3818
      %3851 = vst [vmem:[%s378 + $0x60] sm:$0xf] %v3819
      %3852 = vst [vmem:[%s378 + $0x68] sm:$0xf] %v3820
      %3853 = vst [vmem:[%s378 + $0x70] sm:$0xf] %v3821
      %3854 = vst [vmem:[%s378 + $0x78] sm:$0xf] %v3822
      %v3855 = vmul.f32 %v2721, %v3023
      %v3856 = vmul.f32 %v2725, %v3024
      %v3857 = vmul.f32 %v2731, %v3025
      %v3858 = vmul.f32 %v2735, %v3026
      %v3859 = vmul.f32 %v2741, %v3027
      %v3860 = vmul.f32 %v2745, %v3028
      %v3861 = vmul.f32 %v2751, %v3029
      %v3862 = vmul.f32 %v2755, %v3030
      %v3863 = vmul.f32 %v2761, %v3031
      %v3864 = vmul.f32 %v2765, %v3032
      %v3865 = vmul.f32 %v2771, %v3033
      %v3866 = vmul.f32 %v2775, %v3034
      %v3867 = vmul.f32 %v2781, %v3035
      %v3868 = vmul.f32 %v2785, %v3036
      %v3869 = vmul.f32 %v2791, %v3037
      %v3870 = vmul.f32 %v2795, %v3038
      %3871 = vrot.lane.b32.xlu0 %v2721, 64
      %v3872 = vpop.permute.xlu0 %3871
      %3873 = vrot.lane.b32.xlu0 %v2725, 64
      %v3874 = vpop.permute.xlu0 %3873
      %3875 = vrot.lane.b32.xlu0 %v2731, 64
      %v3876 = vpop.permute.xlu0 %3875
      %3877 = vrot.lane.b32.xlu0 %v2735, 64
      %v3878 = vpop.permute.xlu0 %3877
      %3879 = vrot.lane.b32.xlu0 %v2741, 64
      %v3880 = vpop.permute.xlu0 %3879
      %3881 = vrot.lane.b32.xlu0 %v2745, 64
      %v3882 = vpop.permute.xlu0 %3881
      %3883 = vrot.lane.b32.xlu0 %v2751, 64
      %v3884 = vpop.permute.xlu0 %3883
      %3885 = vrot.lane.b32.xlu0 %v2755, 64
      %v3886 = vpop.permute.xlu0 %3885
      %3887 = vrot.lane.b32.xlu0 %v2761, 64
      %v3888 = vpop.permute.xlu0 %3887
      %3889 = vrot.lane.b32.xlu0 %v2765, 64
      %v3890 = vpop.permute.xlu0 %3889
      %3891 = vrot.lane.b32.xlu0 %v2771, 64
      %v3892 = vpop.permute.xlu0 %3891
      %3893 = vrot.lane.b32.xlu0 %v2775, 64
      %v3894 = vpop.permute.xlu0 %3893
      %3895 = vrot.lane.b32.xlu0 %v2781, 64
      %v3896 = vpop.permute.xlu0 %3895
      %3897 = vrot.lane.b32.xlu0 %v2785, 64
      %v3898 = vpop.permute.xlu0 %3897
      %3899 = vrot.lane.b32.xlu0 %v2791, 64
      %v3900 = vpop.permute.xlu0 %3899
      %3901 = vrot.lane.b32.xlu0 %v2795, 64
      %v3902 = vpop.permute.xlu0 %3901
      %v3903 = vmul.f32 %v3872, %v3039
      %v3904 = vmul.f32 %v3874, %v3040
      %v3905 = vmul.f32 %v3876, %v3041
      %v3906 = vmul.f32 %v3878, %v3042
      %v3907 = vmul.f32 %v3880, %v3043
      %v3908 = vmul.f32 %v3882, %v3044
      %v3909 = vmul.f32 %v3884, %v3045
      %v3910 = vmul.f32 %v3886, %v3046
      %v3911 = vmul.f32 %v3888, %v3047
      %v3912 = vmul.f32 %v3890, %v3048
      %v3913 = vmul.f32 %v3892, %v3049
      %v3914 = vmul.f32 %v3894, %v3050
      %v3915 = vmul.f32 %v3896, %v3051
      %v3916 = vmul.f32 %v3898, %v3052
      %v3917 = vmul.f32 %v3900, %v3053
      %v3918 = vmul.f32 %v3902, %v3054
      %v3919 = vadd.f32 %v3855, %v3903
      %v3920 = vadd.f32 %v3856, %v3904
      %v3921 = vadd.f32 %v3857, %v3905
      %v3922 = vadd.f32 %v3858, %v3906
      %v3923 = vadd.f32 %v3859, %v3907
      %v3924 = vadd.f32 %v3860, %v3908
      %v3925 = vadd.f32 %v3861, %v3909
      %v3926 = vadd.f32 %v3862, %v3910
      %v3927 = vadd.f32 %v3863, %v3911
      %v3928 = vadd.f32 %v3864, %v3912
      %v3929 = vadd.f32 %v3865, %v3913
      %v3930 = vadd.f32 %v3866, %v3914
      %v3931 = vadd.f32 %v3867, %v3915
      %v3932 = vadd.f32 %v3868, %v3916
      %v3933 = vadd.f32 %v3869, %v3917
      %v3934 = vadd.f32 %v3870, %v3918
      %v3935 = vpack.c.bf16 %v3920, %v3919
      %v3936 = vpack.c.bf16 %v3922, %v3921
      %v3937 = vpack.c.bf16 %v3924, %v3923
      %v3938 = vpack.c.bf16 %v3926, %v3925
      %v3939 = vpack.c.bf16 %v3928, %v3927
      %v3940 = vpack.c.bf16 %v3930, %v3929
      %v3941 = vpack.c.bf16 %v3932, %v3931
      %v3942 = vpack.c.bf16 %v3934, %v3933
      %v3951 = vunpack.c.l.b16 %v3935
      %v3952 = vunpack.c.h.b16 %v3935
      %v3953 = vunpack.c.l.b16 %v3936
      %v3954 = vunpack.c.h.b16 %v3936
      %v3955 = vunpack.c.l.b16 %v3937
      %v3956 = vunpack.c.h.b16 %v3937
      %v3957 = vunpack.c.l.b16 %v3938
      %v3958 = vunpack.c.h.b16 %v3938
      %v3959 = vunpack.c.l.b16 %v3939
      %v3960 = vunpack.c.h.b16 %v3939
      %v3961 = vunpack.c.l.b16 %v3940
      %v3962 = vunpack.c.h.b16 %v3940
      %v3963 = vunpack.c.l.b16 %v3941
      %v3964 = vunpack.c.h.b16 %v3941
      %v3965 = vunpack.c.l.b16 %v3942
      %v3966 = vunpack.c.h.b16 %v3942
      %v3967 = vpack.c.b16 %v3951, %v3951
      %v3968 = vpack.c.b16 %v3952, %v3952
      %v3969 = vpack.c.b16 %v3953, %v3953
      %v3970 = vpack.c.b16 %v3954, %v3954
      %v3971 = vpack.c.b16 %v3955, %v3955
      %v3972 = vpack.c.b16 %v3956, %v3956
      %v3973 = vpack.c.b16 %v3957, %v3957
      %v3974 = vpack.c.b16 %v3958, %v3958
      %v3975 = vpack.c.b16 %v3959, %v3959
      %v3976 = vpack.c.b16 %v3960, %v3960
      %v3977 = vpack.c.b16 %v3961, %v3961
      %v3978 = vpack.c.b16 %v3962, %v3962
      %v3979 = vpack.c.b16 %v3963, %v3963
      %v3980 = vpack.c.b16 %v3964, %v3964
      %v3981 = vpack.c.b16 %v3965, %v3965
      %v3982 = vpack.c.b16 %v3966, %v3966
      %3999 = vst [vmem:[%s378 + $0x4] sm:$0xf] %v3967
      %4000 = vst [vmem:[%s378 + $0xc] sm:$0xf] %v3968
      %4001 = vst [vmem:[%s378 + $0x14] sm:$0xf] %v3969
      %4002 = vst [vmem:[%s378 + $0x1c] sm:$0xf] %v3970
      %4003 = vst [vmem:[%s378 + $0x24] sm:$0xf] %v3971
      %4004 = vst [vmem:[%s378 + $0x2c] sm:$0xf] %v3972
      %4005 = vst [vmem:[%s378 + $0x34] sm:$0xf] %v3973
      %4006 = vst [vmem:[%s378 + $0x3c] sm:$0xf] %v3974
      %4007 = vst [vmem:[%s378 + $0x44] sm:$0xf] %v3975
      %4008 = vst [vmem:[%s378 + $0x4c] sm:$0xf] %v3976
      %4009 = vst [vmem:[%s378 + $0x54] sm:$0xf] %v3977
      %4010 = vst [vmem:[%s378 + $0x5c] sm:$0xf] %v3978
      %4011 = vst [vmem:[%s378 + $0x64] sm:$0xf] %v3979
      %4012 = vst [vmem:[%s378 + $0x6c] sm:$0xf] %v3980
      %4013 = vst [vmem:[%s378 + $0x74] sm:$0xf] %v3981
      %4014 = vst [vmem:[%s378 + $0x7c] sm:$0xf] %v3982
      %v4015 = vpack.c.bf16 %v2949, %v2945
      %v4016 = vpack.c.bf16 %v2951, %v2947
      %v4017 = vpack.c.bf16 %v2959, %v2955
      %v4018 = vpack.c.bf16 %v2961, %v2957
      %v4019 = vpack.c.bf16 %v2969, %v2965
      %v4020 = vpack.c.bf16 %v2971, %v2967
      %v4021 = vpack.c.bf16 %v2979, %v2975
      %v4022 = vpack.c.bf16 %v2981, %v2977
      %v4023 = vpack.c.bf16 %v2989, %v2985
      %v4024 = vpack.c.bf16 %v2991, %v2987
      %v4025 = vpack.c.bf16 %v2999, %v2995
      %v4026 = vpack.c.bf16 %v3001, %v2997
      %v4027 = vpack.c.bf16 %v3009, %v3005
      %v4028 = vpack.c.bf16 %v3011, %v3007
      %v4029 = vpack.c.bf16 %v3019, %v3015
      %v4030 = vpack.c.bf16 %v3021, %v3017
      %v4047 = vunpack.c.l.b16 %v4015
      %v4048 = vunpack.c.l.b16 %v4016
      %v4049 = vunpack.c.h.b16 %v4015
      %v4050 = vunpack.c.h.b16 %v4016
      %v4051 = vunpack.c.l.b16 %v4017
      %v4052 = vunpack.c.l.b16 %v4018
      %v4053 = vunpack.c.h.b16 %v4017
      %v4054 = vunpack.c.h.b16 %v4018
      %v4055 = vunpack.c.l.b16 %v4019
      %v4056 = vunpack.c.l.b16 %v4020
      %v4057 = vunpack.c.h.b16 %v4019
      %v4058 = vunpack.c.h.b16 %v4020
      %v4059 = vunpack.c.l.b16 %v4021
      %v4060 = vunpack.c.l.b16 %v4022
      %v4061 = vunpack.c.h.b16 %v4021
      %v4062 = vunpack.c.h.b16 %v4022
      %v4063 = vunpack.c.l.b16 %v4023
      %v4064 = vunpack.c.l.b16 %v4024
      %v4065 = vunpack.c.h.b16 %v4023
      %v4066 = vunpack.c.h.b16 %v4024
      %v4067 = vunpack.c.l.b16 %v4025
      %v4068 = vunpack.c.l.b16 %v4026
      %v4069 = vunpack.c.h.b16 %v4025
      %v4070 = vunpack.c.h.b16 %v4026
      %v4071 = vunpack.c.l.b16 %v4027
      %v4072 = vunpack.c.l.b16 %v4028
      %v4073 = vunpack.c.h.b16 %v4027
      %v4074 = vunpack.c.h.b16 %v4028
      %v4075 = vunpack.c.l.b16 %v4029
      %v4076 = vunpack.c.l.b16 %v4030
      %v4077 = vunpack.c.h.b16 %v4029
      %v4078 = vunpack.c.h.b16 %v4030
      %v4079 = vpack.c.b16 %v4048, %v4047
      %v4080 = vpack.c.b16 %v4050, %v4049
      %v4081 = vpack.c.b16 %v4052, %v4051
      %v4082 = vpack.c.b16 %v4054, %v4053
      %v4083 = vpack.c.b16 %v4056, %v4055
      %v4084 = vpack.c.b16 %v4058, %v4057
      %v4085 = vpack.c.b16 %v4060, %v4059
      %v4086 = vpack.c.b16 %v4062, %v4061
      %v4087 = vpack.c.b16 %v4064, %v4063
      %v4088 = vpack.c.b16 %v4066, %v4065
      %v4089 = vpack.c.b16 %v4068, %v4067
      %v4090 = vpack.c.b16 %v4070, %v4069
      %v4091 = vpack.c.b16 %v4072, %v4071
      %v4092 = vpack.c.b16 %v4074, %v4073
      %v4093 = vpack.c.b16 %v4076, %v4075
      %v4094 = vpack.c.b16 %v4078, %v4077
      %4111 = vst [vmem:[%s389] sm:$0xff] %v4079
      %4112 = vst [vmem:[%s389 + $0x8] sm:$0xff] %v4080
      %4113 = vst [vmem:[%s389 + $0x10] sm:$0xff] %v4081
      %4114 = vst [vmem:[%s389 + $0x18] sm:$0xff] %v4082
      %4115 = vst [vmem:[%s389 + $0x20] sm:$0xff] %v4083
      %4116 = vst [vmem:[%s389 + $0x28] sm:$0xff] %v4084
      %4117 = vst [vmem:[%s389 + $0x30] sm:$0xff] %v4085
      %4118 = vst [vmem:[%s389 + $0x38] sm:$0xff] %v4086
      %4119 = vst [vmem:[%s389 + $0x40] sm:$0xff] %v4087
      %4120 = vst [vmem:[%s389 + $0x48] sm:$0xff] %v4088
      %4121 = vst [vmem:[%s389 + $0x50] sm:$0xff] %v4089
      %4122 = vst [vmem:[%s389 + $0x58] sm:$0xff] %v4090
      %4123 = vst [vmem:[%s389 + $0x60] sm:$0xff] %v4091
      %4124 = vst [vmem:[%s389 + $0x68] sm:$0xff] %v4092
      %4125 = vst [vmem:[%s389 + $0x70] sm:$0xff] %v4093
      %4126 = vst [vmem:[%s389 + $0x78] sm:$0xff] %v4094
      %s4127 = smul.u32 16, %s23
      %p4128 = scmp.lt.s32.totalorder %s22, 1
      %s4129 = scalar_select %p4128, %s22, 1
      %p4130 = scmp.lt.s32.totalorder %s4127, 31
      %s4131 = scalar_select %p4130, %s4127, 31
      %s4132 = smul.addr %s4131, 4
      %s4133 = smul.addr %s4129, 128
      %s4134 = sadd.s32 %s4132, %s4133
      %s4135 = smul.addr %s4134, 4
      %s4136 = scalar_lea.vmem %s4, %s4135
      %s4137 = smul.u32 16, %s23
      %p4138 = scmp.lt.s32.totalorder %s22, 1
      %s4139 = scalar_select %p4138, %s22, 1
      %p4140 = scmp.lt.s32.totalorder %s4137, 31
      %s4141 = scalar_select %p4140, %s4137, 31
      %s4142 = smul.addr %s4141, 2
      %s4143 = smul.addr %s4139, 64
      %s4144 = sadd.s32 %s4142, %s4143
      %s4145 = smul.addr %s4144, 4
      %s4146 = scalar_lea.vmem %s5, %s4145
      %s4147 = smul.u32 16, %s23
      %p4148 = scmp.lt.s32.totalorder %s22, 1
      %s4149 = scalar_select %p4148, %s22, 1
      %p4150 = scmp.lt.s32.totalorder %s4147, 31
      %s4151 = scalar_select %p4150, %s4147, 31
      %s4152 = smul.addr %s4151, 2
      %s4153 = smul.addr %s4149, 64
      %s4154 = sadd.s32 %s4152, %s4153
      %s4155 = smul.addr %s4154, 4
      %s4156 = scalar_lea.vmem %s6, %s4155
      // Predicated region
      $region37: #{self_attention_forward.2} parent=35 // pred_check
        %p4157 = pneg %p151
      $region38: #{self_attention_forward.2} parent=35 // pred_check_branch
        %4159 = sbr.rel (%p4157) target = $region40
      $region39: #{self_attention_forward.2} parent=35 // pred_region
        %s4160 = smul.u32 16, %s23
      $region40: #{self_attention_forward.2} parent=35 // pred_fallthru
        _
      // Predicated region
      $region41: #{self_attention_forward.2} parent=35 // pred_check
        %p4161 = pneg %p179
      $region42: #{self_attention_forward.2} parent=35 // pred_check_branch
        %4163 = sbr.rel (%p4161) target = $region44
      $region43: #{self_attention_forward.2} parent=35 // pred_region
        %s4164 = smul.u32 16, %s23
      $region44: #{self_attention_forward.2} parent=35 // pred_fallthru
        _
      // Predicated region
      $region45: #{self_attention_forward.2} parent=35 // pred_check
        %p4165 = pneg %p207
      $region46: #{self_attention_forward.2} parent=35 // pred_check_branch
        %4167 = sbr.rel (%p4165) target = $region48
      $region47: #{self_attention_forward.2} parent=35 // pred_region
        %s4168 = smul.u32 16, %s23
      $region48: #{self_attention_forward.2} parent=35 // pred_fallthru
        _
    $region36: #{self_attention_forward.2} parent=5 // pred_fallthru
      _
    %p4169 = scmp.le.s32.totalorder 2, %s13
    // Predicated region
    $region49: #{self_attention_forward.2} parent=5 // pred_check
      %p4170 = pneg %p4169
    $region50: #{self_attention_forward.2} parent=5 // pred_check_branch
      %4172 = sbr.rel (%p4170) target = $region52
    $region51: #{self_attention_forward.2} parent=5 // pred_region
      %s4173 = ssub.s32 %s13, 2
      // Predicated region
      $region53: #{self_attention_forward.2} parent=51 // pred_check
        %p4174 = pneg %p157
      $region54: #{self_attention_forward.2} parent=51 // pred_check_branch
        %4176 = sbr.rel (%p4174) target = $region56
      $region55: #{self_attention_forward.2} parent=51 // pred_region
        %s4177 = smul.u32 16, %s25
        %p4178 = scmp.lt.s32.totalorder %s24, 1
        %s4179 = scalar_select %p4178, %s24, 1
        %p4180 = scmp.lt.s32.totalorder %s4177, 31
        %s4181 = scalar_select %p4180, %s4177, 31
        %s4182 = smul.addr %s4181, 4
        %s4183 = smul.addr %s4179, 128
        %s4184 = sadd.s32 %s4182, %s4183
        %s4185 = smul.addr %s4184, 4
        %s4186 = scalar_lea.vmem %s4, %s4185
      $region56: #{self_attention_forward.2} parent=51 // pred_fallthru
        _
      // Predicated region
      $region57: #{self_attention_forward.2} parent=51 // pred_check
        %p4187 = pneg %p185
      $region58: #{self_attention_forward.2} parent=51 // pred_check_branch
        %4189 = sbr.rel (%p4187) target = $region60
      $region59: #{self_attention_forward.2} parent=51 // pred_region
        %s4190 = smul.u32 16, %s25
        %p4191 = scmp.lt.s32.totalorder %s24, 1
        %s4192 = scalar_select %p4191, %s24, 1
        %p4193 = scmp.lt.s32.totalorder %s4190, 31
        %s4194 = scalar_select %p4193, %s4190, 31
        %s4195 = smul.addr %s4194, 2
        %s4196 = smul.addr %s4192, 64
        %s4197 = sadd.s32 %s4195, %s4196
        %s4198 = smul.addr %s4197, 4
        %s4199 = scalar_lea.vmem %s5, %s4198
      $region60: #{self_attention_forward.2} parent=51 // pred_fallthru
        _
      // Predicated region
      $region61: #{self_attention_forward.2} parent=51 // pred_check
        %p4200 = pneg %p213
      $region62: #{self_attention_forward.2} parent=51 // pred_check_branch
        %4202 = sbr.rel (%p4200) target = $region64
      $region63: #{self_attention_forward.2} parent=51 // pred_region
        %s4203 = smul.u32 16, %s25
        %p4204 = scmp.lt.s32.totalorder %s24, 1
        %s4205 = scalar_select %p4204, %s24, 1
        %p4206 = scmp.lt.s32.totalorder %s4203, 31
        %s4207 = scalar_select %p4206, %s4203, 31
        %s4208 = smul.addr %s4207, 2
        %s4209 = smul.addr %s4205, 64
        %s4210 = sadd.s32 %s4208, %s4209
        %s4211 = smul.addr %s4210, 4
        %s4212 = scalar_lea.vmem %s6, %s4211
      $region64: #{self_attention_forward.2} parent=51 // pred_fallthru
        _
    $region52: #{self_attention_forward.2} parent=5 // pred_fallthru
      _
  $region6: #{self_attention_forward.2} parent=0 // loop_footer
    %s17 = sadd.s32 1, %s13
  $region7: #{self_attention_forward.2} parent=0 // loop_footer_branch
    %12 = sbr.rel target = $region3
  $region8: #{self_attention_forward.2} parent=0 // loop_exit
    _

</llo_original>
